<compile_context>
chip_gen: v7x
topology: tpu7x:2x2x1
jax: 0.10.0
libtpu: 0.0.40
codegen_flags: <defaults>
</compile_context>

<pallas_src>
import functools
import math

import jax
import jax.numpy as jnp
from jax.experimental import pallas as pl
from jax.experimental.pallas import tpu as pltpu

_BN_EPS = 1e-5
_VMEM_LIMIT = 48 * 1024 * 1024   # headroom under v7x's 64 MiB physical VMEM


# ---------------------------------------------------------------------------
# Tiling helper (budget includes f32 temporaries; prefer tiles that divide HW).
# ---------------------------------------------------------------------------
def _pick_hw_tile(hw: int, rows: int, itemsize: int = 4) -> int:
    if hw <= 128 or hw % 128 != 0:
        return hw                                    # full-extent block (legal)
    budget = 3 * 1024 * 1024                         # per-block f32 working set
    max_t = max(128, (budget // max(1, rows * itemsize)) // 128 * 128)
    if hw <= max_t:
        return hw
    n = pl.cdiv(hw, max_t)
    t = max(128, (hw // n) // 128 * 128)
    while t > 128 and hw % t != 0:                   # avoid ragged last tile
        t -= 128
    return t


def _sigmoid(x):
    # Plain exp-based sigmoid: guaranteed Mosaic lowering (EUP exp + VPU).
    return 1.0 / (1.0 + jnp.exp(-x))


# ---------------------------------------------------------------------------
# Kernel 1: fused (1x1 conv == channel matmul) + bias + activation.
# 3x3 convs reuse it through an im2col view.
# ---------------------------------------------------------------------------
def _pw_kernel(x_ref, w_ref, b_ref, o_ref, *, act: str):
    x = x_ref[0].astype(jnp.float32)                       # (Cin, T)
    w = w_ref[...].astype(jnp.float32)                     # (Cout, Cin)
    y = jnp.dot(w, x, preferred_element_type=jnp.float32)  # MXU
    y = y + b_ref[...].astype(jnp.float32)                 # (Cout, 1) broadcast
    if act == "relu":
        y = jnp.maximum(y, 0.0)
    elif act == "sigmoid":
        y = _sigmoid(y)
    o_ref[0] = y.astype(o_ref.dtype)


def pointwise_conv(x, w, b, act="none"):
    """x: (B, Cin, HW); w: (Cout, Cin); b: (Cout,) -> (B, Cout, HW)."""
    B, Cin, HW = x.shape
    Cout = w.shape[0]
    t = _pick_hw_tile(HW, Cin + 2 * Cout)
    grid = (B, pl.cdiv(HW, t))
    return pl.pallas_call(
        functools.partial(_pw_kernel, act=act),
        out_shape=jax.ShapeDtypeStruct((B, Cout, HW), x.dtype),
        grid_spec=pltpu.PrefetchScalarGridSpec(
            num_scalar_prefetch=0,
            grid=grid,
            in_specs=[
                pl.BlockSpec((1, Cin, t), lambda bi, i: (bi, 0, i)),
                pl.BlockSpec((Cout, Cin), lambda bi, i: (0, 0)),
                pl.BlockSpec((Cout, 1), lambda bi, i: (0, 0)),
            ],
            out_specs=pl.BlockSpec((1, Cout, t), lambda bi, i: (bi, 0, i)),
        ),
        compiler_params=pltpu.CompilerParams(
            dimension_semantics=("parallel", "parallel"),
            vmem_limit_bytes=_VMEM_LIMIT,
        ),
        cost_estimate=pl.CostEstimate(
            flops=2 * B * Cout * Cin * HW,
            transcendentals=(B * Cout * HW if act == "sigmoid" else 0),
            bytes_accessed=4 * (B * Cin * HW + Cout * Cin + Cout + B * Cout * HW),
        ),
    )(x, w, b.reshape(Cout, 1))


# ---------------------------------------------------------------------------
# Kernel 2: reverse-attention gate:
#   r = (1-sig(prior)) + (1-sig(|F(prior)|)) + (1-sig(x1)) + (1-sig(|F(x1)|))
#   out = r (broadcast over C) * X
# ---------------------------------------------------------------------------
def _reverse_gate_kernel(ps_ref, pf_ref, xs_ref, xf_ref, x_ref, o_ref):
    r = (4.0
         - _sigmoid(ps_ref[0].astype(jnp.float32))
         - _sigmoid(pf_ref[0].astype(jnp.float32))
         - _sigmoid(xs_ref[0].astype(jnp.float32))
         - _sigmoid(xf_ref[0].astype(jnp.float32)))          # (1, T)
    o_ref[0] = (r * x_ref[0].astype(jnp.float32)).astype(o_ref.dtype)


def reverse_gate(prior_s, prior_f, x1_s, x1_f, X):
    B, C, HW = X.shape
    t = _pick_hw_tile(HW, 2 * C + 8)
    grid = (B, pl.cdiv(HW, t))
    one_spec = pl.BlockSpec((1, 1, t), lambda bi, i: (bi, 0, i))
    full_spec = pl.BlockSpec((1, C, t), lambda bi, i: (bi, 0, i))
    return pl.pallas_call(
        _reverse_gate_kernel,
        out_shape=jax.ShapeDtypeStruct((B, C, HW), X.dtype),
        grid_spec=pltpu.PrefetchScalarGridSpec(
            num_scalar_prefetch=0, grid=grid,
            in_specs=[one_spec, one_spec, one_spec, one_spec, full_spec],
            out_specs=full_spec,
        ),
        compiler_params=pltpu.CompilerParams(
            dimension_semantics=("parallel", "parallel"),
            vmem_limit_bytes=_VMEM_LIMIT,
        ),
    )(prior_s, prior_f, x1_s, x1_f, X)


# ---------------------------------------------------------------------------
# Kernel 3: real-valued spectral gating  (w * Re(F), w * Im(F)).
# ---------------------------------------------------------------------------
def _cscale_kernel(w_ref, re_ref, im_ref, ore_ref, oim_ref):
    w = w_ref[0].astype(jnp.float32)
    ore_ref[0] = (w * re_ref[0].astype(jnp.float32)).astype(ore_ref.dtype)
    oim_ref[0] = (w * im_ref[0].astype(jnp.float32)).astype(oim_ref.dtype)


def complex_scale(wmap, f_re, f_im):
    B, C, HW = wmap.shape
    t = _pick_hw_tile(HW, 5 * C)
    grid = (B, pl.cdiv(HW, t))
    spec = pl.BlockSpec((1, C, t), lambda bi, i: (bi, 0, i))
    return pl.pallas_call(
        _cscale_kernel,
        out_shape=(jax.ShapeDtypeStruct((B, C, HW), jnp.float32),
                   jax.ShapeDtypeStruct((B, C, HW), jnp.float32)),
        grid_spec=pltpu.PrefetchScalarGridSpec(
            num_scalar_prefetch=0, grid=grid,
            in_specs=[spec, spec, spec],
            out_specs=[spec, spec],
        ),
        compiler_params=pltpu.CompilerParams(
            dimension_semantics=("parallel", "parallel"),
            vmem_limit_bytes=_VMEM_LIMIT,
        ),
    )(wmap, f_re, f_im)


# ---------------------------------------------------------------------------
# Kernel 4: yt_out = relu( BN(|ifft2|) ) + yt_s  (BN folded to per-channel affine).
# ---------------------------------------------------------------------------
def _abs_bn_relu_add_kernel(re_ref, im_ref, s_ref, t_ref, a_ref, o_ref):
    re = re_ref[0].astype(jnp.float32)
    im = im_ref[0].astype(jnp.float32)
    mag = jnp.sqrt(re * re + im * im)
    y = jnp.maximum(mag * s_ref[0] + t_ref[0], 0.0)
    o_ref[0] = (y + a_ref[0].astype(jnp.float32)).astype(o_ref.dtype)


def abs_bn_relu_add(f_re, f_im, scale, shift, add):
    B, C, HW = f_re.shape
    tile = _pick_hw_tile(HW, 5 * C)
    grid = (B, pl.cdiv(HW, tile))
    spec = pl.BlockSpec((1, C, tile), lambda bi, i: (bi, 0, i))
    cspec = pl.BlockSpec((1, C, 1), lambda bi, i: (0, 0, 0))
    return pl.pallas_call(
        _abs_bn_relu_add_kernel,
        out_shape=jax.ShapeDtypeStruct((B, C, HW), add.dtype),
        grid_spec=pltpu.PrefetchScalarGridSpec(
            num_scalar_prefetch=0, grid=grid,
            in_specs=[spec, spec, cspec, cspec, spec],
            out_specs=spec,
        ),
        compiler_params=pltpu.CompilerParams(
            dimension_semantics=("parallel", "parallel"),
            vmem_limit_bytes=_VMEM_LIMIT,
        ),
    )(f_re, f_im, scale, shift, add)


# ---------------------------------------------------------------------------
# Kernel 5: y = a + b + c  (final residual with both priors).
# ---------------------------------------------------------------------------
def _add3_kernel(a_ref, b_ref, c_ref, o_ref):
    o_ref[...] = a_ref[...] + b_ref[...] + c_ref[...]


def add3(a, b, c):
    B, C, HW = a.shape
    t = _pick_hw_tile(HW, 4 * C)
    grid = (B, pl.cdiv(HW, t))
    spec = pl.BlockSpec((1, C, t), lambda bi, i: (bi, 0, i))
    return pl.pallas_call(
        _add3_kernel,
        out_shape=jax.ShapeDtypeStruct(a.shape, a.dtype),
        grid_spec=pltpu.PrefetchScalarGridSpec(
            num_scalar_prefetch=0, grid=grid,
            in_specs=[spec, spec, spec], out_specs=spec,
        ),
        compiler_params=pltpu.CompilerParams(
            dimension_semantics=("parallel", "parallel"),
            vmem_limit_bytes=_VMEM_LIMIT,
        ),
    )(a, b, c)


# ---------------------------------------------------------------------------
# XLA-side data movement: im2col for 3x3 convs, align_corners bilinear resize.
# ---------------------------------------------------------------------------
def _im2col3x3(x):
    B, C, H, W = x.shape
    xp = jnp.pad(x, ((0, 0), (0, 0), (1, 1), (1, 1)))
    cols = [xp[:, :, kh:kh + H, kw:kw + W] for kh in range(3) for kw in range(3)]
    return jnp.stack(cols, axis=2).reshape(B, C * 9, H, W)


def _interp_matrix(n_out, n_in):
    if n_out == 1 or n_in == 1:
        src = jnp.zeros((n_out,), jnp.float32)
    else:
        src = jnp.arange(n_out, dtype=jnp.float32) * ((n_in - 1) / (n_out - 1))
    lo = jnp.clip(jnp.floor(src).astype(jnp.int32), 0, n_in - 1)
    hi = jnp.clip(lo + 1, 0, n_in - 1)
    frac = src - lo.astype(jnp.float32)
    m = jnp.zeros((n_out, n_in), jnp.float32)
    m = m.at[jnp.arange(n_out), lo].add(1.0 - frac)
    m = m.at[jnp.arange(n_out), hi].add(frac)
    return m


def _bilinear_align_corners(x, H, W):
    # F.interpolate(..., mode='bilinear', align_corners=True) as exact matmuls.
    B, C, h, w = x.shape
    if (h, w) == (H, W):
        return x
    mh, mw = _interp_matrix(H, h), _interp_matrix(W, w)
    return jnp.einsum('Hh,bchw,Ww->bcHW', mh, x.astype(jnp.float32), mw).astype(x.dtype)


# ---------------------------------------------------------------------------
# Parameters (eval-mode BatchNorm folded into the preceding conv).
# ---------------------------------------------------------------------------
def _conv_init(key, cout, cin, k):
    kw, kb = jax.random.split(key)
    bound = 1.0 / math.sqrt(cin * k * k)
    w = bound * jax.random.normal(kw, (cout, cin, k, k), jnp.float32)
    b = bound * jax.random.normal(kb, (cout,), jnp.float32)
    return w, b


def _bn_init(key, c):
    k1, k2, k3, k4 = jax.random.split(key, 4)
    gamma = 1.0 + 0.1 * jax.random.normal(k1, (c,), jnp.float32)
    beta = 0.1 * jax.random.normal(k2, (c,), jnp.float32)
    mean = 0.1 * jax.random.normal(k3, (c,), jnp.float32)
    var = 1.0 + 0.2 * jax.random.uniform(k4, (c,), jnp.float32)
    return gamma, beta, mean, var


def _fold(w, b, bn):
    gamma, beta, mean, var = bn
    s = gamma / jnp.sqrt(var + _BN_EPS)
    return w * s[:, None, None, None], s * (b - mean) + beta


def make_params(key, C, mid):
    keys = iter(jax.random.split(key, 24))

    def conv_bn(cout, cin, k):
        w, b = _conv_init(next(keys), cout, cin, k)
        return _fold(w, b, _bn_init(next(keys), cout))

    p = {}
    # self.conv : 1x1(3C->C)+BN, 3x3+BN, 3x3+BN, ReLU
    p['t1_1'] = conv_bn(C, 3 * C, 1)
    p['t1_2'] = conv_bn(C, C, 3)
    p['t1_3'] = conv_bn(C, C, 3)
    # self.conv3 : 1x1(C->C)+BN, 3x3+BN, 3x3+BN, ReLU
    p['t2_1'] = conv_bn(C, C, 1)
    p['t2_2'] = conv_bn(C, C, 3)
    p['t2_3'] = conv_bn(C, C, 3)
    # self.weight : 1x1(C->C//16)+BN+ReLU, 1x1(C//16->C)+Sigmoid
    p['w_1'] = conv_bn(C // 16, C, 1)
    p['w_2'] = _conv_init(next(keys), C, C // 16, 1)
    # self.out : 3x3(2C->mid)+BN+ReLU, 1x1(mid->1)
    p['o_1'] = conv_bn(mid, 2 * C, 3)
    p['o_2'] = _conv_init(next(keys), 1, mid, 1)
    # self.norm : BatchNorm2d(C) on |ifft2(...)|, eval-mode affine
    gamma, beta, mean, var = _bn_init(next(keys), C)
    s = gamma / jnp.sqrt(var + _BN_EPS)
    p['norm_scale'] = s.reshape(1, C, 1)
    p['norm_shift'] = (beta - s * mean).reshape(1, C, 1)
    return p


# ---------------------------------------------------------------------------
# DRP_2.forward
# ---------------------------------------------------------------------------
def drp2_forward(params, X, x1, prior_cam):
    B, C, H, W = X.shape
    flat = lambda a: a.reshape(a.shape[0], a.shape[1], -1)      # free reshape
    unflat = lambda a: a.reshape(a.shape[0], a.shape[1], H, W)  # free reshape

    def w2(p):
        w, b = p
        return w.reshape(w.shape[0], -1), b

    prior = _bilinear_align_corners(prior_cam, H, W)            # (B,1,H,W)
    x1p = _bilinear_align_corners(x1, H, W)                     # (B,1,H,W)

    # yt = self.conv(cat([X, prior.expand(C), x1p.expand(C)]))
    cat0 = jnp.concatenate(
        [X, jnp.broadcast_to(prior, (B, C, H, W)), jnp.broadcast_to(x1p, (B, C, H, W))],
        axis=1)
    h = pointwise_conv(flat(cat0), *w2(params['t1_1']), act="none")
    h = pointwise_conv(flat(_im2col3x3(unflat(h))), *w2(params['t1_2']), act="none")
    yt = pointwise_conv(flat(_im2col3x3(unflat(h))), *w2(params['t1_3']), act="relu")

    # yt_s = self.conv3(yt)
    g = pointwise_conv(yt, *w2(params['t2_1']), act="none")
    g = pointwise_conv(flat(_im2col3x3(unflat(g))), *w2(params['t2_2']), act="none")
    yt_s = pointwise_conv(flat(_im2col3x3(unflat(g))), *w2(params['t2_3']), act="relu")

    # yt_f = relu(norm(|ifft2( weight(Re fft2(yt)) * fft2(yt) )|));  yt_out = yt_s + yt_f
    # TODO(synk): fft2 / ifft2 have no Pallas equivalent; they run as XLA FFT ops.
    F_yt = jnp.fft.fft2(unflat(yt).astype(jnp.float32))
    f_re, f_im = flat(jnp.real(F_yt)), flat(jnp.imag(F_yt))
    wm = pointwise_conv(f_re, *w2(params['w_1']), act="relu")
    wm = pointwise_conv(wm, *w2(params['w_2']), act="sigmoid")
    s_re, s_im = complex_scale(wm, f_re, f_im)
    inv = jnp.fft.ifft2(unflat(s_re) + 1j * unflat(s_im))
    yt_out = abs_bn_relu_add(flat(jnp.real(inv)), flat(jnp.imag(inv)),
                             params['norm_scale'], params['norm_shift'], yt_s)

    # reverse-attention gates (spatial + spectral) applied to FI = X
    pf = flat(jnp.abs(jnp.fft.fft2(prior.astype(jnp.float32)))).astype(X.dtype)
    xf = flat(jnp.abs(jnp.fft.fft2(x1p.astype(jnp.float32)))).astype(X.dtype)
    y_ra = reverse_gate(flat(prior), pf, flat(x1p), xf, flat(X))

    # y = self.out(cat([y_ra, yt_out])) + prior + x1p
    cat1 = jnp.concatenate([unflat(y_ra), unflat(yt_out)], axis=1)
    o = pointwise_conv(flat(_im2col3x3(cat1)), *w2(params['o_1']), act="relu")
    y = pointwise_conv(o, *w2(params['o_2']), act="none")
    y = add3(y, flat(prior), flat(x1p))
    return unflat(y)                                            # (B, 1, H, W)


# ---------------------------------------------------------------------------
# Pure-JAX reference (lax.conv path) for correctness checking.
# ---------------------------------------------------------------------------
def _conv2d_ref(x, w, b, k):
    pad = 'VALID' if k == 1 else [(1, 1), (1, 1)]
    y = jax.lax.conv_general_dilated(x, w, window_strides=(1, 1), padding=pad,
                                     dimension_numbers=('NCHW', 'OIHW', 'NCHW'))
    return y + b[None, :, None, None]


def drp2_reference(params, X, x1, prior_cam):
    B, C, H, W = X.shape
    prior = _bilinear_align_corners(prior_cam, H, W)
    x1p = _bilinear_align_corners(x1, H, W)

    def seq3(x, p1, p2, p3, k1):
        h = _conv2d_ref(x, *p1, k1)
        h = _conv2d_ref(h, *p2, 3)
        h = _conv2d_ref(h, *p3, 3)
        return jnp.maximum(h, 0.0)

    cat0 = jnp.concatenate([X, jnp.broadcast_to(prior, (B, C, H, W)),
                            jnp.broadcast_to(x1p, (B, C, H, W))], axis=1)
    yt = seq3(cat0, params['t1_1'], params['t1_2'], params['t1_3'], 1)
    yt_s = seq3(yt, params['t2_1'], params['t2_2'], params['t2_3'], 1)

    F_yt = jnp.fft.fft2(yt.astype(jnp.float32))
    wmid = jnp.maximum(_conv2d_ref(jnp.real(F_yt), *params['w_1'], 1), 0.0)
    wmap = jax.nn.sigmoid(_conv2d_ref(wmid, *params['w_2'], 1))
    mag = jnp.abs(jnp.fft.ifft2(wmap * F_yt))
    yt_f = jnp.maximum(mag * params['norm_scale'].reshape(1, C, 1, 1)
                       + params['norm_shift'].reshape(1, C, 1, 1), 0.0)
    yt_out = yt_s + yt_f

    r = ((1 - jax.nn.sigmoid(prior)) + (1 - jax.nn.sigmoid(jnp.abs(jnp.fft.fft2(prior))))
         + (1 - jax.nn.sigmoid(x1p)) + (1 - jax.nn.sigmoid(jnp.abs(jnp.fft.fft2(x1p)))))
    y_ra = jnp.broadcast_to(r, (B, C, H, W)) * X

    cat1 = jnp.concatenate([y_ra, yt_out], axis=1)
    o = jnp.maximum(_conv2d_ref(cat1, *params['o_1'], 3), 0.0)
    y = _conv2d_ref(o, *params['o_2'], 1)
    return y + prior + x1p


if __name__ == "__main__":
    key = jax.random.PRNGKey(0)
    kp, kx, k1, k2 = jax.random.split(key, 4)

    # in_channels must be >= 16 (module uses in_channels // 16).
    B, C, mid, H, W = 2, 32, 16, 16, 16
    X = jax.random.normal(kx, (B, C, H, W), jnp.float32)
    x1 = jax.random.normal(k1, (B, 1, 8, 8), jnp.float32)
    prior_cam = jax.random.normal(k2, (B, 1, 8, 8), jnp.float32)
    params = make_params(kp, C, mid)

    fwd = jax.jit(drp2_forward)
    y = jax.block_until_ready(fwd(params, X, x1, prior_cam))
    assert y.shape == (B, 1, H, W)
    assert bool(jnp.isfinite(y).all())

    y_ref = jax.jit(drp2_reference)(params, X, x1, prior_cam)
    rel_err = float(jnp.max(jnp.abs(y - y_ref)) / (jnp.max(jnp.abs(y_ref)) + 1e-6))
    assert rel_err < 3e-2, f"relative error too large: {rel_err}"

    print("KERNEL_OK")
</pallas_src>

<mosaic_0001>
module attributes {stable_mosaic.version = 11 : i64} {
  func.func private @main(%arg0: i32) attributes {dimension_semantics = [#tpu.dimension_semantics<core_parallel>], iteration_bounds = array<i64: 2>, tpu.core_type = #tpu.core_type<sc_scalar_subcore>, window_params = []} {
    return
  }
}

module attributes {stable_mosaic.version = 11 : i64} {
  func.func private @main(%arg0: i32) attributes {dimension_semantics = [#tpu.dimension_semantics<core_parallel>], iteration_bounds = array<i64: 2>, tpu.core_type = #tpu.core_type<sc_scalar_subcore>, window_params = []} {
    return
  }
}

module attributes {stable_mosaic.version = 11 : i64} {
  func.func @_pw_kernel(%arg0: i32, %arg1: i32, %arg2: memref<1x96x256xf32, #tpu.memory_space<vmem>>, %arg3: memref<32x96xf32, #tpu.memory_space<vmem>>, %arg4: memref<32x1xf32, #tpu.memory_space<vmem>>, %arg5: memref<1x32x256xf32, #tpu.memory_space<vmem>>) attributes {dimension_semantics = [#tpu.dimension_semantics<parallel>, #tpu.dimension_semantics<parallel>], iteration_bounds = array<i64: 2, 1>, scalar_prefetch = 0 : i64, scratch_operands = 0 : i64, tpu.core_type = #tpu.core_type<tc>, window_params = [{transform_indices = @transform_0, window_bounds = array<i64: 1, 96, 256>}, {pipeline_mode = #tpu.pipeline_mode<synchronous>, transform_indices = @transform_1, window_bounds = array<i64: 32, 96>}, {pipeline_mode = #tpu.pipeline_mode<synchronous>, transform_indices = @transform_2, window_bounds = array<i64: 32, 1>}, {transform_indices = @transform_3, window_bounds = array<i64: 1, 32, 256>}]} {
    %c0 = arith.constant 0 : index
    %c0_0 = arith.constant 0 : index
    %c0_1 = arith.constant 0 : index
    %0 = vector.load %arg2[%c0, %c0_0, %c0_1] : memref<1x96x256xf32, #tpu.memory_space<vmem>>, vector<1x96x256xf32>
    %1 = vector.shape_cast %0 : vector<1x96x256xf32> to vector<96x256xf32>
    %c0_2 = arith.constant 0 : index
    %c0_3 = arith.constant 0 : index
    %2 = vector.load %arg3[%c0_2, %c0_3] : memref<32x96xf32, #tpu.memory_space<vmem>>, vector<32x96xf32>
    %cst = arith.constant dense<0.000000e+00> : vector<32x256xf32>
    %3 = tpu.matmul %2, %1, %cst {dimension_numbers = #tpu.dot_dimension_numbers<[1], [0], [0], [1], [0, 0, 1, 1], [], []>} : vector<32x96xf32>, vector<96x256xf32>, vector<32x256xf32> -> vector<32x256xf32>
    %c0_4 = arith.constant 0 : index
    %c0_5 = arith.constant 0 : index
    %4 = vector.load %arg4[%c0_4, %c0_5] : memref<32x1xf32, #tpu.memory_space<vmem>>, vector<32x1xf32>
    %5 = vector.broadcast %4 : vector<32x1xf32> to vector<32x256xf32>
    %6 = arith.addf %3, %5 : vector<32x256xf32>
    %c0_6 = arith.constant 0 : index
    %c0_7 = arith.constant 0 : index
    %c0_8 = arith.constant 0 : index
    %7 = vector.load %arg5[%c0_6, %c0_7, %c0_8] : memref<1x32x256xf32, #tpu.memory_space<vmem>>, vector<1x32x256xf32>
    %8 = vector.shape_cast %7 : vector<1x32x256xf32> to vector<32x256xf32>
    %9 = vector.shape_cast %6 : vector<32x256xf32> to vector<1x32x256xf32>
    tpu.vector_store %arg5[%c0_6, %c0_7, %c0_8], %9 {strides = array<i32>} : memref<1x32x256xf32, #tpu.memory_space<vmem>>, vector<1x32x256xf32>,
    return
  }
  func.func @transform_0(%arg0: i32, %arg1: i32) -> (i32, i32, i32) {
    %c0_i32 = arith.constant 0 : i32
    %c0_i32_0 = arith.constant 0 : i32
    return %arg0, %c0_i32, %arg1 : i32, i32, i32
  }
  func.func @transform_1(%arg0: i32, %arg1: i32) -> (i32, i32) {
    %c0_i32 = arith.constant 0 : i32
    %c0_i32_0 = arith.constant 0 : i32
    %c0_i32_1 = arith.constant 0 : i32
    return %c0_i32, %c0_i32_0 : i32, i32
  }
  func.func @transform_2(%arg0: i32, %arg1: i32) -> (i32, i32) {
    %c0_i32 = arith.constant 0 : i32
    %c0_i32_0 = arith.constant 0 : i32
    %c0_i32_1 = arith.constant 0 : i32
    return %c0_i32, %c0_i32_0 : i32, i32
  }
  func.func @transform_3(%arg0: i32, %arg1: i32) -> (i32, i32, i32) {
    %c0_i32 = arith.constant 0 : i32
    %c0_i32_0 = arith.constant 0 : i32
    return %arg0, %c0_i32, %arg1 : i32, i32, i32
  }
}

module attributes {stable_mosaic.version = 11 : i64} {
  func.func @_pw_kernel(%arg0: i32, %arg1: i32, %arg2: memref<1x288x256xf32, #tpu.memory_space<vmem>>, %arg3: memref<32x288xf32, #tpu.memory_space<vmem>>, %arg4: memref<32x1xf32, #tpu.memory_space<vmem>>, %arg5: memref<1x32x256xf32, #tpu.memory_space<vmem>>) attributes {dimension_semantics = [#tpu.dimension_semantics<parallel>, #tpu.dimension_semantics<parallel>], iteration_bounds = array<i64: 2, 1>, scalar_prefetch = 0 : i64, scratch_operands = 0 : i64, tpu.core_type = #tpu.core_type<tc>, window_params = [{transform_indices = @transform_0, window_bounds = array<i64: 1, 288, 256>}, {pipeline_mode = #tpu.pipeline_mode<synchronous>, transform_indices = @transform_1, window_bounds = array<i64: 32, 288>}, {pipeline_mode = #tpu.pipeline_mode<synchronous>, transform_indices = @transform_2, window_bounds = array<i64: 32, 1>}, {transform_indices = @transform_3, window_bounds = array<i64: 1, 32, 256>}]} {
    %c0 = arith.constant 0 : index
    %c0_0 = arith.constant 0 : index
    %c0_1 = arith.constant 0 : index
    %0 = vector.load %arg2[%c0, %c0_0, %c0_1] : memref<1x288x256xf32, #tpu.memory_space<vmem>>, vector<1x288x256xf32>
    %1 = vector.shape_cast %0 : vector<1x288x256xf32> to vector<288x256xf32>
    %c0_2 = arith.constant 0 : index
    %c0_3 = arith.constant 0 : index
    %2 = vector.load %arg3[%c0_2, %c0_3] : memref<32x288xf32, #tpu.memory_space<vmem>>, vector<32x288xf32>
    %cst = arith.constant dense<0.000000e+00> : vector<32x256xf32>
    %3 = tpu.matmul %2, %1, %cst {dimension_numbers = #tpu.dot_dimension_numbers<[1], [0], [0], [1], [0, 0, 1, 1], [], []>} : vector<32x288xf32>, vector<288x256xf32>, vector<32x256xf32> -> vector<32x256xf32>
    %c0_4 = arith.constant 0 : index
    %c0_5 = arith.constant 0 : index
    %4 = vector.load %arg4[%c0_4, %c0_5] : memref<32x1xf32, #tpu.memory_space<vmem>>, vector<32x1xf32>
    %5 = vector.broadcast %4 : vector<32x1xf32> to vector<32x256xf32>
    %6 = arith.addf %3, %5 : vector<32x256xf32>
    %c0_6 = arith.constant 0 : index
    %c0_7 = arith.constant 0 : index
    %c0_8 = arith.constant 0 : index
    %7 = vector.load %arg5[%c0_6, %c0_7, %c0_8] : memref<1x32x256xf32, #tpu.memory_space<vmem>>, vector<1x32x256xf32>
    %8 = vector.shape_cast %7 : vector<1x32x256xf32> to vector<32x256xf32>
    %9 = vector.shape_cast %6 : vector<32x256xf32> to vector<1x32x256xf32>
    tpu.vector_store %arg5[%c0_6, %c0_7, %c0_8], %9 {strides = array<i32>} : memref<1x32x256xf32, #tpu.memory_space<vmem>>, vector<1x32x256xf32>,
    return
  }
  func.func @transform_0(%arg0: i32, %arg1: i32) -> (i32, i32, i32) {
    %c0_i32 = arith.constant 0 : i32
    %c0_i32_0 = arith.constant 0 : i32
    return %arg0, %c0_i32, %arg1 : i32, i32, i32
  }
  func.func @transform_1(%arg0: i32, %arg1: i32) -> (i32, i32) {
    %c0_i32 = arith.constant 0 : i32
    %c0_i32_0 = arith.constant 0 : i32
    %c0_i32_1 = arith.constant 0 : i32
    return %c0_i32, %c0_i32_0 : i32, i32
  }
  func.func @transform_2(%arg0: i32, %arg1: i32) -> (i32, i32) {
    %c0_i32 = arith.constant 0 : i32
    %c0_i32_0 = arith.constant 0 : i32
    %c0_i32_1 = arith.constant 0 : i32
    return %c0_i32, %c0_i32_0 : i32, i32
  }
  func.func @transform_3(%arg0: i32, %arg1: i32) -> (i32, i32, i32) {
    %c0_i32 = arith.constant 0 : i32
    %c0_i32_0 = arith.constant 0 : i32
    return %arg0, %c0_i32, %arg1 : i32, i32, i32
  }
}

module attributes {stable_mosaic.version = 11 : i64} {
  func.func @_pw_kernel(%arg0: i32, %arg1: i32, %arg2: memref<1x288x256xf32, #tpu.memory_space<vmem>>, %arg3: memref<32x288xf32, #tpu.memory_space<vmem>>, %arg4: memref<32x1xf32, #tpu.memory_space<vmem>>, %arg5: memref<1x32x256xf32, #tpu.memory_space<vmem>>) attributes {dimension_semantics = [#tpu.dimension_semantics<parallel>, #tpu.dimension_semantics<parallel>], iteration_bounds = array<i64: 2, 1>, scalar_prefetch = 0 : i64, scratch_operands = 0 : i64, tpu.core_type = #tpu.core_type<tc>, window_params = [{transform_indices = @transform_0, window_bounds = array<i64: 1, 288, 256>}, {pipeline_mode = #tpu.pipeline_mode<synchronous>, transform_indices = @transform_1, window_bounds = array<i64: 32, 288>}, {pipeline_mode = #tpu.pipeline_mode<synchronous>, transform_indices = @transform_2, window_bounds = array<i64: 32, 1>}, {transform_indices = @transform_3, window_bounds = array<i64: 1, 32, 256>}]} {
    %c0 = arith.constant 0 : index
    %c0_0 = arith.constant 0 : index
    %c0_1 = arith.constant 0 : index
    %0 = vector.load %arg2[%c0, %c0_0, %c0_1] : memref<1x288x256xf32, #tpu.memory_space<vmem>>, vector<1x288x256xf32>
    %1 = vector.shape_cast %0 : vector<1x288x256xf32> to vector<288x256xf32>
    %c0_2 = arith.constant 0 : index
    %c0_3 = arith.constant 0 : index
    %2 = vector.load %arg3[%c0_2, %c0_3] : memref<32x288xf32, #tpu.memory_space<vmem>>, vector<32x288xf32>
    %cst = arith.constant dense<0.000000e+00> : vector<32x256xf32>
    %3 = tpu.matmul %2, %1, %cst {dimension_numbers = #tpu.dot_dimension_numbers<[1], [0], [0], [1], [0, 0, 1, 1], [], []>} : vector<32x288xf32>, vector<288x256xf32>, vector<32x256xf32> -> vector<32x256xf32>
    %c0_4 = arith.constant 0 : index
    %c0_5 = arith.constant 0 : index
    %4 = vector.load %arg4[%c0_4, %c0_5] : memref<32x1xf32, #tpu.memory_space<vmem>>, vector<32x1xf32>
    %5 = vector.broadcast %4 : vector<32x1xf32> to vector<32x256xf32>
    %6 = arith.addf %3, %5 : vector<32x256xf32>
    %cst_6 = arith.constant 0.000000e+00 : f32
    %7 = vector.broadcast %cst_6 : f32 to vector<32x256xf32>
    %8 = arith.maximumf %6, %7 : vector<32x256xf32>
    %c0_7 = arith.constant 0 : index
    %c0_8 = arith.constant 0 : index
    %c0_9 = arith.constant 0 : index
    %9 = vector.load %arg5[%c0_7, %c0_8, %c0_9] : memref<1x32x256xf32, #tpu.memory_space<vmem>>, vector<1x32x256xf32>
    %10 = vector.shape_cast %9 : vector<1x32x256xf32> to vector<32x256xf32>
    %11 = vector.shape_cast %8 : vector<32x256xf32> to vector<1x32x256xf32>
    tpu.vector_store %arg5[%c0_7, %c0_8, %c0_9], %11 {strides = array<i32>} : memref<1x32x256xf32, #tpu.memory_space<vmem>>, vector<1x32x256xf32>,
    return
  }
  func.func @transform_0(%arg0: i32, %arg1: i32) -> (i32, i32, i32) {
    %c0_i32 = arith.constant 0 : i32
    %c0_i32_0 = arith.constant 0 : i32
    return %arg0, %c0_i32, %arg1 : i32, i32, i32
  }
  func.func @transform_1(%arg0: i32, %arg1: i32) -> (i32, i32) {
    %c0_i32 = arith.constant 0 : i32
    %c0_i32_0 = arith.constant 0 : i32
    %c0_i32_1 = arith.constant 0 : i32
    return %c0_i32, %c0_i32_0 : i32, i32
  }
  func.func @transform_2(%arg0: i32, %arg1: i32) -> (i32, i32) {
    %c0_i32 = arith.constant 0 : i32
    %c0_i32_0 = arith.constant 0 : i32
    %c0_i32_1 = arith.constant 0 : i32
    return %c0_i32, %c0_i32_0 : i32, i32
  }
  func.func @transform_3(%arg0: i32, %arg1: i32) -> (i32, i32, i32) {
    %c0_i32 = arith.constant 0 : i32
    %c0_i32_0 = arith.constant 0 : i32
    return %arg0, %c0_i32, %arg1 : i32, i32, i32
  }
}

module attributes {stable_mosaic.version = 11 : i64} {
  func.func @_pw_kernel(%arg0: i32, %arg1: i32, %arg2: memref<1x32x256xf32, #tpu.memory_space<vmem>>, %arg3: memref<32x32xf32, #tpu.memory_space<vmem>>, %arg4: memref<32x1xf32, #tpu.memory_space<vmem>>, %arg5: memref<1x32x256xf32, #tpu.memory_space<vmem>>) attributes {dimension_semantics = [#tpu.dimension_semantics<parallel>, #tpu.dimension_semantics<parallel>], iteration_bounds = array<i64: 2, 1>, scalar_prefetch = 0 : i64, scratch_operands = 0 : i64, tpu.core_type = #tpu.core_type<tc>, window_params = [{transform_indices = @transform_0, window_bounds = array<i64: 1, 32, 256>}, {pipeline_mode = #tpu.pipeline_mode<synchronous>, transform_indices = @transform_1, window_bounds = array<i64: 32, 32>}, {pipeline_mode = #tpu.pipeline_mode<synchronous>, transform_indices = @transform_2, window_bounds = array<i64: 32, 1>}, {transform_indices = @transform_3, window_bounds = array<i64: 1, 32, 256>}]} {
    %c0 = arith.constant 0 : index
    %c0_0 = arith.constant 0 : index
    %c0_1 = arith.constant 0 : index
    %0 = vector.load %arg2[%c0, %c0_0, %c0_1] : memref<1x32x256xf32, #tpu.memory_space<vmem>>, vector<1x32x256xf32>
    %1 = vector.shape_cast %0 : vector<1x32x256xf32> to vector<32x256xf32>
    %c0_2 = arith.constant 0 : index
    %c0_3 = arith.constant 0 : index
    %2 = vector.load %arg3[%c0_2, %c0_3] : memref<32x32xf32, #tpu.memory_space<vmem>>, vector<32x32xf32>
    %cst = arith.constant dense<0.000000e+00> : vector<32x256xf32>
    %3 = tpu.matmul %2, %1, %cst {dimension_numbers = #tpu.dot_dimension_numbers<[1], [0], [0], [1], [0, 0, 1, 1], [], []>} : vector<32x32xf32>, vector<32x256xf32>, vector<32x256xf32> -> vector<32x256xf32>
    %c0_4 = arith.constant 0 : index
    %c0_5 = arith.constant 0 : index
    %4 = vector.load %arg4[%c0_4, %c0_5] : memref<32x1xf32, #tpu.memory_space<vmem>>, vector<32x1xf32>
    %5 = vector.broadcast %4 : vector<32x1xf32> to vector<32x256xf32>
    %6 = arith.addf %3, %5 : vector<32x256xf32>
    %c0_6 = arith.constant 0 : index
    %c0_7 = arith.constant 0 : index
    %c0_8 = arith.constant 0 : index
    %7 = vector.load %arg5[%c0_6, %c0_7, %c0_8] : memref<1x32x256xf32, #tpu.memory_space<vmem>>, vector<1x32x256xf32>
    %8 = vector.shape_cast %7 : vector<1x32x256xf32> to vector<32x256xf32>
    %9 = vector.shape_cast %6 : vector<32x256xf32> to vector<1x32x256xf32>
    tpu.vector_store %arg5[%c0_6, %c0_7, %c0_8], %9 {strides = array<i32>} : memref<1x32x256xf32, #tpu.memory_space<vmem>>, vector<1x32x256xf32>,
    return
  }
  func.func @transform_0(%arg0: i32, %arg1: i32) -> (i32, i32, i32) {
    %c0_i32 = arith.constant 0 : i32
    %c0_i32_0 = arith.constant 0 : i32
    return %arg0, %c0_i32, %arg1 : i32, i32, i32
  }
  func.func @transform_1(%arg0: i32, %arg1: i32) -> (i32, i32) {
    %c0_i32 = arith.constant 0 : i32
    %c0_i32_0 = arith.constant 0 : i32
    %c0_i32_1 = arith.constant 0 : i32
    return %c0_i32, %c0_i32_0 : i32, i32
  }
  func.func @transform_2(%arg0: i32, %arg1: i32) -> (i32, i32) {
    %c0_i32 = arith.constant 0 : i32
    %c0_i32_0 = arith.constant 0 : i32
    %c0_i32_1 = arith.constant 0 : i32
    return %c0_i32, %c0_i32_0 : i32, i32
  }
  func.func @transform_3(%arg0: i32, %arg1: i32) -> (i32, i32, i32) {
    %c0_i32 = arith.constant 0 : i32
    %c0_i32_0 = arith.constant 0 : i32
    return %arg0, %c0_i32, %arg1 : i32, i32, i32
  }
}

module attributes {stable_mosaic.version = 11 : i64} {
  func.func @_pw_kernel(%arg0: i32, %arg1: i32, %arg2: memref<1x32x256xf32, #tpu.memory_space<vmem>>, %arg3: memref<2x32xf32, #tpu.memory_space<vmem>>, %arg4: memref<2x1xf32, #tpu.memory_space<vmem>>, %arg5: memref<1x2x256xf32, #tpu.memory_space<vmem>>) attributes {dimension_semantics = [#tpu.dimension_semantics<parallel>, #tpu.dimension_semantics<parallel>], iteration_bounds = array<i64: 2, 1>, scalar_prefetch = 0 : i64, scratch_operands = 0 : i64, tpu.core_type = #tpu.core_type<tc>, window_params = [{transform_indices = @transform_0, window_bounds = array<i64: 1, 32, 256>}, {pipeline_mode = #tpu.pipeline_mode<synchronous>, transform_indices = @transform_1, window_bounds = array<i64: 2, 32>}, {pipeline_mode = #tpu.pipeline_mode<synchronous>, transform_indices = @transform_2, window_bounds = array<i64: 2, 1>}, {transform_indices = @transform_3, window_bounds = array<i64: 1, 2, 256>}]} {
    %c0 = arith.constant 0 : index
    %c0_0 = arith.constant 0 : index
    %c0_1 = arith.constant 0 : index
    %0 = vector.load %arg2[%c0, %c0_0, %c0_1] : memref<1x32x256xf32, #tpu.memory_space<vmem>>, vector<1x32x256xf32>
    %1 = vector.shape_cast %0 : vector<1x32x256xf32> to vector<32x256xf32>
    %c0_2 = arith.constant 0 : index
    %c0_3 = arith.constant 0 : index
    %2 = vector.load %arg3[%c0_2, %c0_3] : memref<2x32xf32, #tpu.memory_space<vmem>>, vector<2x32xf32>
    %cst = arith.constant dense<0.000000e+00> : vector<2x256xf32>
    %3 = tpu.matmul %2, %1, %cst {dimension_numbers = #tpu.dot_dimension_numbers<[1], [0], [0], [1], [0, 0, 1, 1], [], []>} : vector<2x32xf32>, vector<32x256xf32>, vector<2x256xf32> -> vector<2x256xf32>
    %c0_4 = arith.constant 0 : index
    %c0_5 = arith.constant 0 : index
    %4 = vector.load %arg4[%c0_4, %c0_5] : memref<2x1xf32, #tpu.memory_space<vmem>>, vector<2x1xf32>
    %5 = vector.broadcast %4 : vector<2x1xf32> to vector<2x256xf32>
    %6 = arith.addf %3, %5 : vector<2x256xf32>
    %cst_6 = arith.constant 0.000000e+00 : f32
    %7 = vector.broadcast %cst_6 : f32 to vector<2x256xf32>
    %8 = arith.maximumf %6, %7 : vector<2x256xf32>
    %c0_7 = arith.constant 0 : index
    %c0_8 = arith.constant 0 : index
    %c0_9 = arith.constant 0 : index
    %9 = vector.load %arg5[%c0_7, %c0_8, %c0_9] : memref<1x2x256xf32, #tpu.memory_space<vmem>>, vector<1x2x256xf32>
    %10 = vector.shape_cast %9 : vector<1x2x256xf32> to vector<2x256xf32>
    %11 = vector.shape_cast %8 : vector<2x256xf32> to vector<1x2x256xf32>
    tpu.vector_store %arg5[%c0_7, %c0_8, %c0_9], %11 {strides = array<i32>} : memref<1x2x256xf32, #tpu.memory_space<vmem>>, vector<1x2x256xf32>,
    return
  }
  func.func @transform_0(%arg0: i32, %arg1: i32) -> (i32, i32, i32) {
    %c0_i32 = arith.constant 0 : i32
    %c0_i32_0 = arith.constant 0 : i32
    return %arg0, %c0_i32, %arg1 : i32, i32, i32
  }
  func.func @transform_1(%arg0: i32, %arg1: i32) -> (i32, i32) {
    %c0_i32 = arith.constant 0 : i32
    %c0_i32_0 = arith.constant 0 : i32
    %c0_i32_1 = arith.constant 0 : i32
    return %c0_i32, %c0_i32_0 : i32, i32
  }
  func.func @transform_2(%arg0: i32, %arg1: i32) -> (i32, i32) {
    %c0_i32 = arith.constant 0 : i32
    %c0_i32_0 = arith.constant 0 : i32
    %c0_i32_1 = arith.constant 0 : i32
    return %c0_i32, %c0_i32_0 : i32, i32
  }
  func.func @transform_3(%arg0: i32, %arg1: i32) -> (i32, i32, i32) {
    %c0_i32 = arith.constant 0 : i32
    %c0_i32_0 = arith.constant 0 : i32
    return %arg0, %c0_i32, %arg1 : i32, i32, i32
  }
}

module attributes {stable_mosaic.version = 11 : i64} {
  func.func @_pw_kernel(%arg0: i32, %arg1: i32, %arg2: memref<1x2x256xf32, #tpu.memory_space<vmem>>, %arg3: memref<32x2xf32, #tpu.memory_space<vmem>>, %arg4: memref<32x1xf32, #tpu.memory_space<vmem>>, %arg5: memref<1x32x256xf32, #tpu.memory_space<vmem>>) attributes {dimension_semantics = [#tpu.dimension_semantics<parallel>, #tpu.dimension_semantics<parallel>], iteration_bounds = array<i64: 2, 1>, scalar_prefetch = 0 : i64, scratch_operands = 0 : i64, tpu.core_type = #tpu.core_type<tc>, window_params = [{transform_indices = @transform_0, window_bounds = array<i64: 1, 2, 256>}, {pipeline_mode = #tpu.pipeline_mode<synchronous>, transform_indices = @transform_1, window_bounds = array<i64: 32, 2>}, {pipeline_mode = #tpu.pipeline_mode<synchronous>, transform_indices = @transform_2, window_bounds = array<i64: 32, 1>}, {transform_indices = @transform_3, window_bounds = array<i64: 1, 32, 256>}]} {
    %c0 = arith.constant 0 : index
    %c0_0 = arith.constant 0 : index
    %c0_1 = arith.constant 0 : index
    %0 = vector.load %arg2[%c0, %c0_0, %c0_1] : memref<1x2x256xf32, #tpu.memory_space<vmem>>, vector<1x2x256xf32>
    %1 = vector.shape_cast %0 : vector<1x2x256xf32> to vector<2x256xf32>
    %c0_2 = arith.constant 0 : index
    %c0_3 = arith.constant 0 : index
    %2 = vector.load %arg3[%c0_2, %c0_3] : memref<32x2xf32, #tpu.memory_space<vmem>>, vector<32x2xf32>
    %cst = arith.constant dense<0.000000e+00> : vector<32x256xf32>
    %3 = tpu.matmul %2, %1, %cst {dimension_numbers = #tpu.dot_dimension_numbers<[1], [0], [0], [1], [0, 0, 1, 1], [], []>} : vector<32x2xf32>, vector<2x256xf32>, vector<32x256xf32> -> vector<32x256xf32>
    %c0_4 = arith.constant 0 : index
    %c0_5 = arith.constant 0 : index
    %4 = vector.load %arg4[%c0_4, %c0_5] : memref<32x1xf32, #tpu.memory_space<vmem>>, vector<32x1xf32>
    %5 = vector.broadcast %4 : vector<32x1xf32> to vector<32x256xf32>
    %6 = arith.addf %3, %5 : vector<32x256xf32>
    %cst_6 = arith.constant 0.000000e+00 : f32
    %7 = vector.broadcast %cst_6 : f32 to vector<32x256xf32>
    %8 = arith.subf %7, %6 : vector<32x256xf32>
    %9 = math.exp %8 : vector<32x256xf32>
    %cst_7 = arith.constant 1.000000e+00 : f32
    %10 = vector.broadcast %cst_7 : f32 to vector<32x256xf32>
    %11 = arith.addf %10, %9 : vector<32x256xf32>
    %cst_8 = arith.constant 1.000000e+00 : f32
    %12 = vector.broadcast %cst_8 : f32 to vector<32x256xf32>
    %13 = arith.divf %12, %11 : vector<32x256xf32>
    %c0_9 = arith.constant 0 : index
    %c0_10 = arith.constant 0 : index
    %c0_11 = arith.constant 0 : index
    %14 = vector.load %arg5[%c0_9, %c0_10, %c0_11] : memref<1x32x256xf32, #tpu.memory_space<vmem>>, vector<1x32x256xf32>
    %15 = vector.shape_cast %14 : vector<1x32x256xf32> to vector<32x256xf32>
    %16 = vector.shape_cast %13 : vector<32x256xf32> to vector<1x32x256xf32>
    tpu.vector_store %arg5[%c0_9, %c0_10, %c0_11], %16 {strides = array<i32>} : memref<1x32x256xf32, #tpu.memory_space<vmem>>, vector<1x32x256xf32>,
    return
  }
  func.func @transform_0(%arg0: i32, %arg1: i32) -> (i32, i32, i32) {
    %c0_i32 = arith.constant 0 : i32
    %c0_i32_0 = arith.constant 0 : i32
    return %arg0, %c0_i32, %arg1 : i32, i32, i32
  }
  func.func @transform_1(%arg0: i32, %arg1: i32) -> (i32, i32) {
    %c0_i32 = arith.constant 0 : i32
    %c0_i32_0 = arith.constant 0 : i32
    %c0_i32_1 = arith.constant 0 : i32
    return %c0_i32, %c0_i32_0 : i32, i32
  }
  func.func @transform_2(%arg0: i32, %arg1: i32) -> (i32, i32) {
    %c0_i32 = arith.constant 0 : i32
    %c0_i32_0 = arith.constant 0 : i32
    %c0_i32_1 = arith.constant 0 : i32
    return %c0_i32, %c0_i32_0 : i32, i32
  }
  func.func @transform_3(%arg0: i32, %arg1: i32) -> (i32, i32, i32) {
    %c0_i32 = arith.constant 0 : i32
    %c0_i32_0 = arith.constant 0 : i32
    return %arg0, %c0_i32, %arg1 : i32, i32, i32
  }
}

module attributes {stable_mosaic.version = 11 : i64} {
  func.func @_cscale_kernel(%arg0: i32, %arg1: i32, %arg2: memref<1x32x256xf32, #tpu.memory_space<vmem>>, %arg3: memref<1x32x256xf32, #tpu.memory_space<vmem>>, %arg4: memref<1x32x256xf32, #tpu.memory_space<vmem>>, %arg5: memref<1x32x256xf32, #tpu.memory_space<vmem>>, %arg6: memref<1x32x256xf32, #tpu.memory_space<vmem>>) attributes {dimension_semantics = [#tpu.dimension_semantics<parallel>, #tpu.dimension_semantics<parallel>], iteration_bounds = array<i64: 2, 1>, scalar_prefetch = 0 : i64, scratch_operands = 0 : i64, tpu.core_type = #tpu.core_type<tc>, window_params = [{transform_indices = @transform_0, window_bounds = array<i64: 1, 32, 256>}, {transform_indices = @transform_1, window_bounds = array<i64: 1, 32, 256>}, {transform_indices = @transform_2, window_bounds = array<i64: 1, 32, 256>}, {transform_indices = @transform_3, window_bounds = array<i64: 1, 32, 256>}, {transform_indices = @transform_4, window_bounds = array<i64: 1, 32, 256>}]} {
    %c0 = arith.constant 0 : index
    %c0_0 = arith.constant 0 : index
    %c0_1 = arith.constant 0 : index
    %0 = vector.load %arg2[%c0, %c0_0, %c0_1] : memref<1x32x256xf32, #tpu.memory_space<vmem>>, vector<1x32x256xf32>
    %1 = vector.shape_cast %0 : vector<1x32x256xf32> to vector<32x256xf32>
    %c0_2 = arith.constant 0 : index
    %c0_3 = arith.constant 0 : index
    %c0_4 = arith.constant 0 : index
    %2 = vector.load %arg3[%c0_2, %c0_3, %c0_4] : memref<1x32x256xf32, #tpu.memory_space<vmem>>, vector<1x32x256xf32>
    %3 = vector.shape_cast %2 : vector<1x32x256xf32> to vector<32x256xf32>
    %4 = arith.mulf %1, %3 : vector<32x256xf32>
    %c0_5 = arith.constant 0 : index
    %c0_6 = arith.constant 0 : index
    %c0_7 = arith.constant 0 : index
    %5 = vector.load %arg5[%c0_5, %c0_6, %c0_7] : memref<1x32x256xf32, #tpu.memory_space<vmem>>, vector<1x32x256xf32>
    %6 = vector.shape_cast %5 : vector<1x32x256xf32> to vector<32x256xf32>
    %7 = vector.shape_cast %4 : vector<32x256xf32> to vector<1x32x256xf32>
    tpu.vector_store %arg5[%c0_5, %c0_6, %c0_7], %7 {strides = array<i32>} : memref<1x32x256xf32, #tpu.memory_space<vmem>>, vector<1x32x256xf32>,
    %c0_8 = arith.constant 0 : index
    %c0_9 = arith.constant 0 : index
    %c0_10 = arith.constant 0 : index
    %8 = vector.load %arg4[%c0_8, %c0_9, %c0_10] : memref<1x32x256xf32, #tpu.memory_space<vmem>>, vector<1x32x256xf32>
    %9 = vector.shape_cast %8 : vector<1x32x256xf32> to vector<32x256xf32>
    %10 = arith.mulf %1, %9 : vector<32x256xf32>
    %c0_11 = arith.constant 0 : index
    %c0_12 = arith.constant 0 : index
    %c0_13 = arith.constant 0 : index
    %11 = vector.load %arg6[%c0_11, %c0_12, %c0_13] : memref<1x32x256xf32, #tpu.memory_space<vmem>>, vector<1x32x256xf32>
    %12 = vector.shape_cast %11 : vector<1x32x256xf32> to vector<32x256xf32>
    %13 = vector.shape_cast %10 : vector<32x256xf32> to vector<1x32x256xf32>
    tpu.vector_store %arg6[%c0_11, %c0_12, %c0_13], %13 {strides = array<i32>} : memref<1x32x256xf32, #tpu.memory_space<vmem>>, vector<1x32x256xf32>,
    return
  }
  func.func @transform_0(%arg0: i32, %arg1: i32) -> (i32, i32, i32) {
    %c0_i32 = arith.constant 0 : i32
    %c0_i32_0 = arith.constant 0 : i32
    return %arg0, %c0_i32, %arg1 : i32, i32, i32
  }
  func.func @transform_1(%arg0: i32, %arg1: i32) -> (i32, i32, i32) {
    %c0_i32 = arith.constant 0 : i32
    %c0_i32_0 = arith.constant 0 : i32
    return %arg0, %c0_i32, %arg1 : i32, i32, i32
  }
  func.func @transform_2(%arg0: i32, %arg1: i32) -> (i32, i32, i32) {
    %c0_i32 = arith.constant 0 : i32
    %c0_i32_0 = arith.constant 0 : i32
    return %arg0, %c0_i32, %arg1 : i32, i32, i32
  }
  func.func @transform_3(%arg0: i32, %arg1: i32) -> (i32, i32, i32) {
    %c0_i32 = arith.constant 0 : i32
    %c0_i32_0 = arith.constant 0 : i32
    return %arg0, %c0_i32, %arg1 : i32, i32, i32
  }
  func.func @transform_4(%arg0: i32, %arg1: i32) -> (i32, i32, i32) {
    %c0_i32 = arith.constant 0 : i32
    %c0_i32_0 = arith.constant 0 : i32
    return %arg0, %c0_i32, %arg1 : i32, i32, i32
  }
}

module attributes {stable_mosaic.version = 11 : i64} {
  func.func @_abs_bn_relu_add_kernel(%arg0: i32, %arg1: i32, %arg2: memref<1x32x256xf32, #tpu.memory_space<vmem>>, %arg3: memref<1x32x256xf32, #tpu.memory_space<vmem>>, %arg4: memref<1x32x1xf32, #tpu.memory_space<vmem>>, %arg5: memref<1x32x1xf32, #tpu.memory_space<vmem>>, %arg6: memref<1x32x256xf32, #tpu.memory_space<vmem>>, %arg7: memref<1x32x256xf32, #tpu.memory_space<vmem>>) attributes {dimension_semantics = [#tpu.dimension_semantics<parallel>, #tpu.dimension_semantics<parallel>], iteration_bounds = array<i64: 2, 1>, scalar_prefetch = 0 : i64, scratch_operands = 0 : i64, tpu.core_type = #tpu.core_type<tc>, window_params = [{transform_indices = @transform_0, window_bounds = array<i64: 1, 32, 256>}, {transform_indices = @transform_1, window_bounds = array<i64: 1, 32, 256>}, {pipeline_mode = #tpu.pipeline_mode<synchronous>, transform_indices = @transform_2, window_bounds = array<i64: 1, 32, 1>}, {pipeline_mode = #tpu.pipeline_mode<synchronous>, transform_indices = @transform_3, window_bounds = array<i64: 1, 32, 1>}, {transform_indices = @transform_4, window_bounds = array<i64: 1, 32, 256>}, {transform_indices = @transform_5, window_bounds = array<i64: 1, 32, 256>}]} {
    %c0 = arith.constant 0 : index
    %c0_0 = arith.constant 0 : index
    %c0_1 = arith.constant 0 : index
    %0 = vector.load %arg2[%c0, %c0_0, %c0_1] : memref<1x32x256xf32, #tpu.memory_space<vmem>>, vector<1x32x256xf32>
    %1 = vector.shape_cast %0 : vector<1x32x256xf32> to vector<32x256xf32>
    %c0_2 = arith.constant 0 : index
    %c0_3 = arith.constant 0 : index
    %c0_4 = arith.constant 0 : index
    %2 = vector.load %arg3[%c0_2, %c0_3, %c0_4] : memref<1x32x256xf32, #tpu.memory_space<vmem>>, vector<1x32x256xf32>
    %3 = vector.shape_cast %2 : vector<1x32x256xf32> to vector<32x256xf32>
    %4 = arith.mulf %1, %1 : vector<32x256xf32>
    %5 = arith.mulf %3, %3 : vector<32x256xf32>
    %6 = arith.addf %4, %5 : vector<32x256xf32>
    %7 = math.sqrt %6 : vector<32x256xf32>
    %c0_5 = arith.constant 0 : index
    %c0_6 = arith.constant 0 : index
    %c0_7 = arith.constant 0 : index
    %8 = vector.load %arg4[%c0_5, %c0_6, %c0_7] : memref<1x32x1xf32, #tpu.memory_space<vmem>>, vector<1x32x1xf32>
    %9 = vector.shape_cast %8 : vector<1x32x1xf32> to vector<32x1xf32>
    %10 = vector.broadcast %9 : vector<32x1xf32> to vector<32x256xf32>
    %11 = arith.mulf %7, %10 : vector<32x256xf32>
    %c0_8 = arith.constant 0 : index
    %c0_9 = arith.constant 0 : index
    %c0_10 = arith.constant 0 : index
    %12 = vector.load %arg5[%c0_8, %c0_9, %c0_10] : memref<1x32x1xf32, #tpu.memory_space<vmem>>, vector<1x32x1xf32>
    %13 = vector.shape_cast %12 : vector<1x32x1xf32> to vector<32x1xf32>
    %14 = vector.broadcast %13 : vector<32x1xf32> to vector<32x256xf32>
    %15 = arith.addf %11, %14 : vector<32x256xf32>
    %cst = arith.constant 0.000000e+00 : f32
    %16 = vector.broadcast %cst : f32 to vector<32x256xf32>
    %17 = arith.maximumf %15, %16 : vector<32x256xf32>
    %c0_11 = arith.constant 0 : index
    %c0_12 = arith.constant 0 : index
    %c0_13 = arith.constant 0 : index
    %18 = vector.load %arg6[%c0_11, %c0_12, %c0_13] : memref<1x32x256xf32, #tpu.memory_space<vmem>>, vector<1x32x256xf32>
    %19 = vector.shape_cast %18 : vector<1x32x256xf32> to vector<32x256xf32>
    %20 = arith.addf %17, %19 : vector<32x256xf32>
    %c0_14 = arith.constant 0 : index
    %c0_15 = arith.constant 0 : index
    %c0_16 = arith.constant 0 : index
    %21 = vector.load %arg7[%c0_14, %c0_15, %c0_16] : memref<1x32x256xf32, #tpu.memory_space<vmem>>, vector<1x32x256xf32>
    %22 = vector.shape_cast %21 : vector<1x32x256xf32> to vector<32x256xf32>
    %23 = vector.shape_cast %20 : vector<32x256xf32> to vector<1x32x256xf32>
    tpu.vector_store %arg7[%c0_14, %c0_15, %c0_16], %23 {strides = array<i32>} : memref<1x32x256xf32, #tpu.memory_space<vmem>>, vector<1x32x256xf32>,
    return
  }
  func.func @transform_0(%arg0: i32, %arg1: i32) -> (i32, i32, i32) {
    %c0_i32 = arith.constant 0 : i32
    %c0_i32_0 = arith.constant 0 : i32
    return %arg0, %c0_i32, %arg1 : i32, i32, i32
  }
  func.func @transform_1(%arg0: i32, %arg1: i32) -> (i32, i32, i32) {
    %c0_i32 = arith.constant 0 : i32
    %c0_i32_0 = arith.constant 0 : i32
    return %arg0, %c0_i32, %arg1 : i32, i32, i32
  }
  func.func @transform_2(%arg0: i32, %arg1: i32) -> (i32, i32, i32) {
    %c0_i32 = arith.constant 0 : i32
    %c0_i32_0 = arith.constant 0 : i32
    %c0_i32_1 = arith.constant 0 : i32
    %c0_i32_2 = arith.constant 0 : i32
    return %c0_i32, %c0_i32_0, %c0_i32_1 : i32, i32, i32
  }
  func.func @transform_3(%arg0: i32, %arg1: i32) -> (i32, i32, i32) {
    %c0_i32 = arith.constant 0 : i32
    %c0_i32_0 = arith.constant 0 : i32
    %c0_i32_1 = arith.constant 0 : i32
    %c0_i32_2 = arith.constant 0 : i32
    return %c0_i32, %c0_i32_0, %c0_i32_1 : i32, i32, i32
  }
  func.func @transform_4(%arg0: i32, %arg1: i32) -> (i32, i32, i32) {
    %c0_i32 = arith.constant 0 : i32
    %c0_i32_0 = arith.constant 0 : i32
    return %arg0, %c0_i32, %arg1 : i32, i32, i32
  }
  func.func @transform_5(%arg0: i32, %arg1: i32) -> (i32, i32, i32) {
    %c0_i32 = arith.constant 0 : i32
    %c0_i32_0 = arith.constant 0 : i32
    return %arg0, %c0_i32, %arg1 : i32, i32, i32
  }
}

module attributes {stable_mosaic.version = 11 : i64} {
  func.func @_reverse_gate_kernel(%arg0: i32, %arg1: i32, %arg2: memref<1x1x256xf32, #tpu.memory_space<vmem>>, %arg3: memref<1x1x256xf32, #tpu.memory_space<vmem>>, %arg4: memref<1x1x256xf32, #tpu.memory_space<vmem>>, %arg5: memref<1x1x256xf32, #tpu.memory_space<vmem>>, %arg6: memref<1x32x256xf32, #tpu.memory_space<vmem>>, %arg7: memref<1x32x256xf32, #tpu.memory_space<vmem>>) attributes {dimension_semantics = [#tpu.dimension_semantics<parallel>, #tpu.dimension_semantics<parallel>], iteration_bounds = array<i64: 2, 1>, scalar_prefetch = 0 : i64, scratch_operands = 0 : i64, tpu.core_type = #tpu.core_type<tc>, window_params = [{transform_indices = @transform_0, window_bounds = array<i64: 1, 1, 256>}, {transform_indices = @transform_1, window_bounds = array<i64: 1, 1, 256>}, {transform_indices = @transform_2, window_bounds = array<i64: 1, 1, 256>}, {transform_indices = @transform_3, window_bounds = array<i64: 1, 1, 256>}, {transform_indices = @transform_4, window_bounds = array<i64: 1, 32, 256>}, {transform_indices = @transform_5, window_bounds = array<i64: 1, 32, 256>}]} {
    %c0 = arith.constant 0 : index
    %c0_0 = arith.constant 0 : index
    %c0_1 = arith.constant 0 : index
    %0 = vector.load %arg2[%c0, %c0_0, %c0_1] : memref<1x1x256xf32, #tpu.memory_space<vmem>>, vector<1x1x256xf32>
    %1 = vector.shape_cast %0 : vector<1x1x256xf32> to vector<1x256xf32>
    %cst = arith.constant 0.000000e+00 : f32
    %2 = vector.broadcast %cst : f32 to vector<1x256xf32>
    %3 = arith.subf %2, %1 : vector<1x256xf32>
    %4 = math.exp %3 : vector<1x256xf32>
    %cst_2 = arith.constant 1.000000e+00 : f32
    %5 = vector.broadcast %cst_2 : f32 to vector<1x256xf32>
    %6 = arith.addf %5, %4 : vector<1x256xf32>
    %cst_3 = arith.constant 1.000000e+00 : f32
    %7 = vector.broadcast %cst_3 : f32 to vector<1x256xf32>
    %8 = arith.divf %7, %6 : vector<1x256xf32>
    %cst_4 = arith.constant 4.000000e+00 : f32
    %9 = vector.broadcast %cst_4 : f32 to vector<1x256xf32>
    %10 = arith.subf %9, %8 : vector<1x256xf32>
    %c0_5 = arith.constant 0 : index
    %c0_6 = arith.constant 0 : index
    %c0_7 = arith.constant 0 : index
    %11 = vector.load %arg3[%c0_5, %c0_6, %c0_7] : memref<1x1x256xf32, #tpu.memory_space<vmem>>, vector<1x1x256xf32>
    %12 = vector.shape_cast %11 : vector<1x1x256xf32> to vector<1x256xf32>
    %cst_8 = arith.constant 0.000000e+00 : f32
    %13 = vector.broadcast %cst_8 : f32 to vector<1x256xf32>
    %14 = arith.subf %13, %12 : vector<1x256xf32>
    %15 = math.exp %14 : vector<1x256xf32>
    %cst_9 = arith.constant 1.000000e+00 : f32
    %16 = vector.broadcast %cst_9 : f32 to vector<1x256xf32>
    %17 = arith.addf %16, %15 : vector<1x256xf32>
    %cst_10 = arith.constant 1.000000e+00 : f32
    %18 = vector.broadcast %cst_10 : f32 to vector<1x256xf32>
    %19 = arith.divf %18, %17 : vector<1x256xf32>
    %20 = arith.subf %10, %19 : vector<1x256xf32>
    %c0_11 = arith.constant 0 : index
    %c0_12 = arith.constant 0 : index
    %c0_13 = arith.constant 0 : index
    %21 = vector.load %arg4[%c0_11, %c0_12, %c0_13] : memref<1x1x256xf32, #tpu.memory_space<vmem>>, vector<1x1x256xf32>
    %22 = vector.shape_cast %21 : vector<1x1x256xf32> to vector<1x256xf32>
    %cst_14 = arith.constant 0.000000e+00 : f32
    %23 = vector.broadcast %cst_14 : f32 to vector<1x256xf32>
    %24 = arith.subf %23, %22 : vector<1x256xf32>
    %25 = math.exp %24 : vector<1x256xf32>
    %cst_15 = arith.constant 1.000000e+00 : f32
    %26 = vector.broadcast %cst_15 : f32 to vector<1x256xf32>
    %27 = arith.addf %26, %25 : vector<1x256xf32>
    %cst_16 = arith.constant 1.000000e+00 : f32
    %28 = vector.broadcast %cst_16 : f32 to vector<1x256xf32>
    %29 = arith.divf %28, %27 : vector<1x256xf32>
    %30 = arith.subf %20, %29 : vector<1x256xf32>
    %c0_17 = arith.constant 0 : index
    %c0_18 = arith.constant 0 : index
    %c0_19 = arith.constant 0 : index
    %31 = vector.load %arg5[%c0_17, %c0_18, %c0_19] : memref<1x1x256xf32, #tpu.memory_space<vmem>>, vector<1x1x256xf32>
    %32 = vector.shape_cast %31 : vector<1x1x256xf32> to vector<1x256xf32>
    %cst_20 = arith.constant 0.000000e+00 : f32
    %33 = vector.broadcast %cst_20 : f32 to vector<1x256xf32>
    %34 = arith.subf %33, %32 : vector<1x256xf32>
    %35 = math.exp %34 : vector<1x256xf32>
    %cst_21 = arith.constant 1.000000e+00 : f32
    %36 = vector.broadcast %cst_21 : f32 to vector<1x256xf32>
    %37 = arith.addf %36, %35 : vector<1x256xf32>
    %cst_22 = arith.constant 1.000000e+00 : f32
    %38 = vector.broadcast %cst_22 : f32 to vector<1x256xf32>
    %39 = arith.divf %38, %37 : vector<1x256xf32>
    %40 = arith.subf %30, %39 : vector<1x256xf32>
    %c0_23 = arith.constant 0 : index
    %c0_24 = arith.constant 0 : index
    %c0_25 = arith.constant 0 : index
    %41 = vector.load %arg6[%c0_23, %c0_24, %c0_25] : memref<1x32x256xf32, #tpu.memory_space<vmem>>, vector<1x32x256xf32>
    %42 = vector.shape_cast %41 : vector<1x32x256xf32> to vector<32x256xf32>
    %43 = vector.broadcast %40 : vector<1x256xf32> to vector<32x256xf32>
    %44 = arith.mulf %43, %42 : vector<32x256xf32>
    %c0_26 = arith.constant 0 : index
    %c0_27 = arith.constant 0 : index
    %c0_28 = arith.constant 0 : index
    %45 = vector.load %arg7[%c0_26, %c0_27, %c0_28] : memref<1x32x256xf32, #tpu.memory_space<vmem>>, vector<1x32x256xf32>
    %46 = vector.shape_cast %45 : vector<1x32x256xf32> to vector<32x256xf32>
    %47 = vector.shape_cast %44 : vector<32x256xf32> to vector<1x32x256xf32>
    tpu.vector_store %arg7[%c0_26, %c0_27, %c0_28], %47 {strides = array<i32>} : memref<1x32x256xf32, #tpu.memory_space<vmem>>, vector<1x32x256xf32>,
    return
  }
  func.func @transform_0(%arg0: i32, %arg1: i32) -> (i32, i32, i32) {
    %c0_i32 = arith.constant 0 : i32
    %c0_i32_0 = arith.constant 0 : i32
    return %arg0, %c0_i32, %arg1 : i32, i32, i32
  }
  func.func @transform_1(%arg0: i32, %arg1: i32) -> (i32, i32, i32) {
    %c0_i32 = arith.constant 0 : i32
    %c0_i32_0 = arith.constant 0 : i32
    return %arg0, %c0_i32, %arg1 : i32, i32, i32
  }
  func.func @transform_2(%arg0: i32, %arg1: i32) -> (i32, i32, i32) {
    %c0_i32 = arith.constant 0 : i32
    %c0_i32_0 = arith.constant 0 : i32
    return %arg0, %c0_i32, %arg1 : i32, i32, i32
  }
  func.func @transform_3(%arg0: i32, %arg1: i32) -> (i32, i32, i32) {
    %c0_i32 = arith.constant 0 : i32
    %c0_i32_0 = arith.constant 0 : i32
    return %arg0, %c0_i32, %arg1 : i32, i32, i32
  }
  func.func @transform_4(%arg0: i32, %arg1: i32) -> (i32, i32, i32) {
    %c0_i32 = arith.constant 0 : i32
    %c0_i32_0 = arith.constant 0 : i32
    return %arg0, %c0_i32, %arg1 : i32, i32, i32
  }
  func.func @transform_5(%arg0: i32, %arg1: i32) -> (i32, i32, i32) {
    %c0_i32 = arith.constant 0 : i32
    %c0_i32_0 = arith.constant 0 : i32
    return %arg0, %c0_i32, %arg1 : i32, i32, i32
  }
}

module attributes {stable_mosaic.version = 11 : i64} {
  func.func @_pw_kernel(%arg0: i32, %arg1: i32, %arg2: memref<1x576x256xf32, #tpu.memory_space<vmem>>, %arg3: memref<16x576xf32, #tpu.memory_space<vmem>>, %arg4: memref<16x1xf32, #tpu.memory_space<vmem>>, %arg5: memref<1x16x256xf32, #tpu.memory_space<vmem>>) attributes {dimension_semantics = [#tpu.dimension_semantics<parallel>, #tpu.dimension_semantics<parallel>], iteration_bounds = array<i64: 2, 1>, scalar_prefetch = 0 : i64, scratch_operands = 0 : i64, tpu.core_type = #tpu.core_type<tc>, window_params = [{transform_indices = @transform_0, window_bounds = array<i64: 1, 576, 256>}, {pipeline_mode = #tpu.pipeline_mode<synchronous>, transform_indices = @transform_1, window_bounds = array<i64: 16, 576>}, {pipeline_mode = #tpu.pipeline_mode<synchronous>, transform_indices = @transform_2, window_bounds = array<i64: 16, 1>}, {transform_indices = @transform_3, window_bounds = array<i64: 1, 16, 256>}]} {
    %c0 = arith.constant 0 : index
    %c0_0 = arith.constant 0 : index
    %c0_1 = arith.constant 0 : index
    %0 = vector.load %arg2[%c0, %c0_0, %c0_1] : memref<1x576x256xf32, #tpu.memory_space<vmem>>, vector<1x576x256xf32>
    %1 = vector.shape_cast %0 : vector<1x576x256xf32> to vector<576x256xf32>
    %c0_2 = arith.constant 0 : index
    %c0_3 = arith.constant 0 : index
    %2 = vector.load %arg3[%c0_2, %c0_3] : memref<16x576xf32, #tpu.memory_space<vmem>>, vector<16x576xf32>
    %cst = arith.constant dense<0.000000e+00> : vector<16x256xf32>
    %3 = tpu.matmul %2, %1, %cst {dimension_numbers = #tpu.dot_dimension_numbers<[1], [0], [0], [1], [0, 0, 1, 1], [], []>} : vector<16x576xf32>, vector<576x256xf32>, vector<16x256xf32> -> vector<16x256xf32>
    %c0_4 = arith.constant 0 : index
    %c0_5 = arith.constant 0 : index
    %4 = vector.load %arg4[%c0_4, %c0_5] : memref<16x1xf32, #tpu.memory_space<vmem>>, vector<16x1xf32>
    %5 = vector.broadcast %4 : vector<16x1xf32> to vector<16x256xf32>
    %6 = arith.addf %3, %5 : vector<16x256xf32>
    %cst_6 = arith.constant 0.000000e+00 : f32
    %7 = vector.broadcast %cst_6 : f32 to vector<16x256xf32>
    %8 = arith.maximumf %6, %7 : vector<16x256xf32>
    %c0_7 = arith.constant 0 : index
    %c0_8 = arith.constant 0 : index
    %c0_9 = arith.constant 0 : index
    %9 = vector.load %arg5[%c0_7, %c0_8, %c0_9] : memref<1x16x256xf32, #tpu.memory_space<vmem>>, vector<1x16x256xf32>
    %10 = vector.shape_cast %9 : vector<1x16x256xf32> to vector<16x256xf32>
    %11 = vector.shape_cast %8 : vector<16x256xf32> to vector<1x16x256xf32>
    tpu.vector_store %arg5[%c0_7, %c0_8, %c0_9], %11 {strides = array<i32>} : memref<1x16x256xf32, #tpu.memory_space<vmem>>, vector<1x16x256xf32>,
    return
  }
  func.func @transform_0(%arg0: i32, %arg1: i32) -> (i32, i32, i32) {
    %c0_i32 = arith.constant 0 : i32
    %c0_i32_0 = arith.constant 0 : i32
    return %arg0, %c0_i32, %arg1 : i32, i32, i32
  }
  func.func @transform_1(%arg0: i32, %arg1: i32) -> (i32, i32) {
    %c0_i32 = arith.constant 0 : i32
    %c0_i32_0 = arith.constant 0 : i32
    %c0_i32_1 = arith.constant 0 : i32
    return %c0_i32, %c0_i32_0 : i32, i32
  }
  func.func @transform_2(%arg0: i32, %arg1: i32) -> (i32, i32) {
    %c0_i32 = arith.constant 0 : i32
    %c0_i32_0 = arith.constant 0 : i32
    %c0_i32_1 = arith.constant 0 : i32
    return %c0_i32, %c0_i32_0 : i32, i32
  }
  func.func @transform_3(%arg0: i32, %arg1: i32) -> (i32, i32, i32) {
    %c0_i32 = arith.constant 0 : i32
    %c0_i32_0 = arith.constant 0 : i32
    return %arg0, %c0_i32, %arg1 : i32, i32, i32
  }
}

module attributes {stable_mosaic.version = 11 : i64} {
  func.func @_pw_kernel(%arg0: i32, %arg1: i32, %arg2: memref<1x16x256xf32, #tpu.memory_space<vmem>>, %arg3: memref<1x16xf32, #tpu.memory_space<vmem>>, %arg4: memref<1x1xf32, #tpu.memory_space<vmem>>, %arg5: memref<1x1x256xf32, #tpu.memory_space<vmem>>) attributes {dimension_semantics = [#tpu.dimension_semantics<parallel>, #tpu.dimension_semantics<parallel>], iteration_bounds = array<i64: 2, 1>, scalar_prefetch = 0 : i64, scratch_operands = 0 : i64, tpu.core_type = #tpu.core_type<tc>, window_params = [{transform_indices = @transform_0, window_bounds = array<i64: 1, 16, 256>}, {pipeline_mode = #tpu.pipeline_mode<synchronous>, transform_indices = @transform_1, window_bounds = array<i64: 1, 16>}, {pipeline_mode = #tpu.pipeline_mode<synchronous>, transform_indices = @transform_2, window_bounds = array<i64: 1, 1>}, {transform_indices = @transform_3, window_bounds = array<i64: 1, 1, 256>}]} {
    %c0 = arith.constant 0 : index
    %c0_0 = arith.constant 0 : index
    %c0_1 = arith.constant 0 : index
    %0 = vector.load %arg2[%c0, %c0_0, %c0_1] : memref<1x16x256xf32, #tpu.memory_space<vmem>>, vector<1x16x256xf32>
    %1 = vector.shape_cast %0 : vector<1x16x256xf32> to vector<16x256xf32>
    %c0_2 = arith.constant 0 : index
    %c0_3 = arith.constant 0 : index
    %2 = vector.load %arg3[%c0_2, %c0_3] : memref<1x16xf32, #tpu.memory_space<vmem>>, vector<1x16xf32>
    %cst = arith.constant dense<0.000000e+00> : vector<1x256xf32>
    %3 = tpu.matmul %2, %1, %cst {dimension_numbers = #tpu.dot_dimension_numbers<[1], [0], [0], [1], [0, 0, 1, 1], [], []>} : vector<1x16xf32>, vector<16x256xf32>, vector<1x256xf32> -> vector<1x256xf32>
    %c0_4 = arith.constant 0 : index
    %c0_5 = arith.constant 0 : index
    %4 = vector.load %arg4[%c0_4, %c0_5] : memref<1x1xf32, #tpu.memory_space<vmem>>, vector<1x1xf32>
    %5 = vector.broadcast %4 : vector<1x1xf32> to vector<1x256xf32>
    %6 = arith.addf %3, %5 : vector<1x256xf32>
    %c0_6 = arith.constant 0 : index
    %c0_7 = arith.constant 0 : index
    %c0_8 = arith.constant 0 : index
    %7 = vector.load %arg5[%c0_6, %c0_7, %c0_8] : memref<1x1x256xf32, #tpu.memory_space<vmem>>, vector<1x1x256xf32>
    %8 = vector.shape_cast %7 : vector<1x1x256xf32> to vector<1x256xf32>
    %9 = vector.shape_cast %6 : vector<1x256xf32> to vector<1x1x256xf32>
    tpu.vector_store %arg5[%c0_6, %c0_7, %c0_8], %9 {strides = array<i32>} : memref<1x1x256xf32, #tpu.memory_space<vmem>>, vector<1x1x256xf32>,
    return
  }
  func.func @transform_0(%arg0: i32, %arg1: i32) -> (i32, i32, i32) {
    %c0_i32 = arith.constant 0 : i32
    %c0_i32_0 = arith.constant 0 : i32
    return %arg0, %c0_i32, %arg1 : i32, i32, i32
  }
  func.func @transform_1(%arg0: i32, %arg1: i32) -> (i32, i32) {
    %c0_i32 = arith.constant 0 : i32
    %c0_i32_0 = arith.constant 0 : i32
    %c0_i32_1 = arith.constant 0 : i32
    return %c0_i32, %c0_i32_0 : i32, i32
  }
  func.func @transform_2(%arg0: i32, %arg1: i32) -> (i32, i32) {
    %c0_i32 = arith.constant 0 : i32
    %c0_i32_0 = arith.constant 0 : i32
    %c0_i32_1 = arith.constant 0 : i32
    return %c0_i32, %c0_i32_0 : i32, i32
  }
  func.func @transform_3(%arg0: i32, %arg1: i32) -> (i32, i32, i32) {
    %c0_i32 = arith.constant 0 : i32
    %c0_i32_0 = arith.constant 0 : i32
    return %arg0, %c0_i32, %arg1 : i32, i32, i32
  }
}

module attributes {stable_mosaic.version = 11 : i64} {
  func.func @_add3_kernel(%arg0: i32, %arg1: i32, %arg2: memref<1x1x256xf32, #tpu.memory_space<vmem>>, %arg3: memref<1x1x256xf32, #tpu.memory_space<vmem>>, %arg4: memref<1x1x256xf32, #tpu.memory_space<vmem>>, %arg5: memref<1x1x256xf32, #tpu.memory_space<vmem>>) attributes {dimension_semantics = [#tpu.dimension_semantics<parallel>, #tpu.dimension_semantics<parallel>], iteration_bounds = array<i64: 2, 1>, scalar_prefetch = 0 : i64, scratch_operands = 0 : i64, tpu.core_type = #tpu.core_type<tc>, window_params = [{transform_indices = @transform_0, window_bounds = array<i64: 1, 1, 256>}, {transform_indices = @transform_1, window_bounds = array<i64: 1, 1, 256>}, {transform_indices = @transform_2, window_bounds = array<i64: 1, 1, 256>}, {transform_indices = @transform_3, window_bounds = array<i64: 1, 1, 256>}]} {
    %c0 = arith.constant 0 : index
    %c0_0 = arith.constant 0 : index
    %c0_1 = arith.constant 0 : index
    %0 = vector.load %arg2[%c0, %c0_0, %c0_1] : memref<1x1x256xf32, #tpu.memory_space<vmem>>, vector<1x1x256xf32>
    %c0_2 = arith.constant 0 : index
    %c0_3 = arith.constant 0 : index
    %c0_4 = arith.constant 0 : index
    %1 = vector.load %arg3[%c0_2, %c0_3, %c0_4] : memref<1x1x256xf32, #tpu.memory_space<vmem>>, vector<1x1x256xf32>
    %2 = arith.addf %0, %1 : vector<1x1x256xf32>
    %c0_5 = arith.constant 0 : index
    %c0_6 = arith.constant 0 : index
    %c0_7 = arith.constant 0 : index
    %3 = vector.load %arg4[%c0_5, %c0_6, %c0_7] : memref<1x1x256xf32, #tpu.memory_space<vmem>>, vector<1x1x256xf32>
    %4 = arith.addf %2, %3 : vector<1x1x256xf32>
    %c0_8 = arith.constant 0 : index
    %c0_9 = arith.constant 0 : index
    %c0_10 = arith.constant 0 : index
    %5 = vector.load %arg5[%c0_8, %c0_9, %c0_10] : memref<1x1x256xf32, #tpu.memory_space<vmem>>, vector<1x1x256xf32>
    tpu.vector_store %arg5[%c0_8, %c0_9, %c0_10], %4 {strides = array<i32>} : memref<1x1x256xf32, #tpu.memory_space<vmem>>, vector<1x1x256xf32>,
    return
  }
  func.func @transform_0(%arg0: i32, %arg1: i32) -> (i32, i32, i32) {
    %c0_i32 = arith.constant 0 : i32
    %c0_i32_0 = arith.constant 0 : i32
    return %arg0, %c0_i32, %arg1 : i32, i32, i32
  }
  func.func @transform_1(%arg0: i32, %arg1: i32) -> (i32, i32, i32) {
    %c0_i32 = arith.constant 0 : i32
    %c0_i32_0 = arith.constant 0 : i32
    return %arg0, %c0_i32, %arg1 : i32, i32, i32
  }
  func.func @transform_2(%arg0: i32, %arg1: i32) -> (i32, i32, i32) {
    %c0_i32 = arith.constant 0 : i32
    %c0_i32_0 = arith.constant 0 : i32
    return %arg0, %c0_i32, %arg1 : i32, i32, i32
  }
  func.func @transform_3(%arg0: i32, %arg1: i32) -> (i32, i32, i32) {
    %c0_i32 = arith.constant 0 : i32
    %c0_i32_0 = arith.constant 0 : i32
    return %arg0, %c0_i32, %arg1 : i32, i32, i32
  }
}

</mosaic_0001>

<llo_original>
// kernel: drp2_forward.15
$region0: #{drp2_forward.15}
  #allocation0 [shape = 'u32[]', space=smem, size = 0x4, offset = 0x4, fixed_abs, tag = 'smem constant byte address 0x4 - core index']
  #allocation1 [shape = 'u32[144,128]{1,0:T(1,128)}', space=vmem, size = 0x12000, scoped, tag = 'internal scratch']
  %s0 = inlined_call_operand.vmem [shape: f32[2,96,256], index: 0, kind: input, shape index: {}]
  %s1 = inlined_call_operand.vmem [shape: f32[32,96], index: 1, kind: input, shape index: {}]
  %s2 = inlined_call_operand.vmem [shape: f32[32,1], index: 2, kind: input, shape index: {}]
  %s3 = inlined_call_operand.vmem [shape: f32[2,32,256], index: 3, kind: output, shape index: {}]
  %s4 = sld [smem:[#allocation0]]
  $region45: #{drp2_forward.15} parent=0
    _
  %s6 = ssub.s32 1, %s4
  %s7 = scalar_select 0, %s6, %s4
  loop: start=0, step=1, limit=4
  $region2: #{drp2_forward.15} parent=0 // loop_pre_header
    _
  $region3: #{drp2_forward.15} parent=0 // loop_header
    %s9 = sphi 0, %s13
    %p10 = scmp.ge.s32.totalorder %s9, 4
    %s16 = sphi 0, %s28
    %s17 = sphi 0, %s24
    %s18 = sphi 0, %s16
    %s19 = sphi 0, %s17
    %s20 = sphi 0, %s18
    %s21 = sphi 0, %s19
    %s33 = sphi 0, %s35
    %s36 = sphi 0, %s33
    %s37 = sphi 0, %s36
    %s53 = sphi 0, %s37
    %s57 = sphi 0, %s57
    %s59 = sphi 0, %s57
    %s60 = sphi 0, %s59
    %s74 = sphi 0, %s60
    %s78 = sphi 0, %s78
    %s80 = sphi 0, %s78
    %s81 = sphi 0, %s80
    %s95 = sphi 0, %s81
    %s103 = sphi 0, %s105
    %s106 = sphi 0, %s103
    %s107 = sphi 0, %s106
    %s123 = sphi 0, %s107
  $region4: #{drp2_forward.15} parent=0 // loop_header_branch
    %12 = sbr.rel (%p10) target = $region8
  $region5: #{drp2_forward.15} parent=0 // loop_body
    %s14 = ssub.s32 %s9, 1
    %s15 = ssub.s32 %s9, 2
    %s22 = sadd.s32 1, %s17
    %p23 = scmp.ge.s32.totalorder %s22, 1
    %s24 = scalar_select %p23, 0, %s22
    %s25 = sadd.s32 1, %s16
    %s26 = scalar_select %p23, %s25, %s16
    %p27 = scmp.ge.s32.totalorder %s26, 2
    %s28 = scalar_select %p27, 0, %s26
    %s29 = ssub.s32 %s16, %s28
    %s30 = ssub.s32 %s17, %s24
    %s31 = sor.u32 %s29, %s30
    %p32 = scmp.eq.s32.totalorder %s31, 0
    %s34 = sadd.s32 %s33, 1
    %s35 = scalar_select %p32, %s33, %s34
    %p38 = pneg %p32
    %p39 = scmp.eq.s32.totalorder %s9, 1
    %p40 = por %p38, %p39
    %p41 = scmp.ne.s32.totalorder %s33, %s36
    %p42 = scmp.eq.s32.totalorder %s9, 0
    %p43 = por %p41, %p42
    %p44 = scmp.ne.s32.totalorder %s33, %s36
    %p45 = scmp.eq.s32.totalorder %s14, 1
    %p46 = por %p44, %p45
    %p47 = scmp.ne.s32.totalorder %s36, %s37
    %p48 = scmp.eq.s32.totalorder %s14, 0
    %p49 = por %p47, %p48
    %p50 = scmp.ne.s32.totalorder %s36, %s37
    %p51 = scmp.eq.s32.totalorder %s15, 1
    %p52 = por %p50, %p51
    %p54 = scmp.ne.s32.totalorder %s37, %s53
    %p55 = scmp.eq.s32.totalorder %s15, 0
    %p56 = por %p54, %p55
    %s58 = sadd.s32 %s57, 1
    %p61 = scmp.eq.s32.totalorder %s9, 1
    %p62 = scmp.ne.s32.totalorder %s57, %s59
    %p63 = scmp.eq.s32.totalorder %s9, 0
    %p64 = por %p62, %p63
    %p65 = scmp.ne.s32.totalorder %s57, %s59
    %p66 = scmp.eq.s32.totalorder %s14, 1
    %p67 = por %p65, %p66
    %p68 = scmp.ne.s32.totalorder %s59, %s60
    %p69 = scmp.eq.s32.totalorder %s14, 0
    %p70 = por %p68, %p69
    %p71 = scmp.ne.s32.totalorder %s59, %s60
    %p72 = scmp.eq.s32.totalorder %s15, 1
    %p73 = por %p71, %p72
    %p75 = scmp.ne.s32.totalorder %s60, %s74
    %p76 = scmp.eq.s32.totalorder %s15, 0
    %p77 = por %p75, %p76
    %s79 = sadd.s32 %s78, 1
    %p82 = scmp.eq.s32.totalorder %s9, 1
    %p83 = scmp.ne.s32.totalorder %s78, %s80
    %p84 = scmp.eq.s32.totalorder %s9, 0
    %p85 = por %p83, %p84
    %p86 = scmp.ne.s32.totalorder %s78, %s80
    %p87 = scmp.eq.s32.totalorder %s14, 1
    %p88 = por %p86, %p87
    %p89 = scmp.ne.s32.totalorder %s80, %s81
    %p90 = scmp.eq.s32.totalorder %s14, 0
    %p91 = por %p89, %p90
    %p92 = scmp.ne.s32.totalorder %s80, %s81
    %p93 = scmp.eq.s32.totalorder %s15, 1
    %p94 = por %p92, %p93
    %p96 = scmp.ne.s32.totalorder %s81, %s95
    %p97 = scmp.eq.s32.totalorder %s15, 0
    %p98 = por %p96, %p97
    %s99 = ssub.s32 %s16, %s28
    %s100 = ssub.s32 %s17, %s24
    %s101 = sor.u32 %s99, %s100
    %p102 = scmp.eq.s32.totalorder %s101, 0
    %s104 = sadd.s32 %s103, 1
    %s105 = scalar_select %p102, %s103, %s104
    %p108 = pneg %p102
    %p109 = scmp.eq.s32.totalorder %s9, 1
    %p110 = por %p108, %p109
    %p111 = scmp.ne.s32.totalorder %s103, %s106
    %p112 = scmp.eq.s32.totalorder %s9, 0
    %p113 = por %p111, %p112
    %p114 = scmp.ne.s32.totalorder %s103, %s106
    %p115 = scmp.eq.s32.totalorder %s14, 1
    %p116 = por %p114, %p115
    %p117 = scmp.ne.s32.totalorder %s106, %s107
    %p118 = scmp.eq.s32.totalorder %s14, 0
    %p119 = por %p117, %p118
    %p120 = scmp.ne.s32.totalorder %s106, %s107
    %p121 = scmp.eq.s32.totalorder %s15, 1
    %p122 = por %p120, %p121
    %p124 = scmp.ne.s32.totalorder %s107, %s123
    %p125 = scmp.eq.s32.totalorder %s15, 0
    %p126 = por %p124, %p125
    %p127 = scmp.le.s32.totalorder 1, %s9
    %p128 = scmp.lt.s32.totalorder %s9, 3
    %p129 = pnand %p127, %p128
    %p130 = pneg %p129
    // Predicated region
    $region9: #{drp2_forward.15} parent=5 // pred_check
      _
    $region10: #{drp2_forward.15} parent=5 // pred_check_branch
      %132 = sbr.rel (%p129) target = $region12
    $region11: #{drp2_forward.15} parent=5 // pred_region
      %s133 = ssub.s32 %s9, 1
      // Predicated region
      $region13: #{drp2_forward.15} parent=11 // pred_check
        %p134 = pneg %p70
      $region14: #{drp2_forward.15} parent=11 // pred_check_branch
        %136 = sbr.rel (%p134) target = $region16
      $region15: #{drp2_forward.15} parent=11 // pred_region
        _
      $region16: #{drp2_forward.15} parent=11 // pred_fallthru
        _
      // Predicated region
      $region17: #{drp2_forward.15} parent=11 // pred_check
        %p137 = pneg %p91
      $region18: #{drp2_forward.15} parent=11 // pred_check_branch
        %139 = sbr.rel (%p137) target = $region20
      $region19: #{drp2_forward.15} parent=11 // pred_region
        _
      $region20: #{drp2_forward.15} parent=11 // pred_fallthru
        _
    $region12: #{drp2_forward.15} parent=5 // pred_fallthru
      _
    %p140 = scmp.lt.s32.totalorder %s9, 2
    // Predicated region
    $region21: #{drp2_forward.15} parent=5 // pred_check
      %p141 = pneg %p140
    $region22: #{drp2_forward.15} parent=5 // pred_check_branch
      %143 = sbr.rel (%p141) target = $region24
    $region23: #{drp2_forward.15} parent=5 // pred_region
      // Predicated region
      $region25: #{drp2_forward.15} parent=23 // pred_check
        %p144 = pneg %p43
      $region26: #{drp2_forward.15} parent=23 // pred_check_branch
        %146 = sbr.rel (%p144) target = $region28
      $region27: #{drp2_forward.15} parent=23 // pred_region
        %s147 = smul.u32 2, %s17
        %p148 = scmp.lt.s32.totalorder %s16, 1
        %s149 = scalar_select %p148, %s16, 1
        %p150 = scmp.lt.s32.totalorder %s147, 1
        %s151 = scalar_select %p150, %s147, 1
        %s152 = smul.addr %s149, 24
        %s153 = sadd.s32 %s151, %s152
        %s154 = smul.addr %s153, 8
        %s155 = scalar_lea.vmem %s0, %s154
        %s156 = smul.u32 2, %s17
      $region28: #{drp2_forward.15} parent=23 // pred_fallthru
        _
    $region24: #{drp2_forward.15} parent=5 // pred_fallthru
      _
    %p157 = scmp.le.s32.totalorder 1, %s9
    %p158 = scmp.lt.s32.totalorder %s9, 3
    %p159 = pnand %p157, %p158
    %p160 = pneg %p159
    // Predicated region
    $region29: #{drp2_forward.15} parent=5 // pred_check
      _
    $region30: #{drp2_forward.15} parent=5 // pred_check_branch
      %162 = sbr.rel (%p159) target = $region32
    $region31: #{drp2_forward.15} parent=5 // pred_region
      %s163 = ssub.s32 %s9, 1
      %s164 = smul.u32 2, %s19
      %p165 = scmp.lt.s32.totalorder %s18, 1
      %s166 = scalar_select %p165, %s18, 1
      %p167 = scmp.lt.s32.totalorder %s164, 1
      %s168 = scalar_select %p167, %s164, 1
      %s169 = smul.addr %s166, 24
      %s170 = sadd.s32 %s168, %s169
      %s171 = smul.addr %s170, 8
      %s172 = scalar_lea.vmem %s0, %s171
      %p173 = pneg %p49
      %p174 = pneg %p46
      %p175 = pneg %p70
      %p176 = pneg %p67
      %p177 = pneg %p91
      %p178 = pneg %p88
      %p179 = pneg %p119
      %p180 = pneg %p116
      %s181 = smul.u32 2, %s19
      %p182 = scmp.lt.s32.totalorder %s18, 1
      %s183 = scalar_select %p182, %s18, 1
      %p184 = scmp.lt.s32.totalorder %s181, 1
      %s185 = scalar_select %p184, %s181, 1
      %s186 = smul.addr %s183, 8
      %s187 = sadd.s32 %s185, %s186
      %s188 = smul.addr %s187, 8
      %s189 = scalar_lea.vmem %s3, %s188
      %s190 = smul.u32 2, %s19
      %p191 = scmp.lt.s32.totalorder %s18, 1
      %s192 = scalar_select %p191, %s18, 1
      %p193 = scmp.lt.s32.totalorder %s190, 1
      %s194 = scalar_select %p193, %s190, 1
      %s195 = smul.addr %s192, 24
      %s196 = sadd.s32 %s194, %s195
      %s197 = smul.addr %s196, 8
      %s198 = scalar_lea.vmem %s0, %s197
      %s199 = smul.u32 2, %s19
      %s200 = smul.u32 2, %s19
      %p201 = scmp.lt.s32.totalorder %s18, 1
      %s202 = scalar_select %p201, %s18, 1
      %p203 = scmp.lt.s32.totalorder %s200, 1
      %s204 = scalar_select %p203, %s200, 1
      %s205 = smul.addr %s202, 8
      %s206 = sadd.s32 %s204, %s205
      %s207 = smul.addr %s206, 8
      %s208 = scalar_lea.vmem %s3, %s207
      %s209 = smul.u32 2, %s19
      %v210 = vld [vmem:[%s198] sm:$0xff]
      %v211 = vld [vmem:[%s198 + $0x8] sm:$0xff]
      %v212 = vld [vmem:[%s198 + $0x10] sm:$0xff]
      %v213 = vld [vmem:[%s198 + $0x18] sm:$0xff]
      %v214 = vld [vmem:[%s198 + $0x20] sm:$0xff]
      %v215 = vld [vmem:[%s198 + $0x28] sm:$0xff]
      %v216 = vld [vmem:[%s198 + $0x30] sm:$0xff]
      %v217 = vld [vmem:[%s198 + $0x38] sm:$0xff]
      %v218 = vld [vmem:[%s198 + $0x40] sm:$0xff]
      %v219 = vld [vmem:[%s198 + $0x48] sm:$0xff]
      %v220 = vld [vmem:[%s198 + $0x50] sm:$0xff]
      %v221 = vld [vmem:[%s198 + $0x58] sm:$0xff]
      %v222 = vld [vmem:[%s198 + $0x60] sm:$0xff]
      %v223 = vld [vmem:[%s198 + $0x68] sm:$0xff]
      %v224 = vld [vmem:[%s198 + $0x70] sm:$0xff]
      %v225 = vld [vmem:[%s198 + $0x78] sm:$0xff]
      %v226 = vld [vmem:[%s198 + $0x80] sm:$0xff]
      %v227 = vld [vmem:[%s198 + $0x88] sm:$0xff]
      %v228 = vld [vmem:[%s198 + $0x90] sm:$0xff]
      %v229 = vld [vmem:[%s198 + $0x98] sm:$0xff]
      %v230 = vld [vmem:[%s198 + $0xa0] sm:$0xff]
      %v231 = vld [vmem:[%s198 + $0xa8] sm:$0xff]
      %v232 = vld [vmem:[%s198 + $0xb0] sm:$0xff]
      %v233 = vld [vmem:[%s198 + $0xb8] sm:$0xff]
      %v234 = vld [vmem:[%s1] sm:$0xff]
      %v235 = vld [vmem:[%s1 + $0x8] sm:$0xff]
      %v236 = vld [vmem:[%s1 + $0x10] sm:$0xff]
      %v237 = vld [vmem:[%s1 + $0x18] sm:$0xff]
      %v238 = vld [vmem:[%s2] sm:$0xff]
      %v239 = vld [vmem:[%s2 + $0x8] sm:$0xff]
      %v240 = vld [vmem:[%s2 + $0x10] sm:$0xff]
      %v241 = vld [vmem:[%s2 + $0x18] sm:$0xff]
      %243 = vset.pattern.permute.xlu0 0
      %244 = vperm.xlu0 %243, %v238
      %v245 = vpop.permute.xlu0 %244
      %248 = vset.pattern.permute.xlu0 0
      %249 = vperm.xlu0 %248, %v239
      %v250 = vpop.permute.xlu0 %249
      %253 = vset.pattern.permute.xlu0 0
      %254 = vperm.xlu0 %253, %v240
      %v255 = vpop.permute.xlu0 %254
      %258 = vset.pattern.permute.xlu0 0
      %259 = vperm.xlu0 %258, %v241
      %v260 = vpop.permute.xlu0 %259
      %vm262 = vcmask 785408
      %v264 = vsel %vm262, %v234, 0
      %v267 = vsel %vm262, %v235, 0
      %v270 = vsel %vm262, %v236, 0
      %v273 = vsel %vm262, %v237, 0
      %275 = vmatprep.subr.mxu0 %v211
      %276 = vmatpush1.msra.mxu0 %v210
      %277 = vmatprep.subr.mxu0 %v213
      %278 = vmatpush1.msra.mxu0 %v212
      %279 = vmatprep.subr.mxu0 %v215
      %280 = vmatpush1.msra.mxu0 %v214
      %281 = vmatprep.subr.mxu0 %v217
      %282 = vmatpush1.msra.mxu0 %v216
      %283 = vmatprep.subr.mxu0 %v219
      %284 = vmatpush1.msra.mxu0 %v218
      %285 = vmatprep.subr.mxu0 %v221
      %286 = vmatpush1.msra.mxu0 %v220
      %287 = vmatprep.subr.mxu0 %v223
      %288 = vmatpush1.msra.mxu0 %v222
      %289 = vmatprep.subr.mxu0 %v225
      %290 = vmatpush1.msra.mxu0 %v224
      %291 = vmatprep.subr.mxu0 %v227
      %292 = vmatpush1.msra.mxu0 %v226
      %293 = vmatprep.subr.mxu0 %v229
      %294 = vmatpush1.msra.mxu0 %v228
      %295 = vmatprep.subr.mxu0 %v231
      %296 = vmatpush1.msra.mxu0 %v230
      %297 = vmatprep.subr.mxu0 %v233
      %298 = vmatpush1.msra.mxu0 %v232
      %299 = vmatprep.subr.mxu0 0.0
      %300 = vmatpush1.msra.mxu0 0.0
      %301 = vmatprep.subr.mxu0 0.0
      %302 = vmatpush1.msra.mxu0 0.0
      %303 = vmatprep.subr.mxu0 0.0
      %304 = vmatpush1.msra.mxu0 0.0
      %305 = vmatprep.subr.mxu0 0.0
      %306 = vmatpush1.msra.mxu0 0.0
      %307 = vmatprep.subr.mxu0 0.0
      %308 = vmatpush1.msra.mxu0 0.0
      %309 = vmatprep.subr.mxu0 0.0
      %310 = vmatpush1.msra.mxu0 0.0
      %311 = vmatprep.subr.mxu0 0.0
      %312 = vmatpush1.msra.mxu0 0.0
      %313 = vmatprep.subr.mxu0 0.0
      %314 = vmatpush1.msra.mxu0 0.0
      %315 = vmatprep.subr.mxu0 0.0
      %316 = vmatpush1.msra.mxu0 0.0
      %317 = vmatprep.subr.mxu0 0.0
      %318 = vmatpush1.msra.mxu0 0.0
      %319 = vmatprep.subr.mxu0 0.0
      %320 = vmatpush1.msra.mxu0 0.0
      %321 = vmatprep.subr.mxu0 0.0
      %322 = vmatpush1.msra.mxu0 0.0
      %323 = vmatprep.subr.mxu0 0.0
      %324 = vmatpush1.msra.mxu0 0.0
      %325 = vmatprep.subr.mxu0 0.0
      %326 = vmatpush1.msra.mxu0 0.0
      %327 = vmatprep.subr.mxu0 0.0
      %328 = vmatpush1.msra.mxu0 0.0
      %329 = vmatprep.subr.mxu0 0.0
      %330 = vmatpush1.msra.mxu0 0.0
      %331 = vmatprep.subr.mxu0 0.0
      %332 = vmatpush1.msra.mxu0 0.0
      %333 = vmatprep.subr.mxu0 0.0
      %334 = vmatpush1.msra.mxu0 0.0
      %335 = vmatprep.subr.mxu0 0.0
      %336 = vmatpush1.msra.mxu0 0.0
      %337 = vmatprep.subr.mxu0 0.0
      %338 = vmatpush1.msra.mxu0 0.0
      %339 = vmatprep.mubr.f32.mxu0 0.0
      %340 = vmatmul.mubr.f32.gmra.mrb[0].mxu0 %v264
      %v341 = vpop.f32.mrb[0].mxu0
      %v342 = vadd.f32 %v245, %v341
      %v343 = vpop.f32.mrb[0].mxu0
      %v344 = vadd.f32 %v245, %v343
      %345 = vmatprep.mubr.f32.mxu0 0.0
      %346 = vmatmul.mubr.f32.gmra.mrb[0].mxu0 %v267
      %v347 = vpop.f32.mrb[0].mxu0
      %v348 = vadd.f32 %v250, %v347
      %v349 = vpop.f32.mrb[0].mxu0
      %v350 = vadd.f32 %v250, %v349
      %351 = vmatprep.mubr.f32.mxu0 0.0
      %352 = vmatmul.mubr.f32.gmra.mrb[0].mxu0 %v270
      %v353 = vpop.f32.mrb[0].mxu0
      %v354 = vadd.f32 %v255, %v353
      %v355 = vpop.f32.mrb[0].mxu0
      %v356 = vadd.f32 %v255, %v355
      %357 = vmatprep.mubr.f32.mxu0 0.0
      %358 = vmatmul.mubr.f32.gmra.mrb[0].mxu0 %v273
      %v359 = vpop.f32.mrb[0].mxu0
      %v360 = vadd.f32 %v260, %v359
      %v361 = vpop.f32.mrb[0].mxu0
      %v362 = vadd.f32 %v260, %v361
      %363 = vdwg.mxu0
      %364 = vst [vmem:[%s208] sm:$0xff] %v342
      %365 = vst [vmem:[%s208 + $0x8] sm:$0xff] %v344
      %366 = vst [vmem:[%s208 + $0x10] sm:$0xff] %v348
      %367 = vst [vmem:[%s208 + $0x18] sm:$0xff] %v350
      %368 = vst [vmem:[%s208 + $0x20] sm:$0xff] %v354
      %369 = vst [vmem:[%s208 + $0x28] sm:$0xff] %v356
      %370 = vst [vmem:[%s208 + $0x30] sm:$0xff] %v360
      %371 = vst [vmem:[%s208 + $0x38] sm:$0xff] %v362
      %s372 = smul.u32 2, %s19
      %p373 = scmp.lt.s32.totalorder %s18, 1
      %s374 = scalar_select %p373, %s18, 1
      %p375 = scmp.lt.s32.totalorder %s372, 1
      %s376 = scalar_select %p375, %s372, 1
      %s377 = smul.addr %s374, 8
      %s378 = sadd.s32 %s376, %s377
      %s379 = smul.addr %s378, 8
      %s380 = scalar_lea.vmem %s3, %s379
      // Predicated region
      $region33: #{drp2_forward.15} parent=31 // pred_check
        %p381 = pneg %p116
      $region34: #{drp2_forward.15} parent=31 // pred_check_branch
        %383 = sbr.rel (%p381) target = $region36
      $region35: #{drp2_forward.15} parent=31 // pred_region
        %s384 = smul.u32 2, %s19
      $region36: #{drp2_forward.15} parent=31 // pred_fallthru
        _
    $region32: #{drp2_forward.15} parent=5 // pred_fallthru
      _
    %p385 = scmp.le.s32.totalorder 2, %s9
    // Predicated region
    $region37: #{drp2_forward.15} parent=5 // pred_check
      %p386 = pneg %p385
    $region38: #{drp2_forward.15} parent=5 // pred_check_branch
      %388 = sbr.rel (%p386) target = $region40
    $region39: #{drp2_forward.15} parent=5 // pred_region
      %s389 = ssub.s32 %s9, 2
      // Predicated region
      $region41: #{drp2_forward.15} parent=39 // pred_check
        %p390 = pneg %p122
      $region42: #{drp2_forward.15} parent=39 // pred_check_branch
        %392 = sbr.rel (%p390) target = $region44
      $region43: #{drp2_forward.15} parent=39 // pred_region
        %s393 = smul.u32 2, %s21
        %p394 = scmp.lt.s32.totalorder %s20, 1
        %s395 = scalar_select %p394, %s20, 1
        %p396 = scmp.lt.s32.totalorder %s393, 1
        %s397 = scalar_select %p396, %s393, 1
        %s398 = smul.addr %s395, 8
        %s399 = sadd.s32 %s397, %s398
        %s400 = smul.addr %s399, 8
        %s401 = scalar_lea.vmem %s3, %s400
      $region44: #{drp2_forward.15} parent=39 // pred_fallthru
        _
    $region40: #{drp2_forward.15} parent=5 // pred_fallthru
      _
  $region6: #{drp2_forward.15} parent=0 // loop_footer
    %s13 = sadd.s32 1, %s9
  $region7: #{drp2_forward.15} parent=0 // loop_footer_branch
    %8 = sbr.rel target = $region3
  $region8: #{drp2_forward.15} parent=0 // loop_exit
    _

// kernel: drp2_forward.16
$region0: #{drp2_forward.16}
  #allocation0 [shape = 'u32[]', space=smem, size = 0x4, offset = 0x4, fixed_abs, tag = 'smem constant byte address 0x4 - core index']
  #allocation1 [shape = 'u32[144,128]{1,0:T(1,128)}', space=vmem, size = 0x12000, scoped, tag = 'internal scratch']
  %s0 = inlined_call_operand.vmem [shape: f32[2,288,256], index: 0, kind: input, shape index: {}]
  %s1 = inlined_call_operand.vmem [shape: f32[32,288], index: 1, kind: input, shape index: {}]
  %s2 = inlined_call_operand.vmem [shape: f32[32,1], index: 2, kind: input, shape index: {}]
  %s3 = inlined_call_operand.vmem [shape: f32[2,32,256], index: 3, kind: output, shape index: {}]
  %s4 = sld [smem:[#allocation0]]
  $region45: #{drp2_forward.16} parent=0
    _
  %s6 = ssub.s32 1, %s4
  %s7 = scalar_select 0, %s6, %s4
  loop: start=0, step=1, limit=4
  $region2: #{drp2_forward.16} parent=0 // loop_pre_header
    _
  $region3: #{drp2_forward.16} parent=0 // loop_header
    %s9 = sphi 0, %s13
    %p10 = scmp.ge.s32.totalorder %s9, 4
    %s16 = sphi 0, %s28
    %s17 = sphi 0, %s24
    %s18 = sphi 0, %s16
    %s19 = sphi 0, %s17
    %s20 = sphi 0, %s18
    %s21 = sphi 0, %s19
    %s33 = sphi 0, %s35
    %s36 = sphi 0, %s33
    %s37 = sphi 0, %s36
    %s53 = sphi 0, %s37
    %s57 = sphi 0, %s57
    %s59 = sphi 0, %s57
    %s60 = sphi 0, %s59
    %s74 = sphi 0, %s60
    %s78 = sphi 0, %s78
    %s80 = sphi 0, %s78
    %s81 = sphi 0, %s80
    %s95 = sphi 0, %s81
    %s103 = sphi 0, %s105
    %s106 = sphi 0, %s103
    %s107 = sphi 0, %s106
    %s123 = sphi 0, %s107
  $region4: #{drp2_forward.16} parent=0 // loop_header_branch
    %12 = sbr.rel (%p10) target = $region8
  $region5: #{drp2_forward.16} parent=0 // loop_body
    %s14 = ssub.s32 %s9, 1
    %s15 = ssub.s32 %s9, 2
    %s22 = sadd.s32 1, %s17
    %p23 = scmp.ge.s32.totalorder %s22, 1
    %s24 = scalar_select %p23, 0, %s22
    %s25 = sadd.s32 1, %s16
    %s26 = scalar_select %p23, %s25, %s16
    %p27 = scmp.ge.s32.totalorder %s26, 2
    %s28 = scalar_select %p27, 0, %s26
    %s29 = ssub.s32 %s16, %s28
    %s30 = ssub.s32 %s17, %s24
    %s31 = sor.u32 %s29, %s30
    %p32 = scmp.eq.s32.totalorder %s31, 0
    %s34 = sadd.s32 %s33, 1
    %s35 = scalar_select %p32, %s33, %s34
    %p38 = pneg %p32
    %p39 = scmp.eq.s32.totalorder %s9, 1
    %p40 = por %p38, %p39
    %p41 = scmp.ne.s32.totalorder %s33, %s36
    %p42 = scmp.eq.s32.totalorder %s9, 0
    %p43 = por %p41, %p42
    %p44 = scmp.ne.s32.totalorder %s33, %s36
    %p45 = scmp.eq.s32.totalorder %s14, 1
    %p46 = por %p44, %p45
    %p47 = scmp.ne.s32.totalorder %s36, %s37
    %p48 = scmp.eq.s32.totalorder %s14, 0
    %p49 = por %p47, %p48
    %p50 = scmp.ne.s32.totalorder %s36, %s37
    %p51 = scmp.eq.s32.totalorder %s15, 1
    %p52 = por %p50, %p51
    %p54 = scmp.ne.s32.totalorder %s37, %s53
    %p55 = scmp.eq.s32.totalorder %s15, 0
    %p56 = por %p54, %p55
    %s58 = sadd.s32 %s57, 1
    %p61 = scmp.eq.s32.totalorder %s9, 1
    %p62 = scmp.ne.s32.totalorder %s57, %s59
    %p63 = scmp.eq.s32.totalorder %s9, 0
    %p64 = por %p62, %p63
    %p65 = scmp.ne.s32.totalorder %s57, %s59
    %p66 = scmp.eq.s32.totalorder %s14, 1
    %p67 = por %p65, %p66
    %p68 = scmp.ne.s32.totalorder %s59, %s60
    %p69 = scmp.eq.s32.totalorder %s14, 0
    %p70 = por %p68, %p69
    %p71 = scmp.ne.s32.totalorder %s59, %s60
    %p72 = scmp.eq.s32.totalorder %s15, 1
    %p73 = por %p71, %p72
    %p75 = scmp.ne.s32.totalorder %s60, %s74
    %p76 = scmp.eq.s32.totalorder %s15, 0
    %p77 = por %p75, %p76
    %s79 = sadd.s32 %s78, 1
    %p82 = scmp.eq.s32.totalorder %s9, 1
    %p83 = scmp.ne.s32.totalorder %s78, %s80
    %p84 = scmp.eq.s32.totalorder %s9, 0
    %p85 = por %p83, %p84
    %p86 = scmp.ne.s32.totalorder %s78, %s80
    %p87 = scmp.eq.s32.totalorder %s14, 1
    %p88 = por %p86, %p87
    %p89 = scmp.ne.s32.totalorder %s80, %s81
    %p90 = scmp.eq.s32.totalorder %s14, 0
    %p91 = por %p89, %p90
    %p92 = scmp.ne.s32.totalorder %s80, %s81
    %p93 = scmp.eq.s32.totalorder %s15, 1
    %p94 = por %p92, %p93
    %p96 = scmp.ne.s32.totalorder %s81, %s95
    %p97 = scmp.eq.s32.totalorder %s15, 0
    %p98 = por %p96, %p97
    %s99 = ssub.s32 %s16, %s28
    %s100 = ssub.s32 %s17, %s24
    %s101 = sor.u32 %s99, %s100
    %p102 = scmp.eq.s32.totalorder %s101, 0
    %s104 = sadd.s32 %s103, 1
    %s105 = scalar_select %p102, %s103, %s104
    %p108 = pneg %p102
    %p109 = scmp.eq.s32.totalorder %s9, 1
    %p110 = por %p108, %p109
    %p111 = scmp.ne.s32.totalorder %s103, %s106
    %p112 = scmp.eq.s32.totalorder %s9, 0
    %p113 = por %p111, %p112
    %p114 = scmp.ne.s32.totalorder %s103, %s106
    %p115 = scmp.eq.s32.totalorder %s14, 1
    %p116 = por %p114, %p115
    %p117 = scmp.ne.s32.totalorder %s106, %s107
    %p118 = scmp.eq.s32.totalorder %s14, 0
    %p119 = por %p117, %p118
    %p120 = scmp.ne.s32.totalorder %s106, %s107
    %p121 = scmp.eq.s32.totalorder %s15, 1
    %p122 = por %p120, %p121
    %p124 = scmp.ne.s32.totalorder %s107, %s123
    %p125 = scmp.eq.s32.totalorder %s15, 0
    %p126 = por %p124, %p125
    %p127 = scmp.le.s32.totalorder 1, %s9
    %p128 = scmp.lt.s32.totalorder %s9, 3
    %p129 = pnand %p127, %p128
    %p130 = pneg %p129
    // Predicated region
    $region9: #{drp2_forward.16} parent=5 // pred_check
      _
    $region10: #{drp2_forward.16} parent=5 // pred_check_branch
      %132 = sbr.rel (%p129) target = $region12
    $region11: #{drp2_forward.16} parent=5 // pred_region
      %s133 = ssub.s32 %s9, 1
      // Predicated region
      $region13: #{drp2_forward.16} parent=11 // pred_check
        %p134 = pneg %p70
      $region14: #{drp2_forward.16} parent=11 // pred_check_branch
        %136 = sbr.rel (%p134) target = $region16
      $region15: #{drp2_forward.16} parent=11 // pred_region
        _
      $region16: #{drp2_forward.16} parent=11 // pred_fallthru
        _
      // Predicated region
      $region17: #{drp2_forward.16} parent=11 // pred_check
        %p137 = pneg %p91
      $region18: #{drp2_forward.16} parent=11 // pred_check_branch
        %139 = sbr.rel (%p137) target = $region20
      $region19: #{drp2_forward.16} parent=11 // pred_region
        _
      $region20: #{drp2_forward.16} parent=11 // pred_fallthru
        _
    $region12: #{drp2_forward.16} parent=5 // pred_fallthru
      _
    %p140 = scmp.lt.s32.totalorder %s9, 2
    // Predicated region
    $region21: #{drp2_forward.16} parent=5 // pred_check
      %p141 = pneg %p140
    $region22: #{drp2_forward.16} parent=5 // pred_check_branch
      %143 = sbr.rel (%p141) target = $region24
    $region23: #{drp2_forward.16} parent=5 // pred_region
      // Predicated region
      $region25: #{drp2_forward.16} parent=23 // pred_check
        %p144 = pneg %p43
      $region26: #{drp2_forward.16} parent=23 // pred_check_branch
        %146 = sbr.rel (%p144) target = $region28
      $region27: #{drp2_forward.16} parent=23 // pred_region
        %s147 = smul.u32 2, %s17
        %p148 = scmp.lt.s32.totalorder %s16, 1
        %s149 = scalar_select %p148, %s16, 1
        %p150 = scmp.lt.s32.totalorder %s147, 1
        %s151 = scalar_select %p150, %s147, 1
        %s152 = smul.addr %s149, 72
        %s153 = sadd.s32 %s151, %s152
        %s154 = smul.addr %s153, 8
        %s155 = scalar_lea.vmem %s0, %s154
        %s156 = smul.u32 2, %s17
      $region28: #{drp2_forward.16} parent=23 // pred_fallthru
        _
    $region24: #{drp2_forward.16} parent=5 // pred_fallthru
      _
    %p157 = scmp.le.s32.totalorder 1, %s9
    %p158 = scmp.lt.s32.totalorder %s9, 3
    %p159 = pnand %p157, %p158
    %p160 = pneg %p159
    // Predicated region
    $region29: #{drp2_forward.16} parent=5 // pred_check
      _
    $region30: #{drp2_forward.16} parent=5 // pred_check_branch
      %162 = sbr.rel (%p159) target = $region32
    $region31: #{drp2_forward.16} parent=5 // pred_region
      %s163 = ssub.s32 %s9, 1
      %s164 = smul.u32 2, %s19
      %p165 = scmp.lt.s32.totalorder %s18, 1
      %s166 = scalar_select %p165, %s18, 1
      %p167 = scmp.lt.s32.totalorder %s164, 1
      %s168 = scalar_select %p167, %s164, 1
      %s169 = smul.addr %s166, 72
      %s170 = sadd.s32 %s168, %s169
      %s171 = smul.addr %s170, 8
      %s172 = scalar_lea.vmem %s0, %s171
      %p173 = pneg %p49
      %p174 = pneg %p46
      %p175 = pneg %p70
      %p176 = pneg %p67
      %p177 = pneg %p91
      %p178 = pneg %p88
      %p179 = pneg %p119
      %p180 = pneg %p116
      %s181 = smul.u32 2, %s19
      %p182 = scmp.lt.s32.totalorder %s18, 1
      %s183 = scalar_select %p182, %s18, 1
      %p184 = scmp.lt.s32.totalorder %s181, 1
      %s185 = scalar_select %p184, %s181, 1
      %s186 = smul.addr %s183, 8
      %s187 = sadd.s32 %s185, %s186
      %s188 = smul.addr %s187, 8
      %s189 = scalar_lea.vmem %s3, %s188
      %s190 = smul.u32 2, %s19
      %p191 = scmp.lt.s32.totalorder %s18, 1
      %s192 = scalar_select %p191, %s18, 1
      %p193 = scmp.lt.s32.totalorder %s190, 1
      %s194 = scalar_select %p193, %s190, 1
      %s195 = smul.addr %s192, 72
      %s196 = sadd.s32 %s194, %s195
      %s197 = smul.addr %s196, 8
      %s198 = scalar_lea.vmem %s0, %s197
      %s199 = smul.u32 2, %s19
      %s200 = smul.u32 2, %s19
      %p201 = scmp.lt.s32.totalorder %s18, 1
      %s202 = scalar_select %p201, %s18, 1
      %p203 = scmp.lt.s32.totalorder %s200, 1
      %s204 = scalar_select %p203, %s200, 1
      %s205 = smul.addr %s202, 8
      %s206 = sadd.s32 %s204, %s205
      %s207 = smul.addr %s206, 8
      %s208 = scalar_lea.vmem %s3, %s207
      %s209 = smul.u32 2, %s19
      %v210 = vld [vmem:[%s198] sm:$0xff]
      %v211 = vld [vmem:[%s198 + $0x8] sm:$0xff]
      %v212 = vld [vmem:[%s198 + $0x10] sm:$0xff]
      %v213 = vld [vmem:[%s198 + $0x18] sm:$0xff]
      %v214 = vld [vmem:[%s198 + $0x20] sm:$0xff]
      %v215 = vld [vmem:[%s198 + $0x28] sm:$0xff]
      %v216 = vld [vmem:[%s198 + $0x30] sm:$0xff]
      %v217 = vld [vmem:[%s198 + $0x38] sm:$0xff]
      %v218 = vld [vmem:[%s198 + $0x40] sm:$0xff]
      %v219 = vld [vmem:[%s198 + $0x48] sm:$0xff]
      %v220 = vld [vmem:[%s198 + $0x50] sm:$0xff]
      %v221 = vld [vmem:[%s198 + $0x58] sm:$0xff]
      %v222 = vld [vmem:[%s198 + $0x60] sm:$0xff]
      %v223 = vld [vmem:[%s198 + $0x68] sm:$0xff]
      %v224 = vld [vmem:[%s198 + $0x70] sm:$0xff]
      %v225 = vld [vmem:[%s198 + $0x78] sm:$0xff]
      %v226 = vld [vmem:[%s198 + $0x80] sm:$0xff]
      %v227 = vld [vmem:[%s198 + $0x88] sm:$0xff]
      %v228 = vld [vmem:[%s198 + $0x90] sm:$0xff]
      %v229 = vld [vmem:[%s198 + $0x98] sm:$0xff]
      %v230 = vld [vmem:[%s198 + $0xa0] sm:$0xff]
      %v231 = vld [vmem:[%s198 + $0xa8] sm:$0xff]
      %v232 = vld [vmem:[%s198 + $0xb0] sm:$0xff]
      %v233 = vld [vmem:[%s198 + $0xb8] sm:$0xff]
      %v234 = vld [vmem:[%s198 + $0xc0] sm:$0xff]
      %v235 = vld [vmem:[%s198 + $0xc8] sm:$0xff]
      %v236 = vld [vmem:[%s198 + $0xd0] sm:$0xff]
      %v237 = vld [vmem:[%s198 + $0xd8] sm:$0xff]
      %v238 = vld [vmem:[%s198 + $0xe0] sm:$0xff]
      %v239 = vld [vmem:[%s198 + $0xe8] sm:$0xff]
      %v240 = vld [vmem:[%s198 + $0xf0] sm:$0xff]
      %v241 = vld [vmem:[%s198 + $0xf8] sm:$0xff]
      %v242 = vld [vmem:[%s198 + $0x100] sm:$0xff]
      %v243 = vld [vmem:[%s198 + $0x108] sm:$0xff]
      %v244 = vld [vmem:[%s198 + $0x110] sm:$0xff]
      %v245 = vld [vmem:[%s198 + $0x118] sm:$0xff]
      %v246 = vld [vmem:[%s198 + $0x120] sm:$0xff]
      %v247 = vld [vmem:[%s198 + $0x128] sm:$0xff]
      %v248 = vld [vmem:[%s198 + $0x130] sm:$0xff]
      %v249 = vld [vmem:[%s198 + $0x138] sm:$0xff]
      %v250 = vld [vmem:[%s198 + $0x140] sm:$0xff]
      %v251 = vld [vmem:[%s198 + $0x148] sm:$0xff]
      %v252 = vld [vmem:[%s198 + $0x150] sm:$0xff]
      %v253 = vld [vmem:[%s198 + $0x158] sm:$0xff]
      %v254 = vld [vmem:[%s198 + $0x160] sm:$0xff]
      %v255 = vld [vmem:[%s198 + $0x168] sm:$0xff]
      %v256 = vld [vmem:[%s198 + $0x170] sm:$0xff]
      %v257 = vld [vmem:[%s198 + $0x178] sm:$0xff]
      %v258 = vld [vmem:[%s198 + $0x180] sm:$0xff]
      %v259 = vld [vmem:[%s198 + $0x188] sm:$0xff]
      %v260 = vld [vmem:[%s198 + $0x190] sm:$0xff]
      %v261 = vld [vmem:[%s198 + $0x198] sm:$0xff]
      %v262 = vld [vmem:[%s198 + $0x1a0] sm:$0xff]
      %v263 = vld [vmem:[%s198 + $0x1a8] sm:$0xff]
      %v264 = vld [vmem:[%s198 + $0x1b0] sm:$0xff]
      %v265 = vld [vmem:[%s198 + $0x1b8] sm:$0xff]
      %v266 = vld [vmem:[%s198 + $0x1c0] sm:$0xff]
      %v267 = vld [vmem:[%s198 + $0x1c8] sm:$0xff]
      %v268 = vld [vmem:[%s198 + $0x1d0] sm:$0xff]
      %v269 = vld [vmem:[%s198 + $0x1d8] sm:$0xff]
      %v270 = vld [vmem:[%s198 + $0x1e0] sm:$0xff]
      %v271 = vld [vmem:[%s198 + $0x1e8] sm:$0xff]
      %v272 = vld [vmem:[%s198 + $0x1f0] sm:$0xff]
      %v273 = vld [vmem:[%s198 + $0x1f8] sm:$0xff]
      %v274 = vld [vmem:[%s198 + $0x200] sm:$0xff]
      %v275 = vld [vmem:[%s198 + $0x208] sm:$0xff]
      %v276 = vld [vmem:[%s198 + $0x210] sm:$0xff]
      %v277 = vld [vmem:[%s198 + $0x218] sm:$0xff]
      %v278 = vld [vmem:[%s198 + $0x220] sm:$0xff]
      %v279 = vld [vmem:[%s198 + $0x228] sm:$0xff]
      %v280 = vld [vmem:[%s198 + $0x230] sm:$0xff]
      %v281 = vld [vmem:[%s198 + $0x238] sm:$0xff]
      %v282 = vld [vmem:[%s1] sm:$0xff]
      %v283 = vld [vmem:[%s1 + $0x8] sm:$0xff]
      %v284 = vld [vmem:[%s1 + $0x10] sm:$0xff]
      %v285 = vld [vmem:[%s1 + $0x18] sm:$0xff]
      %v286 = vld [vmem:[%s1 + $0x20] sm:$0xff]
      %v287 = vld [vmem:[%s1 + $0x28] sm:$0xff]
      %v288 = vld [vmem:[%s1 + $0x30] sm:$0xff]
      %v289 = vld [vmem:[%s1 + $0x38] sm:$0xff]
      %v290 = vld [vmem:[%s1 + $0x40] sm:$0xff]
      %v291 = vld [vmem:[%s1 + $0x48] sm:$0xff]
      %v292 = vld [vmem:[%s1 + $0x50] sm:$0xff]
      %v293 = vld [vmem:[%s1 + $0x58] sm:$0xff]
      %v294 = vld [vmem:[%s2] sm:$0xff]
      %v295 = vld [vmem:[%s2 + $0x8] sm:$0xff]
      %v296 = vld [vmem:[%s2 + $0x10] sm:$0xff]
      %v297 = vld [vmem:[%s2 + $0x18] sm:$0xff]
      %299 = vset.pattern.permute.xlu0 0
      %300 = vperm.xlu0 %299, %v294
      %v301 = vpop.permute.xlu0 %300
      %304 = vset.pattern.permute.xlu0 0
      %305 = vperm.xlu0 %304, %v295
      %v306 = vpop.permute.xlu0 %305
      %309 = vset.pattern.permute.xlu0 0
      %310 = vperm.xlu0 %309, %v296
      %v311 = vpop.permute.xlu0 %310
      %314 = vset.pattern.permute.xlu0 0
      %315 = vperm.xlu0 %314, %v297
      %v316 = vpop.permute.xlu0 %315
      %vm318 = vcmask 261120
      %v320 = vsel %vm318, %v284, 0
      %v323 = vsel %vm318, %v287, 0
      %v326 = vsel %vm318, %v290, 0
      %v329 = vsel %vm318, %v293, 0
      %331 = vmatprep.subr.mxu0 %v211
      %332 = vmatpush1.msra.mxu0 %v210
      %333 = vmatprep.subr.mxu0 %v213
      %334 = vmatpush1.msra.mxu0 %v212
      %335 = vmatprep.subr.mxu0 %v215
      %336 = vmatpush1.msra.mxu0 %v214
      %337 = vmatprep.subr.mxu0 %v217
      %338 = vmatpush1.msra.mxu0 %v216
      %339 = vmatprep.subr.mxu0 %v219
      %340 = vmatpush1.msra.mxu0 %v218
      %341 = vmatprep.subr.mxu0 %v221
      %342 = vmatpush1.msra.mxu0 %v220
      %343 = vmatprep.subr.mxu0 %v223
      %344 = vmatpush1.msra.mxu0 %v222
      %345 = vmatprep.subr.mxu0 %v225
      %346 = vmatpush1.msra.mxu0 %v224
      %347 = vmatprep.subr.mxu0 %v227
      %348 = vmatpush1.msra.mxu0 %v226
      %349 = vmatprep.subr.mxu0 %v229
      %350 = vmatpush1.msra.mxu0 %v228
      %351 = vmatprep.subr.mxu0 %v231
      %352 = vmatpush1.msra.mxu0 %v230
      %353 = vmatprep.subr.mxu0 %v233
      %354 = vmatpush1.msra.mxu0 %v232
      %355 = vmatprep.subr.mxu0 %v235
      %356 = vmatpush1.msra.mxu0 %v234
      %357 = vmatprep.subr.mxu0 %v237
      %358 = vmatpush1.msra.mxu0 %v236
      %359 = vmatprep.subr.mxu0 %v239
      %360 = vmatpush1.msra.mxu0 %v238
      %361 = vmatprep.subr.mxu0 %v241
      %362 = vmatpush1.msra.mxu0 %v240
      %363 = vmatprep.subr.mxu0 %v243
      %364 = vmatpush1.msra.mxu0 %v242
      %365 = vmatprep.subr.mxu0 %v245
      %366 = vmatpush1.msra.mxu0 %v244
      %367 = vmatprep.subr.mxu0 %v247
      %368 = vmatpush1.msra.mxu0 %v246
      %369 = vmatprep.subr.mxu0 %v249
      %370 = vmatpush1.msra.mxu0 %v248
      %371 = vmatprep.subr.mxu0 %v251
      %372 = vmatpush1.msra.mxu0 %v250
      %373 = vmatprep.subr.mxu0 %v253
      %374 = vmatpush1.msra.mxu0 %v252
      %375 = vmatprep.subr.mxu0 %v255
      %376 = vmatpush1.msra.mxu0 %v254
      %377 = vmatprep.subr.mxu0 %v257
      %378 = vmatpush1.msra.mxu0 %v256
      %379 = vmatprep.subr.mxu0 %v259
      %380 = vmatpush1.msra.mxu0 %v258
      %381 = vmatprep.subr.mxu0 %v261
      %382 = vmatpush1.msra.mxu0 %v260
      %383 = vmatprep.subr.mxu0 %v263
      %384 = vmatpush1.msra.mxu0 %v262
      %385 = vmatprep.subr.mxu0 %v265
      %386 = vmatpush1.msra.mxu0 %v264
      %387 = vmatprep.subr.mxu0 %v267
      %388 = vmatpush1.msra.mxu0 %v266
      %389 = vmatprep.subr.mxu0 %v269
      %390 = vmatpush1.msra.mxu0 %v268
      %391 = vmatprep.subr.mxu0 %v271
      %392 = vmatpush1.msra.mxu0 %v270
      %393 = vmatprep.subr.mxu0 %v273
      %394 = vmatpush1.msra.mxu0 %v272
      %395 = vmatprep.mubr.f32.mxu0 %v283
      %396 = vmatmul.mubr.f32.gmra.mrb[0].mxu0 %v282
      %v397 = vpop.f32.mrb[0].mxu0
      %v398 = vadd.f32 %v301, %v397
      %v399 = vpop.f32.mrb[0].mxu0
      %v400 = vadd.f32 %v301, %v399
      %401 = vmatprep.mubr.f32.mxu0 %v286
      %402 = vmatmul.mubr.f32.gmra.mrb[0].mxu0 %v285
      %v403 = vpop.f32.mrb[0].mxu0
      %v404 = vadd.f32 %v306, %v403
      %v405 = vpop.f32.mrb[0].mxu0
      %v406 = vadd.f32 %v306, %v405
      %407 = vmatprep.mubr.f32.mxu0 %v289
      %408 = vmatmul.mubr.f32.gmra.mrb[0].mxu0 %v288
      %v409 = vpop.f32.mrb[0].mxu0
      %v410 = vadd.f32 %v311, %v409
      %v411 = vpop.f32.mrb[0].mxu0
      %v412 = vadd.f32 %v311, %v411
      %413 = vmatprep.mubr.f32.mxu0 %v292
      %414 = vmatmul.mubr.f32.gmra.mrb[0].mxu0 %v291
      %v415 = vpop.f32.mrb[0].mxu0
      %v416 = vadd.f32 %v316, %v415
      %v417 = vpop.f32.mrb[0].mxu0
      %v418 = vadd.f32 %v316, %v417
      %419 = vdwg.mxu0
      %420 = vmatprep.subr.mxu0 %v275
      %421 = vmatpush1.msra.mxu0 %v274
      %422 = vmatprep.subr.mxu0 %v277
      %423 = vmatpush1.msra.mxu0 %v276
      %424 = vmatprep.subr.mxu0 %v279
      %425 = vmatpush1.msra.mxu0 %v278
      %426 = vmatprep.subr.mxu0 %v281
      %427 = vmatpush1.msra.mxu0 %v280
      %428 = vmatprep.subr.mxu0 0.0
      %429 = vmatpush1.msra.mxu0 0.0
      %430 = vmatprep.subr.mxu0 0.0
      %431 = vmatpush1.msra.mxu0 0.0
      %432 = vmatprep.subr.mxu0 0.0
      %433 = vmatpush1.msra.mxu0 0.0
      %434 = vmatprep.subr.mxu0 0.0
      %435 = vmatpush1.msra.mxu0 0.0
      %436 = vmatprep.subr.mxu0 0.0
      %437 = vmatpush1.msra.mxu0 0.0
      %438 = vmatprep.subr.mxu0 0.0
      %439 = vmatpush1.msra.mxu0 0.0
      %440 = vmatprep.subr.mxu0 0.0
      %441 = vmatpush1.msra.mxu0 0.0
      %442 = vmatprep.subr.mxu0 0.0
      %443 = vmatpush1.msra.mxu0 0.0
      %444 = vmatprep.subr.mxu0 0.0
      %445 = vmatpush1.msra.mxu0 0.0
      %446 = vmatprep.subr.mxu0 0.0
      %447 = vmatpush1.msra.mxu0 0.0
      %448 = vmatprep.subr.mxu0 0.0
      %449 = vmatpush1.msra.mxu0 0.0
      %450 = vmatprep.subr.mxu0 0.0
      %451 = vmatpush1.msra.mxu0 0.0
      %452 = vmatprep.subr.mxu0 0.0
      %453 = vmatpush1.msra.mxu0 0.0
      %454 = vmatprep.subr.mxu0 0.0
      %455 = vmatpush1.msra.mxu0 0.0
      %456 = vmatprep.subr.mxu0 0.0
      %457 = vmatpush1.msra.mxu0 0.0
      %458 = vmatprep.subr.mxu0 0.0
      %459 = vmatpush1.msra.mxu0 0.0
      %460 = vmatprep.subr.mxu0 0.0
      %461 = vmatpush1.msra.mxu0 0.0
      %462 = vmatprep.subr.mxu0 0.0
      %463 = vmatpush1.msra.mxu0 0.0
      %464 = vmatprep.subr.mxu0 0.0
      %465 = vmatpush1.msra.mxu0 0.0
      %466 = vmatprep.subr.mxu0 0.0
      %467 = vmatpush1.msra.mxu0 0.0
      %468 = vmatprep.subr.mxu0 0.0
      %469 = vmatpush1.msra.mxu0 0.0
      %470 = vmatprep.subr.mxu0 0.0
      %471 = vmatpush1.msra.mxu0 0.0
      %472 = vmatprep.subr.mxu0 0.0
      %473 = vmatpush1.msra.mxu0 0.0
      %474 = vmatprep.subr.mxu0 0.0
      %475 = vmatpush1.msra.mxu0 0.0
      %476 = vmatprep.subr.mxu0 0.0
      %477 = vmatpush1.msra.mxu0 0.0
      %478 = vmatprep.subr.mxu0 0.0
      %479 = vmatpush1.msra.mxu0 0.0
      %480 = vmatprep.subr.mxu0 0.0
      %481 = vmatpush1.msra.mxu0 0.0
      %482 = vmatprep.subr.mxu0 0.0
      %483 = vmatpush1.msra.mxu0 0.0
      %484 = vmatprep.mubr.f32.mxu0 0.0
      %485 = vmatmul.mubr.f32.gmra.mrb[0].mxu0 %v320
      %v486 = vpop.f32.mrb[0].mxu0
      %v487 = vadd.f32 %v398, %v486
      %v488 = vpop.f32.mrb[0].mxu0
      %v489 = vadd.f32 %v400, %v488
      %490 = vmatprep.mubr.f32.mxu0 0.0
      %491 = vmatmul.mubr.f32.gmra.mrb[0].mxu0 %v323
      %v492 = vpop.f32.mrb[0].mxu0
      %v493 = vadd.f32 %v404, %v492
      %v494 = vpop.f32.mrb[0].mxu0
      %v495 = vadd.f32 %v406, %v494
      %496 = vmatprep.mubr.f32.mxu0 0.0
      %497 = vmatmul.mubr.f32.gmra.mrb[0].mxu0 %v326
      %v498 = vpop.f32.mrb[0].mxu0
      %v499 = vadd.f32 %v410, %v498
      %v500 = vpop.f32.mrb[0].mxu0
      %v501 = vadd.f32 %v412, %v500
      %502 = vmatprep.mubr.f32.mxu0 0.0
      %503 = vmatmul.mubr.f32.gmra.mrb[0].mxu0 %v329
      %v504 = vpop.f32.mrb[0].mxu0
      %v505 = vadd.f32 %v416, %v504
      %v506 = vpop.f32.mrb[0].mxu0
      %v507 = vadd.f32 %v418, %v506
      %508 = vdwg.mxu0
      %509 = vst [vmem:[%s208] sm:$0xff] %v487
      %510 = vst [vmem:[%s208 + $0x8] sm:$0xff] %v489
      %511 = vst [vmem:[%s208 + $0x10] sm:$0xff] %v493
      %512 = vst [vmem:[%s208 + $0x18] sm:$0xff] %v495
      %513 = vst [vmem:[%s208 + $0x20] sm:$0xff] %v499
      %514 = vst [vmem:[%s208 + $0x28] sm:$0xff] %v501
      %515 = vst [vmem:[%s208 + $0x30] sm:$0xff] %v505
      %516 = vst [vmem:[%s208 + $0x38] sm:$0xff] %v507
      %s517 = smul.u32 2, %s19
      %p518 = scmp.lt.s32.totalorder %s18, 1
      %s519 = scalar_select %p518, %s18, 1
      %p520 = scmp.lt.s32.totalorder %s517, 1
      %s521 = scalar_select %p520, %s517, 1
      %s522 = smul.addr %s519, 8
      %s523 = sadd.s32 %s521, %s522
      %s524 = smul.addr %s523, 8
      %s525 = scalar_lea.vmem %s3, %s524
      // Predicated region
      $region33: #{drp2_forward.16} parent=31 // pred_check
        %p526 = pneg %p116
      $region34: #{drp2_forward.16} parent=31 // pred_check_branch
        %528 = sbr.rel (%p526) target = $region36
      $region35: #{drp2_forward.16} parent=31 // pred_region
        %s529 = smul.u32 2, %s19
      $region36: #{drp2_forward.16} parent=31 // pred_fallthru
        _
    $region32: #{drp2_forward.16} parent=5 // pred_fallthru
      _
    %p530 = scmp.le.s32.totalorder 2, %s9
    // Predicated region
    $region37: #{drp2_forward.16} parent=5 // pred_check
      %p531 = pneg %p530
    $region38: #{drp2_forward.16} parent=5 // pred_check_branch
      %533 = sbr.rel (%p531) target = $region40
    $region39: #{drp2_forward.16} parent=5 // pred_region
      %s534 = ssub.s32 %s9, 2
      // Predicated region
      $region41: #{drp2_forward.16} parent=39 // pred_check
        %p535 = pneg %p122
      $region42: #{drp2_forward.16} parent=39 // pred_check_branch
        %537 = sbr.rel (%p535) target = $region44
      $region43: #{drp2_forward.16} parent=39 // pred_region
        %s538 = smul.u32 2, %s21
        %p539 = scmp.lt.s32.totalorder %s20, 1
        %s540 = scalar_select %p539, %s20, 1
        %p541 = scmp.lt.s32.totalorder %s538, 1
        %s542 = scalar_select %p541, %s538, 1
        %s543 = smul.addr %s540, 8
        %s544 = sadd.s32 %s542, %s543
        %s545 = smul.addr %s544, 8
        %s546 = scalar_lea.vmem %s3, %s545
      $region44: #{drp2_forward.16} parent=39 // pred_fallthru
        _
    $region40: #{drp2_forward.16} parent=5 // pred_fallthru
      _
  $region6: #{drp2_forward.16} parent=0 // loop_footer
    %s13 = sadd.s32 1, %s9
  $region7: #{drp2_forward.16} parent=0 // loop_footer_branch
    %8 = sbr.rel target = $region3
  $region8: #{drp2_forward.16} parent=0 // loop_exit
    _

// kernel: drp2_forward.17
$region0: #{drp2_forward.17}
  #allocation0 [shape = 'u32[]', space=smem, size = 0x4, offset = 0x4, fixed_abs, tag = 'smem constant byte address 0x4 - core index']
  #allocation1 [shape = 'u32[144,128]{1,0:T(1,128)}', space=vmem, size = 0x12000, scoped, tag = 'internal scratch']
  %s0 = inlined_call_operand.vmem [shape: f32[2,288,256], index: 0, kind: input, shape index: {}]
  %s1 = inlined_call_operand.vmem [shape: f32[32,288], index: 1, kind: input, shape index: {}]
  %s2 = inlined_call_operand.vmem [shape: f32[32,1], index: 2, kind: input, shape index: {}]
  %s3 = inlined_call_operand.vmem [shape: f32[2,32,256], index: 3, kind: output, shape index: {}]
  %s4 = sld [smem:[#allocation0]]
  $region45: #{drp2_forward.17} parent=0
    _
  %s6 = ssub.s32 1, %s4
  %s7 = scalar_select 0, %s6, %s4
  loop: start=0, step=1, limit=4
  $region2: #{drp2_forward.17} parent=0 // loop_pre_header
    _
  $region3: #{drp2_forward.17} parent=0 // loop_header
    %s9 = sphi 0, %s13
    %p10 = scmp.ge.s32.totalorder %s9, 4
    %s16 = sphi 0, %s28
    %s17 = sphi 0, %s24
    %s18 = sphi 0, %s16
    %s19 = sphi 0, %s17
    %s20 = sphi 0, %s18
    %s21 = sphi 0, %s19
    %s33 = sphi 0, %s35
    %s36 = sphi 0, %s33
    %s37 = sphi 0, %s36
    %s53 = sphi 0, %s37
    %s57 = sphi 0, %s57
    %s59 = sphi 0, %s57
    %s60 = sphi 0, %s59
    %s74 = sphi 0, %s60
    %s78 = sphi 0, %s78
    %s80 = sphi 0, %s78
    %s81 = sphi 0, %s80
    %s95 = sphi 0, %s81
    %s103 = sphi 0, %s105
    %s106 = sphi 0, %s103
    %s107 = sphi 0, %s106
    %s123 = sphi 0, %s107
  $region4: #{drp2_forward.17} parent=0 // loop_header_branch
    %12 = sbr.rel (%p10) target = $region8
  $region5: #{drp2_forward.17} parent=0 // loop_body
    %s14 = ssub.s32 %s9, 1
    %s15 = ssub.s32 %s9, 2
    %s22 = sadd.s32 1, %s17
    %p23 = scmp.ge.s32.totalorder %s22, 1
    %s24 = scalar_select %p23, 0, %s22
    %s25 = sadd.s32 1, %s16
    %s26 = scalar_select %p23, %s25, %s16
    %p27 = scmp.ge.s32.totalorder %s26, 2
    %s28 = scalar_select %p27, 0, %s26
    %s29 = ssub.s32 %s16, %s28
    %s30 = ssub.s32 %s17, %s24
    %s31 = sor.u32 %s29, %s30
    %p32 = scmp.eq.s32.totalorder %s31, 0
    %s34 = sadd.s32 %s33, 1
    %s35 = scalar_select %p32, %s33, %s34
    %p38 = pneg %p32
    %p39 = scmp.eq.s32.totalorder %s9, 1
    %p40 = por %p38, %p39
    %p41 = scmp.ne.s32.totalorder %s33, %s36
    %p42 = scmp.eq.s32.totalorder %s9, 0
    %p43 = por %p41, %p42
    %p44 = scmp.ne.s32.totalorder %s33, %s36
    %p45 = scmp.eq.s32.totalorder %s14, 1
    %p46 = por %p44, %p45
    %p47 = scmp.ne.s32.totalorder %s36, %s37
    %p48 = scmp.eq.s32.totalorder %s14, 0
    %p49 = por %p47, %p48
    %p50 = scmp.ne.s32.totalorder %s36, %s37
    %p51 = scmp.eq.s32.totalorder %s15, 1
    %p52 = por %p50, %p51
    %p54 = scmp.ne.s32.totalorder %s37, %s53
    %p55 = scmp.eq.s32.totalorder %s15, 0
    %p56 = por %p54, %p55
    %s58 = sadd.s32 %s57, 1
    %p61 = scmp.eq.s32.totalorder %s9, 1
    %p62 = scmp.ne.s32.totalorder %s57, %s59
    %p63 = scmp.eq.s32.totalorder %s9, 0
    %p64 = por %p62, %p63
    %p65 = scmp.ne.s32.totalorder %s57, %s59
    %p66 = scmp.eq.s32.totalorder %s14, 1
    %p67 = por %p65, %p66
    %p68 = scmp.ne.s32.totalorder %s59, %s60
    %p69 = scmp.eq.s32.totalorder %s14, 0
    %p70 = por %p68, %p69
    %p71 = scmp.ne.s32.totalorder %s59, %s60
    %p72 = scmp.eq.s32.totalorder %s15, 1
    %p73 = por %p71, %p72
    %p75 = scmp.ne.s32.totalorder %s60, %s74
    %p76 = scmp.eq.s32.totalorder %s15, 0
    %p77 = por %p75, %p76
    %s79 = sadd.s32 %s78, 1
    %p82 = scmp.eq.s32.totalorder %s9, 1
    %p83 = scmp.ne.s32.totalorder %s78, %s80
    %p84 = scmp.eq.s32.totalorder %s9, 0
    %p85 = por %p83, %p84
    %p86 = scmp.ne.s32.totalorder %s78, %s80
    %p87 = scmp.eq.s32.totalorder %s14, 1
    %p88 = por %p86, %p87
    %p89 = scmp.ne.s32.totalorder %s80, %s81
    %p90 = scmp.eq.s32.totalorder %s14, 0
    %p91 = por %p89, %p90
    %p92 = scmp.ne.s32.totalorder %s80, %s81
    %p93 = scmp.eq.s32.totalorder %s15, 1
    %p94 = por %p92, %p93
    %p96 = scmp.ne.s32.totalorder %s81, %s95
    %p97 = scmp.eq.s32.totalorder %s15, 0
    %p98 = por %p96, %p97
    %s99 = ssub.s32 %s16, %s28
    %s100 = ssub.s32 %s17, %s24
    %s101 = sor.u32 %s99, %s100
    %p102 = scmp.eq.s32.totalorder %s101, 0
    %s104 = sadd.s32 %s103, 1
    %s105 = scalar_select %p102, %s103, %s104
    %p108 = pneg %p102
    %p109 = scmp.eq.s32.totalorder %s9, 1
    %p110 = por %p108, %p109
    %p111 = scmp.ne.s32.totalorder %s103, %s106
    %p112 = scmp.eq.s32.totalorder %s9, 0
    %p113 = por %p111, %p112
    %p114 = scmp.ne.s32.totalorder %s103, %s106
    %p115 = scmp.eq.s32.totalorder %s14, 1
    %p116 = por %p114, %p115
    %p117 = scmp.ne.s32.totalorder %s106, %s107
    %p118 = scmp.eq.s32.totalorder %s14, 0
    %p119 = por %p117, %p118
    %p120 = scmp.ne.s32.totalorder %s106, %s107
    %p121 = scmp.eq.s32.totalorder %s15, 1
    %p122 = por %p120, %p121
    %p124 = scmp.ne.s32.totalorder %s107, %s123
    %p125 = scmp.eq.s32.totalorder %s15, 0
    %p126 = por %p124, %p125
    %p127 = scmp.le.s32.totalorder 1, %s9
    %p128 = scmp.lt.s32.totalorder %s9, 3
    %p129 = pnand %p127, %p128
    %p130 = pneg %p129
    // Predicated region
    $region9: #{drp2_forward.17} parent=5 // pred_check
      _
    $region10: #{drp2_forward.17} parent=5 // pred_check_branch
      %132 = sbr.rel (%p129) target = $region12
    $region11: #{drp2_forward.17} parent=5 // pred_region
      %s133 = ssub.s32 %s9, 1
      // Predicated region
      $region13: #{drp2_forward.17} parent=11 // pred_check
        %p134 = pneg %p70
      $region14: #{drp2_forward.17} parent=11 // pred_check_branch
        %136 = sbr.rel (%p134) target = $region16
      $region15: #{drp2_forward.17} parent=11 // pred_region
        _
      $region16: #{drp2_forward.17} parent=11 // pred_fallthru
        _
      // Predicated region
      $region17: #{drp2_forward.17} parent=11 // pred_check
        %p137 = pneg %p91
      $region18: #{drp2_forward.17} parent=11 // pred_check_branch
        %139 = sbr.rel (%p137) target = $region20
      $region19: #{drp2_forward.17} parent=11 // pred_region
        _
      $region20: #{drp2_forward.17} parent=11 // pred_fallthru
        _
    $region12: #{drp2_forward.17} parent=5 // pred_fallthru
      _
    %p140 = scmp.lt.s32.totalorder %s9, 2
    // Predicated region
    $region21: #{drp2_forward.17} parent=5 // pred_check
      %p141 = pneg %p140
    $region22: #{drp2_forward.17} parent=5 // pred_check_branch
      %143 = sbr.rel (%p141) target = $region24
    $region23: #{drp2_forward.17} parent=5 // pred_region
      // Predicated region
      $region25: #{drp2_forward.17} parent=23 // pred_check
        %p144 = pneg %p43
      $region26: #{drp2_forward.17} parent=23 // pred_check_branch
        %146 = sbr.rel (%p144) target = $region28
      $region27: #{drp2_forward.17} parent=23 // pred_region
        %s147 = smul.u32 2, %s17
        %p148 = scmp.lt.s32.totalorder %s16, 1
        %s149 = scalar_select %p148, %s16, 1
        %p150 = scmp.lt.s32.totalorder %s147, 1
        %s151 = scalar_select %p150, %s147, 1
        %s152 = smul.addr %s149, 72
        %s153 = sadd.s32 %s151, %s152
        %s154 = smul.addr %s153, 8
        %s155 = scalar_lea.vmem %s0, %s154
        %s156 = smul.u32 2, %s17
      $region28: #{drp2_forward.17} parent=23 // pred_fallthru
        _
    $region24: #{drp2_forward.17} parent=5 // pred_fallthru
      _
    %p157 = scmp.le.s32.totalorder 1, %s9
    %p158 = scmp.lt.s32.totalorder %s9, 3
    %p159 = pnand %p157, %p158
    %p160 = pneg %p159
    // Predicated region
    $region29: #{drp2_forward.17} parent=5 // pred_check
      _
    $region30: #{drp2_forward.17} parent=5 // pred_check_branch
      %162 = sbr.rel (%p159) target = $region32
    $region31: #{drp2_forward.17} parent=5 // pred_region
      %s163 = ssub.s32 %s9, 1
      %s164 = smul.u32 2, %s19
      %p165 = scmp.lt.s32.totalorder %s18, 1
      %s166 = scalar_select %p165, %s18, 1
      %p167 = scmp.lt.s32.totalorder %s164, 1
      %s168 = scalar_select %p167, %s164, 1
      %s169 = smul.addr %s166, 72
      %s170 = sadd.s32 %s168, %s169
      %s171 = smul.addr %s170, 8
      %s172 = scalar_lea.vmem %s0, %s171
      %p173 = pneg %p49
      %p174 = pneg %p46
      %p175 = pneg %p70
      %p176 = pneg %p67
      %p177 = pneg %p91
      %p178 = pneg %p88
      %p179 = pneg %p119
      %p180 = pneg %p116
      %s181 = smul.u32 2, %s19
      %p182 = scmp.lt.s32.totalorder %s18, 1
      %s183 = scalar_select %p182, %s18, 1
      %p184 = scmp.lt.s32.totalorder %s181, 1
      %s185 = scalar_select %p184, %s181, 1
      %s186 = smul.addr %s183, 8
      %s187 = sadd.s32 %s185, %s186
      %s188 = smul.addr %s187, 8
      %s189 = scalar_lea.vmem %s3, %s188
      %s190 = smul.u32 2, %s19
      %p191 = scmp.lt.s32.totalorder %s18, 1
      %s192 = scalar_select %p191, %s18, 1
      %p193 = scmp.lt.s32.totalorder %s190, 1
      %s194 = scalar_select %p193, %s190, 1
      %s195 = smul.addr %s192, 72
      %s196 = sadd.s32 %s194, %s195
      %s197 = smul.addr %s196, 8
      %s198 = scalar_lea.vmem %s0, %s197
      %s199 = smul.u32 2, %s19
      %s200 = smul.u32 2, %s19
      %p201 = scmp.lt.s32.totalorder %s18, 1
      %s202 = scalar_select %p201, %s18, 1
      %p203 = scmp.lt.s32.totalorder %s200, 1
      %s204 = scalar_select %p203, %s200, 1
      %s205 = smul.addr %s202, 8
      %s206 = sadd.s32 %s204, %s205
      %s207 = smul.addr %s206, 8
      %s208 = scalar_lea.vmem %s3, %s207
      %s209 = smul.u32 2, %s19
      %v210 = vld [vmem:[%s198] sm:$0xff]
      %v211 = vld [vmem:[%s198 + $0x8] sm:$0xff]
      %v212 = vld [vmem:[%s198 + $0x10] sm:$0xff]
      %v213 = vld [vmem:[%s198 + $0x18] sm:$0xff]
      %v214 = vld [vmem:[%s198 + $0x20] sm:$0xff]
      %v215 = vld [vmem:[%s198 + $0x28] sm:$0xff]
      %v216 = vld [vmem:[%s198 + $0x30] sm:$0xff]
      %v217 = vld [vmem:[%s198 + $0x38] sm:$0xff]
      %v218 = vld [vmem:[%s198 + $0x40] sm:$0xff]
      %v219 = vld [vmem:[%s198 + $0x48] sm:$0xff]
      %v220 = vld [vmem:[%s198 + $0x50] sm:$0xff]
      %v221 = vld [vmem:[%s198 + $0x58] sm:$0xff]
      %v222 = vld [vmem:[%s198 + $0x60] sm:$0xff]
      %v223 = vld [vmem:[%s198 + $0x68] sm:$0xff]
      %v224 = vld [vmem:[%s198 + $0x70] sm:$0xff]
      %v225 = vld [vmem:[%s198 + $0x78] sm:$0xff]
      %v226 = vld [vmem:[%s198 + $0x80] sm:$0xff]
      %v227 = vld [vmem:[%s198 + $0x88] sm:$0xff]
      %v228 = vld [vmem:[%s198 + $0x90] sm:$0xff]
      %v229 = vld [vmem:[%s198 + $0x98] sm:$0xff]
      %v230 = vld [vmem:[%s198 + $0xa0] sm:$0xff]
      %v231 = vld [vmem:[%s198 + $0xa8] sm:$0xff]
      %v232 = vld [vmem:[%s198 + $0xb0] sm:$0xff]
      %v233 = vld [vmem:[%s198 + $0xb8] sm:$0xff]
      %v234 = vld [vmem:[%s198 + $0xc0] sm:$0xff]
      %v235 = vld [vmem:[%s198 + $0xc8] sm:$0xff]
      %v236 = vld [vmem:[%s198 + $0xd0] sm:$0xff]
      %v237 = vld [vmem:[%s198 + $0xd8] sm:$0xff]
      %v238 = vld [vmem:[%s198 + $0xe0] sm:$0xff]
      %v239 = vld [vmem:[%s198 + $0xe8] sm:$0xff]
      %v240 = vld [vmem:[%s198 + $0xf0] sm:$0xff]
      %v241 = vld [vmem:[%s198 + $0xf8] sm:$0xff]
      %v242 = vld [vmem:[%s198 + $0x100] sm:$0xff]
      %v243 = vld [vmem:[%s198 + $0x108] sm:$0xff]
      %v244 = vld [vmem:[%s198 + $0x110] sm:$0xff]
      %v245 = vld [vmem:[%s198 + $0x118] sm:$0xff]
      %v246 = vld [vmem:[%s198 + $0x120] sm:$0xff]
      %v247 = vld [vmem:[%s198 + $0x128] sm:$0xff]
      %v248 = vld [vmem:[%s198 + $0x130] sm:$0xff]
      %v249 = vld [vmem:[%s198 + $0x138] sm:$0xff]
      %v250 = vld [vmem:[%s198 + $0x140] sm:$0xff]
      %v251 = vld [vmem:[%s198 + $0x148] sm:$0xff]
      %v252 = vld [vmem:[%s198 + $0x150] sm:$0xff]
      %v253 = vld [vmem:[%s198 + $0x158] sm:$0xff]
      %v254 = vld [vmem:[%s198 + $0x160] sm:$0xff]
      %v255 = vld [vmem:[%s198 + $0x168] sm:$0xff]
      %v256 = vld [vmem:[%s198 + $0x170] sm:$0xff]
      %v257 = vld [vmem:[%s198 + $0x178] sm:$0xff]
      %v258 = vld [vmem:[%s198 + $0x180] sm:$0xff]
      %v259 = vld [vmem:[%s198 + $0x188] sm:$0xff]
      %v260 = vld [vmem:[%s198 + $0x190] sm:$0xff]
      %v261 = vld [vmem:[%s198 + $0x198] sm:$0xff]
      %v262 = vld [vmem:[%s198 + $0x1a0] sm:$0xff]
      %v263 = vld [vmem:[%s198 + $0x1a8] sm:$0xff]
      %v264 = vld [vmem:[%s198 + $0x1b0] sm:$0xff]
      %v265 = vld [vmem:[%s198 + $0x1b8] sm:$0xff]
      %v266 = vld [vmem:[%s198 + $0x1c0] sm:$0xff]
      %v267 = vld [vmem:[%s198 + $0x1c8] sm:$0xff]
      %v268 = vld [vmem:[%s198 + $0x1d0] sm:$0xff]
      %v269 = vld [vmem:[%s198 + $0x1d8] sm:$0xff]
      %v270 = vld [vmem:[%s198 + $0x1e0] sm:$0xff]
      %v271 = vld [vmem:[%s198 + $0x1e8] sm:$0xff]
      %v272 = vld [vmem:[%s198 + $0x1f0] sm:$0xff]
      %v273 = vld [vmem:[%s198 + $0x1f8] sm:$0xff]
      %v274 = vld [vmem:[%s198 + $0x200] sm:$0xff]
      %v275 = vld [vmem:[%s198 + $0x208] sm:$0xff]
      %v276 = vld [vmem:[%s198 + $0x210] sm:$0xff]
      %v277 = vld [vmem:[%s198 + $0x218] sm:$0xff]
      %v278 = vld [vmem:[%s198 + $0x220] sm:$0xff]
      %v279 = vld [vmem:[%s198 + $0x228] sm:$0xff]
      %v280 = vld [vmem:[%s198 + $0x230] sm:$0xff]
      %v281 = vld [vmem:[%s198 + $0x238] sm:$0xff]
      %v282 = vld [vmem:[%s1] sm:$0xff]
      %v283 = vld [vmem:[%s1 + $0x8] sm:$0xff]
      %v284 = vld [vmem:[%s1 + $0x10] sm:$0xff]
      %v285 = vld [vmem:[%s1 + $0x18] sm:$0xff]
      %v286 = vld [vmem:[%s1 + $0x20] sm:$0xff]
      %v287 = vld [vmem:[%s1 + $0x28] sm:$0xff]
      %v288 = vld [vmem:[%s1 + $0x30] sm:$0xff]
      %v289 = vld [vmem:[%s1 + $0x38] sm:$0xff]
      %v290 = vld [vmem:[%s1 + $0x40] sm:$0xff]
      %v291 = vld [vmem:[%s1 + $0x48] sm:$0xff]
      %v292 = vld [vmem:[%s1 + $0x50] sm:$0xff]
      %v293 = vld [vmem:[%s1 + $0x58] sm:$0xff]
      %v294 = vld [vmem:[%s2] sm:$0xff]
      %v295 = vld [vmem:[%s2 + $0x8] sm:$0xff]
      %v296 = vld [vmem:[%s2 + $0x10] sm:$0xff]
      %v297 = vld [vmem:[%s2 + $0x18] sm:$0xff]
      %299 = vset.pattern.permute.xlu0 0
      %300 = vperm.xlu0 %299, %v294
      %v301 = vpop.permute.xlu0 %300
      %304 = vset.pattern.permute.xlu0 0
      %305 = vperm.xlu0 %304, %v295
      %v306 = vpop.permute.xlu0 %305
      %309 = vset.pattern.permute.xlu0 0
      %310 = vperm.xlu0 %309, %v296
      %v311 = vpop.permute.xlu0 %310
      %314 = vset.pattern.permute.xlu0 0
      %315 = vperm.xlu0 %314, %v297
      %v316 = vpop.permute.xlu0 %315
      %vm318 = vcmask 261120
      %v320 = vsel %vm318, %v284, 0
      %v323 = vsel %vm318, %v287, 0
      %v326 = vsel %vm318, %v290, 0
      %v329 = vsel %vm318, %v293, 0
      %331 = vmatprep.subr.mxu0 %v211
      %332 = vmatpush1.msra.mxu0 %v210
      %333 = vmatprep.subr.mxu0 %v213
      %334 = vmatpush1.msra.mxu0 %v212
      %335 = vmatprep.subr.mxu0 %v215
      %336 = vmatpush1.msra.mxu0 %v214
      %337 = vmatprep.subr.mxu0 %v217
      %338 = vmatpush1.msra.mxu0 %v216
      %339 = vmatprep.subr.mxu0 %v219
      %340 = vmatpush1.msra.mxu0 %v218
      %341 = vmatprep.subr.mxu0 %v221
      %342 = vmatpush1.msra.mxu0 %v220
      %343 = vmatprep.subr.mxu0 %v223
      %344 = vmatpush1.msra.mxu0 %v222
      %345 = vmatprep.subr.mxu0 %v225
      %346 = vmatpush1.msra.mxu0 %v224
      %347 = vmatprep.subr.mxu0 %v227
      %348 = vmatpush1.msra.mxu0 %v226
      %349 = vmatprep.subr.mxu0 %v229
      %350 = vmatpush1.msra.mxu0 %v228
      %351 = vmatprep.subr.mxu0 %v231
      %352 = vmatpush1.msra.mxu0 %v230
      %353 = vmatprep.subr.mxu0 %v233
      %354 = vmatpush1.msra.mxu0 %v232
      %355 = vmatprep.subr.mxu0 %v235
      %356 = vmatpush1.msra.mxu0 %v234
      %357 = vmatprep.subr.mxu0 %v237
      %358 = vmatpush1.msra.mxu0 %v236
      %359 = vmatprep.subr.mxu0 %v239
      %360 = vmatpush1.msra.mxu0 %v238
      %361 = vmatprep.subr.mxu0 %v241
      %362 = vmatpush1.msra.mxu0 %v240
      %363 = vmatprep.subr.mxu0 %v243
      %364 = vmatpush1.msra.mxu0 %v242
      %365 = vmatprep.subr.mxu0 %v245
      %366 = vmatpush1.msra.mxu0 %v244
      %367 = vmatprep.subr.mxu0 %v247
      %368 = vmatpush1.msra.mxu0 %v246
      %369 = vmatprep.subr.mxu0 %v249
      %370 = vmatpush1.msra.mxu0 %v248
      %371 = vmatprep.subr.mxu0 %v251
      %372 = vmatpush1.msra.mxu0 %v250
      %373 = vmatprep.subr.mxu0 %v253
      %374 = vmatpush1.msra.mxu0 %v252
      %375 = vmatprep.subr.mxu0 %v255
      %376 = vmatpush1.msra.mxu0 %v254
      %377 = vmatprep.subr.mxu0 %v257
      %378 = vmatpush1.msra.mxu0 %v256
      %379 = vmatprep.subr.mxu0 %v259
      %380 = vmatpush1.msra.mxu0 %v258
      %381 = vmatprep.subr.mxu0 %v261
      %382 = vmatpush1.msra.mxu0 %v260
      %383 = vmatprep.subr.mxu0 %v263
      %384 = vmatpush1.msra.mxu0 %v262
      %385 = vmatprep.subr.mxu0 %v265
      %386 = vmatpush1.msra.mxu0 %v264
      %387 = vmatprep.subr.mxu0 %v267
      %388 = vmatpush1.msra.mxu0 %v266
      %389 = vmatprep.subr.mxu0 %v269
      %390 = vmatpush1.msra.mxu0 %v268
      %391 = vmatprep.subr.mxu0 %v271
      %392 = vmatpush1.msra.mxu0 %v270
      %393 = vmatprep.subr.mxu0 %v273
      %394 = vmatpush1.msra.mxu0 %v272
      %395 = vmatprep.mubr.f32.mxu0 %v283
      %396 = vmatmul.mubr.f32.gmra.mrb[0].mxu0 %v282
      %v397 = vpop.f32.mrb[0].mxu0
      %v398 = vadd.f32 %v301, %v397
      %v399 = vpop.f32.mrb[0].mxu0
      %v400 = vadd.f32 %v301, %v399
      %401 = vmatprep.mubr.f32.mxu0 %v286
      %402 = vmatmul.mubr.f32.gmra.mrb[0].mxu0 %v285
      %v403 = vpop.f32.mrb[0].mxu0
      %v404 = vadd.f32 %v306, %v403
      %v405 = vpop.f32.mrb[0].mxu0
      %v406 = vadd.f32 %v306, %v405
      %407 = vmatprep.mubr.f32.mxu0 %v289
      %408 = vmatmul.mubr.f32.gmra.mrb[0].mxu0 %v288
      %v409 = vpop.f32.mrb[0].mxu0
      %v410 = vadd.f32 %v311, %v409
      %v411 = vpop.f32.mrb[0].mxu0
      %v412 = vadd.f32 %v311, %v411
      %413 = vmatprep.mubr.f32.mxu0 %v292
      %414 = vmatmul.mubr.f32.gmra.mrb[0].mxu0 %v291
      %v415 = vpop.f32.mrb[0].mxu0
      %v416 = vadd.f32 %v316, %v415
      %v417 = vpop.f32.mrb[0].mxu0
      %v418 = vadd.f32 %v316, %v417
      %419 = vdwg.mxu0
      %420 = vmatprep.subr.mxu0 %v275
      %421 = vmatpush1.msra.mxu0 %v274
      %422 = vmatprep.subr.mxu0 %v277
      %423 = vmatpush1.msra.mxu0 %v276
      %424 = vmatprep.subr.mxu0 %v279
      %425 = vmatpush1.msra.mxu0 %v278
      %426 = vmatprep.subr.mxu0 %v281
      %427 = vmatpush1.msra.mxu0 %v280
      %428 = vmatprep.subr.mxu0 0.0
      %429 = vmatpush1.msra.mxu0 0.0
      %430 = vmatprep.subr.mxu0 0.0
      %431 = vmatpush1.msra.mxu0 0.0
      %432 = vmatprep.subr.mxu0 0.0
      %433 = vmatpush1.msra.mxu0 0.0
      %434 = vmatprep.subr.mxu0 0.0
      %435 = vmatpush1.msra.mxu0 0.0
      %436 = vmatprep.subr.mxu0 0.0
      %437 = vmatpush1.msra.mxu0 0.0
      %438 = vmatprep.subr.mxu0 0.0
      %439 = vmatpush1.msra.mxu0 0.0
      %440 = vmatprep.subr.mxu0 0.0
      %441 = vmatpush1.msra.mxu0 0.0
      %442 = vmatprep.subr.mxu0 0.0
      %443 = vmatpush1.msra.mxu0 0.0
      %444 = vmatprep.subr.mxu0 0.0
      %445 = vmatpush1.msra.mxu0 0.0
      %446 = vmatprep.subr.mxu0 0.0
      %447 = vmatpush1.msra.mxu0 0.0
      %448 = vmatprep.subr.mxu0 0.0
      %449 = vmatpush1.msra.mxu0 0.0
      %450 = vmatprep.subr.mxu0 0.0
      %451 = vmatpush1.msra.mxu0 0.0
      %452 = vmatprep.subr.mxu0 0.0
      %453 = vmatpush1.msra.mxu0 0.0
      %454 = vmatprep.subr.mxu0 0.0
      %455 = vmatpush1.msra.mxu0 0.0
      %456 = vmatprep.subr.mxu0 0.0
      %457 = vmatpush1.msra.mxu0 0.0
      %458 = vmatprep.subr.mxu0 0.0
      %459 = vmatpush1.msra.mxu0 0.0
      %460 = vmatprep.subr.mxu0 0.0
      %461 = vmatpush1.msra.mxu0 0.0
      %462 = vmatprep.subr.mxu0 0.0
      %463 = vmatpush1.msra.mxu0 0.0
      %464 = vmatprep.subr.mxu0 0.0
      %465 = vmatpush1.msra.mxu0 0.0
      %466 = vmatprep.subr.mxu0 0.0
      %467 = vmatpush1.msra.mxu0 0.0
      %468 = vmatprep.subr.mxu0 0.0
      %469 = vmatpush1.msra.mxu0 0.0
      %470 = vmatprep.subr.mxu0 0.0
      %471 = vmatpush1.msra.mxu0 0.0
      %472 = vmatprep.subr.mxu0 0.0
      %473 = vmatpush1.msra.mxu0 0.0
      %474 = vmatprep.subr.mxu0 0.0
      %475 = vmatpush1.msra.mxu0 0.0
      %476 = vmatprep.subr.mxu0 0.0
      %477 = vmatpush1.msra.mxu0 0.0
      %478 = vmatprep.subr.mxu0 0.0
      %479 = vmatpush1.msra.mxu0 0.0
      %480 = vmatprep.subr.mxu0 0.0
      %481 = vmatpush1.msra.mxu0 0.0
      %482 = vmatprep.subr.mxu0 0.0
      %483 = vmatpush1.msra.mxu0 0.0
      %484 = vmatprep.mubr.f32.mxu0 0.0
      %485 = vmatmul.mubr.f32.gmra.mrb[0].mxu0 %v320
      %v486 = vpop.f32.mrb[0].mxu0
      %v487 = vadd.f32 %v398, %v486
      %v488 = vpop.f32.mrb[0].mxu0
      %v489 = vadd.f32 %v400, %v488
      %490 = vmatprep.mubr.f32.mxu0 0.0
      %491 = vmatmul.mubr.f32.gmra.mrb[0].mxu0 %v323
      %v492 = vpop.f32.mrb[0].mxu0
      %v493 = vadd.f32 %v404, %v492
      %v494 = vpop.f32.mrb[0].mxu0
      %v495 = vadd.f32 %v406, %v494
      %496 = vmatprep.mubr.f32.mxu0 0.0
      %497 = vmatmul.mubr.f32.gmra.mrb[0].mxu0 %v326
      %v498 = vpop.f32.mrb[0].mxu0
      %v499 = vadd.f32 %v410, %v498
      %v500 = vpop.f32.mrb[0].mxu0
      %v501 = vadd.f32 %v412, %v500
      %502 = vmatprep.mubr.f32.mxu0 0.0
      %503 = vmatmul.mubr.f32.gmra.mrb[0].mxu0 %v329
      %v504 = vpop.f32.mrb[0].mxu0
      %v505 = vadd.f32 %v416, %v504
      %v506 = vpop.f32.mrb[0].mxu0
      %v507 = vadd.f32 %v418, %v506
      %508 = vdwg.mxu0
      %v509 = vmax.f32 %v487, 0.0
      %v510 = vmax.f32 %v489, 0.0
      %v511 = vmax.f32 %v493, 0.0
      %v512 = vmax.f32 %v495, 0.0
      %v513 = vmax.f32 %v499, 0.0
      %v514 = vmax.f32 %v501, 0.0
      %v515 = vmax.f32 %v505, 0.0
      %v516 = vmax.f32 %v507, 0.0
      %517 = vst [vmem:[%s208] sm:$0xff] %v509
      %518 = vst [vmem:[%s208 + $0x8] sm:$0xff] %v510
      %519 = vst [vmem:[%s208 + $0x10] sm:$0xff] %v511
      %520 = vst [vmem:[%s208 + $0x18] sm:$0xff] %v512
      %521 = vst [vmem:[%s208 + $0x20] sm:$0xff] %v513
      %522 = vst [vmem:[%s208 + $0x28] sm:$0xff] %v514
      %523 = vst [vmem:[%s208 + $0x30] sm:$0xff] %v515
      %524 = vst [vmem:[%s208 + $0x38] sm:$0xff] %v516
      %s525 = smul.u32 2, %s19
      %p526 = scmp.lt.s32.totalorder %s18, 1
      %s527 = scalar_select %p526, %s18, 1
      %p528 = scmp.lt.s32.totalorder %s525, 1
      %s529 = scalar_select %p528, %s525, 1
      %s530 = smul.addr %s527, 8
      %s531 = sadd.s32 %s529, %s530
      %s532 = smul.addr %s531, 8
      %s533 = scalar_lea.vmem %s3, %s532
      // Predicated region
      $region33: #{drp2_forward.17} parent=31 // pred_check
        %p534 = pneg %p116
      $region34: #{drp2_forward.17} parent=31 // pred_check_branch
        %536 = sbr.rel (%p534) target = $region36
      $region35: #{drp2_forward.17} parent=31 // pred_region
        %s537 = smul.u32 2, %s19
      $region36: #{drp2_forward.17} parent=31 // pred_fallthru
        _
    $region32: #{drp2_forward.17} parent=5 // pred_fallthru
      _
    %p538 = scmp.le.s32.totalorder 2, %s9
    // Predicated region
    $region37: #{drp2_forward.17} parent=5 // pred_check
      %p539 = pneg %p538
    $region38: #{drp2_forward.17} parent=5 // pred_check_branch
      %541 = sbr.rel (%p539) target = $region40
    $region39: #{drp2_forward.17} parent=5 // pred_region
      %s542 = ssub.s32 %s9, 2
      // Predicated region
      $region41: #{drp2_forward.17} parent=39 // pred_check
        %p543 = pneg %p122
      $region42: #{drp2_forward.17} parent=39 // pred_check_branch
        %545 = sbr.rel (%p543) target = $region44
      $region43: #{drp2_forward.17} parent=39 // pred_region
        %s546 = smul.u32 2, %s21
        %p547 = scmp.lt.s32.totalorder %s20, 1
        %s548 = scalar_select %p547, %s20, 1
        %p549 = scmp.lt.s32.totalorder %s546, 1
        %s550 = scalar_select %p549, %s546, 1
        %s551 = smul.addr %s548, 8
        %s552 = sadd.s32 %s550, %s551
        %s553 = smul.addr %s552, 8
        %s554 = scalar_lea.vmem %s3, %s553
      $region44: #{drp2_forward.17} parent=39 // pred_fallthru
        _
    $region40: #{drp2_forward.17} parent=5 // pred_fallthru
      _
  $region6: #{drp2_forward.17} parent=0 // loop_footer
    %s13 = sadd.s32 1, %s9
  $region7: #{drp2_forward.17} parent=0 // loop_footer_branch
    %8 = sbr.rel target = $region3
  $region8: #{drp2_forward.17} parent=0 // loop_exit
    _

// kernel: drp2_forward.21
$region0: #{drp2_forward.21}
  #allocation0 [shape = 'u32[]', space=smem, size = 0x4, offset = 0x4, fixed_abs, tag = 'smem constant byte address 0x4 - core index']
  #allocation1 [shape = 'u32[144,128]{1,0:T(1,128)}', space=vmem, size = 0x12000, scoped, tag = 'internal scratch']
  %s0 = inlined_call_operand.vmem [shape: f32[2,32,256], index: 0, kind: input, shape index: {}]
  %s1 = inlined_call_operand.vmem [shape: f32[32,32], index: 1, kind: input, shape index: {}]
  %s2 = inlined_call_operand.vmem [shape: f32[32,1], index: 2, kind: input, shape index: {}]
  %s3 = inlined_call_operand.vmem [shape: f32[2,32,256], index: 3, kind: output, shape index: {}]
  %s4 = sld [smem:[#allocation0]]
  $region45: #{drp2_forward.21} parent=0
    _
  %s6 = ssub.s32 1, %s4
  %s7 = scalar_select 0, %s6, %s4
  loop: start=0, step=1, limit=4
  $region2: #{drp2_forward.21} parent=0 // loop_pre_header
    _
  $region3: #{drp2_forward.21} parent=0 // loop_header
    %s9 = sphi 0, %s13
    %p10 = scmp.ge.s32.totalorder %s9, 4
    %s16 = sphi 0, %s28
    %s17 = sphi 0, %s24
    %s18 = sphi 0, %s16
    %s19 = sphi 0, %s17
    %s20 = sphi 0, %s18
    %s21 = sphi 0, %s19
    %s33 = sphi 0, %s35
    %s36 = sphi 0, %s33
    %s37 = sphi 0, %s36
    %s53 = sphi 0, %s37
    %s57 = sphi 0, %s57
    %s59 = sphi 0, %s57
    %s60 = sphi 0, %s59
    %s74 = sphi 0, %s60
    %s78 = sphi 0, %s78
    %s80 = sphi 0, %s78
    %s81 = sphi 0, %s80
    %s95 = sphi 0, %s81
    %s103 = sphi 0, %s105
    %s106 = sphi 0, %s103
    %s107 = sphi 0, %s106
    %s123 = sphi 0, %s107
  $region4: #{drp2_forward.21} parent=0 // loop_header_branch
    %12 = sbr.rel (%p10) target = $region8
  $region5: #{drp2_forward.21} parent=0 // loop_body
    %s14 = ssub.s32 %s9, 1
    %s15 = ssub.s32 %s9, 2
    %s22 = sadd.s32 1, %s17
    %p23 = scmp.ge.s32.totalorder %s22, 1
    %s24 = scalar_select %p23, 0, %s22
    %s25 = sadd.s32 1, %s16
    %s26 = scalar_select %p23, %s25, %s16
    %p27 = scmp.ge.s32.totalorder %s26, 2
    %s28 = scalar_select %p27, 0, %s26
    %s29 = ssub.s32 %s16, %s28
    %s30 = ssub.s32 %s17, %s24
    %s31 = sor.u32 %s29, %s30
    %p32 = scmp.eq.s32.totalorder %s31, 0
    %s34 = sadd.s32 %s33, 1
    %s35 = scalar_select %p32, %s33, %s34
    %p38 = pneg %p32
    %p39 = scmp.eq.s32.totalorder %s9, 1
    %p40 = por %p38, %p39
    %p41 = scmp.ne.s32.totalorder %s33, %s36
    %p42 = scmp.eq.s32.totalorder %s9, 0
    %p43 = por %p41, %p42
    %p44 = scmp.ne.s32.totalorder %s33, %s36
    %p45 = scmp.eq.s32.totalorder %s14, 1
    %p46 = por %p44, %p45
    %p47 = scmp.ne.s32.totalorder %s36, %s37
    %p48 = scmp.eq.s32.totalorder %s14, 0
    %p49 = por %p47, %p48
    %p50 = scmp.ne.s32.totalorder %s36, %s37
    %p51 = scmp.eq.s32.totalorder %s15, 1
    %p52 = por %p50, %p51
    %p54 = scmp.ne.s32.totalorder %s37, %s53
    %p55 = scmp.eq.s32.totalorder %s15, 0
    %p56 = por %p54, %p55
    %s58 = sadd.s32 %s57, 1
    %p61 = scmp.eq.s32.totalorder %s9, 1
    %p62 = scmp.ne.s32.totalorder %s57, %s59
    %p63 = scmp.eq.s32.totalorder %s9, 0
    %p64 = por %p62, %p63
    %p65 = scmp.ne.s32.totalorder %s57, %s59
    %p66 = scmp.eq.s32.totalorder %s14, 1
    %p67 = por %p65, %p66
    %p68 = scmp.ne.s32.totalorder %s59, %s60
    %p69 = scmp.eq.s32.totalorder %s14, 0
    %p70 = por %p68, %p69
    %p71 = scmp.ne.s32.totalorder %s59, %s60
    %p72 = scmp.eq.s32.totalorder %s15, 1
    %p73 = por %p71, %p72
    %p75 = scmp.ne.s32.totalorder %s60, %s74
    %p76 = scmp.eq.s32.totalorder %s15, 0
    %p77 = por %p75, %p76
    %s79 = sadd.s32 %s78, 1
    %p82 = scmp.eq.s32.totalorder %s9, 1
    %p83 = scmp.ne.s32.totalorder %s78, %s80
    %p84 = scmp.eq.s32.totalorder %s9, 0
    %p85 = por %p83, %p84
    %p86 = scmp.ne.s32.totalorder %s78, %s80
    %p87 = scmp.eq.s32.totalorder %s14, 1
    %p88 = por %p86, %p87
    %p89 = scmp.ne.s32.totalorder %s80, %s81
    %p90 = scmp.eq.s32.totalorder %s14, 0
    %p91 = por %p89, %p90
    %p92 = scmp.ne.s32.totalorder %s80, %s81
    %p93 = scmp.eq.s32.totalorder %s15, 1
    %p94 = por %p92, %p93
    %p96 = scmp.ne.s32.totalorder %s81, %s95
    %p97 = scmp.eq.s32.totalorder %s15, 0
    %p98 = por %p96, %p97
    %s99 = ssub.s32 %s16, %s28
    %s100 = ssub.s32 %s17, %s24
    %s101 = sor.u32 %s99, %s100
    %p102 = scmp.eq.s32.totalorder %s101, 0
    %s104 = sadd.s32 %s103, 1
    %s105 = scalar_select %p102, %s103, %s104
    %p108 = pneg %p102
    %p109 = scmp.eq.s32.totalorder %s9, 1
    %p110 = por %p108, %p109
    %p111 = scmp.ne.s32.totalorder %s103, %s106
    %p112 = scmp.eq.s32.totalorder %s9, 0
    %p113 = por %p111, %p112
    %p114 = scmp.ne.s32.totalorder %s103, %s106
    %p115 = scmp.eq.s32.totalorder %s14, 1
    %p116 = por %p114, %p115
    %p117 = scmp.ne.s32.totalorder %s106, %s107
    %p118 = scmp.eq.s32.totalorder %s14, 0
    %p119 = por %p117, %p118
    %p120 = scmp.ne.s32.totalorder %s106, %s107
    %p121 = scmp.eq.s32.totalorder %s15, 1
    %p122 = por %p120, %p121
    %p124 = scmp.ne.s32.totalorder %s107, %s123
    %p125 = scmp.eq.s32.totalorder %s15, 0
    %p126 = por %p124, %p125
    %p127 = scmp.le.s32.totalorder 1, %s9
    %p128 = scmp.lt.s32.totalorder %s9, 3
    %p129 = pnand %p127, %p128
    %p130 = pneg %p129
    // Predicated region
    $region9: #{drp2_forward.21} parent=5 // pred_check
      _
    $region10: #{drp2_forward.21} parent=5 // pred_check_branch
      %132 = sbr.rel (%p129) target = $region12
    $region11: #{drp2_forward.21} parent=5 // pred_region
      %s133 = ssub.s32 %s9, 1
      // Predicated region
      $region13: #{drp2_forward.21} parent=11 // pred_check
        %p134 = pneg %p70
      $region14: #{drp2_forward.21} parent=11 // pred_check_branch
        %136 = sbr.rel (%p134) target = $region16
      $region15: #{drp2_forward.21} parent=11 // pred_region
        _
      $region16: #{drp2_forward.21} parent=11 // pred_fallthru
        _
      // Predicated region
      $region17: #{drp2_forward.21} parent=11 // pred_check
        %p137 = pneg %p91
      $region18: #{drp2_forward.21} parent=11 // pred_check_branch
        %139 = sbr.rel (%p137) target = $region20
      $region19: #{drp2_forward.21} parent=11 // pred_region
        _
      $region20: #{drp2_forward.21} parent=11 // pred_fallthru
        _
    $region12: #{drp2_forward.21} parent=5 // pred_fallthru
      _
    %p140 = scmp.lt.s32.totalorder %s9, 2
    // Predicated region
    $region21: #{drp2_forward.21} parent=5 // pred_check
      %p141 = pneg %p140
    $region22: #{drp2_forward.21} parent=5 // pred_check_branch
      %143 = sbr.rel (%p141) target = $region24
    $region23: #{drp2_forward.21} parent=5 // pred_region
      // Predicated region
      $region25: #{drp2_forward.21} parent=23 // pred_check
        %p144 = pneg %p43
      $region26: #{drp2_forward.21} parent=23 // pred_check_branch
        %146 = sbr.rel (%p144) target = $region28
      $region27: #{drp2_forward.21} parent=23 // pred_region
        %s147 = smul.u32 2, %s17
        %p148 = scmp.lt.s32.totalorder %s16, 1
        %s149 = scalar_select %p148, %s16, 1
        %p150 = scmp.lt.s32.totalorder %s147, 1
        %s151 = scalar_select %p150, %s147, 1
        %s152 = smul.addr %s149, 8
        %s153 = sadd.s32 %s151, %s152
        %s154 = smul.addr %s153, 8
        %s155 = scalar_lea.vmem %s0, %s154
        %s156 = smul.u32 2, %s17
      $region28: #{drp2_forward.21} parent=23 // pred_fallthru
        _
    $region24: #{drp2_forward.21} parent=5 // pred_fallthru
      _
    %p157 = scmp.le.s32.totalorder 1, %s9
    %p158 = scmp.lt.s32.totalorder %s9, 3
    %p159 = pnand %p157, %p158
    %p160 = pneg %p159
    // Predicated region
    $region29: #{drp2_forward.21} parent=5 // pred_check
      _
    $region30: #{drp2_forward.21} parent=5 // pred_check_branch
      %162 = sbr.rel (%p159) target = $region32
    $region31: #{drp2_forward.21} parent=5 // pred_region
      %s163 = ssub.s32 %s9, 1
      %s164 = smul.u32 2, %s19
      %p165 = scmp.lt.s32.totalorder %s18, 1
      %s166 = scalar_select %p165, %s18, 1
      %p167 = scmp.lt.s32.totalorder %s164, 1
      %s168 = scalar_select %p167, %s164, 1
      %s169 = smul.addr %s166, 8
      %s170 = sadd.s32 %s168, %s169
      %s171 = smul.addr %s170, 8
      %s172 = scalar_lea.vmem %s0, %s171
      %p173 = pneg %p49
      %p174 = pneg %p46
      %p175 = pneg %p70
      %p176 = pneg %p67
      %p177 = pneg %p91
      %p178 = pneg %p88
      %p179 = pneg %p119
      %p180 = pneg %p116
      %s181 = smul.u32 2, %s19
      %p182 = scmp.lt.s32.totalorder %s18, 1
      %s183 = scalar_select %p182, %s18, 1
      %p184 = scmp.lt.s32.totalorder %s181, 1
      %s185 = scalar_select %p184, %s181, 1
      %s186 = smul.addr %s183, 8
      %s187 = sadd.s32 %s185, %s186
      %s188 = smul.addr %s187, 8
      %s189 = scalar_lea.vmem %s3, %s188
      %s190 = smul.u32 2, %s19
      %p191 = scmp.lt.s32.totalorder %s18, 1
      %s192 = scalar_select %p191, %s18, 1
      %p193 = scmp.lt.s32.totalorder %s190, 1
      %s194 = scalar_select %p193, %s190, 1
      %s195 = smul.addr %s192, 8
      %s196 = sadd.s32 %s194, %s195
      %s197 = smul.addr %s196, 8
      %s198 = scalar_lea.vmem %s0, %s197
      %s199 = smul.u32 2, %s19
      %s200 = smul.u32 2, %s19
      %p201 = scmp.lt.s32.totalorder %s18, 1
      %s202 = scalar_select %p201, %s18, 1
      %p203 = scmp.lt.s32.totalorder %s200, 1
      %s204 = scalar_select %p203, %s200, 1
      %s205 = smul.addr %s202, 8
      %s206 = sadd.s32 %s204, %s205
      %s207 = smul.addr %s206, 8
      %s208 = scalar_lea.vmem %s3, %s207
      %s209 = smul.u32 2, %s19
      %v210 = vld [vmem:[%s198] sm:$0xff]
      %v211 = vld [vmem:[%s198 + $0x8] sm:$0xff]
      %v212 = vld [vmem:[%s198 + $0x10] sm:$0xff]
      %v213 = vld [vmem:[%s198 + $0x18] sm:$0xff]
      %v214 = vld [vmem:[%s198 + $0x20] sm:$0xff]
      %v215 = vld [vmem:[%s198 + $0x28] sm:$0xff]
      %v216 = vld [vmem:[%s198 + $0x30] sm:$0xff]
      %v217 = vld [vmem:[%s198 + $0x38] sm:$0xff]
      %v218 = vld [vmem:[%s1] sm:$0xff]
      %v219 = vld [vmem:[%s1 + $0x8] sm:$0xff]
      %v220 = vld [vmem:[%s1 + $0x10] sm:$0xff]
      %v221 = vld [vmem:[%s1 + $0x18] sm:$0xff]
      %v222 = vld [vmem:[%s2] sm:$0xff]
      %v223 = vld [vmem:[%s2 + $0x8] sm:$0xff]
      %v224 = vld [vmem:[%s2 + $0x10] sm:$0xff]
      %v225 = vld [vmem:[%s2 + $0x18] sm:$0xff]
      %227 = vset.pattern.permute.xlu0 0
      %228 = vperm.xlu0 %227, %v222
      %v229 = vpop.permute.xlu0 %228
      %232 = vset.pattern.permute.xlu0 0
      %233 = vperm.xlu0 %232, %v223
      %v234 = vpop.permute.xlu0 %233
      %237 = vset.pattern.permute.xlu0 0
      %238 = vperm.xlu0 %237, %v224
      %v239 = vpop.permute.xlu0 %238
      %242 = vset.pattern.permute.xlu0 0
      %243 = vperm.xlu0 %242, %v225
      %v244 = vpop.permute.xlu0 %243
      %vm246 = vcmask 261120
      %v248 = vsel %vm246, %v218, 0
      %v251 = vsel %vm246, %v219, 0
      %v254 = vsel %vm246, %v220, 0
      %v257 = vsel %vm246, %v221, 0
      %259 = vmatprep.subr.mxu0 %v211
      %260 = vmatpush1.msra.mxu0 %v210
      %261 = vmatprep.subr.mxu0 %v213
      %262 = vmatpush1.msra.mxu0 %v212
      %263 = vmatprep.subr.mxu0 %v215
      %264 = vmatpush1.msra.mxu0 %v214
      %265 = vmatprep.subr.mxu0 %v217
      %266 = vmatpush1.msra.mxu0 %v216
      %267 = vmatprep.subr.mxu0 0.0
      %268 = vmatpush1.msra.mxu0 0.0
      %269 = vmatprep.subr.mxu0 0.0
      %270 = vmatpush1.msra.mxu0 0.0
      %271 = vmatprep.subr.mxu0 0.0
      %272 = vmatpush1.msra.mxu0 0.0
      %273 = vmatprep.subr.mxu0 0.0
      %274 = vmatpush1.msra.mxu0 0.0
      %275 = vmatprep.subr.mxu0 0.0
      %276 = vmatpush1.msra.mxu0 0.0
      %277 = vmatprep.subr.mxu0 0.0
      %278 = vmatpush1.msra.mxu0 0.0
      %279 = vmatprep.subr.mxu0 0.0
      %280 = vmatpush1.msra.mxu0 0.0
      %281 = vmatprep.subr.mxu0 0.0
      %282 = vmatpush1.msra.mxu0 0.0
      %283 = vmatprep.subr.mxu0 0.0
      %284 = vmatpush1.msra.mxu0 0.0
      %285 = vmatprep.subr.mxu0 0.0
      %286 = vmatpush1.msra.mxu0 0.0
      %287 = vmatprep.subr.mxu0 0.0
      %288 = vmatpush1.msra.mxu0 0.0
      %289 = vmatprep.subr.mxu0 0.0
      %290 = vmatpush1.msra.mxu0 0.0
      %291 = vmatprep.subr.mxu0 0.0
      %292 = vmatpush1.msra.mxu0 0.0
      %293 = vmatprep.subr.mxu0 0.0
      %294 = vmatpush1.msra.mxu0 0.0
      %295 = vmatprep.subr.mxu0 0.0
      %296 = vmatpush1.msra.mxu0 0.0
      %297 = vmatprep.subr.mxu0 0.0
      %298 = vmatpush1.msra.mxu0 0.0
      %299 = vmatprep.subr.mxu0 0.0
      %300 = vmatpush1.msra.mxu0 0.0
      %301 = vmatprep.subr.mxu0 0.0
      %302 = vmatpush1.msra.mxu0 0.0
      %303 = vmatprep.subr.mxu0 0.0
      %304 = vmatpush1.msra.mxu0 0.0
      %305 = vmatprep.subr.mxu0 0.0
      %306 = vmatpush1.msra.mxu0 0.0
      %307 = vmatprep.subr.mxu0 0.0
      %308 = vmatpush1.msra.mxu0 0.0
      %309 = vmatprep.subr.mxu0 0.0
      %310 = vmatpush1.msra.mxu0 0.0
      %311 = vmatprep.subr.mxu0 0.0
      %312 = vmatpush1.msra.mxu0 0.0
      %313 = vmatprep.subr.mxu0 0.0
      %314 = vmatpush1.msra.mxu0 0.0
      %315 = vmatprep.subr.mxu0 0.0
      %316 = vmatpush1.msra.mxu0 0.0
      %317 = vmatprep.subr.mxu0 0.0
      %318 = vmatpush1.msra.mxu0 0.0
      %319 = vmatprep.subr.mxu0 0.0
      %320 = vmatpush1.msra.mxu0 0.0
      %321 = vmatprep.subr.mxu0 0.0
      %322 = vmatpush1.msra.mxu0 0.0
      %323 = vmatprep.mubr.f32.mxu0 0.0
      %324 = vmatmul.mubr.f32.gmra.mrb[0].mxu0 %v248
      %v325 = vpop.f32.mrb[0].mxu0
      %v326 = vadd.f32 %v229, %v325
      %v327 = vpop.f32.mrb[0].mxu0
      %v328 = vadd.f32 %v229, %v327
      %329 = vmatprep.mubr.f32.mxu0 0.0
      %330 = vmatmul.mubr.f32.gmra.mrb[0].mxu0 %v251
      %v331 = vpop.f32.mrb[0].mxu0
      %v332 = vadd.f32 %v234, %v331
      %v333 = vpop.f32.mrb[0].mxu0
      %v334 = vadd.f32 %v234, %v333
      %335 = vmatprep.mubr.f32.mxu0 0.0
      %336 = vmatmul.mubr.f32.gmra.mrb[0].mxu0 %v254
      %v337 = vpop.f32.mrb[0].mxu0
      %v338 = vadd.f32 %v239, %v337
      %v339 = vpop.f32.mrb[0].mxu0
      %v340 = vadd.f32 %v239, %v339
      %341 = vmatprep.mubr.f32.mxu0 0.0
      %342 = vmatmul.mubr.f32.gmra.mrb[0].mxu0 %v257
      %v343 = vpop.f32.mrb[0].mxu0
      %v344 = vadd.f32 %v244, %v343
      %v345 = vpop.f32.mrb[0].mxu0
      %v346 = vadd.f32 %v244, %v345
      %347 = vdwg.mxu0
      %348 = vst [vmem:[%s208] sm:$0xff] %v326
      %349 = vst [vmem:[%s208 + $0x8] sm:$0xff] %v328
      %350 = vst [vmem:[%s208 + $0x10] sm:$0xff] %v332
      %351 = vst [vmem:[%s208 + $0x18] sm:$0xff] %v334
      %352 = vst [vmem:[%s208 + $0x20] sm:$0xff] %v338
      %353 = vst [vmem:[%s208 + $0x28] sm:$0xff] %v340
      %354 = vst [vmem:[%s208 + $0x30] sm:$0xff] %v344
      %355 = vst [vmem:[%s208 + $0x38] sm:$0xff] %v346
      %s356 = smul.u32 2, %s19
      %p357 = scmp.lt.s32.totalorder %s18, 1
      %s358 = scalar_select %p357, %s18, 1
      %p359 = scmp.lt.s32.totalorder %s356, 1
      %s360 = scalar_select %p359, %s356, 1
      %s361 = smul.addr %s358, 8
      %s362 = sadd.s32 %s360, %s361
      %s363 = smul.addr %s362, 8
      %s364 = scalar_lea.vmem %s3, %s363
      // Predicated region
      $region33: #{drp2_forward.21} parent=31 // pred_check
        %p365 = pneg %p116
      $region34: #{drp2_forward.21} parent=31 // pred_check_branch
        %367 = sbr.rel (%p365) target = $region36
      $region35: #{drp2_forward.21} parent=31 // pred_region
        %s368 = smul.u32 2, %s19
      $region36: #{drp2_forward.21} parent=31 // pred_fallthru
        _
    $region32: #{drp2_forward.21} parent=5 // pred_fallthru
      _
    %p369 = scmp.le.s32.totalorder 2, %s9
    // Predicated region
    $region37: #{drp2_forward.21} parent=5 // pred_check
      %p370 = pneg %p369
    $region38: #{drp2_forward.21} parent=5 // pred_check_branch
      %372 = sbr.rel (%p370) target = $region40
    $region39: #{drp2_forward.21} parent=5 // pred_region
      %s373 = ssub.s32 %s9, 2
      // Predicated region
      $region41: #{drp2_forward.21} parent=39 // pred_check
        %p374 = pneg %p122
      $region42: #{drp2_forward.21} parent=39 // pred_check_branch
        %376 = sbr.rel (%p374) target = $region44
      $region43: #{drp2_forward.21} parent=39 // pred_region
        %s377 = smul.u32 2, %s21
        %p378 = scmp.lt.s32.totalorder %s20, 1
        %s379 = scalar_select %p378, %s20, 1
        %p380 = scmp.lt.s32.totalorder %s377, 1
        %s381 = scalar_select %p380, %s377, 1
        %s382 = smul.addr %s379, 8
        %s383 = sadd.s32 %s381, %s382
        %s384 = smul.addr %s383, 8
        %s385 = scalar_lea.vmem %s3, %s384
      $region44: #{drp2_forward.21} parent=39 // pred_fallthru
        _
    $region40: #{drp2_forward.21} parent=5 // pred_fallthru
      _
  $region6: #{drp2_forward.21} parent=0 // loop_footer
    %s13 = sadd.s32 1, %s9
  $region7: #{drp2_forward.21} parent=0 // loop_footer_branch
    %8 = sbr.rel target = $region3
  $region8: #{drp2_forward.21} parent=0 // loop_exit
    _

// kernel: drp2_forward.18
$region0: #{drp2_forward.18}
  #allocation0 [shape = 'u32[]', space=smem, size = 0x4, offset = 0x4, fixed_abs, tag = 'smem constant byte address 0x4 - core index']
  #allocation1 [shape = 'u32[144,128]{1,0:T(1,128)}', space=vmem, size = 0x12000, scoped, tag = 'internal scratch']
  %s0 = inlined_call_operand.vmem [shape: f32[2,32,256], index: 0, kind: input, shape index: {}]
  %s1 = inlined_call_operand.vmem [shape: f32[2,32], index: 1, kind: input, shape index: {}]
  %s2 = inlined_call_operand.vmem [shape: f32[2,1], index: 2, kind: input, shape index: {}]
  %s3 = inlined_call_operand.vmem [shape: f32[2,2,256], index: 3, kind: output, shape index: {}]
  %s4 = sld [smem:[#allocation0]]
  $region45: #{drp2_forward.18} parent=0
    _
  %s6 = ssub.s32 1, %s4
  %s7 = scalar_select 0, %s6, %s4
  loop: start=0, step=1, limit=4
  $region2: #{drp2_forward.18} parent=0 // loop_pre_header
    _
  $region3: #{drp2_forward.18} parent=0 // loop_header
    %s9 = sphi 0, %s13
    %p10 = scmp.ge.s32.totalorder %s9, 4
    %s16 = sphi 0, %s28
    %s17 = sphi 0, %s24
    %s18 = sphi 0, %s16
    %s19 = sphi 0, %s17
    %s20 = sphi 0, %s18
    %s21 = sphi 0, %s19
    %s33 = sphi 0, %s35
    %s36 = sphi 0, %s33
    %s37 = sphi 0, %s36
    %s53 = sphi 0, %s37
    %s57 = sphi 0, %s57
    %s59 = sphi 0, %s57
    %s60 = sphi 0, %s59
    %s74 = sphi 0, %s60
    %s78 = sphi 0, %s78
    %s80 = sphi 0, %s78
    %s81 = sphi 0, %s80
    %s95 = sphi 0, %s81
    %s103 = sphi 0, %s105
    %s106 = sphi 0, %s103
    %s107 = sphi 0, %s106
    %s123 = sphi 0, %s107
  $region4: #{drp2_forward.18} parent=0 // loop_header_branch
    %12 = sbr.rel (%p10) target = $region8
  $region5: #{drp2_forward.18} parent=0 // loop_body
    %s14 = ssub.s32 %s9, 1
    %s15 = ssub.s32 %s9, 2
    %s22 = sadd.s32 1, %s17
    %p23 = scmp.ge.s32.totalorder %s22, 1
    %s24 = scalar_select %p23, 0, %s22
    %s25 = sadd.s32 1, %s16
    %s26 = scalar_select %p23, %s25, %s16
    %p27 = scmp.ge.s32.totalorder %s26, 2
    %s28 = scalar_select %p27, 0, %s26
    %s29 = ssub.s32 %s16, %s28
    %s30 = ssub.s32 %s17, %s24
    %s31 = sor.u32 %s29, %s30
    %p32 = scmp.eq.s32.totalorder %s31, 0
    %s34 = sadd.s32 %s33, 1
    %s35 = scalar_select %p32, %s33, %s34
    %p38 = pneg %p32
    %p39 = scmp.eq.s32.totalorder %s9, 1
    %p40 = por %p38, %p39
    %p41 = scmp.ne.s32.totalorder %s33, %s36
    %p42 = scmp.eq.s32.totalorder %s9, 0
    %p43 = por %p41, %p42
    %p44 = scmp.ne.s32.totalorder %s33, %s36
    %p45 = scmp.eq.s32.totalorder %s14, 1
    %p46 = por %p44, %p45
    %p47 = scmp.ne.s32.totalorder %s36, %s37
    %p48 = scmp.eq.s32.totalorder %s14, 0
    %p49 = por %p47, %p48
    %p50 = scmp.ne.s32.totalorder %s36, %s37
    %p51 = scmp.eq.s32.totalorder %s15, 1
    %p52 = por %p50, %p51
    %p54 = scmp.ne.s32.totalorder %s37, %s53
    %p55 = scmp.eq.s32.totalorder %s15, 0
    %p56 = por %p54, %p55
    %s58 = sadd.s32 %s57, 1
    %p61 = scmp.eq.s32.totalorder %s9, 1
    %p62 = scmp.ne.s32.totalorder %s57, %s59
    %p63 = scmp.eq.s32.totalorder %s9, 0
    %p64 = por %p62, %p63
    %p65 = scmp.ne.s32.totalorder %s57, %s59
    %p66 = scmp.eq.s32.totalorder %s14, 1
    %p67 = por %p65, %p66
    %p68 = scmp.ne.s32.totalorder %s59, %s60
    %p69 = scmp.eq.s32.totalorder %s14, 0
    %p70 = por %p68, %p69
    %p71 = scmp.ne.s32.totalorder %s59, %s60
    %p72 = scmp.eq.s32.totalorder %s15, 1
    %p73 = por %p71, %p72
    %p75 = scmp.ne.s32.totalorder %s60, %s74
    %p76 = scmp.eq.s32.totalorder %s15, 0
    %p77 = por %p75, %p76
    %s79 = sadd.s32 %s78, 1
    %p82 = scmp.eq.s32.totalorder %s9, 1
    %p83 = scmp.ne.s32.totalorder %s78, %s80
    %p84 = scmp.eq.s32.totalorder %s9, 0
    %p85 = por %p83, %p84
    %p86 = scmp.ne.s32.totalorder %s78, %s80
    %p87 = scmp.eq.s32.totalorder %s14, 1
    %p88 = por %p86, %p87
    %p89 = scmp.ne.s32.totalorder %s80, %s81
    %p90 = scmp.eq.s32.totalorder %s14, 0
    %p91 = por %p89, %p90
    %p92 = scmp.ne.s32.totalorder %s80, %s81
    %p93 = scmp.eq.s32.totalorder %s15, 1
    %p94 = por %p92, %p93
    %p96 = scmp.ne.s32.totalorder %s81, %s95
    %p97 = scmp.eq.s32.totalorder %s15, 0
    %p98 = por %p96, %p97
    %s99 = ssub.s32 %s16, %s28
    %s100 = ssub.s32 %s17, %s24
    %s101 = sor.u32 %s99, %s100
    %p102 = scmp.eq.s32.totalorder %s101, 0
    %s104 = sadd.s32 %s103, 1
    %s105 = scalar_select %p102, %s103, %s104
    %p108 = pneg %p102
    %p109 = scmp.eq.s32.totalorder %s9, 1
    %p110 = por %p108, %p109
    %p111 = scmp.ne.s32.totalorder %s103, %s106
    %p112 = scmp.eq.s32.totalorder %s9, 0
    %p113 = por %p111, %p112
    %p114 = scmp.ne.s32.totalorder %s103, %s106
    %p115 = scmp.eq.s32.totalorder %s14, 1
    %p116 = por %p114, %p115
    %p117 = scmp.ne.s32.totalorder %s106, %s107
    %p118 = scmp.eq.s32.totalorder %s14, 0
    %p119 = por %p117, %p118
    %p120 = scmp.ne.s32.totalorder %s106, %s107
    %p121 = scmp.eq.s32.totalorder %s15, 1
    %p122 = por %p120, %p121
    %p124 = scmp.ne.s32.totalorder %s107, %s123
    %p125 = scmp.eq.s32.totalorder %s15, 0
    %p126 = por %p124, %p125
    %p127 = scmp.le.s32.totalorder 1, %s9
    %p128 = scmp.lt.s32.totalorder %s9, 3
    %p129 = pnand %p127, %p128
    %p130 = pneg %p129
    // Predicated region
    $region9: #{drp2_forward.18} parent=5 // pred_check
      _
    $region10: #{drp2_forward.18} parent=5 // pred_check_branch
      %132 = sbr.rel (%p129) target = $region12
    $region11: #{drp2_forward.18} parent=5 // pred_region
      %s133 = ssub.s32 %s9, 1
      // Predicated region
      $region13: #{drp2_forward.18} parent=11 // pred_check
        %p134 = pneg %p70
      $region14: #{drp2_forward.18} parent=11 // pred_check_branch
        %136 = sbr.rel (%p134) target = $region16
      $region15: #{drp2_forward.18} parent=11 // pred_region
        _
      $region16: #{drp2_forward.18} parent=11 // pred_fallthru
        _
      // Predicated region
      $region17: #{drp2_forward.18} parent=11 // pred_check
        %p137 = pneg %p91
      $region18: #{drp2_forward.18} parent=11 // pred_check_branch
        %139 = sbr.rel (%p137) target = $region20
      $region19: #{drp2_forward.18} parent=11 // pred_region
        _
      $region20: #{drp2_forward.18} parent=11 // pred_fallthru
        _
    $region12: #{drp2_forward.18} parent=5 // pred_fallthru
      _
    %p140 = scmp.lt.s32.totalorder %s9, 2
    // Predicated region
    $region21: #{drp2_forward.18} parent=5 // pred_check
      %p141 = pneg %p140
    $region22: #{drp2_forward.18} parent=5 // pred_check_branch
      %143 = sbr.rel (%p141) target = $region24
    $region23: #{drp2_forward.18} parent=5 // pred_region
      // Predicated region
      $region25: #{drp2_forward.18} parent=23 // pred_check
        %p144 = pneg %p43
      $region26: #{drp2_forward.18} parent=23 // pred_check_branch
        %146 = sbr.rel (%p144) target = $region28
      $region27: #{drp2_forward.18} parent=23 // pred_region
        %s147 = smul.u32 2, %s17
        %p148 = scmp.lt.s32.totalorder %s16, 1
        %s149 = scalar_select %p148, %s16, 1
        %p150 = scmp.lt.s32.totalorder %s147, 1
        %s151 = scalar_select %p150, %s147, 1
        %s152 = smul.addr %s149, 8
        %s153 = sadd.s32 %s151, %s152
        %s154 = smul.addr %s153, 8
        %s155 = scalar_lea.vmem %s0, %s154
        %s156 = smul.u32 2, %s17
      $region28: #{drp2_forward.18} parent=23 // pred_fallthru
        _
    $region24: #{drp2_forward.18} parent=5 // pred_fallthru
      _
    %p157 = scmp.le.s32.totalorder 1, %s9
    %p158 = scmp.lt.s32.totalorder %s9, 3
    %p159 = pnand %p157, %p158
    %p160 = pneg %p159
    // Predicated region
    $region29: #{drp2_forward.18} parent=5 // pred_check
      _
    $region30: #{drp2_forward.18} parent=5 // pred_check_branch
      %162 = sbr.rel (%p159) target = $region32
    $region31: #{drp2_forward.18} parent=5 // pred_region
      %s163 = ssub.s32 %s9, 1
      %s164 = smul.u32 2, %s19
      %p165 = scmp.lt.s32.totalorder %s18, 1
      %s166 = scalar_select %p165, %s18, 1
      %p167 = scmp.lt.s32.totalorder %s164, 1
      %s168 = scalar_select %p167, %s164, 1
      %s169 = smul.addr %s166, 8
      %s170 = sadd.s32 %s168, %s169
      %s171 = smul.addr %s170, 8
      %s172 = scalar_lea.vmem %s0, %s171
      %p173 = pneg %p49
      %p174 = pneg %p46
      %p175 = pneg %p70
      %p176 = pneg %p67
      %p177 = pneg %p91
      %p178 = pneg %p88
      %p179 = pneg %p119
      %p180 = pneg %p116
      %s181 = smul.u32 2, %s19
      %p182 = scmp.lt.s32.totalorder %s18, 1
      %s183 = scalar_select %p182, %s18, 1
      %p184 = scmp.lt.s32.totalorder %s181, 1
      %s185 = scalar_select %p184, %s181, 1
      %s186 = smul.addr %s183, 2
      %s187 = sadd.s32 %s185, %s186
      %s188 = smul.addr %s187, 2
      %s189 = scalar_lea.vmem %s3, %s188
      %s190 = smul.u32 2, %s19
      %p191 = scmp.lt.s32.totalorder %s18, 1
      %s192 = scalar_select %p191, %s18, 1
      %p193 = scmp.lt.s32.totalorder %s190, 1
      %s194 = scalar_select %p193, %s190, 1
      %s195 = smul.addr %s192, 8
      %s196 = sadd.s32 %s194, %s195
      %s197 = smul.addr %s196, 8
      %s198 = scalar_lea.vmem %s0, %s197
      %s199 = smul.u32 2, %s19
      %s200 = smul.u32 2, %s19
      %p201 = scmp.lt.s32.totalorder %s18, 1
      %s202 = scalar_select %p201, %s18, 1
      %p203 = scmp.lt.s32.totalorder %s200, 1
      %s204 = scalar_select %p203, %s200, 1
      %s205 = smul.addr %s202, 2
      %s206 = sadd.s32 %s204, %s205
      %s207 = smul.addr %s206, 2
      %s208 = scalar_lea.vmem %s3, %s207
      %s209 = smul.u32 2, %s19
      %v210 = vld [vmem:[%s198] sm:$0xff]
      %v211 = vld [vmem:[%s198 + $0x8] sm:$0xff]
      %v212 = vld [vmem:[%s198 + $0x10] sm:$0xff]
      %v213 = vld [vmem:[%s198 + $0x18] sm:$0xff]
      %v214 = vld [vmem:[%s198 + $0x20] sm:$0xff]
      %v215 = vld [vmem:[%s198 + $0x28] sm:$0xff]
      %v216 = vld [vmem:[%s198 + $0x30] sm:$0xff]
      %v217 = vld [vmem:[%s198 + $0x38] sm:$0xff]
      %v218 = vld [vmem:[%s1] sm:$0x3]
      %v219 = vld [vmem:[%s2] sm:$0x3]
      %221 = vset.pattern.permute.xlu0 0
      %222 = vperm.xlu0 %221, %v219
      %v223 = vpop.permute.xlu0 %222
      %vm225 = vcmask 261120
      %v227 = vsel %vm225, %v218, 0
      %229 = vmatprep.subr.mxu0 %v211
      %230 = vmatpush1.msra.mxu0 %v210
      %231 = vmatprep.subr.mxu0 %v213
      %232 = vmatpush1.msra.mxu0 %v212
      %233 = vmatprep.subr.mxu0 %v215
      %234 = vmatpush1.msra.mxu0 %v214
      %235 = vmatprep.subr.mxu0 %v217
      %236 = vmatpush1.msra.mxu0 %v216
      %237 = vmatprep.subr.mxu0 0.0
      %238 = vmatpush1.msra.mxu0 0.0
      %239 = vmatprep.subr.mxu0 0.0
      %240 = vmatpush1.msra.mxu0 0.0
      %241 = vmatprep.subr.mxu0 0.0
      %242 = vmatpush1.msra.mxu0 0.0
      %243 = vmatprep.subr.mxu0 0.0
      %244 = vmatpush1.msra.mxu0 0.0
      %245 = vmatprep.subr.mxu0 0.0
      %246 = vmatpush1.msra.mxu0 0.0
      %247 = vmatprep.subr.mxu0 0.0
      %248 = vmatpush1.msra.mxu0 0.0
      %249 = vmatprep.subr.mxu0 0.0
      %250 = vmatpush1.msra.mxu0 0.0
      %251 = vmatprep.subr.mxu0 0.0
      %252 = vmatpush1.msra.mxu0 0.0
      %253 = vmatprep.subr.mxu0 0.0
      %254 = vmatpush1.msra.mxu0 0.0
      %255 = vmatprep.subr.mxu0 0.0
      %256 = vmatpush1.msra.mxu0 0.0
      %257 = vmatprep.subr.mxu0 0.0
      %258 = vmatpush1.msra.mxu0 0.0
      %259 = vmatprep.subr.mxu0 0.0
      %260 = vmatpush1.msra.mxu0 0.0
      %261 = vmatprep.subr.mxu0 0.0
      %262 = vmatpush1.msra.mxu0 0.0
      %263 = vmatprep.subr.mxu0 0.0
      %264 = vmatpush1.msra.mxu0 0.0
      %265 = vmatprep.subr.mxu0 0.0
      %266 = vmatpush1.msra.mxu0 0.0
      %267 = vmatprep.subr.mxu0 0.0
      %268 = vmatpush1.msra.mxu0 0.0
      %269 = vmatprep.subr.mxu0 0.0
      %270 = vmatpush1.msra.mxu0 0.0
      %271 = vmatprep.subr.mxu0 0.0
      %272 = vmatpush1.msra.mxu0 0.0
      %273 = vmatprep.subr.mxu0 0.0
      %274 = vmatpush1.msra.mxu0 0.0
      %275 = vmatprep.subr.mxu0 0.0
      %276 = vmatpush1.msra.mxu0 0.0
      %277 = vmatprep.subr.mxu0 0.0
      %278 = vmatpush1.msra.mxu0 0.0
      %279 = vmatprep.subr.mxu0 0.0
      %280 = vmatpush1.msra.mxu0 0.0
      %281 = vmatprep.subr.mxu0 0.0
      %282 = vmatpush1.msra.mxu0 0.0
      %283 = vmatprep.subr.mxu0 0.0
      %284 = vmatpush1.msra.mxu0 0.0
      %285 = vmatprep.subr.mxu0 0.0
      %286 = vmatpush1.msra.mxu0 0.0
      %287 = vmatprep.subr.mxu0 0.0
      %288 = vmatpush1.msra.mxu0 0.0
      %289 = vmatprep.subr.mxu0 0.0
      %290 = vmatpush1.msra.mxu0 0.0
      %291 = vmatprep.subr.mxu0 0.0
      %292 = vmatpush1.msra.mxu0 0.0
      %293 = vmatprep.mubr.f32.mxu0 0.0
      %294 = vmatmul.mubr.f32.gmra.mrb[0].mxu0 %v227
      %v295 = vpop.f32.mrb[0].mxu0
      %v296 = vadd.f32 %v223, %v295
      %v297 = vpop.f32.mrb[0].mxu0
      %v298 = vadd.f32 %v223, %v297
      %299 = vdwg.mxu0
      %v300 = vmax.f32 %v296, 0.0
      %v301 = vmax.f32 %v298, 0.0
      %v304 = vcombine.low %v300, %v301
      %v306 = vunpack.c.l.s4 1983009808
      %v307 = vunpack.c.0.s8 %v306
      %v308 = vlaneseq
      %v309 = vshrl.u32 %v308, 7
      %v310 = vsub.s32 %v307, %v309
      %v311 = vrot.slane %v304, %v310
      %313 = vst [vmem:[%s208] sm:$0xf] %v311
      %s314 = smul.u32 2, %s19
      %p315 = scmp.lt.s32.totalorder %s18, 1
      %s316 = scalar_select %p315, %s18, 1
      %p317 = scmp.lt.s32.totalorder %s314, 1
      %s318 = scalar_select %p317, %s314, 1
      %s319 = smul.addr %s316, 2
      %s320 = sadd.s32 %s318, %s319
      %s321 = smul.addr %s320, 2
      %s322 = scalar_lea.vmem %s3, %s321
      // Predicated region
      $region33: #{drp2_forward.18} parent=31 // pred_check
        %p323 = pneg %p116
      $region34: #{drp2_forward.18} parent=31 // pred_check_branch
        %325 = sbr.rel (%p323) target = $region36
      $region35: #{drp2_forward.18} parent=31 // pred_region
        %s326 = smul.u32 2, %s19
      $region36: #{drp2_forward.18} parent=31 // pred_fallthru
        _
    $region32: #{drp2_forward.18} parent=5 // pred_fallthru
      _
    %p327 = scmp.le.s32.totalorder 2, %s9
    // Predicated region
    $region37: #{drp2_forward.18} parent=5 // pred_check
      %p328 = pneg %p327
    $region38: #{drp2_forward.18} parent=5 // pred_check_branch
      %330 = sbr.rel (%p328) target = $region40
    $region39: #{drp2_forward.18} parent=5 // pred_region
      %s331 = ssub.s32 %s9, 2
      // Predicated region
      $region41: #{drp2_forward.18} parent=39 // pred_check
        %p332 = pneg %p122
      $region42: #{drp2_forward.18} parent=39 // pred_check_branch
        %334 = sbr.rel (%p332) target = $region44
      $region43: #{drp2_forward.18} parent=39 // pred_region
        %s335 = smul.u32 2, %s21
        %p336 = scmp.lt.s32.totalorder %s20, 1
        %s337 = scalar_select %p336, %s20, 1
        %p338 = scmp.lt.s32.totalorder %s335, 1
        %s339 = scalar_select %p338, %s335, 1
        %s340 = smul.addr %s337, 2
        %s341 = sadd.s32 %s339, %s340
        %s342 = smul.addr %s341, 2
        %s343 = scalar_lea.vmem %s3, %s342
      $region44: #{drp2_forward.18} parent=39 // pred_fallthru
        _
    $region40: #{drp2_forward.18} parent=5 // pred_fallthru
      _
  $region6: #{drp2_forward.18} parent=0 // loop_footer
    %s13 = sadd.s32 1, %s9
  $region7: #{drp2_forward.18} parent=0 // loop_footer_branch
    %8 = sbr.rel target = $region3
  $region8: #{drp2_forward.18} parent=0 // loop_exit
    _

// kernel: drp2_forward.19
$region0: #{drp2_forward.19}
  #allocation0 [shape = 'u32[]', space=smem, size = 0x4, offset = 0x4, fixed_abs, tag = 'smem constant byte address 0x4 - core index']
  #allocation1 [shape = 'u32[144,128]{1,0:T(1,128)}', space=vmem, size = 0x12000, scoped, tag = 'internal scratch']
  %s0 = inlined_call_operand.vmem [shape: f32[2,2,256], index: 0, kind: input, shape index: {}]
  %s1 = inlined_call_operand.vmem [shape: f32[32,2], index: 1, kind: input, shape index: {}]
  %s2 = inlined_call_operand.vmem [shape: f32[32,1], index: 2, kind: input, shape index: {}]
  %s3 = inlined_call_operand.vmem [shape: f32[2,32,256], index: 3, kind: output, shape index: {}]
  %s4 = sld [smem:[#allocation0]]
  $region45: #{drp2_forward.19} parent=0
    _
  %s6 = ssub.s32 1, %s4
  %s7 = scalar_select 0, %s6, %s4
  loop: start=0, step=1, limit=4
  $region2: #{drp2_forward.19} parent=0 // loop_pre_header
    _
  $region3: #{drp2_forward.19} parent=0 // loop_header
    %s9 = sphi 0, %s13
    %p10 = scmp.ge.s32.totalorder %s9, 4
    %s16 = sphi 0, %s28
    %s17 = sphi 0, %s24
    %s18 = sphi 0, %s16
    %s19 = sphi 0, %s17
    %s20 = sphi 0, %s18
    %s21 = sphi 0, %s19
    %s33 = sphi 0, %s35
    %s36 = sphi 0, %s33
    %s37 = sphi 0, %s36
    %s53 = sphi 0, %s37
    %s57 = sphi 0, %s57
    %s59 = sphi 0, %s57
    %s60 = sphi 0, %s59
    %s74 = sphi 0, %s60
    %s78 = sphi 0, %s78
    %s80 = sphi 0, %s78
    %s81 = sphi 0, %s80
    %s95 = sphi 0, %s81
    %s103 = sphi 0, %s105
    %s106 = sphi 0, %s103
    %s107 = sphi 0, %s106
    %s123 = sphi 0, %s107
  $region4: #{drp2_forward.19} parent=0 // loop_header_branch
    %12 = sbr.rel (%p10) target = $region8
  $region5: #{drp2_forward.19} parent=0 // loop_body
    %s14 = ssub.s32 %s9, 1
    %s15 = ssub.s32 %s9, 2
    %s22 = sadd.s32 1, %s17
    %p23 = scmp.ge.s32.totalorder %s22, 1
    %s24 = scalar_select %p23, 0, %s22
    %s25 = sadd.s32 1, %s16
    %s26 = scalar_select %p23, %s25, %s16
    %p27 = scmp.ge.s32.totalorder %s26, 2
    %s28 = scalar_select %p27, 0, %s26
    %s29 = ssub.s32 %s16, %s28
    %s30 = ssub.s32 %s17, %s24
    %s31 = sor.u32 %s29, %s30
    %p32 = scmp.eq.s32.totalorder %s31, 0
    %s34 = sadd.s32 %s33, 1
    %s35 = scalar_select %p32, %s33, %s34
    %p38 = pneg %p32
    %p39 = scmp.eq.s32.totalorder %s9, 1
    %p40 = por %p38, %p39
    %p41 = scmp.ne.s32.totalorder %s33, %s36
    %p42 = scmp.eq.s32.totalorder %s9, 0
    %p43 = por %p41, %p42
    %p44 = scmp.ne.s32.totalorder %s33, %s36
    %p45 = scmp.eq.s32.totalorder %s14, 1
    %p46 = por %p44, %p45
    %p47 = scmp.ne.s32.totalorder %s36, %s37
    %p48 = scmp.eq.s32.totalorder %s14, 0
    %p49 = por %p47, %p48
    %p50 = scmp.ne.s32.totalorder %s36, %s37
    %p51 = scmp.eq.s32.totalorder %s15, 1
    %p52 = por %p50, %p51
    %p54 = scmp.ne.s32.totalorder %s37, %s53
    %p55 = scmp.eq.s32.totalorder %s15, 0
    %p56 = por %p54, %p55
    %s58 = sadd.s32 %s57, 1
    %p61 = scmp.eq.s32.totalorder %s9, 1
    %p62 = scmp.ne.s32.totalorder %s57, %s59
    %p63 = scmp.eq.s32.totalorder %s9, 0
    %p64 = por %p62, %p63
    %p65 = scmp.ne.s32.totalorder %s57, %s59
    %p66 = scmp.eq.s32.totalorder %s14, 1
    %p67 = por %p65, %p66
    %p68 = scmp.ne.s32.totalorder %s59, %s60
    %p69 = scmp.eq.s32.totalorder %s14, 0
    %p70 = por %p68, %p69
    %p71 = scmp.ne.s32.totalorder %s59, %s60
    %p72 = scmp.eq.s32.totalorder %s15, 1
    %p73 = por %p71, %p72
    %p75 = scmp.ne.s32.totalorder %s60, %s74
    %p76 = scmp.eq.s32.totalorder %s15, 0
    %p77 = por %p75, %p76
    %s79 = sadd.s32 %s78, 1
    %p82 = scmp.eq.s32.totalorder %s9, 1
    %p83 = scmp.ne.s32.totalorder %s78, %s80
    %p84 = scmp.eq.s32.totalorder %s9, 0
    %p85 = por %p83, %p84
    %p86 = scmp.ne.s32.totalorder %s78, %s80
    %p87 = scmp.eq.s32.totalorder %s14, 1
    %p88 = por %p86, %p87
    %p89 = scmp.ne.s32.totalorder %s80, %s81
    %p90 = scmp.eq.s32.totalorder %s14, 0
    %p91 = por %p89, %p90
    %p92 = scmp.ne.s32.totalorder %s80, %s81
    %p93 = scmp.eq.s32.totalorder %s15, 1
    %p94 = por %p92, %p93
    %p96 = scmp.ne.s32.totalorder %s81, %s95
    %p97 = scmp.eq.s32.totalorder %s15, 0
    %p98 = por %p96, %p97
    %s99 = ssub.s32 %s16, %s28
    %s100 = ssub.s32 %s17, %s24
    %s101 = sor.u32 %s99, %s100
    %p102 = scmp.eq.s32.totalorder %s101, 0
    %s104 = sadd.s32 %s103, 1
    %s105 = scalar_select %p102, %s103, %s104
    %p108 = pneg %p102
    %p109 = scmp.eq.s32.totalorder %s9, 1
    %p110 = por %p108, %p109
    %p111 = scmp.ne.s32.totalorder %s103, %s106
    %p112 = scmp.eq.s32.totalorder %s9, 0
    %p113 = por %p111, %p112
    %p114 = scmp.ne.s32.totalorder %s103, %s106
    %p115 = scmp.eq.s32.totalorder %s14, 1
    %p116 = por %p114, %p115
    %p117 = scmp.ne.s32.totalorder %s106, %s107
    %p118 = scmp.eq.s32.totalorder %s14, 0
    %p119 = por %p117, %p118
    %p120 = scmp.ne.s32.totalorder %s106, %s107
    %p121 = scmp.eq.s32.totalorder %s15, 1
    %p122 = por %p120, %p121
    %p124 = scmp.ne.s32.totalorder %s107, %s123
    %p125 = scmp.eq.s32.totalorder %s15, 0
    %p126 = por %p124, %p125
    %p127 = scmp.le.s32.totalorder 1, %s9
    %p128 = scmp.lt.s32.totalorder %s9, 3
    %p129 = pnand %p127, %p128
    %p130 = pneg %p129
    // Predicated region
    $region9: #{drp2_forward.19} parent=5 // pred_check
      _
    $region10: #{drp2_forward.19} parent=5 // pred_check_branch
      %132 = sbr.rel (%p129) target = $region12
    $region11: #{drp2_forward.19} parent=5 // pred_region
      %s133 = ssub.s32 %s9, 1
      // Predicated region
      $region13: #{drp2_forward.19} parent=11 // pred_check
        %p134 = pneg %p70
      $region14: #{drp2_forward.19} parent=11 // pred_check_branch
        %136 = sbr.rel (%p134) target = $region16
      $region15: #{drp2_forward.19} parent=11 // pred_region
        _
      $region16: #{drp2_forward.19} parent=11 // pred_fallthru
        _
      // Predicated region
      $region17: #{drp2_forward.19} parent=11 // pred_check
        %p137 = pneg %p91
      $region18: #{drp2_forward.19} parent=11 // pred_check_branch
        %139 = sbr.rel (%p137) target = $region20
      $region19: #{drp2_forward.19} parent=11 // pred_region
        _
      $region20: #{drp2_forward.19} parent=11 // pred_fallthru
        _
    $region12: #{drp2_forward.19} parent=5 // pred_fallthru
      _
    %p140 = scmp.lt.s32.totalorder %s9, 2
    // Predicated region
    $region21: #{drp2_forward.19} parent=5 // pred_check
      %p141 = pneg %p140
    $region22: #{drp2_forward.19} parent=5 // pred_check_branch
      %143 = sbr.rel (%p141) target = $region24
    $region23: #{drp2_forward.19} parent=5 // pred_region
      // Predicated region
      $region25: #{drp2_forward.19} parent=23 // pred_check
        %p144 = pneg %p43
      $region26: #{drp2_forward.19} parent=23 // pred_check_branch
        %146 = sbr.rel (%p144) target = $region28
      $region27: #{drp2_forward.19} parent=23 // pred_region
        %s147 = smul.u32 2, %s17
        %p148 = scmp.lt.s32.totalorder %s16, 1
        %s149 = scalar_select %p148, %s16, 1
        %p150 = scmp.lt.s32.totalorder %s147, 1
        %s151 = scalar_select %p150, %s147, 1
        %s152 = smul.addr %s149, 2
        %s153 = sadd.s32 %s151, %s152
        %s154 = smul.addr %s153, 2
        %s155 = scalar_lea.vmem %s0, %s154
        %s156 = smul.u32 2, %s17
      $region28: #{drp2_forward.19} parent=23 // pred_fallthru
        _
    $region24: #{drp2_forward.19} parent=5 // pred_fallthru
      _
    %p157 = scmp.le.s32.totalorder 1, %s9
    %p158 = scmp.lt.s32.totalorder %s9, 3
    %p159 = pnand %p157, %p158
    %p160 = pneg %p159
    // Predicated region
    $region29: #{drp2_forward.19} parent=5 // pred_check
      _
    $region30: #{drp2_forward.19} parent=5 // pred_check_branch
      %162 = sbr.rel (%p159) target = $region32
    $region31: #{drp2_forward.19} parent=5 // pred_region
      %s163 = ssub.s32 %s9, 1
      %s164 = smul.u32 2, %s19
      %p165 = scmp.lt.s32.totalorder %s18, 1
      %s166 = scalar_select %p165, %s18, 1
      %p167 = scmp.lt.s32.totalorder %s164, 1
      %s168 = scalar_select %p167, %s164, 1
      %s169 = smul.addr %s166, 2
      %s170 = sadd.s32 %s168, %s169
      %s171 = smul.addr %s170, 2
      %s172 = scalar_lea.vmem %s0, %s171
      %p173 = pneg %p49
      %p174 = pneg %p46
      %p175 = pneg %p70
      %p176 = pneg %p67
      %p177 = pneg %p91
      %p178 = pneg %p88
      %p179 = pneg %p119
      %p180 = pneg %p116
      %s181 = smul.u32 2, %s19
      %p182 = scmp.lt.s32.totalorder %s18, 1
      %s183 = scalar_select %p182, %s18, 1
      %p184 = scmp.lt.s32.totalorder %s181, 1
      %s185 = scalar_select %p184, %s181, 1
      %s186 = smul.addr %s183, 8
      %s187 = sadd.s32 %s185, %s186
      %s188 = smul.addr %s187, 8
      %s189 = scalar_lea.vmem %s3, %s188
      %s190 = smul.u32 2, %s19
      %p191 = scmp.lt.s32.totalorder %s18, 1
      %s192 = scalar_select %p191, %s18, 1
      %p193 = scmp.lt.s32.totalorder %s190, 1
      %s194 = scalar_select %p193, %s190, 1
      %s195 = smul.addr %s192, 2
      %s196 = sadd.s32 %s194, %s195
      %s197 = smul.addr %s196, 2
      %s198 = scalar_lea.vmem %s0, %s197
      %s199 = smul.u32 2, %s19
      %s200 = smul.u32 2, %s19
      %p201 = scmp.lt.s32.totalorder %s18, 1
      %s202 = scalar_select %p201, %s18, 1
      %p203 = scmp.lt.s32.totalorder %s200, 1
      %s204 = scalar_select %p203, %s200, 1
      %s205 = smul.addr %s202, 8
      %s206 = sadd.s32 %s204, %s205
      %s207 = smul.addr %s206, 8
      %s208 = scalar_lea.vmem %s3, %s207
      %s209 = smul.u32 2, %s19
      %v210 = vld [vmem:[%s198] sm:$0xf]
      %v211 = vld [vmem:[%s1] sm:$0xff]
      %v212 = vld [vmem:[%s1 + $0x8] sm:$0xff]
      %v213 = vld [vmem:[%s1 + $0x10] sm:$0xff]
      %v214 = vld [vmem:[%s1 + $0x18] sm:$0xff]
      %v215 = vld [vmem:[%s2] sm:$0xff]
      %v216 = vld [vmem:[%s2 + $0x8] sm:$0xff]
      %v217 = vld [vmem:[%s2 + $0x10] sm:$0xff]
      %v218 = vld [vmem:[%s2 + $0x18] sm:$0xff]
      %220 = vset.pattern.permute.xlu0 0
      %221 = vperm.xlu0 %220, %v215
      %v222 = vpop.permute.xlu0 %221
      %225 = vset.pattern.permute.xlu0 0
      %226 = vperm.xlu0 %225, %v216
      %v227 = vpop.permute.xlu0 %226
      %230 = vset.pattern.permute.xlu0 0
      %231 = vperm.xlu0 %230, %v217
      %v232 = vpop.permute.xlu0 %231
      %235 = vset.pattern.permute.xlu0 0
      %236 = vperm.xlu0 %235, %v218
      %v237 = vpop.permute.xlu0 %236
      %v241 = vunpack.c.l.s4 1983009808
      %v242 = vunpack.c.0.s8 %v241
      %v243 = vlaneseq
      %v244 = vshrl.u32 %v243, 7
      %v245 = vsub.s32 %v242, %v244
      %v246 = vrot.slane %v210, %v245
      %v247 = vcombine.high %v246, %v246
      %vm248 = vcmask 15360
      %v250 = vsel %vm248, %v211, 0
      %v253 = vsel %vm248, %v212, 0
      %v256 = vsel %vm248, %v213, 0
      %v259 = vsel %vm248, %v214, 0
      %vm261 = vcmask 1041408
      %v262 = vsel %vm261, %v246, 0
      %v264 = vsel %vm261, %v247, 0
      %266 = vmatprep.subr.mxu0 %v264
      %267 = vmatpush1.msra.mxu0 %v262
      %268 = vmatprep.subr.mxu0 0.0
      %269 = vmatpush1.msra.mxu0 0.0
      %270 = vmatprep.subr.mxu0 0.0
      %271 = vmatpush1.msra.mxu0 0.0
      %272 = vmatprep.subr.mxu0 0.0
      %273 = vmatpush1.msra.mxu0 0.0
      %274 = vmatprep.subr.mxu0 0.0
      %275 = vmatpush1.msra.mxu0 0.0
      %276 = vmatprep.subr.mxu0 0.0
      %277 = vmatpush1.msra.mxu0 0.0
      %278 = vmatprep.subr.mxu0 0.0
      %279 = vmatpush1.msra.mxu0 0.0
      %280 = vmatprep.subr.mxu0 0.0
      %281 = vmatpush1.msra.mxu0 0.0
      %282 = vmatprep.subr.mxu0 0.0
      %283 = vmatpush1.msra.mxu0 0.0
      %284 = vmatprep.subr.mxu0 0.0
      %285 = vmatpush1.msra.mxu0 0.0
      %286 = vmatprep.subr.mxu0 0.0
      %287 = vmatpush1.msra.mxu0 0.0
      %288 = vmatprep.subr.mxu0 0.0
      %289 = vmatpush1.msra.mxu0 0.0
      %290 = vmatprep.subr.mxu0 0.0
      %291 = vmatpush1.msra.mxu0 0.0
      %292 = vmatprep.subr.mxu0 0.0
      %293 = vmatpush1.msra.mxu0 0.0
      %294 = vmatprep.subr.mxu0 0.0
      %295 = vmatpush1.msra.mxu0 0.0
      %296 = vmatprep.subr.mxu0 0.0
      %297 = vmatpush1.msra.mxu0 0.0
      %298 = vmatprep.subr.mxu0 0.0
      %299 = vmatpush1.msra.mxu0 0.0
      %300 = vmatprep.subr.mxu0 0.0
      %301 = vmatpush1.msra.mxu0 0.0
      %302 = vmatprep.subr.mxu0 0.0
      %303 = vmatpush1.msra.mxu0 0.0
      %304 = vmatprep.subr.mxu0 0.0
      %305 = vmatpush1.msra.mxu0 0.0
      %306 = vmatprep.subr.mxu0 0.0
      %307 = vmatpush1.msra.mxu0 0.0
      %308 = vmatprep.subr.mxu0 0.0
      %309 = vmatpush1.msra.mxu0 0.0
      %310 = vmatprep.subr.mxu0 0.0
      %311 = vmatpush1.msra.mxu0 0.0
      %312 = vmatprep.subr.mxu0 0.0
      %313 = vmatpush1.msra.mxu0 0.0
      %314 = vmatprep.subr.mxu0 0.0
      %315 = vmatpush1.msra.mxu0 0.0
      %316 = vmatprep.subr.mxu0 0.0
      %317 = vmatpush1.msra.mxu0 0.0
      %318 = vmatprep.subr.mxu0 0.0
      %319 = vmatpush1.msra.mxu0 0.0
      %320 = vmatprep.subr.mxu0 0.0
      %321 = vmatpush1.msra.mxu0 0.0
      %322 = vmatprep.subr.mxu0 0.0
      %323 = vmatpush1.msra.mxu0 0.0
      %324 = vmatprep.subr.mxu0 0.0
      %325 = vmatpush1.msra.mxu0 0.0
      %326 = vmatprep.subr.mxu0 0.0
      %327 = vmatpush1.msra.mxu0 0.0
      %328 = vmatprep.subr.mxu0 0.0
      %329 = vmatpush1.msra.mxu0 0.0
      %330 = vmatprep.mubr.f32.mxu0 0.0
      %331 = vmatmul.mubr.f32.gmra.mrb[0].mxu0 %v250
      %v332 = vpop.f32.mrb[0].mxu0
      %v333 = vadd.f32 %v222, %v332
      %v334 = vpop.f32.mrb[0].mxu0
      %v335 = vadd.f32 %v222, %v334
      %336 = vmatprep.mubr.f32.mxu0 0.0
      %337 = vmatmul.mubr.f32.gmra.mrb[0].mxu0 %v253
      %v338 = vpop.f32.mrb[0].mxu0
      %v339 = vadd.f32 %v227, %v338
      %v340 = vpop.f32.mrb[0].mxu0
      %v341 = vadd.f32 %v227, %v340
      %342 = vmatprep.mubr.f32.mxu0 0.0
      %343 = vmatmul.mubr.f32.gmra.mrb[0].mxu0 %v256
      %v344 = vpop.f32.mrb[0].mxu0
      %v345 = vadd.f32 %v232, %v344
      %v346 = vpop.f32.mrb[0].mxu0
      %v347 = vadd.f32 %v232, %v346
      %348 = vmatprep.mubr.f32.mxu0 0.0
      %349 = vmatmul.mubr.f32.gmra.mrb[0].mxu0 %v259
      %v350 = vpop.f32.mrb[0].mxu0
      %v351 = vadd.f32 %v237, %v350
      %v352 = vpop.f32.mrb[0].mxu0
      %v353 = vadd.f32 %v237, %v352
      %354 = vdwg.mxu0
      %v355 = vsub.f32 0.0, %v333
      %v356 = vsub.f32 0.0, %v335
      %v357 = vsub.f32 0.0, %v339
      %v358 = vsub.f32 0.0, %v341
      %v359 = vsub.f32 0.0, %v345
      %v360 = vsub.f32 0.0, %v347
      %v361 = vsub.f32 0.0, %v351
      %v362 = vsub.f32 0.0, %v353
      %v363 = vmul.f32 %v355, 1.442695
      %v364 = vpow.pop %v363
      %v365 = vmul.f32 %v356, 1.442695
      %v366 = vpow.pop %v365
      %v367 = vmul.f32 %v357, 1.442695
      %v368 = vpow.pop %v367
      %v369 = vmul.f32 %v358, 1.442695
      %v370 = vpow.pop %v369
      %v371 = vmul.f32 %v359, 1.442695
      %v372 = vpow.pop %v371
      %v373 = vmul.f32 %v360, 1.442695
      %v374 = vpow.pop %v373
      %v375 = vmul.f32 %v361, 1.442695
      %v376 = vpow.pop %v375
      %v377 = vmul.f32 %v362, 1.442695
      %v378 = vpow.pop %v377
      %v379 = vadd.f32 %v364, 1.0
      %v380 = vadd.f32 %v366, 1.0
      %v381 = vadd.f32 %v368, 1.0
      %v382 = vadd.f32 %v370, 1.0
      %v383 = vadd.f32 %v372, 1.0
      %v384 = vadd.f32 %v374, 1.0
      %v385 = vadd.f32 %v376, 1.0
      %v386 = vadd.f32 %v378, 1.0
      %v387 = vrcp.pop %v379
      %v388 = vmul.f32 1.0, %v387
      %v389 = vrcp.pop %v380
      %v390 = vmul.f32 1.0, %v389
      %v391 = vrcp.pop %v381
      %v392 = vmul.f32 1.0, %v391
      %v393 = vrcp.pop %v382
      %v394 = vmul.f32 1.0, %v393
      %v395 = vrcp.pop %v383
      %v396 = vmul.f32 1.0, %v395
      %v397 = vrcp.pop %v384
      %v398 = vmul.f32 1.0, %v397
      %v399 = vrcp.pop %v385
      %v400 = vmul.f32 1.0, %v399
      %v401 = vrcp.pop %v386
      %v402 = vmul.f32 1.0, %v401
      %403 = vst [vmem:[%s208] sm:$0xff] %v388
      %404 = vst [vmem:[%s208 + $0x8] sm:$0xff] %v390
      %405 = vst [vmem:[%s208 + $0x10] sm:$0xff] %v392
      %406 = vst [vmem:[%s208 + $0x18] sm:$0xff] %v394
      %407 = vst [vmem:[%s208 + $0x20] sm:$0xff] %v396
      %408 = vst [vmem:[%s208 + $0x28] sm:$0xff] %v398
      %409 = vst [vmem:[%s208 + $0x30] sm:$0xff] %v400
      %410 = vst [vmem:[%s208 + $0x38] sm:$0xff] %v402
      %s411 = smul.u32 2, %s19
      %p412 = scmp.lt.s32.totalorder %s18, 1
      %s413 = scalar_select %p412, %s18, 1
      %p414 = scmp.lt.s32.totalorder %s411, 1
      %s415 = scalar_select %p414, %s411, 1
      %s416 = smul.addr %s413, 8
      %s417 = sadd.s32 %s415, %s416
      %s418 = smul.addr %s417, 8
      %s419 = scalar_lea.vmem %s3, %s418
      // Predicated region
      $region33: #{drp2_forward.19} parent=31 // pred_check
        %p420 = pneg %p116
      $region34: #{drp2_forward.19} parent=31 // pred_check_branch
        %422 = sbr.rel (%p420) target = $region36
      $region35: #{drp2_forward.19} parent=31 // pred_region
        %s423 = smul.u32 2, %s19
      $region36: #{drp2_forward.19} parent=31 // pred_fallthru
        _
    $region32: #{drp2_forward.19} parent=5 // pred_fallthru
      _
    %p424 = scmp.le.s32.totalorder 2, %s9
    // Predicated region
    $region37: #{drp2_forward.19} parent=5 // pred_check
      %p425 = pneg %p424
    $region38: #{drp2_forward.19} parent=5 // pred_check_branch
      %427 = sbr.rel (%p425) target = $region40
    $region39: #{drp2_forward.19} parent=5 // pred_region
      %s428 = ssub.s32 %s9, 2
      // Predicated region
      $region41: #{drp2_forward.19} parent=39 // pred_check
        %p429 = pneg %p122
      $region42: #{drp2_forward.19} parent=39 // pred_check_branch
        %431 = sbr.rel (%p429) target = $region44
      $region43: #{drp2_forward.19} parent=39 // pred_region
        %s432 = smul.u32 2, %s21
        %p433 = scmp.lt.s32.totalorder %s20, 1
        %s434 = scalar_select %p433, %s20, 1
        %p435 = scmp.lt.s32.totalorder %s432, 1
        %s436 = scalar_select %p435, %s432, 1
        %s437 = smul.addr %s434, 8
        %s438 = sadd.s32 %s436, %s437
        %s439 = smul.addr %s438, 8
        %s440 = scalar_lea.vmem %s3, %s439
      $region44: #{drp2_forward.19} parent=39 // pred_fallthru
        _
    $region40: #{drp2_forward.19} parent=5 // pred_fallthru
      _
  $region6: #{drp2_forward.19} parent=0 // loop_footer
    %s13 = sadd.s32 1, %s9
  $region7: #{drp2_forward.19} parent=0 // loop_footer_branch
    %8 = sbr.rel target = $region3
  $region8: #{drp2_forward.19} parent=0 // loop_exit
    _

// kernel: drp2_forward.20
$region0: #{drp2_forward.20}
  #allocation0 [shape = 'u32[]', space=smem, size = 0x4, offset = 0x4, fixed_abs, tag = 'smem constant byte address 0x4 - core index']
  #allocation1 [shape = 'u32[144,128]{1,0:T(1,128)}', space=vmem, size = 0x12000, scoped, tag = 'internal scratch']
  %s0 = inlined_call_operand.vmem [shape: f32[2,32,256], index: 0, kind: input, shape index: {}]
  %s1 = inlined_call_operand.vmem [shape: f32[2,32,256], index: 1, kind: input, shape index: {}]
  %s2 = inlined_call_operand.vmem [shape: f32[2,32,256], index: 2, kind: input, shape index: {}]
  %s3 = inlined_call_operand.vmem [shape: f32[2,32,256], index: 3, kind: output, shape index: {0}]
  %s4 = inlined_call_operand.vmem [shape: f32[2,32,256], index: 4, kind: output, shape index: {1}]
  %5 = xla_tuple %s3, %s4
  %s6 = sld [smem:[#allocation0]]
  $region53: #{drp2_forward.20} parent=0
    _
  %s8 = ssub.s32 1, %s6
  %s9 = scalar_select 0, %s8, %s6
  loop: start=0, step=1, limit=4
  $region2: #{drp2_forward.20} parent=0 // loop_pre_header
    _
  $region3: #{drp2_forward.20} parent=0 // loop_header
    %s11 = sphi 0, %s15
    %p12 = scmp.ge.s32.totalorder %s11, 4
    %s18 = sphi 0, %s30
    %s19 = sphi 0, %s26
    %s20 = sphi 0, %s18
    %s21 = sphi 0, %s19
    %s22 = sphi 0, %s20
    %s23 = sphi 0, %s21
    %s35 = sphi 0, %s37
    %s38 = sphi 0, %s35
    %s39 = sphi 0, %s38
    %s55 = sphi 0, %s39
    %s63 = sphi 0, %s65
    %s66 = sphi 0, %s63
    %s67 = sphi 0, %s66
    %s83 = sphi 0, %s67
    %s91 = sphi 0, %s93
    %s94 = sphi 0, %s91
    %s95 = sphi 0, %s94
    %s111 = sphi 0, %s95
    %s119 = sphi 0, %s121
    %s122 = sphi 0, %s119
    %s123 = sphi 0, %s122
    %s139 = sphi 0, %s123
    %s147 = sphi 0, %s149
    %s150 = sphi 0, %s147
    %s151 = sphi 0, %s150
    %s167 = sphi 0, %s151
  $region4: #{drp2_forward.20} parent=0 // loop_header_branch
    %14 = sbr.rel (%p12) target = $region8
  $region5: #{drp2_forward.20} parent=0 // loop_body
    %s16 = ssub.s32 %s11, 1
    %s17 = ssub.s32 %s11, 2
    %s24 = sadd.s32 1, %s19
    %p25 = scmp.ge.s32.totalorder %s24, 1
    %s26 = scalar_select %p25, 0, %s24
    %s27 = sadd.s32 1, %s18
    %s28 = scalar_select %p25, %s27, %s18
    %p29 = scmp.ge.s32.totalorder %s28, 2
    %s30 = scalar_select %p29, 0, %s28
    %s31 = ssub.s32 %s18, %s30
    %s32 = ssub.s32 %s19, %s26
    %s33 = sor.u32 %s31, %s32
    %p34 = scmp.eq.s32.totalorder %s33, 0
    %s36 = sadd.s32 %s35, 1
    %s37 = scalar_select %p34, %s35, %s36
    %p40 = pneg %p34
    %p41 = scmp.eq.s32.totalorder %s11, 1
    %p42 = por %p40, %p41
    %p43 = scmp.ne.s32.totalorder %s35, %s38
    %p44 = scmp.eq.s32.totalorder %s11, 0
    %p45 = por %p43, %p44
    %p46 = scmp.ne.s32.totalorder %s35, %s38
    %p47 = scmp.eq.s32.totalorder %s16, 1
    %p48 = por %p46, %p47
    %p49 = scmp.ne.s32.totalorder %s38, %s39
    %p50 = scmp.eq.s32.totalorder %s16, 0
    %p51 = por %p49, %p50
    %p52 = scmp.ne.s32.totalorder %s38, %s39
    %p53 = scmp.eq.s32.totalorder %s17, 1
    %p54 = por %p52, %p53
    %p56 = scmp.ne.s32.totalorder %s39, %s55
    %p57 = scmp.eq.s32.totalorder %s17, 0
    %p58 = por %p56, %p57
    %s59 = ssub.s32 %s18, %s30
    %s60 = ssub.s32 %s19, %s26
    %s61 = sor.u32 %s59, %s60
    %p62 = scmp.eq.s32.totalorder %s61, 0
    %s64 = sadd.s32 %s63, 1
    %s65 = scalar_select %p62, %s63, %s64
    %p68 = pneg %p62
    %p69 = scmp.eq.s32.totalorder %s11, 1
    %p70 = por %p68, %p69
    %p71 = scmp.ne.s32.totalorder %s63, %s66
    %p72 = scmp.eq.s32.totalorder %s11, 0
    %p73 = por %p71, %p72
    %p74 = scmp.ne.s32.totalorder %s63, %s66
    %p75 = scmp.eq.s32.totalorder %s16, 1
    %p76 = por %p74, %p75
    %p77 = scmp.ne.s32.totalorder %s66, %s67
    %p78 = scmp.eq.s32.totalorder %s16, 0
    %p79 = por %p77, %p78
    %p80 = scmp.ne.s32.totalorder %s66, %s67
    %p81 = scmp.eq.s32.totalorder %s17, 1
    %p82 = por %p80, %p81
    %p84 = scmp.ne.s32.totalorder %s67, %s83
    %p85 = scmp.eq.s32.totalorder %s17, 0
    %p86 = por %p84, %p85
    %s87 = ssub.s32 %s18, %s30
    %s88 = ssub.s32 %s19, %s26
    %s89 = sor.u32 %s87, %s88
    %p90 = scmp.eq.s32.totalorder %s89, 0
    %s92 = sadd.s32 %s91, 1
    %s93 = scalar_select %p90, %s91, %s92
    %p96 = pneg %p90
    %p97 = scmp.eq.s32.totalorder %s11, 1
    %p98 = por %p96, %p97
    %p99 = scmp.ne.s32.totalorder %s91, %s94
    %p100 = scmp.eq.s32.totalorder %s11, 0
    %p101 = por %p99, %p100
    %p102 = scmp.ne.s32.totalorder %s91, %s94
    %p103 = scmp.eq.s32.totalorder %s16, 1
    %p104 = por %p102, %p103
    %p105 = scmp.ne.s32.totalorder %s94, %s95
    %p106 = scmp.eq.s32.totalorder %s16, 0
    %p107 = por %p105, %p106
    %p108 = scmp.ne.s32.totalorder %s94, %s95
    %p109 = scmp.eq.s32.totalorder %s17, 1
    %p110 = por %p108, %p109
    %p112 = scmp.ne.s32.totalorder %s95, %s111
    %p113 = scmp.eq.s32.totalorder %s17, 0
    %p114 = por %p112, %p113
    %s115 = ssub.s32 %s18, %s30
    %s116 = ssub.s32 %s19, %s26
    %s117 = sor.u32 %s115, %s116
    %p118 = scmp.eq.s32.totalorder %s117, 0
    %s120 = sadd.s32 %s119, 1
    %s121 = scalar_select %p118, %s119, %s120
    %p124 = pneg %p118
    %p125 = scmp.eq.s32.totalorder %s11, 1
    %p126 = por %p124, %p125
    %p127 = scmp.ne.s32.totalorder %s119, %s122
    %p128 = scmp.eq.s32.totalorder %s11, 0
    %p129 = por %p127, %p128
    %p130 = scmp.ne.s32.totalorder %s119, %s122
    %p131 = scmp.eq.s32.totalorder %s16, 1
    %p132 = por %p130, %p131
    %p133 = scmp.ne.s32.totalorder %s122, %s123
    %p134 = scmp.eq.s32.totalorder %s16, 0
    %p135 = por %p133, %p134
    %p136 = scmp.ne.s32.totalorder %s122, %s123
    %p137 = scmp.eq.s32.totalorder %s17, 1
    %p138 = por %p136, %p137
    %p140 = scmp.ne.s32.totalorder %s123, %s139
    %p141 = scmp.eq.s32.totalorder %s17, 0
    %p142 = por %p140, %p141
    %s143 = ssub.s32 %s18, %s30
    %s144 = ssub.s32 %s19, %s26
    %s145 = sor.u32 %s143, %s144
    %p146 = scmp.eq.s32.totalorder %s145, 0
    %s148 = sadd.s32 %s147, 1
    %s149 = scalar_select %p146, %s147, %s148
    %p152 = pneg %p146
    %p153 = scmp.eq.s32.totalorder %s11, 1
    %p154 = por %p152, %p153
    %p155 = scmp.ne.s32.totalorder %s147, %s150
    %p156 = scmp.eq.s32.totalorder %s11, 0
    %p157 = por %p155, %p156
    %p158 = scmp.ne.s32.totalorder %s147, %s150
    %p159 = scmp.eq.s32.totalorder %s16, 1
    %p160 = por %p158, %p159
    %p161 = scmp.ne.s32.totalorder %s150, %s151
    %p162 = scmp.eq.s32.totalorder %s16, 0
    %p163 = por %p161, %p162
    %p164 = scmp.ne.s32.totalorder %s150, %s151
    %p165 = scmp.eq.s32.totalorder %s17, 1
    %p166 = por %p164, %p165
    %p168 = scmp.ne.s32.totalorder %s151, %s167
    %p169 = scmp.eq.s32.totalorder %s17, 0
    %p170 = por %p168, %p169
    %p171 = scmp.le.s32.totalorder 1, %s11
    %p172 = scmp.lt.s32.totalorder %s11, 3
    %p173 = pnand %p171, %p172
    %p174 = pneg %p173
    // Predicated region
    $region9: #{drp2_forward.20} parent=5 // pred_check
      _
    $region10: #{drp2_forward.20} parent=5 // pred_check_branch
      %176 = sbr.rel (%p173) target = $region12
    $region11: #{drp2_forward.20} parent=5 // pred_region
      %s177 = ssub.s32 %s11, 1
    $region12: #{drp2_forward.20} parent=5 // pred_fallthru
      _
    %p178 = scmp.lt.s32.totalorder %s11, 2
    // Predicated region
    $region13: #{drp2_forward.20} parent=5 // pred_check
      %p179 = pneg %p178
    $region14: #{drp2_forward.20} parent=5 // pred_check_branch
      %181 = sbr.rel (%p179) target = $region16
    $region15: #{drp2_forward.20} parent=5 // pred_region
      // Predicated region
      $region17: #{drp2_forward.20} parent=15 // pred_check
        %p182 = pneg %p45
      $region18: #{drp2_forward.20} parent=15 // pred_check_branch
        %184 = sbr.rel (%p182) target = $region20
      $region19: #{drp2_forward.20} parent=15 // pred_region
        %s185 = smul.u32 2, %s19
        %p186 = scmp.lt.s32.totalorder %s18, 1
        %s187 = scalar_select %p186, %s18, 1
        %p188 = scmp.lt.s32.totalorder %s185, 1
        %s189 = scalar_select %p188, %s185, 1
        %s190 = smul.addr %s187, 8
        %s191 = sadd.s32 %s189, %s190
        %s192 = smul.addr %s191, 8
        %s193 = scalar_lea.vmem %s0, %s192
        %s194 = smul.u32 2, %s19
      $region20: #{drp2_forward.20} parent=15 // pred_fallthru
        _
      // Predicated region
      $region21: #{drp2_forward.20} parent=15 // pred_check
        %p195 = pneg %p73
      $region22: #{drp2_forward.20} parent=15 // pred_check_branch
        %197 = sbr.rel (%p195) target = $region24
      $region23: #{drp2_forward.20} parent=15 // pred_region
        %s198 = smul.u32 2, %s19
        %p199 = scmp.lt.s32.totalorder %s18, 1
        %s200 = scalar_select %p199, %s18, 1
        %p201 = scmp.lt.s32.totalorder %s198, 1
        %s202 = scalar_select %p201, %s198, 1
        %s203 = smul.addr %s200, 8
        %s204 = sadd.s32 %s202, %s203
        %s205 = smul.addr %s204, 8
        %s206 = scalar_lea.vmem %s1, %s205
        %s207 = smul.u32 2, %s19
      $region24: #{drp2_forward.20} parent=15 // pred_fallthru
        _
      // Predicated region
      $region25: #{drp2_forward.20} parent=15 // pred_check
        %p208 = pneg %p101
      $region26: #{drp2_forward.20} parent=15 // pred_check_branch
        %210 = sbr.rel (%p208) target = $region28
      $region27: #{drp2_forward.20} parent=15 // pred_region
        %s211 = smul.u32 2, %s19
        %p212 = scmp.lt.s32.totalorder %s18, 1
        %s213 = scalar_select %p212, %s18, 1
        %p214 = scmp.lt.s32.totalorder %s211, 1
        %s215 = scalar_select %p214, %s211, 1
        %s216 = smul.addr %s213, 8
        %s217 = sadd.s32 %s215, %s216
        %s218 = smul.addr %s217, 8
        %s219 = scalar_lea.vmem %s2, %s218
        %s220 = smul.u32 2, %s19
      $region28: #{drp2_forward.20} parent=15 // pred_fallthru
        _
    $region16: #{drp2_forward.20} parent=5 // pred_fallthru
      _
    %p221 = scmp.le.s32.totalorder 1, %s11
    %p222 = scmp.lt.s32.totalorder %s11, 3
    %p223 = pnand %p221, %p222
    %p224 = pneg %p223
    // Predicated region
    $region29: #{drp2_forward.20} parent=5 // pred_check
      _
    $region30: #{drp2_forward.20} parent=5 // pred_check_branch
      %226 = sbr.rel (%p223) target = $region32
    $region31: #{drp2_forward.20} parent=5 // pred_region
      %s227 = ssub.s32 %s11, 1
      %s228 = smul.u32 2, %s21
      %p229 = scmp.lt.s32.totalorder %s20, 1
      %s230 = scalar_select %p229, %s20, 1
      %p231 = scmp.lt.s32.totalorder %s228, 1
      %s232 = scalar_select %p231, %s228, 1
      %s233 = smul.addr %s230, 8
      %s234 = sadd.s32 %s232, %s233
      %s235 = smul.addr %s234, 8
      %s236 = scalar_lea.vmem %s0, %s235
      %p237 = pneg %p51
      %p238 = pneg %p48
      %s239 = smul.u32 2, %s21
      %p240 = scmp.lt.s32.totalorder %s20, 1
      %s241 = scalar_select %p240, %s20, 1
      %p242 = scmp.lt.s32.totalorder %s239, 1
      %s243 = scalar_select %p242, %s239, 1
      %s244 = smul.addr %s241, 8
      %s245 = sadd.s32 %s243, %s244
      %s246 = smul.addr %s245, 8
      %s247 = scalar_lea.vmem %s1, %s246
      %p248 = pneg %p79
      %p249 = pneg %p76
      %s250 = smul.u32 2, %s21
      %p251 = scmp.lt.s32.totalorder %s20, 1
      %s252 = scalar_select %p251, %s20, 1
      %p253 = scmp.lt.s32.totalorder %s250, 1
      %s254 = scalar_select %p253, %s250, 1
      %s255 = smul.addr %s252, 8
      %s256 = sadd.s32 %s254, %s255
      %s257 = smul.addr %s256, 8
      %s258 = scalar_lea.vmem %s2, %s257
      %p259 = pneg %p107
      %p260 = pneg %p104
      %p261 = pneg %p135
      %p262 = pneg %p132
      %s263 = smul.u32 2, %s21
      %p264 = scmp.lt.s32.totalorder %s20, 1
      %s265 = scalar_select %p264, %s20, 1
      %p266 = scmp.lt.s32.totalorder %s263, 1
      %s267 = scalar_select %p266, %s263, 1
      %s268 = smul.addr %s265, 8
      %s269 = sadd.s32 %s267, %s268
      %s270 = smul.addr %s269, 8
      %s271 = scalar_lea.vmem %s3, %s270
      %p272 = pneg %p163
      %p273 = pneg %p160
      %s274 = smul.u32 2, %s21
      %p275 = scmp.lt.s32.totalorder %s20, 1
      %s276 = scalar_select %p275, %s20, 1
      %p277 = scmp.lt.s32.totalorder %s274, 1
      %s278 = scalar_select %p277, %s274, 1
      %s279 = smul.addr %s276, 8
      %s280 = sadd.s32 %s278, %s279
      %s281 = smul.addr %s280, 8
      %s282 = scalar_lea.vmem %s4, %s281
      %s283 = smul.u32 2, %s21
      %p284 = scmp.lt.s32.totalorder %s20, 1
      %s285 = scalar_select %p284, %s20, 1
      %p286 = scmp.lt.s32.totalorder %s283, 1
      %s287 = scalar_select %p286, %s283, 1
      %s288 = smul.addr %s285, 8
      %s289 = sadd.s32 %s287, %s288
      %s290 = smul.addr %s289, 8
      %s291 = scalar_lea.vmem %s0, %s290
      %s292 = smul.u32 2, %s21
      %s293 = smul.u32 2, %s21
      %p294 = scmp.lt.s32.totalorder %s20, 1
      %s295 = scalar_select %p294, %s20, 1
      %p296 = scmp.lt.s32.totalorder %s293, 1
      %s297 = scalar_select %p296, %s293, 1
      %s298 = smul.addr %s295, 8
      %s299 = sadd.s32 %s297, %s298
      %s300 = smul.addr %s299, 8
      %s301 = scalar_lea.vmem %s1, %s300
      %s302 = smul.u32 2, %s21
      %s303 = smul.u32 2, %s21
      %p304 = scmp.lt.s32.totalorder %s20, 1
      %s305 = scalar_select %p304, %s20, 1
      %p306 = scmp.lt.s32.totalorder %s303, 1
      %s307 = scalar_select %p306, %s303, 1
      %s308 = smul.addr %s305, 8
      %s309 = sadd.s32 %s307, %s308
      %s310 = smul.addr %s309, 8
      %s311 = scalar_lea.vmem %s2, %s310
      %s312 = smul.u32 2, %s21
      %s313 = smul.u32 2, %s21
      %p314 = scmp.lt.s32.totalorder %s20, 1
      %s315 = scalar_select %p314, %s20, 1
      %p316 = scmp.lt.s32.totalorder %s313, 1
      %s317 = scalar_select %p316, %s313, 1
      %s318 = smul.addr %s315, 8
      %s319 = sadd.s32 %s317, %s318
      %s320 = smul.addr %s319, 8
      %s321 = scalar_lea.vmem %s3, %s320
      %s322 = smul.u32 2, %s21
      %s323 = smul.u32 2, %s21
      %p324 = scmp.lt.s32.totalorder %s20, 1
      %s325 = scalar_select %p324, %s20, 1
      %p326 = scmp.lt.s32.totalorder %s323, 1
      %s327 = scalar_select %p326, %s323, 1
      %s328 = smul.addr %s325, 8
      %s329 = sadd.s32 %s327, %s328
      %s330 = smul.addr %s329, 8
      %s331 = scalar_lea.vmem %s4, %s330
      %s332 = smul.u32 2, %s21
      %v333 = vld [vmem:[%s291] sm:$0xff]
      %v334 = vld [vmem:[%s291 + $0x8] sm:$0xff]
      %v335 = vld [vmem:[%s291 + $0x10] sm:$0xff]
      %v336 = vld [vmem:[%s291 + $0x18] sm:$0xff]
      %v337 = vld [vmem:[%s291 + $0x20] sm:$0xff]
      %v338 = vld [vmem:[%s291 + $0x28] sm:$0xff]
      %v339 = vld [vmem:[%s291 + $0x30] sm:$0xff]
      %v340 = vld [vmem:[%s291 + $0x38] sm:$0xff]
      %v341 = vld [vmem:[%s301] sm:$0xff]
      %v342 = vld [vmem:[%s301 + $0x8] sm:$0xff]
      %v343 = vld [vmem:[%s301 + $0x10] sm:$0xff]
      %v344 = vld [vmem:[%s301 + $0x18] sm:$0xff]
      %v345 = vld [vmem:[%s301 + $0x20] sm:$0xff]
      %v346 = vld [vmem:[%s301 + $0x28] sm:$0xff]
      %v347 = vld [vmem:[%s301 + $0x30] sm:$0xff]
      %v348 = vld [vmem:[%s301 + $0x38] sm:$0xff]
      %v349 = vmul.f32 %v333, %v341
      %v350 = vmul.f32 %v334, %v342
      %v351 = vmul.f32 %v335, %v343
      %v352 = vmul.f32 %v336, %v344
      %v353 = vmul.f32 %v337, %v345
      %v354 = vmul.f32 %v338, %v346
      %v355 = vmul.f32 %v339, %v347
      %v356 = vmul.f32 %v340, %v348
      %357 = vst [vmem:[%s321] sm:$0xff] %v349
      %358 = vst [vmem:[%s321 + $0x8] sm:$0xff] %v350
      %359 = vst [vmem:[%s321 + $0x10] sm:$0xff] %v351
      %360 = vst [vmem:[%s321 + $0x18] sm:$0xff] %v352
      %361 = vst [vmem:[%s321 + $0x20] sm:$0xff] %v353
      %362 = vst [vmem:[%s321 + $0x28] sm:$0xff] %v354
      %363 = vst [vmem:[%s321 + $0x30] sm:$0xff] %v355
      %364 = vst [vmem:[%s321 + $0x38] sm:$0xff] %v356
      %v365 = vld [vmem:[%s311] sm:$0xff]
      %v366 = vld [vmem:[%s311 + $0x8] sm:$0xff]
      %v367 = vld [vmem:[%s311 + $0x10] sm:$0xff]
      %v368 = vld [vmem:[%s311 + $0x18] sm:$0xff]
      %v369 = vld [vmem:[%s311 + $0x20] sm:$0xff]
      %v370 = vld [vmem:[%s311 + $0x28] sm:$0xff]
      %v371 = vld [vmem:[%s311 + $0x30] sm:$0xff]
      %v372 = vld [vmem:[%s311 + $0x38] sm:$0xff]
      %v373 = vmul.f32 %v333, %v365
      %v374 = vmul.f32 %v334, %v366
      %v375 = vmul.f32 %v335, %v367
      %v376 = vmul.f32 %v336, %v368
      %v377 = vmul.f32 %v337, %v369
      %v378 = vmul.f32 %v338, %v370
      %v379 = vmul.f32 %v339, %v371
      %v380 = vmul.f32 %v340, %v372
      %381 = vst [vmem:[%s331] sm:$0xff] %v373
      %382 = vst [vmem:[%s331 + $0x8] sm:$0xff] %v374
      %383 = vst [vmem:[%s331 + $0x10] sm:$0xff] %v375
      %384 = vst [vmem:[%s331 + $0x18] sm:$0xff] %v376
      %385 = vst [vmem:[%s331 + $0x20] sm:$0xff] %v377
      %386 = vst [vmem:[%s331 + $0x28] sm:$0xff] %v378
      %387 = vst [vmem:[%s331 + $0x30] sm:$0xff] %v379
      %388 = vst [vmem:[%s331 + $0x38] sm:$0xff] %v380
      %s389 = smul.u32 2, %s21
      %p390 = scmp.lt.s32.totalorder %s20, 1
      %s391 = scalar_select %p390, %s20, 1
      %p392 = scmp.lt.s32.totalorder %s389, 1
      %s393 = scalar_select %p392, %s389, 1
      %s394 = smul.addr %s391, 8
      %s395 = sadd.s32 %s393, %s394
      %s396 = smul.addr %s395, 8
      %s397 = scalar_lea.vmem %s3, %s396
      %s398 = smul.u32 2, %s21
      %p399 = scmp.lt.s32.totalorder %s20, 1
      %s400 = scalar_select %p399, %s20, 1
      %p401 = scmp.lt.s32.totalorder %s398, 1
      %s402 = scalar_select %p401, %s398, 1
      %s403 = smul.addr %s400, 8
      %s404 = sadd.s32 %s402, %s403
      %s405 = smul.addr %s404, 8
      %s406 = scalar_lea.vmem %s4, %s405
      // Predicated region
      $region33: #{drp2_forward.20} parent=31 // pred_check
        %p407 = pneg %p132
      $region34: #{drp2_forward.20} parent=31 // pred_check_branch
        %409 = sbr.rel (%p407) target = $region36
      $region35: #{drp2_forward.20} parent=31 // pred_region
        %s410 = smul.u32 2, %s21
      $region36: #{drp2_forward.20} parent=31 // pred_fallthru
        _
      // Predicated region
      $region37: #{drp2_forward.20} parent=31 // pred_check
        %p411 = pneg %p160
      $region38: #{drp2_forward.20} parent=31 // pred_check_branch
        %413 = sbr.rel (%p411) target = $region40
      $region39: #{drp2_forward.20} parent=31 // pred_region
        %s414 = smul.u32 2, %s21
      $region40: #{drp2_forward.20} parent=31 // pred_fallthru
        _
    $region32: #{drp2_forward.20} parent=5 // pred_fallthru
      _
    %p415 = scmp.le.s32.totalorder 2, %s11
    // Predicated region
    $region41: #{drp2_forward.20} parent=5 // pred_check
      %p416 = pneg %p415
    $region42: #{drp2_forward.20} parent=5 // pred_check_branch
      %418 = sbr.rel (%p416) target = $region44
    $region43: #{drp2_forward.20} parent=5 // pred_region
      %s419 = ssub.s32 %s11, 2
      // Predicated region
      $region45: #{drp2_forward.20} parent=43 // pred_check
        %p420 = pneg %p138
      $region46: #{drp2_forward.20} parent=43 // pred_check_branch
        %422 = sbr.rel (%p420) target = $region48
      $region47: #{drp2_forward.20} parent=43 // pred_region
        %s423 = smul.u32 2, %s23
        %p424 = scmp.lt.s32.totalorder %s22, 1
        %s425 = scalar_select %p424, %s22, 1
        %p426 = scmp.lt.s32.totalorder %s423, 1
        %s427 = scalar_select %p426, %s423, 1
        %s428 = smul.addr %s425, 8
        %s429 = sadd.s32 %s427, %s428
        %s430 = smul.addr %s429, 8
        %s431 = scalar_lea.vmem %s3, %s430
      $region48: #{drp2_forward.20} parent=43 // pred_fallthru
        _
      // Predicated region
      $region49: #{drp2_forward.20} parent=43 // pred_check
        %p432 = pneg %p166
      $region50: #{drp2_forward.20} parent=43 // pred_check_branch
        %434 = sbr.rel (%p432) target = $region52
      $region51: #{drp2_forward.20} parent=43 // pred_region
        %s435 = smul.u32 2, %s23
        %p436 = scmp.lt.s32.totalorder %s22, 1
        %s437 = scalar_select %p436, %s22, 1
        %p438 = scmp.lt.s32.totalorder %s435, 1
        %s439 = scalar_select %p438, %s435, 1
        %s440 = smul.addr %s437, 8
        %s441 = sadd.s32 %s439, %s440
        %s442 = smul.addr %s441, 8
        %s443 = scalar_lea.vmem %s4, %s442
      $region52: #{drp2_forward.20} parent=43 // pred_fallthru
        _
    $region44: #{drp2_forward.20} parent=5 // pred_fallthru
      _
  $region6: #{drp2_forward.20} parent=0 // loop_footer
    %s15 = sadd.s32 1, %s11
  $region7: #{drp2_forward.20} parent=0 // loop_footer_branch
    %10 = sbr.rel target = $region3
  $region8: #{drp2_forward.20} parent=0 // loop_exit
    _

// kernel: drp2_forward.24
$region0: #{drp2_forward.24}
  #allocation0 [shape = 'u32[]', space=smem, size = 0x4, offset = 0x4, fixed_abs, tag = 'smem constant byte address 0x4 - core index']
  #allocation1 [shape = 'u32[144,128]{1,0:T(1,128)}', space=vmem, size = 0x12000, scoped, tag = 'internal scratch']
  %s0 = inlined_call_operand.vmem [shape: f32[2,32,256], index: 0, kind: input, shape index: {}]
  %s1 = inlined_call_operand.vmem [shape: f32[2,32,256], index: 1, kind: input, shape index: {}]
  %s2 = inlined_call_operand.vmem [shape: f32[1,32,1], index: 2, kind: input, shape index: {}]
  %s3 = inlined_call_operand.vmem [shape: f32[1,32,1], index: 3, kind: input, shape index: {}]
  %s4 = inlined_call_operand.vmem [shape: f32[2,32,256], index: 4, kind: input, shape index: {}]
  %s5 = inlined_call_operand.vmem [shape: f32[2,32,256], index: 5, kind: output, shape index: {}]
  %s6 = sld [smem:[#allocation0]]
  $region53: #{drp2_forward.24} parent=0
    _
  %s8 = ssub.s32 1, %s6
  %s9 = scalar_select 0, %s8, %s6
  loop: start=0, step=1, limit=4
  $region2: #{drp2_forward.24} parent=0 // loop_pre_header
    _
  $region3: #{drp2_forward.24} parent=0 // loop_header
    %s11 = sphi 0, %s15
    %p12 = scmp.ge.s32.totalorder %s11, 4
    %s18 = sphi 0, %s30
    %s19 = sphi 0, %s26
    %s20 = sphi 0, %s18
    %s21 = sphi 0, %s19
    %s22 = sphi 0, %s20
    %s23 = sphi 0, %s21
    %s35 = sphi 0, %s37
    %s38 = sphi 0, %s35
    %s39 = sphi 0, %s38
    %s55 = sphi 0, %s39
    %s63 = sphi 0, %s65
    %s66 = sphi 0, %s63
    %s67 = sphi 0, %s66
    %s83 = sphi 0, %s67
    %s87 = sphi 0, %s87
    %s89 = sphi 0, %s87
    %s90 = sphi 0, %s89
    %s104 = sphi 0, %s90
    %s108 = sphi 0, %s108
    %s110 = sphi 0, %s108
    %s111 = sphi 0, %s110
    %s125 = sphi 0, %s111
    %s133 = sphi 0, %s135
    %s136 = sphi 0, %s133
    %s137 = sphi 0, %s136
    %s153 = sphi 0, %s137
    %s161 = sphi 0, %s163
    %s164 = sphi 0, %s161
    %s165 = sphi 0, %s164
    %s181 = sphi 0, %s165
  $region4: #{drp2_forward.24} parent=0 // loop_header_branch
    %14 = sbr.rel (%p12) target = $region8
  $region5: #{drp2_forward.24} parent=0 // loop_body
    %s16 = ssub.s32 %s11, 1
    %s17 = ssub.s32 %s11, 2
    %s24 = sadd.s32 1, %s19
    %p25 = scmp.ge.s32.totalorder %s24, 1
    %s26 = scalar_select %p25, 0, %s24
    %s27 = sadd.s32 1, %s18
    %s28 = scalar_select %p25, %s27, %s18
    %p29 = scmp.ge.s32.totalorder %s28, 2
    %s30 = scalar_select %p29, 0, %s28
    %s31 = ssub.s32 %s18, %s30
    %s32 = ssub.s32 %s19, %s26
    %s33 = sor.u32 %s31, %s32
    %p34 = scmp.eq.s32.totalorder %s33, 0
    %s36 = sadd.s32 %s35, 1
    %s37 = scalar_select %p34, %s35, %s36
    %p40 = pneg %p34
    %p41 = scmp.eq.s32.totalorder %s11, 1
    %p42 = por %p40, %p41
    %p43 = scmp.ne.s32.totalorder %s35, %s38
    %p44 = scmp.eq.s32.totalorder %s11, 0
    %p45 = por %p43, %p44
    %p46 = scmp.ne.s32.totalorder %s35, %s38
    %p47 = scmp.eq.s32.totalorder %s16, 1
    %p48 = por %p46, %p47
    %p49 = scmp.ne.s32.totalorder %s38, %s39
    %p50 = scmp.eq.s32.totalorder %s16, 0
    %p51 = por %p49, %p50
    %p52 = scmp.ne.s32.totalorder %s38, %s39
    %p53 = scmp.eq.s32.totalorder %s17, 1
    %p54 = por %p52, %p53
    %p56 = scmp.ne.s32.totalorder %s39, %s55
    %p57 = scmp.eq.s32.totalorder %s17, 0
    %p58 = por %p56, %p57
    %s59 = ssub.s32 %s18, %s30
    %s60 = ssub.s32 %s19, %s26
    %s61 = sor.u32 %s59, %s60
    %p62 = scmp.eq.s32.totalorder %s61, 0
    %s64 = sadd.s32 %s63, 1
    %s65 = scalar_select %p62, %s63, %s64
    %p68 = pneg %p62
    %p69 = scmp.eq.s32.totalorder %s11, 1
    %p70 = por %p68, %p69
    %p71 = scmp.ne.s32.totalorder %s63, %s66
    %p72 = scmp.eq.s32.totalorder %s11, 0
    %p73 = por %p71, %p72
    %p74 = scmp.ne.s32.totalorder %s63, %s66
    %p75 = scmp.eq.s32.totalorder %s16, 1
    %p76 = por %p74, %p75
    %p77 = scmp.ne.s32.totalorder %s66, %s67
    %p78 = scmp.eq.s32.totalorder %s16, 0
    %p79 = por %p77, %p78
    %p80 = scmp.ne.s32.totalorder %s66, %s67
    %p81 = scmp.eq.s32.totalorder %s17, 1
    %p82 = por %p80, %p81
    %p84 = scmp.ne.s32.totalorder %s67, %s83
    %p85 = scmp.eq.s32.totalorder %s17, 0
    %p86 = por %p84, %p85
    %s88 = sadd.s32 %s87, 1
    %p91 = scmp.eq.s32.totalorder %s11, 1
    %p92 = scmp.ne.s32.totalorder %s87, %s89
    %p93 = scmp.eq.s32.totalorder %s11, 0
    %p94 = por %p92, %p93
    %p95 = scmp.ne.s32.totalorder %s87, %s89
    %p96 = scmp.eq.s32.totalorder %s16, 1
    %p97 = por %p95, %p96
    %p98 = scmp.ne.s32.totalorder %s89, %s90
    %p99 = scmp.eq.s32.totalorder %s16, 0
    %p100 = por %p98, %p99
    %p101 = scmp.ne.s32.totalorder %s89, %s90
    %p102 = scmp.eq.s32.totalorder %s17, 1
    %p103 = por %p101, %p102
    %p105 = scmp.ne.s32.totalorder %s90, %s104
    %p106 = scmp.eq.s32.totalorder %s17, 0
    %p107 = por %p105, %p106
    %s109 = sadd.s32 %s108, 1
    %p112 = scmp.eq.s32.totalorder %s11, 1
    %p113 = scmp.ne.s32.totalorder %s108, %s110
    %p114 = scmp.eq.s32.totalorder %s11, 0
    %p115 = por %p113, %p114
    %p116 = scmp.ne.s32.totalorder %s108, %s110
    %p117 = scmp.eq.s32.totalorder %s16, 1
    %p118 = por %p116, %p117
    %p119 = scmp.ne.s32.totalorder %s110, %s111
    %p120 = scmp.eq.s32.totalorder %s16, 0
    %p121 = por %p119, %p120
    %p122 = scmp.ne.s32.totalorder %s110, %s111
    %p123 = scmp.eq.s32.totalorder %s17, 1
    %p124 = por %p122, %p123
    %p126 = scmp.ne.s32.totalorder %s111, %s125
    %p127 = scmp.eq.s32.totalorder %s17, 0
    %p128 = por %p126, %p127
    %s129 = ssub.s32 %s18, %s30
    %s130 = ssub.s32 %s19, %s26
    %s131 = sor.u32 %s129, %s130
    %p132 = scmp.eq.s32.totalorder %s131, 0
    %s134 = sadd.s32 %s133, 1
    %s135 = scalar_select %p132, %s133, %s134
    %p138 = pneg %p132
    %p139 = scmp.eq.s32.totalorder %s11, 1
    %p140 = por %p138, %p139
    %p141 = scmp.ne.s32.totalorder %s133, %s136
    %p142 = scmp.eq.s32.totalorder %s11, 0
    %p143 = por %p141, %p142
    %p144 = scmp.ne.s32.totalorder %s133, %s136
    %p145 = scmp.eq.s32.totalorder %s16, 1
    %p146 = por %p144, %p145
    %p147 = scmp.ne.s32.totalorder %s136, %s137
    %p148 = scmp.eq.s32.totalorder %s16, 0
    %p149 = por %p147, %p148
    %p150 = scmp.ne.s32.totalorder %s136, %s137
    %p151 = scmp.eq.s32.totalorder %s17, 1
    %p152 = por %p150, %p151
    %p154 = scmp.ne.s32.totalorder %s137, %s153
    %p155 = scmp.eq.s32.totalorder %s17, 0
    %p156 = por %p154, %p155
    %s157 = ssub.s32 %s18, %s30
    %s158 = ssub.s32 %s19, %s26
    %s159 = sor.u32 %s157, %s158
    %p160 = scmp.eq.s32.totalorder %s159, 0
    %s162 = sadd.s32 %s161, 1
    %s163 = scalar_select %p160, %s161, %s162
    %p166 = pneg %p160
    %p167 = scmp.eq.s32.totalorder %s11, 1
    %p168 = por %p166, %p167
    %p169 = scmp.ne.s32.totalorder %s161, %s164
    %p170 = scmp.eq.s32.totalorder %s11, 0
    %p171 = por %p169, %p170
    %p172 = scmp.ne.s32.totalorder %s161, %s164
    %p173 = scmp.eq.s32.totalorder %s16, 1
    %p174 = por %p172, %p173
    %p175 = scmp.ne.s32.totalorder %s164, %s165
    %p176 = scmp.eq.s32.totalorder %s16, 0
    %p177 = por %p175, %p176
    %p178 = scmp.ne.s32.totalorder %s164, %s165
    %p179 = scmp.eq.s32.totalorder %s17, 1
    %p180 = por %p178, %p179
    %p182 = scmp.ne.s32.totalorder %s165, %s181
    %p183 = scmp.eq.s32.totalorder %s17, 0
    %p184 = por %p182, %p183
    %p185 = scmp.le.s32.totalorder 1, %s11
    %p186 = scmp.lt.s32.totalorder %s11, 3
    %p187 = pnand %p185, %p186
    %p188 = pneg %p187
    // Predicated region
    $region9: #{drp2_forward.24} parent=5 // pred_check
      _
    $region10: #{drp2_forward.24} parent=5 // pred_check_branch
      %190 = sbr.rel (%p187) target = $region12
    $region11: #{drp2_forward.24} parent=5 // pred_region
      %s191 = ssub.s32 %s11, 1
      // Predicated region
      $region13: #{drp2_forward.24} parent=11 // pred_check
        %p192 = pneg %p100
      $region14: #{drp2_forward.24} parent=11 // pred_check_branch
        %194 = sbr.rel (%p192) target = $region16
      $region15: #{drp2_forward.24} parent=11 // pred_region
        _
      $region16: #{drp2_forward.24} parent=11 // pred_fallthru
        _
      // Predicated region
      $region17: #{drp2_forward.24} parent=11 // pred_check
        %p195 = pneg %p121
      $region18: #{drp2_forward.24} parent=11 // pred_check_branch
        %197 = sbr.rel (%p195) target = $region20
      $region19: #{drp2_forward.24} parent=11 // pred_region
        _
      $region20: #{drp2_forward.24} parent=11 // pred_fallthru
        _
    $region12: #{drp2_forward.24} parent=5 // pred_fallthru
      _
    %p198 = scmp.lt.s32.totalorder %s11, 2
    // Predicated region
    $region21: #{drp2_forward.24} parent=5 // pred_check
      %p199 = pneg %p198
    $region22: #{drp2_forward.24} parent=5 // pred_check_branch
      %201 = sbr.rel (%p199) target = $region24
    $region23: #{drp2_forward.24} parent=5 // pred_region
      // Predicated region
      $region25: #{drp2_forward.24} parent=23 // pred_check
        %p202 = pneg %p45
      $region26: #{drp2_forward.24} parent=23 // pred_check_branch
        %204 = sbr.rel (%p202) target = $region28
      $region27: #{drp2_forward.24} parent=23 // pred_region
        %s205 = smul.u32 2, %s19
        %p206 = scmp.lt.s32.totalorder %s18, 1
        %s207 = scalar_select %p206, %s18, 1
        %p208 = scmp.lt.s32.totalorder %s205, 1
        %s209 = scalar_select %p208, %s205, 1
        %s210 = smul.addr %s207, 8
        %s211 = sadd.s32 %s209, %s210
        %s212 = smul.addr %s211, 8
        %s213 = scalar_lea.vmem %s0, %s212
        %s214 = smul.u32 2, %s19
      $region28: #{drp2_forward.24} parent=23 // pred_fallthru
        _
      // Predicated region
      $region29: #{drp2_forward.24} parent=23 // pred_check
        %p215 = pneg %p73
      $region30: #{drp2_forward.24} parent=23 // pred_check_branch
        %217 = sbr.rel (%p215) target = $region32
      $region31: #{drp2_forward.24} parent=23 // pred_region
        %s218 = smul.u32 2, %s19
        %p219 = scmp.lt.s32.totalorder %s18, 1
        %s220 = scalar_select %p219, %s18, 1
        %p221 = scmp.lt.s32.totalorder %s218, 1
        %s222 = scalar_select %p221, %s218, 1
        %s223 = smul.addr %s220, 8
        %s224 = sadd.s32 %s222, %s223
        %s225 = smul.addr %s224, 8
        %s226 = scalar_lea.vmem %s1, %s225
        %s227 = smul.u32 2, %s19
      $region32: #{drp2_forward.24} parent=23 // pred_fallthru
        _
      // Predicated region
      $region33: #{drp2_forward.24} parent=23 // pred_check
        %p228 = pneg %p143
      $region34: #{drp2_forward.24} parent=23 // pred_check_branch
        %230 = sbr.rel (%p228) target = $region36
      $region35: #{drp2_forward.24} parent=23 // pred_region
        %s231 = smul.u32 2, %s19
        %p232 = scmp.lt.s32.totalorder %s18, 1
        %s233 = scalar_select %p232, %s18, 1
        %p234 = scmp.lt.s32.totalorder %s231, 1
        %s235 = scalar_select %p234, %s231, 1
        %s236 = smul.addr %s233, 8
        %s237 = sadd.s32 %s235, %s236
        %s238 = smul.addr %s237, 8
        %s239 = scalar_lea.vmem %s4, %s238
        %s240 = smul.u32 2, %s19
      $region36: #{drp2_forward.24} parent=23 // pred_fallthru
        _
    $region24: #{drp2_forward.24} parent=5 // pred_fallthru
      _
    %p241 = scmp.le.s32.totalorder 1, %s11
    %p242 = scmp.lt.s32.totalorder %s11, 3
    %p243 = pnand %p241, %p242
    %p244 = pneg %p243
    // Predicated region
    $region37: #{drp2_forward.24} parent=5 // pred_check
      _
    $region38: #{drp2_forward.24} parent=5 // pred_check_branch
      %246 = sbr.rel (%p243) target = $region40
    $region39: #{drp2_forward.24} parent=5 // pred_region
      %s247 = ssub.s32 %s11, 1
      %s248 = smul.u32 2, %s21
      %p249 = scmp.lt.s32.totalorder %s20, 1
      %s250 = scalar_select %p249, %s20, 1
      %p251 = scmp.lt.s32.totalorder %s248, 1
      %s252 = scalar_select %p251, %s248, 1
      %s253 = smul.addr %s250, 8
      %s254 = sadd.s32 %s252, %s253
      %s255 = smul.addr %s254, 8
      %s256 = scalar_lea.vmem %s0, %s255
      %p257 = pneg %p51
      %p258 = pneg %p48
      %s259 = smul.u32 2, %s21
      %p260 = scmp.lt.s32.totalorder %s20, 1
      %s261 = scalar_select %p260, %s20, 1
      %p262 = scmp.lt.s32.totalorder %s259, 1
      %s263 = scalar_select %p262, %s259, 1
      %s264 = smul.addr %s261, 8
      %s265 = sadd.s32 %s263, %s264
      %s266 = smul.addr %s265, 8
      %s267 = scalar_lea.vmem %s1, %s266
      %p268 = pneg %p79
      %p269 = pneg %p76
      %p270 = pneg %p100
      %p271 = pneg %p97
      %p272 = pneg %p121
      %p273 = pneg %p118
      %s274 = smul.u32 2, %s21
      %p275 = scmp.lt.s32.totalorder %s20, 1
      %s276 = scalar_select %p275, %s20, 1
      %p277 = scmp.lt.s32.totalorder %s274, 1
      %s278 = scalar_select %p277, %s274, 1
      %s279 = smul.addr %s276, 8
      %s280 = sadd.s32 %s278, %s279
      %s281 = smul.addr %s280, 8
      %s282 = scalar_lea.vmem %s4, %s281
      %p283 = pneg %p149
      %p284 = pneg %p146
      %p285 = pneg %p177
      %p286 = pneg %p174
      %s287 = smul.u32 2, %s21
      %p288 = scmp.lt.s32.totalorder %s20, 1
      %s289 = scalar_select %p288, %s20, 1
      %p290 = scmp.lt.s32.totalorder %s287, 1
      %s291 = scalar_select %p290, %s287, 1
      %s292 = smul.addr %s289, 8
      %s293 = sadd.s32 %s291, %s292
      %s294 = smul.addr %s293, 8
      %s295 = scalar_lea.vmem %s5, %s294
      %s296 = smul.u32 2, %s21
      %p297 = scmp.lt.s32.totalorder %s20, 1
      %s298 = scalar_select %p297, %s20, 1
      %p299 = scmp.lt.s32.totalorder %s296, 1
      %s300 = scalar_select %p299, %s296, 1
      %s301 = smul.addr %s298, 8
      %s302 = sadd.s32 %s300, %s301
      %s303 = smul.addr %s302, 8
      %s304 = scalar_lea.vmem %s0, %s303
      %s305 = smul.u32 2, %s21
      %s306 = smul.u32 2, %s21
      %p307 = scmp.lt.s32.totalorder %s20, 1
      %s308 = scalar_select %p307, %s20, 1
      %p309 = scmp.lt.s32.totalorder %s306, 1
      %s310 = scalar_select %p309, %s306, 1
      %s311 = smul.addr %s308, 8
      %s312 = sadd.s32 %s310, %s311
      %s313 = smul.addr %s312, 8
      %s314 = scalar_lea.vmem %s1, %s313
      %s315 = smul.u32 2, %s21
      %s316 = smul.u32 2, %s21
      %p317 = scmp.lt.s32.totalorder %s20, 1
      %s318 = scalar_select %p317, %s20, 1
      %p319 = scmp.lt.s32.totalorder %s316, 1
      %s320 = scalar_select %p319, %s316, 1
      %s321 = smul.addr %s318, 8
      %s322 = sadd.s32 %s320, %s321
      %s323 = smul.addr %s322, 8
      %s324 = scalar_lea.vmem %s4, %s323
      %s325 = smul.u32 2, %s21
      %s326 = smul.u32 2, %s21
      %p327 = scmp.lt.s32.totalorder %s20, 1
      %s328 = scalar_select %p327, %s20, 1
      %p329 = scmp.lt.s32.totalorder %s326, 1
      %s330 = scalar_select %p329, %s326, 1
      %s331 = smul.addr %s328, 8
      %s332 = sadd.s32 %s330, %s331
      %s333 = smul.addr %s332, 8
      %s334 = scalar_lea.vmem %s5, %s333
      %s335 = smul.u32 2, %s21
      %v336 = vld [vmem:[%s304] sm:$0xff]
      %v337 = vld [vmem:[%s304 + $0x8] sm:$0xff]
      %v338 = vld [vmem:[%s304 + $0x10] sm:$0xff]
      %v339 = vld [vmem:[%s304 + $0x18] sm:$0xff]
      %v340 = vld [vmem:[%s304 + $0x20] sm:$0xff]
      %v341 = vld [vmem:[%s304 + $0x28] sm:$0xff]
      %v342 = vld [vmem:[%s304 + $0x30] sm:$0xff]
      %v343 = vld [vmem:[%s304 + $0x38] sm:$0xff]
      %v344 = vld [vmem:[%s314] sm:$0xff]
      %v345 = vld [vmem:[%s314 + $0x8] sm:$0xff]
      %v346 = vld [vmem:[%s314 + $0x10] sm:$0xff]
      %v347 = vld [vmem:[%s314 + $0x18] sm:$0xff]
      %v348 = vld [vmem:[%s314 + $0x20] sm:$0xff]
      %v349 = vld [vmem:[%s314 + $0x28] sm:$0xff]
      %v350 = vld [vmem:[%s314 + $0x30] sm:$0xff]
      %v351 = vld [vmem:[%s314 + $0x38] sm:$0xff]
      %v352 = vmul.f32 %v336, %v336
      %v353 = vmul.f32 %v337, %v337
      %v354 = vmul.f32 %v338, %v338
      %v355 = vmul.f32 %v339, %v339
      %v356 = vmul.f32 %v340, %v340
      %v357 = vmul.f32 %v341, %v341
      %v358 = vmul.f32 %v342, %v342
      %v359 = vmul.f32 %v343, %v343
      %v360 = vmul.f32 %v344, %v344
      %v361 = vmul.f32 %v345, %v345
      %v362 = vmul.f32 %v346, %v346
      %v363 = vmul.f32 %v347, %v347
      %v364 = vmul.f32 %v348, %v348
      %v365 = vmul.f32 %v349, %v349
      %v366 = vmul.f32 %v350, %v350
      %v367 = vmul.f32 %v351, %v351
      %v368 = vadd.f32 %v352, %v360
      %v369 = vadd.f32 %v353, %v361
      %v370 = vadd.f32 %v354, %v362
      %v371 = vadd.f32 %v355, %v363
      %v372 = vadd.f32 %v356, %v364
      %v373 = vadd.f32 %v357, %v365
      %v374 = vadd.f32 %v358, %v366
      %v375 = vadd.f32 %v359, %v367
      %v376 = vrsqrt.pop %v368
      %v377 = vmul.f32 %v368, %v376
      %vm378 = vcmp.eq.f32.partialorder %v368, inf
      %v379 = vsel %vm378, %v368, %v377
      %vm380 = vcmp.eq.f32.partialorder %v368, 0.0
      %v381 = vand.u32 %v368, 2147483648
      %v382 = vsel %vm380, %v381, %v379
      %v383 = vrsqrt.pop %v369
      %v384 = vmul.f32 %v369, %v383
      %vm385 = vcmp.eq.f32.partialorder %v369, inf
      %v386 = vsel %vm385, %v369, %v384
      %vm387 = vcmp.eq.f32.partialorder %v369, 0.0
      %v388 = vand.u32 %v369, 2147483648
      %v389 = vsel %vm387, %v388, %v386
      %v390 = vrsqrt.pop %v370
      %v391 = vmul.f32 %v370, %v390
      %vm392 = vcmp.eq.f32.partialorder %v370, inf
      %v393 = vsel %vm392, %v370, %v391
      %vm394 = vcmp.eq.f32.partialorder %v370, 0.0
      %v395 = vand.u32 %v370, 2147483648
      %v396 = vsel %vm394, %v395, %v393
      %v397 = vrsqrt.pop %v371
      %v398 = vmul.f32 %v371, %v397
      %vm399 = vcmp.eq.f32.partialorder %v371, inf
      %v400 = vsel %vm399, %v371, %v398
      %vm401 = vcmp.eq.f32.partialorder %v371, 0.0
      %v402 = vand.u32 %v371, 2147483648
      %v403 = vsel %vm401, %v402, %v400
      %v404 = vrsqrt.pop %v372
      %v405 = vmul.f32 %v372, %v404
      %vm406 = vcmp.eq.f32.partialorder %v372, inf
      %v407 = vsel %vm406, %v372, %v405
      %vm408 = vcmp.eq.f32.partialorder %v372, 0.0
      %v409 = vand.u32 %v372, 2147483648
      %v410 = vsel %vm408, %v409, %v407
      %v411 = vrsqrt.pop %v373
      %v412 = vmul.f32 %v373, %v411
      %vm413 = vcmp.eq.f32.partialorder %v373, inf
      %v414 = vsel %vm413, %v373, %v412
      %vm415 = vcmp.eq.f32.partialorder %v373, 0.0
      %v416 = vand.u32 %v373, 2147483648
      %v417 = vsel %vm415, %v416, %v414
      %v418 = vrsqrt.pop %v374
      %v419 = vmul.f32 %v374, %v418
      %vm420 = vcmp.eq.f32.partialorder %v374, inf
      %v421 = vsel %vm420, %v374, %v419
      %vm422 = vcmp.eq.f32.partialorder %v374, 0.0
      %v423 = vand.u32 %v374, 2147483648
      %v424 = vsel %vm422, %v423, %v421
      %v425 = vrsqrt.pop %v375
      %v426 = vmul.f32 %v375, %v425
      %vm427 = vcmp.eq.f32.partialorder %v375, inf
      %v428 = vsel %vm427, %v375, %v426
      %vm429 = vcmp.eq.f32.partialorder %v375, 0.0
      %v430 = vand.u32 %v375, 2147483648
      %v431 = vsel %vm429, %v430, %v428
      %v432 = vld [vmem:[%s2] sm:$0xff]
      %v433 = vld [vmem:[%s2 + $0x8] sm:$0xff]
      %v434 = vld [vmem:[%s2 + $0x10] sm:$0xff]
      %v435 = vld [vmem:[%s2 + $0x18] sm:$0xff]
      %437 = vset.pattern.permute.xlu0 0
      %438 = vperm.xlu0 %437, %v432
      %v439 = vpop.permute.xlu0 %438
      %442 = vset.pattern.permute.xlu0 0
      %443 = vperm.xlu0 %442, %v433
      %v444 = vpop.permute.xlu0 %443
      %447 = vset.pattern.permute.xlu0 0
      %448 = vperm.xlu0 %447, %v434
      %v449 = vpop.permute.xlu0 %448
      %452 = vset.pattern.permute.xlu0 0
      %453 = vperm.xlu0 %452, %v435
      %v454 = vpop.permute.xlu0 %453
      %v456 = vmul.f32 %v382, %v439
      %v457 = vmul.f32 %v389, %v439
      %v458 = vmul.f32 %v396, %v444
      %v459 = vmul.f32 %v403, %v444
      %v460 = vmul.f32 %v410, %v449
      %v461 = vmul.f32 %v417, %v449
      %v462 = vmul.f32 %v424, %v454
      %v463 = vmul.f32 %v431, %v454
      %v464 = vld [vmem:[%s3] sm:$0xff]
      %v465 = vld [vmem:[%s3 + $0x8] sm:$0xff]
      %v466 = vld [vmem:[%s3 + $0x10] sm:$0xff]
      %v467 = vld [vmem:[%s3 + $0x18] sm:$0xff]
      %469 = vset.pattern.permute.xlu0 0
      %470 = vperm.xlu0 %469, %v464
      %v471 = vpop.permute.xlu0 %470
      %474 = vset.pattern.permute.xlu0 0
      %475 = vperm.xlu0 %474, %v465
      %v476 = vpop.permute.xlu0 %475
      %479 = vset.pattern.permute.xlu0 0
      %480 = vperm.xlu0 %479, %v466
      %v481 = vpop.permute.xlu0 %480
      %484 = vset.pattern.permute.xlu0 0
      %485 = vperm.xlu0 %484, %v467
      %v486 = vpop.permute.xlu0 %485
      %v488 = vadd.f32 %v456, %v471
      %v489 = vadd.f32 %v457, %v471
      %v490 = vadd.f32 %v458, %v476
      %v491 = vadd.f32 %v459, %v476
      %v492 = vadd.f32 %v460, %v481
      %v493 = vadd.f32 %v461, %v481
      %v494 = vadd.f32 %v462, %v486
      %v495 = vadd.f32 %v463, %v486
      %v496 = vmax.f32 %v488, 0.0
      %v497 = vmax.f32 %v489, 0.0
      %v498 = vmax.f32 %v490, 0.0
      %v499 = vmax.f32 %v491, 0.0
      %v500 = vmax.f32 %v492, 0.0
      %v501 = vmax.f32 %v493, 0.0
      %v502 = vmax.f32 %v494, 0.0
      %v503 = vmax.f32 %v495, 0.0
      %v504 = vld [vmem:[%s324] sm:$0xff]
      %v505 = vld [vmem:[%s324 + $0x8] sm:$0xff]
      %v506 = vld [vmem:[%s324 + $0x10] sm:$0xff]
      %v507 = vld [vmem:[%s324 + $0x18] sm:$0xff]
      %v508 = vld [vmem:[%s324 + $0x20] sm:$0xff]
      %v509 = vld [vmem:[%s324 + $0x28] sm:$0xff]
      %v510 = vld [vmem:[%s324 + $0x30] sm:$0xff]
      %v511 = vld [vmem:[%s324 + $0x38] sm:$0xff]
      %v512 = vadd.f32 %v496, %v504
      %v513 = vadd.f32 %v497, %v505
      %v514 = vadd.f32 %v498, %v506
      %v515 = vadd.f32 %v499, %v507
      %v516 = vadd.f32 %v500, %v508
      %v517 = vadd.f32 %v501, %v509
      %v518 = vadd.f32 %v502, %v510
      %v519 = vadd.f32 %v503, %v511
      %520 = vst [vmem:[%s334] sm:$0xff] %v512
      %521 = vst [vmem:[%s334 + $0x8] sm:$0xff] %v513
      %522 = vst [vmem:[%s334 + $0x10] sm:$0xff] %v514
      %523 = vst [vmem:[%s334 + $0x18] sm:$0xff] %v515
      %524 = vst [vmem:[%s334 + $0x20] sm:$0xff] %v516
      %525 = vst [vmem:[%s334 + $0x28] sm:$0xff] %v517
      %526 = vst [vmem:[%s334 + $0x30] sm:$0xff] %v518
      %527 = vst [vmem:[%s334 + $0x38] sm:$0xff] %v519
      %s528 = smul.u32 2, %s21
      %p529 = scmp.lt.s32.totalorder %s20, 1
      %s530 = scalar_select %p529, %s20, 1
      %p531 = scmp.lt.s32.totalorder %s528, 1
      %s532 = scalar_select %p531, %s528, 1
      %s533 = smul.addr %s530, 8
      %s534 = sadd.s32 %s532, %s533
      %s535 = smul.addr %s534, 8
      %s536 = scalar_lea.vmem %s5, %s535
      // Predicated region
      $region41: #{drp2_forward.24} parent=39 // pred_check
        %p537 = pneg %p174
      $region42: #{drp2_forward.24} parent=39 // pred_check_branch
        %539 = sbr.rel (%p537) target = $region44
      $region43: #{drp2_forward.24} parent=39 // pred_region
        %s540 = smul.u32 2, %s21
      $region44: #{drp2_forward.24} parent=39 // pred_fallthru
        _
    $region40: #{drp2_forward.24} parent=5 // pred_fallthru
      _
    %p541 = scmp.le.s32.totalorder 2, %s11
    // Predicated region
    $region45: #{drp2_forward.24} parent=5 // pred_check
      %p542 = pneg %p541
    $region46: #{drp2_forward.24} parent=5 // pred_check_branch
      %544 = sbr.rel (%p542) target = $region48
    $region47: #{drp2_forward.24} parent=5 // pred_region
      %s545 = ssub.s32 %s11, 2
      // Predicated region
      $region49: #{drp2_forward.24} parent=47 // pred_check
        %p546 = pneg %p180
      $region50: #{drp2_forward.24} parent=47 // pred_check_branch
        %548 = sbr.rel (%p546) target = $region52
      $region51: #{drp2_forward.24} parent=47 // pred_region
        %s549 = smul.u32 2, %s23
        %p550 = scmp.lt.s32.totalorder %s22, 1
        %s551 = scalar_select %p550, %s22, 1
        %p552 = scmp.lt.s32.totalorder %s549, 1
        %s553 = scalar_select %p552, %s549, 1
        %s554 = smul.addr %s551, 8
        %s555 = sadd.s32 %s553, %s554
        %s556 = smul.addr %s555, 8
        %s557 = scalar_lea.vmem %s5, %s556
      $region52: #{drp2_forward.24} parent=47 // pred_fallthru
        _
    $region48: #{drp2_forward.24} parent=5 // pred_fallthru
      _
  $region6: #{drp2_forward.24} parent=0 // loop_footer
    %s15 = sadd.s32 1, %s11
  $region7: #{drp2_forward.24} parent=0 // loop_footer_branch
    %10 = sbr.rel target = $region3
  $region8: #{drp2_forward.24} parent=0 // loop_exit
    _

// kernel: drp2_forward.14
$region0: #{drp2_forward.14}
  #allocation0 [shape = 'u32[]', space=smem, size = 0x4, offset = 0x4, fixed_abs, tag = 'smem constant byte address 0x4 - core index']
  #allocation1 [shape = 'u32[144,128]{1,0:T(1,128)}', space=vmem, size = 0x12000, scoped, tag = 'internal scratch']
  %s0 = inlined_call_operand.vmem [shape: f32[2,1,256], index: 0, kind: input, shape index: {}]
  %s1 = inlined_call_operand.vmem [shape: f32[2,1,256], index: 1, kind: input, shape index: {}]
  %s2 = inlined_call_operand.vmem [shape: f32[2,1,256], index: 2, kind: input, shape index: {}]
  %s3 = inlined_call_operand.vmem [shape: f32[2,1,256], index: 3, kind: input, shape index: {}]
  %s4 = inlined_call_operand.vmem [shape: f32[2,32,256], index: 4, kind: input, shape index: {}]
  %s5 = inlined_call_operand.vmem [shape: f32[2,32,256], index: 5, kind: output, shape index: {}]
  %s6 = sld [smem:[#allocation0]]
  $region53: #{drp2_forward.14} parent=0
    _
  %s8 = ssub.s32 1, %s6
  %s9 = scalar_select 0, %s8, %s6
  loop: start=0, step=1, limit=4
  $region2: #{drp2_forward.14} parent=0 // loop_pre_header
    _
  $region3: #{drp2_forward.14} parent=0 // loop_header
    %s11 = sphi 0, %s15
    %p12 = scmp.ge.s32.totalorder %s11, 4
    %s18 = sphi 0, %s30
    %s19 = sphi 0, %s26
    %s20 = sphi 0, %s18
    %s21 = sphi 0, %s19
    %s22 = sphi 0, %s20
    %s23 = sphi 0, %s21
    %s35 = sphi 0, %s37
    %s38 = sphi 0, %s35
    %s39 = sphi 0, %s38
    %s55 = sphi 0, %s39
    %s63 = sphi 0, %s65
    %s66 = sphi 0, %s63
    %s67 = sphi 0, %s66
    %s83 = sphi 0, %s67
    %s91 = sphi 0, %s93
    %s94 = sphi 0, %s91
    %s95 = sphi 0, %s94
    %s111 = sphi 0, %s95
    %s119 = sphi 0, %s121
    %s122 = sphi 0, %s119
    %s123 = sphi 0, %s122
    %s139 = sphi 0, %s123
    %s147 = sphi 0, %s149
    %s150 = sphi 0, %s147
    %s151 = sphi 0, %s150
    %s167 = sphi 0, %s151
    %s175 = sphi 0, %s177
    %s178 = sphi 0, %s175
    %s179 = sphi 0, %s178
    %s195 = sphi 0, %s179
  $region4: #{drp2_forward.14} parent=0 // loop_header_branch
    %14 = sbr.rel (%p12) target = $region8
  $region5: #{drp2_forward.14} parent=0 // loop_body
    %s16 = ssub.s32 %s11, 1
    %s17 = ssub.s32 %s11, 2
    %s24 = sadd.s32 1, %s19
    %p25 = scmp.ge.s32.totalorder %s24, 1
    %s26 = scalar_select %p25, 0, %s24
    %s27 = sadd.s32 1, %s18
    %s28 = scalar_select %p25, %s27, %s18
    %p29 = scmp.ge.s32.totalorder %s28, 2
    %s30 = scalar_select %p29, 0, %s28
    %s31 = ssub.s32 %s18, %s30
    %s32 = ssub.s32 %s19, %s26
    %s33 = sor.u32 %s31, %s32
    %p34 = scmp.eq.s32.totalorder %s33, 0
    %s36 = sadd.s32 %s35, 1
    %s37 = scalar_select %p34, %s35, %s36
    %p40 = pneg %p34
    %p41 = scmp.eq.s32.totalorder %s11, 1
    %p42 = por %p40, %p41
    %p43 = scmp.ne.s32.totalorder %s35, %s38
    %p44 = scmp.eq.s32.totalorder %s11, 0
    %p45 = por %p43, %p44
    %p46 = scmp.ne.s32.totalorder %s35, %s38
    %p47 = scmp.eq.s32.totalorder %s16, 1
    %p48 = por %p46, %p47
    %p49 = scmp.ne.s32.totalorder %s38, %s39
    %p50 = scmp.eq.s32.totalorder %s16, 0
    %p51 = por %p49, %p50
    %p52 = scmp.ne.s32.totalorder %s38, %s39
    %p53 = scmp.eq.s32.totalorder %s17, 1
    %p54 = por %p52, %p53
    %p56 = scmp.ne.s32.totalorder %s39, %s55
    %p57 = scmp.eq.s32.totalorder %s17, 0
    %p58 = por %p56, %p57
    %s59 = ssub.s32 %s18, %s30
    %s60 = ssub.s32 %s19, %s26
    %s61 = sor.u32 %s59, %s60
    %p62 = scmp.eq.s32.totalorder %s61, 0
    %s64 = sadd.s32 %s63, 1
    %s65 = scalar_select %p62, %s63, %s64
    %p68 = pneg %p62
    %p69 = scmp.eq.s32.totalorder %s11, 1
    %p70 = por %p68, %p69
    %p71 = scmp.ne.s32.totalorder %s63, %s66
    %p72 = scmp.eq.s32.totalorder %s11, 0
    %p73 = por %p71, %p72
    %p74 = scmp.ne.s32.totalorder %s63, %s66
    %p75 = scmp.eq.s32.totalorder %s16, 1
    %p76 = por %p74, %p75
    %p77 = scmp.ne.s32.totalorder %s66, %s67
    %p78 = scmp.eq.s32.totalorder %s16, 0
    %p79 = por %p77, %p78
    %p80 = scmp.ne.s32.totalorder %s66, %s67
    %p81 = scmp.eq.s32.totalorder %s17, 1
    %p82 = por %p80, %p81
    %p84 = scmp.ne.s32.totalorder %s67, %s83
    %p85 = scmp.eq.s32.totalorder %s17, 0
    %p86 = por %p84, %p85
    %s87 = ssub.s32 %s18, %s30
    %s88 = ssub.s32 %s19, %s26
    %s89 = sor.u32 %s87, %s88
    %p90 = scmp.eq.s32.totalorder %s89, 0
    %s92 = sadd.s32 %s91, 1
    %s93 = scalar_select %p90, %s91, %s92
    %p96 = pneg %p90
    %p97 = scmp.eq.s32.totalorder %s11, 1
    %p98 = por %p96, %p97
    %p99 = scmp.ne.s32.totalorder %s91, %s94
    %p100 = scmp.eq.s32.totalorder %s11, 0
    %p101 = por %p99, %p100
    %p102 = scmp.ne.s32.totalorder %s91, %s94
    %p103 = scmp.eq.s32.totalorder %s16, 1
    %p104 = por %p102, %p103
    %p105 = scmp.ne.s32.totalorder %s94, %s95
    %p106 = scmp.eq.s32.totalorder %s16, 0
    %p107 = por %p105, %p106
    %p108 = scmp.ne.s32.totalorder %s94, %s95
    %p109 = scmp.eq.s32.totalorder %s17, 1
    %p110 = por %p108, %p109
    %p112 = scmp.ne.s32.totalorder %s95, %s111
    %p113 = scmp.eq.s32.totalorder %s17, 0
    %p114 = por %p112, %p113
    %s115 = ssub.s32 %s18, %s30
    %s116 = ssub.s32 %s19, %s26
    %s117 = sor.u32 %s115, %s116
    %p118 = scmp.eq.s32.totalorder %s117, 0
    %s120 = sadd.s32 %s119, 1
    %s121 = scalar_select %p118, %s119, %s120
    %p124 = pneg %p118
    %p125 = scmp.eq.s32.totalorder %s11, 1
    %p126 = por %p124, %p125
    %p127 = scmp.ne.s32.totalorder %s119, %s122
    %p128 = scmp.eq.s32.totalorder %s11, 0
    %p129 = por %p127, %p128
    %p130 = scmp.ne.s32.totalorder %s119, %s122
    %p131 = scmp.eq.s32.totalorder %s16, 1
    %p132 = por %p130, %p131
    %p133 = scmp.ne.s32.totalorder %s122, %s123
    %p134 = scmp.eq.s32.totalorder %s16, 0
    %p135 = por %p133, %p134
    %p136 = scmp.ne.s32.totalorder %s122, %s123
    %p137 = scmp.eq.s32.totalorder %s17, 1
    %p138 = por %p136, %p137
    %p140 = scmp.ne.s32.totalorder %s123, %s139
    %p141 = scmp.eq.s32.totalorder %s17, 0
    %p142 = por %p140, %p141
    %s143 = ssub.s32 %s18, %s30
    %s144 = ssub.s32 %s19, %s26
    %s145 = sor.u32 %s143, %s144
    %p146 = scmp.eq.s32.totalorder %s145, 0
    %s148 = sadd.s32 %s147, 1
    %s149 = scalar_select %p146, %s147, %s148
    %p152 = pneg %p146
    %p153 = scmp.eq.s32.totalorder %s11, 1
    %p154 = por %p152, %p153
    %p155 = scmp.ne.s32.totalorder %s147, %s150
    %p156 = scmp.eq.s32.totalorder %s11, 0
    %p157 = por %p155, %p156
    %p158 = scmp.ne.s32.totalorder %s147, %s150
    %p159 = scmp.eq.s32.totalorder %s16, 1
    %p160 = por %p158, %p159
    %p161 = scmp.ne.s32.totalorder %s150, %s151
    %p162 = scmp.eq.s32.totalorder %s16, 0
    %p163 = por %p161, %p162
    %p164 = scmp.ne.s32.totalorder %s150, %s151
    %p165 = scmp.eq.s32.totalorder %s17, 1
    %p166 = por %p164, %p165
    %p168 = scmp.ne.s32.totalorder %s151, %s167
    %p169 = scmp.eq.s32.totalorder %s17, 0
    %p170 = por %p168, %p169
    %s171 = ssub.s32 %s18, %s30
    %s172 = ssub.s32 %s19, %s26
    %s173 = sor.u32 %s171, %s172
    %p174 = scmp.eq.s32.totalorder %s173, 0
    %s176 = sadd.s32 %s175, 1
    %s177 = scalar_select %p174, %s175, %s176
    %p180 = pneg %p174
    %p181 = scmp.eq.s32.totalorder %s11, 1
    %p182 = por %p180, %p181
    %p183 = scmp.ne.s32.totalorder %s175, %s178
    %p184 = scmp.eq.s32.totalorder %s11, 0
    %p185 = por %p183, %p184
    %p186 = scmp.ne.s32.totalorder %s175, %s178
    %p187 = scmp.eq.s32.totalorder %s16, 1
    %p188 = por %p186, %p187
    %p189 = scmp.ne.s32.totalorder %s178, %s179
    %p190 = scmp.eq.s32.totalorder %s16, 0
    %p191 = por %p189, %p190
    %p192 = scmp.ne.s32.totalorder %s178, %s179
    %p193 = scmp.eq.s32.totalorder %s17, 1
    %p194 = por %p192, %p193
    %p196 = scmp.ne.s32.totalorder %s179, %s195
    %p197 = scmp.eq.s32.totalorder %s17, 0
    %p198 = por %p196, %p197
    %p199 = scmp.le.s32.totalorder 1, %s11
    %p200 = scmp.lt.s32.totalorder %s11, 3
    %p201 = pnand %p199, %p200
    %p202 = pneg %p201
    // Predicated region
    $region9: #{drp2_forward.14} parent=5 // pred_check
      _
    $region10: #{drp2_forward.14} parent=5 // pred_check_branch
      %204 = sbr.rel (%p201) target = $region12
    $region11: #{drp2_forward.14} parent=5 // pred_region
      %s205 = ssub.s32 %s11, 1
    $region12: #{drp2_forward.14} parent=5 // pred_fallthru
      _
    %p206 = scmp.lt.s32.totalorder %s11, 2
    // Predicated region
    $region13: #{drp2_forward.14} parent=5 // pred_check
      %p207 = pneg %p206
    $region14: #{drp2_forward.14} parent=5 // pred_check_branch
      %209 = sbr.rel (%p207) target = $region16
    $region15: #{drp2_forward.14} parent=5 // pred_region
      // Predicated region
      $region17: #{drp2_forward.14} parent=15 // pred_check
        %p210 = pneg %p45
      $region18: #{drp2_forward.14} parent=15 // pred_check_branch
        %212 = sbr.rel (%p210) target = $region20
      $region19: #{drp2_forward.14} parent=15 // pred_region
        %s213 = smul.u32 2, %s19
        %p214 = scmp.lt.s32.totalorder %s18, 1
        %s215 = scalar_select %p214, %s18, 1
        %p216 = scmp.lt.s32.totalorder %s213, 1
        %s217 = scalar_select %p216, %s213, 1
        %s218 = smul.addr %s215, 2
        %s219 = sadd.s32 %s217, %s218
        %s220 = scalar_lea.vmem %s0, %s219
        %s221 = smul.u32 2, %s19
      $region20: #{drp2_forward.14} parent=15 // pred_fallthru
        _
      // Predicated region
      $region21: #{drp2_forward.14} parent=15 // pred_check
        %p222 = pneg %p73
      $region22: #{drp2_forward.14} parent=15 // pred_check_branch
        %224 = sbr.rel (%p222) target = $region24
      $region23: #{drp2_forward.14} parent=15 // pred_region
        %s225 = smul.u32 2, %s19
        %p226 = scmp.lt.s32.totalorder %s18, 1
        %s227 = scalar_select %p226, %s18, 1
        %p228 = scmp.lt.s32.totalorder %s225, 1
        %s229 = scalar_select %p228, %s225, 1
        %s230 = smul.addr %s227, 2
        %s231 = sadd.s32 %s229, %s230
        %s232 = scalar_lea.vmem %s1, %s231
        %s233 = smul.u32 2, %s19
      $region24: #{drp2_forward.14} parent=15 // pred_fallthru
        _
      // Predicated region
      $region25: #{drp2_forward.14} parent=15 // pred_check
        %p234 = pneg %p101
      $region26: #{drp2_forward.14} parent=15 // pred_check_branch
        %236 = sbr.rel (%p234) target = $region28
      $region27: #{drp2_forward.14} parent=15 // pred_region
        %s237 = smul.u32 2, %s19
        %p238 = scmp.lt.s32.totalorder %s18, 1
        %s239 = scalar_select %p238, %s18, 1
        %p240 = scmp.lt.s32.totalorder %s237, 1
        %s241 = scalar_select %p240, %s237, 1
        %s242 = smul.addr %s239, 2
        %s243 = sadd.s32 %s241, %s242
        %s244 = scalar_lea.vmem %s2, %s243
        %s245 = smul.u32 2, %s19
      $region28: #{drp2_forward.14} parent=15 // pred_fallthru
        _
      // Predicated region
      $region29: #{drp2_forward.14} parent=15 // pred_check
        %p246 = pneg %p129
      $region30: #{drp2_forward.14} parent=15 // pred_check_branch
        %248 = sbr.rel (%p246) target = $region32
      $region31: #{drp2_forward.14} parent=15 // pred_region
        %s249 = smul.u32 2, %s19
        %p250 = scmp.lt.s32.totalorder %s18, 1
        %s251 = scalar_select %p250, %s18, 1
        %p252 = scmp.lt.s32.totalorder %s249, 1
        %s253 = scalar_select %p252, %s249, 1
        %s254 = smul.addr %s251, 2
        %s255 = sadd.s32 %s253, %s254
        %s256 = scalar_lea.vmem %s3, %s255
        %s257 = smul.u32 2, %s19
      $region32: #{drp2_forward.14} parent=15 // pred_fallthru
        _
      // Predicated region
      $region33: #{drp2_forward.14} parent=15 // pred_check
        %p258 = pneg %p157
      $region34: #{drp2_forward.14} parent=15 // pred_check_branch
        %260 = sbr.rel (%p258) target = $region36
      $region35: #{drp2_forward.14} parent=15 // pred_region
        %s261 = smul.u32 2, %s19
        %p262 = scmp.lt.s32.totalorder %s18, 1
        %s263 = scalar_select %p262, %s18, 1
        %p264 = scmp.lt.s32.totalorder %s261, 1
        %s265 = scalar_select %p264, %s261, 1
        %s266 = smul.addr %s263, 8
        %s267 = sadd.s32 %s265, %s266
        %s268 = smul.addr %s267, 8
        %s269 = scalar_lea.vmem %s4, %s268
        %s270 = smul.u32 2, %s19
      $region36: #{drp2_forward.14} parent=15 // pred_fallthru
        _
    $region16: #{drp2_forward.14} parent=5 // pred_fallthru
      _
    %p271 = scmp.le.s32.totalorder 1, %s11
    %p272 = scmp.lt.s32.totalorder %s11, 3
    %p273 = pnand %p271, %p272
    %p274 = pneg %p273
    // Predicated region
    $region37: #{drp2_forward.14} parent=5 // pred_check
      _
    $region38: #{drp2_forward.14} parent=5 // pred_check_branch
      %276 = sbr.rel (%p273) target = $region40
    $region39: #{drp2_forward.14} parent=5 // pred_region
      %s277 = ssub.s32 %s11, 1
      %s278 = smul.u32 2, %s21
      %p279 = scmp.lt.s32.totalorder %s20, 1
      %s280 = scalar_select %p279, %s20, 1
      %p281 = scmp.lt.s32.totalorder %s278, 1
      %s282 = scalar_select %p281, %s278, 1
      %s283 = smul.addr %s280, 2
      %s284 = sadd.s32 %s282, %s283
      %s285 = scalar_lea.vmem %s0, %s284
      %p286 = pneg %p51
      %p287 = pneg %p48
      %s288 = smul.u32 2, %s21
      %p289 = scmp.lt.s32.totalorder %s20, 1
      %s290 = scalar_select %p289, %s20, 1
      %p291 = scmp.lt.s32.totalorder %s288, 1
      %s292 = scalar_select %p291, %s288, 1
      %s293 = smul.addr %s290, 2
      %s294 = sadd.s32 %s292, %s293
      %s295 = scalar_lea.vmem %s1, %s294
      %p296 = pneg %p79
      %p297 = pneg %p76
      %s298 = smul.u32 2, %s21
      %p299 = scmp.lt.s32.totalorder %s20, 1
      %s300 = scalar_select %p299, %s20, 1
      %p301 = scmp.lt.s32.totalorder %s298, 1
      %s302 = scalar_select %p301, %s298, 1
      %s303 = smul.addr %s300, 2
      %s304 = sadd.s32 %s302, %s303
      %s305 = scalar_lea.vmem %s2, %s304
      %p306 = pneg %p107
      %p307 = pneg %p104
      %s308 = smul.u32 2, %s21
      %p309 = scmp.lt.s32.totalorder %s20, 1
      %s310 = scalar_select %p309, %s20, 1
      %p311 = scmp.lt.s32.totalorder %s308, 1
      %s312 = scalar_select %p311, %s308, 1
      %s313 = smul.addr %s310, 2
      %s314 = sadd.s32 %s312, %s313
      %s315 = scalar_lea.vmem %s3, %s314
      %p316 = pneg %p135
      %p317 = pneg %p132
      %s318 = smul.u32 2, %s21
      %p319 = scmp.lt.s32.totalorder %s20, 1
      %s320 = scalar_select %p319, %s20, 1
      %p321 = scmp.lt.s32.totalorder %s318, 1
      %s322 = scalar_select %p321, %s318, 1
      %s323 = smul.addr %s320, 8
      %s324 = sadd.s32 %s322, %s323
      %s325 = smul.addr %s324, 8
      %s326 = scalar_lea.vmem %s4, %s325
      %p327 = pneg %p163
      %p328 = pneg %p160
      %p329 = pneg %p191
      %p330 = pneg %p188
      %s331 = smul.u32 2, %s21
      %p332 = scmp.lt.s32.totalorder %s20, 1
      %s333 = scalar_select %p332, %s20, 1
      %p334 = scmp.lt.s32.totalorder %s331, 1
      %s335 = scalar_select %p334, %s331, 1
      %s336 = smul.addr %s333, 8
      %s337 = sadd.s32 %s335, %s336
      %s338 = smul.addr %s337, 8
      %s339 = scalar_lea.vmem %s5, %s338
      %s340 = smul.u32 2, %s21
      %p341 = scmp.lt.s32.totalorder %s20, 1
      %s342 = scalar_select %p341, %s20, 1
      %p343 = scmp.lt.s32.totalorder %s340, 1
      %s344 = scalar_select %p343, %s340, 1
      %s345 = smul.addr %s342, 2
      %s346 = sadd.s32 %s344, %s345
      %s347 = scalar_lea.vmem %s0, %s346
      %s348 = smul.u32 2, %s21
      %s349 = smul.u32 2, %s21
      %p350 = scmp.lt.s32.totalorder %s20, 1
      %s351 = scalar_select %p350, %s20, 1
      %p352 = scmp.lt.s32.totalorder %s349, 1
      %s353 = scalar_select %p352, %s349, 1
      %s354 = smul.addr %s351, 2
      %s355 = sadd.s32 %s353, %s354
      %s356 = scalar_lea.vmem %s1, %s355
      %s357 = smul.u32 2, %s21
      %s358 = smul.u32 2, %s21
      %p359 = scmp.lt.s32.totalorder %s20, 1
      %s360 = scalar_select %p359, %s20, 1
      %p361 = scmp.lt.s32.totalorder %s358, 1
      %s362 = scalar_select %p361, %s358, 1
      %s363 = smul.addr %s360, 2
      %s364 = sadd.s32 %s362, %s363
      %s365 = scalar_lea.vmem %s2, %s364
      %s366 = smul.u32 2, %s21
      %s367 = smul.u32 2, %s21
      %p368 = scmp.lt.s32.totalorder %s20, 1
      %s369 = scalar_select %p368, %s20, 1
      %p370 = scmp.lt.s32.totalorder %s367, 1
      %s371 = scalar_select %p370, %s367, 1
      %s372 = smul.addr %s369, 2
      %s373 = sadd.s32 %s371, %s372
      %s374 = scalar_lea.vmem %s3, %s373
      %s375 = smul.u32 2, %s21
      %s376 = smul.u32 2, %s21
      %p377 = scmp.lt.s32.totalorder %s20, 1
      %s378 = scalar_select %p377, %s20, 1
      %p379 = scmp.lt.s32.totalorder %s376, 1
      %s380 = scalar_select %p379, %s376, 1
      %s381 = smul.addr %s378, 8
      %s382 = sadd.s32 %s380, %s381
      %s383 = smul.addr %s382, 8
      %s384 = scalar_lea.vmem %s4, %s383
      %s385 = smul.u32 2, %s21
      %s386 = smul.u32 2, %s21
      %p387 = scmp.lt.s32.totalorder %s20, 1
      %s388 = scalar_select %p387, %s20, 1
      %p389 = scmp.lt.s32.totalorder %s386, 1
      %s390 = scalar_select %p389, %s386, 1
      %s391 = smul.addr %s388, 8
      %s392 = sadd.s32 %s390, %s391
      %s393 = smul.addr %s392, 8
      %s394 = scalar_lea.vmem %s5, %s393
      %s395 = smul.u32 2, %s21
      %v396 = vld [vmem:[%s347] sm:$0x3]
      %v397 = vsub.f32 0.0, %v396
      %v398 = vmul.f32 %v397, 1.442695
      %v399 = vpow.pop %v398
      %v400 = vadd.f32 %v399, 1.0
      %v401 = vrcp.pop %v400
      %v402 = vmul.f32 1.0, %v401
      %v403 = vsub.f32 4.0, %v402
      %v404 = vld [vmem:[%s356] sm:$0x3]
      %v405 = vsub.f32 0.0, %v404
      %v406 = vmul.f32 %v405, 1.442695
      %v407 = vpow.pop %v406
      %v408 = vadd.f32 %v407, 1.0
      %v409 = vrcp.pop %v408
      %v410 = vmul.f32 1.0, %v409
      %v411 = vsub.f32 %v403, %v410
      %v412 = vld [vmem:[%s365] sm:$0x3]
      %v413 = vsub.f32 0.0, %v412
      %v414 = vmul.f32 %v413, 1.442695
      %v415 = vpow.pop %v414
      %v416 = vadd.f32 %v415, 1.0
      %v417 = vrcp.pop %v416
      %v418 = vmul.f32 1.0, %v417
      %v419 = vsub.f32 %v411, %v418
      %v420 = vld [vmem:[%s374] sm:$0x3]
      %v421 = vsub.f32 0.0, %v420
      %v422 = vmul.f32 %v421, 1.442695
      %v423 = vpow.pop %v422
      %v424 = vadd.f32 %v423, 1.0
      %v425 = vrcp.pop %v424
      %v426 = vmul.f32 1.0, %v425
      %v427 = vsub.f32 %v419, %v426
      %v428 = vld [vmem:[%s384] sm:$0xff]
      %v429 = vld [vmem:[%s384 + $0x8] sm:$0xff]
      %v430 = vld [vmem:[%s384 + $0x10] sm:$0xff]
      %v431 = vld [vmem:[%s384 + $0x18] sm:$0xff]
      %v432 = vld [vmem:[%s384 + $0x20] sm:$0xff]
      %v433 = vld [vmem:[%s384 + $0x28] sm:$0xff]
      %v434 = vld [vmem:[%s384 + $0x30] sm:$0xff]
      %v435 = vld [vmem:[%s384 + $0x38] sm:$0xff]
      %v437 = vlaneseq
      %v438 = vshrl.u32 %v437, 7
      %v439 = vsub.s32 0, %v438
      %v440 = vrot.slane %v427, %v439
      %v441 = vlaneseq
      %v442 = vshrl.u32 %v441, 7
      %v443 = vsub.s32 1, %v442
      %v444 = vrot.slane %v427, %v443
      %v447 = vmul.f32 %v440, %v428
      %v448 = vmul.f32 %v444, %v429
      %v449 = vmul.f32 %v440, %v430
      %v450 = vmul.f32 %v444, %v431
      %v451 = vmul.f32 %v440, %v432
      %v452 = vmul.f32 %v444, %v433
      %v453 = vmul.f32 %v440, %v434
      %v454 = vmul.f32 %v444, %v435
      %455 = vst [vmem:[%s394] sm:$0xff] %v447
      %456 = vst [vmem:[%s394 + $0x8] sm:$0xff] %v448
      %457 = vst [vmem:[%s394 + $0x10] sm:$0xff] %v449
      %458 = vst [vmem:[%s394 + $0x18] sm:$0xff] %v450
      %459 = vst [vmem:[%s394 + $0x20] sm:$0xff] %v451
      %460 = vst [vmem:[%s394 + $0x28] sm:$0xff] %v452
      %461 = vst [vmem:[%s394 + $0x30] sm:$0xff] %v453
      %462 = vst [vmem:[%s394 + $0x38] sm:$0xff] %v454
      %s463 = smul.u32 2, %s21
      %p464 = scmp.lt.s32.totalorder %s20, 1
      %s465 = scalar_select %p464, %s20, 1
      %p466 = scmp.lt.s32.totalorder %s463, 1
      %s467 = scalar_select %p466, %s463, 1
      %s468 = smul.addr %s465, 8
      %s469 = sadd.s32 %s467, %s468
      %s470 = smul.addr %s469, 8
      %s471 = scalar_lea.vmem %s5, %s470
      // Predicated region
      $region41: #{drp2_forward.14} parent=39 // pred_check
        %p472 = pneg %p188
      $region42: #{drp2_forward.14} parent=39 // pred_check_branch
        %474 = sbr.rel (%p472) target = $region44
      $region43: #{drp2_forward.14} parent=39 // pred_region
        %s475 = smul.u32 2, %s21
      $region44: #{drp2_forward.14} parent=39 // pred_fallthru
        _
    $region40: #{drp2_forward.14} parent=5 // pred_fallthru
      _
    %p476 = scmp.le.s32.totalorder 2, %s11
    // Predicated region
    $region45: #{drp2_forward.14} parent=5 // pred_check
      %p477 = pneg %p476
    $region46: #{drp2_forward.14} parent=5 // pred_check_branch
      %479 = sbr.rel (%p477) target = $region48
    $region47: #{drp2_forward.14} parent=5 // pred_region
      %s480 = ssub.s32 %s11, 2
      // Predicated region
      $region49: #{drp2_forward.14} parent=47 // pred_check
        %p481 = pneg %p194
      $region50: #{drp2_forward.14} parent=47 // pred_check_branch
        %483 = sbr.rel (%p481) target = $region52
      $region51: #{drp2_forward.14} parent=47 // pred_region
        %s484 = smul.u32 2, %s23
        %p485 = scmp.lt.s32.totalorder %s22, 1
        %s486 = scalar_select %p485, %s22, 1
        %p487 = scmp.lt.s32.totalorder %s484, 1
        %s488 = scalar_select %p487, %s484, 1
        %s489 = smul.addr %s486, 8
        %s490 = sadd.s32 %s488, %s489
        %s491 = smul.addr %s490, 8
        %s492 = scalar_lea.vmem %s5, %s491
      $region52: #{drp2_forward.14} parent=47 // pred_fallthru
        _
    $region48: #{drp2_forward.14} parent=5 // pred_fallthru
      _
  $region6: #{drp2_forward.14} parent=0 // loop_footer
    %s15 = sadd.s32 1, %s11
  $region7: #{drp2_forward.14} parent=0 // loop_footer_branch
    %10 = sbr.rel target = $region3
  $region8: #{drp2_forward.14} parent=0 // loop_exit
    _

// kernel: drp2_forward.26
$region0: #{drp2_forward.26}
  #allocation0 [shape = 'u32[]', space=smem, size = 0x4, offset = 0x4, fixed_abs, tag = 'smem constant byte address 0x4 - core index']
  #allocation1 [shape = 'u32[144,128]{1,0:T(1,128)}', space=vmem, size = 0x12000, scoped, tag = 'internal scratch']
  #allocation2 [shape = 'f32[1,1]{1,0:T(1,128)S(1)}', space=vmem, size = 0x200, scoped, tag = 'scoped memory for drp2_forward.26']
  %s0 = inlined_call_operand.vmem [shape: f32[2,16,256], index: 0, kind: input, shape index: {}]
  %s1 = inlined_call_operand.vmem [shape: f32[1,16], index: 1, kind: input, shape index: {}]
  %s2 = inlined_call_operand.<no memory space> [shape: f32[1,1], index: 2, kind: input, shape index: {}]
  %s3 = inlined_call_operand.vmem [shape: f32[2,1,256], index: 3, kind: output, shape index: {}]
  %s4 = sld [smem:[#allocation0]]
  $region45: #{drp2_forward.26} parent=0
    _
  %s6 = ssub.s32 1, %s4
  %s7 = scalar_select 0, %s6, %s4
  %v8 = vstv %s2
  %9 = vst [vmem:[#allocation2] sm:$0x1] %v8
  loop: start=0, step=1, limit=4
  $region2: #{drp2_forward.26} parent=0 // loop_pre_header
    _
  $region3: #{drp2_forward.26} parent=0 // loop_header
    %s11 = sphi 0, %s15
    %p12 = scmp.ge.s32.totalorder %s11, 4
    %s18 = sphi 0, %s30
    %s19 = sphi 0, %s26
    %s20 = sphi 0, %s18
    %s21 = sphi 0, %s19
    %s22 = sphi 0, %s20
    %s23 = sphi 0, %s21
    %s35 = sphi 0, %s37
    %s38 = sphi 0, %s35
    %s39 = sphi 0, %s38
    %s55 = sphi 0, %s39
    %s59 = sphi 0, %s59
    %s61 = sphi 0, %s59
    %s62 = sphi 0, %s61
    %s76 = sphi 0, %s62
    %s80 = sphi 0, %s80
    %s82 = sphi 0, %s80
    %s83 = sphi 0, %s82
    %s97 = sphi 0, %s83
    %s105 = sphi 0, %s107
    %s108 = sphi 0, %s105
    %s109 = sphi 0, %s108
    %s125 = sphi 0, %s109
  $region4: #{drp2_forward.26} parent=0 // loop_header_branch
    %14 = sbr.rel (%p12) target = $region8
  $region5: #{drp2_forward.26} parent=0 // loop_body
    %s16 = ssub.s32 %s11, 1
    %s17 = ssub.s32 %s11, 2
    %s24 = sadd.s32 1, %s19
    %p25 = scmp.ge.s32.totalorder %s24, 1
    %s26 = scalar_select %p25, 0, %s24
    %s27 = sadd.s32 1, %s18
    %s28 = scalar_select %p25, %s27, %s18
    %p29 = scmp.ge.s32.totalorder %s28, 2
    %s30 = scalar_select %p29, 0, %s28
    %s31 = ssub.s32 %s18, %s30
    %s32 = ssub.s32 %s19, %s26
    %s33 = sor.u32 %s31, %s32
    %p34 = scmp.eq.s32.totalorder %s33, 0
    %s36 = sadd.s32 %s35, 1
    %s37 = scalar_select %p34, %s35, %s36
    %p40 = pneg %p34
    %p41 = scmp.eq.s32.totalorder %s11, 1
    %p42 = por %p40, %p41
    %p43 = scmp.ne.s32.totalorder %s35, %s38
    %p44 = scmp.eq.s32.totalorder %s11, 0
    %p45 = por %p43, %p44
    %p46 = scmp.ne.s32.totalorder %s35, %s38
    %p47 = scmp.eq.s32.totalorder %s16, 1
    %p48 = por %p46, %p47
    %p49 = scmp.ne.s32.totalorder %s38, %s39
    %p50 = scmp.eq.s32.totalorder %s16, 0
    %p51 = por %p49, %p50
    %p52 = scmp.ne.s32.totalorder %s38, %s39
    %p53 = scmp.eq.s32.totalorder %s17, 1
    %p54 = por %p52, %p53
    %p56 = scmp.ne.s32.totalorder %s39, %s55
    %p57 = scmp.eq.s32.totalorder %s17, 0
    %p58 = por %p56, %p57
    %s60 = sadd.s32 %s59, 1
    %p63 = scmp.eq.s32.totalorder %s11, 1
    %p64 = scmp.ne.s32.totalorder %s59, %s61
    %p65 = scmp.eq.s32.totalorder %s11, 0
    %p66 = por %p64, %p65
    %p67 = scmp.ne.s32.totalorder %s59, %s61
    %p68 = scmp.eq.s32.totalorder %s16, 1
    %p69 = por %p67, %p68
    %p70 = scmp.ne.s32.totalorder %s61, %s62
    %p71 = scmp.eq.s32.totalorder %s16, 0
    %p72 = por %p70, %p71
    %p73 = scmp.ne.s32.totalorder %s61, %s62
    %p74 = scmp.eq.s32.totalorder %s17, 1
    %p75 = por %p73, %p74
    %p77 = scmp.ne.s32.totalorder %s62, %s76
    %p78 = scmp.eq.s32.totalorder %s17, 0
    %p79 = por %p77, %p78
    %s81 = sadd.s32 %s80, 1
    %p84 = scmp.eq.s32.totalorder %s11, 1
    %p85 = scmp.ne.s32.totalorder %s80, %s82
    %p86 = scmp.eq.s32.totalorder %s11, 0
    %p87 = por %p85, %p86
    %p88 = scmp.ne.s32.totalorder %s80, %s82
    %p89 = scmp.eq.s32.totalorder %s16, 1
    %p90 = por %p88, %p89
    %p91 = scmp.ne.s32.totalorder %s82, %s83
    %p92 = scmp.eq.s32.totalorder %s16, 0
    %p93 = por %p91, %p92
    %p94 = scmp.ne.s32.totalorder %s82, %s83
    %p95 = scmp.eq.s32.totalorder %s17, 1
    %p96 = por %p94, %p95
    %p98 = scmp.ne.s32.totalorder %s83, %s97
    %p99 = scmp.eq.s32.totalorder %s17, 0
    %p100 = por %p98, %p99
    %s101 = ssub.s32 %s18, %s30
    %s102 = ssub.s32 %s19, %s26
    %s103 = sor.u32 %s101, %s102
    %p104 = scmp.eq.s32.totalorder %s103, 0
    %s106 = sadd.s32 %s105, 1
    %s107 = scalar_select %p104, %s105, %s106
    %p110 = pneg %p104
    %p111 = scmp.eq.s32.totalorder %s11, 1
    %p112 = por %p110, %p111
    %p113 = scmp.ne.s32.totalorder %s105, %s108
    %p114 = scmp.eq.s32.totalorder %s11, 0
    %p115 = por %p113, %p114
    %p116 = scmp.ne.s32.totalorder %s105, %s108
    %p117 = scmp.eq.s32.totalorder %s16, 1
    %p118 = por %p116, %p117
    %p119 = scmp.ne.s32.totalorder %s108, %s109
    %p120 = scmp.eq.s32.totalorder %s16, 0
    %p121 = por %p119, %p120
    %p122 = scmp.ne.s32.totalorder %s108, %s109
    %p123 = scmp.eq.s32.totalorder %s17, 1
    %p124 = por %p122, %p123
    %p126 = scmp.ne.s32.totalorder %s109, %s125
    %p127 = scmp.eq.s32.totalorder %s17, 0
    %p128 = por %p126, %p127
    %p129 = scmp.le.s32.totalorder 1, %s11
    %p130 = scmp.lt.s32.totalorder %s11, 3
    %p131 = pnand %p129, %p130
    %p132 = pneg %p131
    // Predicated region
    $region9: #{drp2_forward.26} parent=5 // pred_check
      _
    $region10: #{drp2_forward.26} parent=5 // pred_check_branch
      %134 = sbr.rel (%p131) target = $region12
    $region11: #{drp2_forward.26} parent=5 // pred_region
      %s135 = ssub.s32 %s11, 1
      // Predicated region
      $region13: #{drp2_forward.26} parent=11 // pred_check
        %p136 = pneg %p72
      $region14: #{drp2_forward.26} parent=11 // pred_check_branch
        %138 = sbr.rel (%p136) target = $region16
      $region15: #{drp2_forward.26} parent=11 // pred_region
        _
      $region16: #{drp2_forward.26} parent=11 // pred_fallthru
        _
      // Predicated region
      $region17: #{drp2_forward.26} parent=11 // pred_check
        %p139 = pneg %p93
      $region18: #{drp2_forward.26} parent=11 // pred_check_branch
        %141 = sbr.rel (%p139) target = $region20
      $region19: #{drp2_forward.26} parent=11 // pred_region
        _
      $region20: #{drp2_forward.26} parent=11 // pred_fallthru
        _
    $region12: #{drp2_forward.26} parent=5 // pred_fallthru
      _
    %p142 = scmp.lt.s32.totalorder %s11, 2
    // Predicated region
    $region21: #{drp2_forward.26} parent=5 // pred_check
      %p143 = pneg %p142
    $region22: #{drp2_forward.26} parent=5 // pred_check_branch
      %145 = sbr.rel (%p143) target = $region24
    $region23: #{drp2_forward.26} parent=5 // pred_region
      // Predicated region
      $region25: #{drp2_forward.26} parent=23 // pred_check
        %p146 = pneg %p45
      $region26: #{drp2_forward.26} parent=23 // pred_check_branch
        %148 = sbr.rel (%p146) target = $region28
      $region27: #{drp2_forward.26} parent=23 // pred_region
        %s149 = smul.u32 2, %s19
        %p150 = scmp.lt.s32.totalorder %s18, 1
        %s151 = scalar_select %p150, %s18, 1
        %p152 = scmp.lt.s32.totalorder %s149, 1
        %s153 = scalar_select %p152, %s149, 1
        %s154 = smul.addr %s151, 4
        %s155 = sadd.s32 %s153, %s154
        %s156 = smul.addr %s155, 8
        %s157 = scalar_lea.vmem %s0, %s156
        %s158 = smul.u32 2, %s19
      $region28: #{drp2_forward.26} parent=23 // pred_fallthru
        _
    $region24: #{drp2_forward.26} parent=5 // pred_fallthru
      _
    %p159 = scmp.le.s32.totalorder 1, %s11
    %p160 = scmp.lt.s32.totalorder %s11, 3
    %p161 = pnand %p159, %p160
    %p162 = pneg %p161
    // Predicated region
    $region29: #{drp2_forward.26} parent=5 // pred_check
      _
    $region30: #{drp2_forward.26} parent=5 // pred_check_branch
      %164 = sbr.rel (%p161) target = $region32
    $region31: #{drp2_forward.26} parent=5 // pred_region
      %s165 = ssub.s32 %s11, 1
      %s166 = smul.u32 2, %s21
      %p167 = scmp.lt.s32.totalorder %s20, 1
      %s168 = scalar_select %p167, %s20, 1
      %p169 = scmp.lt.s32.totalorder %s166, 1
      %s170 = scalar_select %p169, %s166, 1
      %s171 = smul.addr %s168, 4
      %s172 = sadd.s32 %s170, %s171
      %s173 = smul.addr %s172, 8
      %s174 = scalar_lea.vmem %s0, %s173
      %p175 = pneg %p51
      %p176 = pneg %p48
      %p177 = pneg %p72
      %p178 = pneg %p69
      %p179 = pneg %p93
      %p180 = pneg %p90
      %p181 = pneg %p121
      %p182 = pneg %p118
      %s183 = smul.u32 2, %s21
      %p184 = scmp.lt.s32.totalorder %s20, 1
      %s185 = scalar_select %p184, %s20, 1
      %p186 = scmp.lt.s32.totalorder %s183, 1
      %s187 = scalar_select %p186, %s183, 1
      %s188 = smul.addr %s185, 2
      %s189 = sadd.s32 %s187, %s188
      %s190 = scalar_lea.vmem %s3, %s189
      %s191 = smul.u32 2, %s21
      %p192 = scmp.lt.s32.totalorder %s20, 1
      %s193 = scalar_select %p192, %s20, 1
      %p194 = scmp.lt.s32.totalorder %s191, 1
      %s195 = scalar_select %p194, %s191, 1
      %s196 = smul.addr %s193, 4
      %s197 = sadd.s32 %s195, %s196
      %s198 = smul.addr %s197, 8
      %s199 = scalar_lea.vmem %s0, %s198
      %s200 = smul.u32 2, %s21
      %s201 = smul.u32 2, %s21
      %p202 = scmp.lt.s32.totalorder %s20, 1
      %s203 = scalar_select %p202, %s20, 1
      %p204 = scmp.lt.s32.totalorder %s201, 1
      %s205 = scalar_select %p204, %s201, 1
      %s206 = smul.addr %s203, 2
      %s207 = sadd.s32 %s205, %s206
      %s208 = scalar_lea.vmem %s3, %s207
      %s209 = smul.u32 2, %s21
      %v210 = vld [vmem:[%s199] sm:$0xff]
      %v211 = vld [vmem:[%s199 + $0x8] sm:$0xff]
      %v212 = vld [vmem:[%s199 + $0x10] sm:$0xff]
      %v213 = vld [vmem:[%s199 + $0x18] sm:$0xff]
      %v214 = vld [vmem:[%s1] sm:$0x1]
      %v215 = vld [vmem:[#allocation2] sm:$0x1]
      %217 = vset.pattern.permute.xlu0 0
      %218 = vperm.xlu0 %217, %v215
      %v219 = vpop.permute.xlu0 %218
      %v221 = vlaneseq
      %v222 = vshrl.u32 %v221, 7
      %v223 = vsub.s32 0, %v222
      %v224 = vrot.slane %v219, %v223
      %vm225 = vcmask 130048
      %v227 = vsel %vm225, %v214, 0
      %229 = vmatprep.subr.mxu0 %v211
      %230 = vmatpush1.msra.mxu0 %v210
      %231 = vmatprep.subr.mxu0 %v213
      %232 = vmatpush1.msra.mxu0 %v212
      %233 = vmatprep.subr.mxu0 0.0
      %234 = vmatpush1.msra.mxu0 0.0
      %235 = vmatprep.subr.mxu0 0.0
      %236 = vmatpush1.msra.mxu0 0.0
      %237 = vmatprep.subr.mxu0 0.0
      %238 = vmatpush1.msra.mxu0 0.0
      %239 = vmatprep.subr.mxu0 0.0
      %240 = vmatpush1.msra.mxu0 0.0
      %241 = vmatprep.subr.mxu0 0.0
      %242 = vmatpush1.msra.mxu0 0.0
      %243 = vmatprep.subr.mxu0 0.0
      %244 = vmatpush1.msra.mxu0 0.0
      %245 = vmatprep.subr.mxu0 0.0
      %246 = vmatpush1.msra.mxu0 0.0
      %247 = vmatprep.subr.mxu0 0.0
      %248 = vmatpush1.msra.mxu0 0.0
      %249 = vmatprep.subr.mxu0 0.0
      %250 = vmatpush1.msra.mxu0 0.0
      %251 = vmatprep.subr.mxu0 0.0
      %252 = vmatpush1.msra.mxu0 0.0
      %253 = vmatprep.subr.mxu0 0.0
      %254 = vmatpush1.msra.mxu0 0.0
      %255 = vmatprep.subr.mxu0 0.0
      %256 = vmatpush1.msra.mxu0 0.0
      %257 = vmatprep.subr.mxu0 0.0
      %258 = vmatpush1.msra.mxu0 0.0
      %259 = vmatprep.subr.mxu0 0.0
      %260 = vmatpush1.msra.mxu0 0.0
      %261 = vmatprep.subr.mxu0 0.0
      %262 = vmatpush1.msra.mxu0 0.0
      %263 = vmatprep.subr.mxu0 0.0
      %264 = vmatpush1.msra.mxu0 0.0
      %265 = vmatprep.subr.mxu0 0.0
      %266 = vmatpush1.msra.mxu0 0.0
      %267 = vmatprep.subr.mxu0 0.0
      %268 = vmatpush1.msra.mxu0 0.0
      %269 = vmatprep.subr.mxu0 0.0
      %270 = vmatpush1.msra.mxu0 0.0
      %271 = vmatprep.subr.mxu0 0.0
      %272 = vmatpush1.msra.mxu0 0.0
      %273 = vmatprep.subr.mxu0 0.0
      %274 = vmatpush1.msra.mxu0 0.0
      %275 = vmatprep.subr.mxu0 0.0
      %276 = vmatpush1.msra.mxu0 0.0
      %277 = vmatprep.subr.mxu0 0.0
      %278 = vmatpush1.msra.mxu0 0.0
      %279 = vmatprep.subr.mxu0 0.0
      %280 = vmatpush1.msra.mxu0 0.0
      %281 = vmatprep.subr.mxu0 0.0
      %282 = vmatpush1.msra.mxu0 0.0
      %283 = vmatprep.subr.mxu0 0.0
      %284 = vmatpush1.msra.mxu0 0.0
      %285 = vmatprep.subr.mxu0 0.0
      %286 = vmatpush1.msra.mxu0 0.0
      %287 = vmatprep.subr.mxu0 0.0
      %288 = vmatpush1.msra.mxu0 0.0
      %289 = vmatprep.subr.mxu0 0.0
      %290 = vmatpush1.msra.mxu0 0.0
      %291 = vmatprep.subr.mxu0 0.0
      %292 = vmatpush1.msra.mxu0 0.0
      %293 = vmatprep.mubr.f32.mxu0 0.0
      %294 = vmatmul.mubr.f32.gmra.mrb[0].mxu0 %v227
      %v295 = vpop.f32.mrb[0].mxu0
      %v296 = vadd.f32 %v224, %v295
      %v297 = vpop.f32.mrb[0].mxu0
      %v298 = vadd.f32 %v224, %v297
      %299 = vdwg.mxu0
      %v302 = vcombine.low %v296, %v298
      %v304 = vunpack.c.l.s4 1966171168
      %v305 = vunpack.c.0.s8 %v304
      %v306 = vlaneseq
      %v307 = vshrl.u32 %v306, 7
      %v308 = vsub.s32 %v305, %v307
      %v309 = vrot.slane %v302, %v308
      %v311 = vunpack.c.l.s4 1966171168
      %v312 = vunpack.c.0.s8 %v311
      %v313 = vlaneseq
      %v314 = vshrl.u32 %v313, 7
      %v315 = vsub.s32 %v312, %v314
      %v316 = vrot.slane %v309, %v315
      %v318 = vlaneseq
      %vm319 = vcmp.ge.s32.totalorder %v318, 0
      %vm320 = vcmp.lt.s32.totalorder %v318, 256
      %vm321 = vmand %vm319, %vm320
      %322 = vst.msk [vmem:[%s208] sm:$0x3] %vm321, %v316
      %s323 = smul.u32 2, %s21
      %p324 = scmp.lt.s32.totalorder %s20, 1
      %s325 = scalar_select %p324, %s20, 1
      %p326 = scmp.lt.s32.totalorder %s323, 1
      %s327 = scalar_select %p326, %s323, 1
      %s328 = smul.addr %s325, 2
      %s329 = sadd.s32 %s327, %s328
      %s330 = scalar_lea.vmem %s3, %s329
      // Predicated region
      $region33: #{drp2_forward.26} parent=31 // pred_check
        %p331 = pneg %p118
      $region34: #{drp2_forward.26} parent=31 // pred_check_branch
        %333 = sbr.rel (%p331) target = $region36
      $region35: #{drp2_forward.26} parent=31 // pred_region
        %s334 = smul.u32 2, %s21
      $region36: #{drp2_forward.26} parent=31 // pred_fallthru
        _
    $region32: #{drp2_forward.26} parent=5 // pred_fallthru
      _
    %p335 = scmp.le.s32.totalorder 2, %s11
    // Predicated region
    $region37: #{drp2_forward.26} parent=5 // pred_check
      %p336 = pneg %p335
    $region38: #{drp2_forward.26} parent=5 // pred_check_branch
      %338 = sbr.rel (%p336) target = $region40
    $region39: #{drp2_forward.26} parent=5 // pred_region
      %s339 = ssub.s32 %s11, 2
      // Predicated region
      $region41: #{drp2_forward.26} parent=39 // pred_check
        %p340 = pneg %p124
      $region42: #{drp2_forward.26} parent=39 // pred_check_branch
        %342 = sbr.rel (%p340) target = $region44
      $region43: #{drp2_forward.26} parent=39 // pred_region
        %s343 = smul.u32 2, %s23
        %p344 = scmp.lt.s32.totalorder %s22, 1
        %s345 = scalar_select %p344, %s22, 1
        %p346 = scmp.lt.s32.totalorder %s343, 1
        %s347 = scalar_select %p346, %s343, 1
        %s348 = smul.addr %s345, 2
        %s349 = sadd.s32 %s347, %s348
        %s350 = scalar_lea.vmem %s3, %s349
      $region44: #{drp2_forward.26} parent=39 // pred_fallthru
        _
    $region40: #{drp2_forward.26} parent=5 // pred_fallthru
      _
  $region6: #{drp2_forward.26} parent=0 // loop_footer
    %s15 = sadd.s32 1, %s11
  $region7: #{drp2_forward.26} parent=0 // loop_footer_branch
    %10 = sbr.rel target = $region3
  $region8: #{drp2_forward.26} parent=0 // loop_exit
    _

// kernel: drp2_forward.25
$region0: #{drp2_forward.25}
  #allocation0 [shape = 'u32[]', space=smem, size = 0x4, offset = 0x4, fixed_abs, tag = 'smem constant byte address 0x4 - core index']
  #allocation1 [shape = 'u32[144,128]{1,0:T(1,128)}', space=vmem, size = 0x12000, scoped, tag = 'internal scratch']
  %s0 = inlined_call_operand.vmem [shape: f32[2,576,256], index: 0, kind: input, shape index: {}]
  %s1 = inlined_call_operand.vmem [shape: f32[16,576], index: 1, kind: input, shape index: {}]
  %s2 = inlined_call_operand.vmem [shape: f32[16,1], index: 2, kind: input, shape index: {}]
  %s3 = inlined_call_operand.vmem [shape: f32[2,16,256], index: 3, kind: output, shape index: {}]
  %s4 = sld [smem:[#allocation0]]
  $region45: #{drp2_forward.25} parent=0
    _
  %s6 = ssub.s32 1, %s4
  %s7 = scalar_select 0, %s6, %s4
  loop: start=0, step=1, limit=4
  $region2: #{drp2_forward.25} parent=0 // loop_pre_header
    _
  $region3: #{drp2_forward.25} parent=0 // loop_header
    %s9 = sphi 0, %s13
    %p10 = scmp.ge.s32.totalorder %s9, 4
    %s16 = sphi 0, %s28
    %s17 = sphi 0, %s24
    %s18 = sphi 0, %s16
    %s19 = sphi 0, %s17
    %s20 = sphi 0, %s18
    %s21 = sphi 0, %s19
    %s33 = sphi 0, %s35
    %s36 = sphi 0, %s33
    %s37 = sphi 0, %s36
    %s53 = sphi 0, %s37
    %s57 = sphi 0, %s57
    %s59 = sphi 0, %s57
    %s60 = sphi 0, %s59
    %s74 = sphi 0, %s60
    %s78 = sphi 0, %s78
    %s80 = sphi 0, %s78
    %s81 = sphi 0, %s80
    %s95 = sphi 0, %s81
    %s103 = sphi 0, %s105
    %s106 = sphi 0, %s103
    %s107 = sphi 0, %s106
    %s123 = sphi 0, %s107
  $region4: #{drp2_forward.25} parent=0 // loop_header_branch
    %12 = sbr.rel (%p10) target = $region8
  $region5: #{drp2_forward.25} parent=0 // loop_body
    %s14 = ssub.s32 %s9, 1
    %s15 = ssub.s32 %s9, 2
    %s22 = sadd.s32 1, %s17
    %p23 = scmp.ge.s32.totalorder %s22, 1
    %s24 = scalar_select %p23, 0, %s22
    %s25 = sadd.s32 1, %s16
    %s26 = scalar_select %p23, %s25, %s16
    %p27 = scmp.ge.s32.totalorder %s26, 2
    %s28 = scalar_select %p27, 0, %s26
    %s29 = ssub.s32 %s16, %s28
    %s30 = ssub.s32 %s17, %s24
    %s31 = sor.u32 %s29, %s30
    %p32 = scmp.eq.s32.totalorder %s31, 0
    %s34 = sadd.s32 %s33, 1
    %s35 = scalar_select %p32, %s33, %s34
    %p38 = pneg %p32
    %p39 = scmp.eq.s32.totalorder %s9, 1
    %p40 = por %p38, %p39
    %p41 = scmp.ne.s32.totalorder %s33, %s36
    %p42 = scmp.eq.s32.totalorder %s9, 0
    %p43 = por %p41, %p42
    %p44 = scmp.ne.s32.totalorder %s33, %s36
    %p45 = scmp.eq.s32.totalorder %s14, 1
    %p46 = por %p44, %p45
    %p47 = scmp.ne.s32.totalorder %s36, %s37
    %p48 = scmp.eq.s32.totalorder %s14, 0
    %p49 = por %p47, %p48
    %p50 = scmp.ne.s32.totalorder %s36, %s37
    %p51 = scmp.eq.s32.totalorder %s15, 1
    %p52 = por %p50, %p51
    %p54 = scmp.ne.s32.totalorder %s37, %s53
    %p55 = scmp.eq.s32.totalorder %s15, 0
    %p56 = por %p54, %p55
    %s58 = sadd.s32 %s57, 1
    %p61 = scmp.eq.s32.totalorder %s9, 1
    %p62 = scmp.ne.s32.totalorder %s57, %s59
    %p63 = scmp.eq.s32.totalorder %s9, 0
    %p64 = por %p62, %p63
    %p65 = scmp.ne.s32.totalorder %s57, %s59
    %p66 = scmp.eq.s32.totalorder %s14, 1
    %p67 = por %p65, %p66
    %p68 = scmp.ne.s32.totalorder %s59, %s60
    %p69 = scmp.eq.s32.totalorder %s14, 0
    %p70 = por %p68, %p69
    %p71 = scmp.ne.s32.totalorder %s59, %s60
    %p72 = scmp.eq.s32.totalorder %s15, 1
    %p73 = por %p71, %p72
    %p75 = scmp.ne.s32.totalorder %s60, %s74
    %p76 = scmp.eq.s32.totalorder %s15, 0
    %p77 = por %p75, %p76
    %s79 = sadd.s32 %s78, 1
    %p82 = scmp.eq.s32.totalorder %s9, 1
    %p83 = scmp.ne.s32.totalorder %s78, %s80
    %p84 = scmp.eq.s32.totalorder %s9, 0
    %p85 = por %p83, %p84
    %p86 = scmp.ne.s32.totalorder %s78, %s80
    %p87 = scmp.eq.s32.totalorder %s14, 1
    %p88 = por %p86, %p87
    %p89 = scmp.ne.s32.totalorder %s80, %s81
    %p90 = scmp.eq.s32.totalorder %s14, 0
    %p91 = por %p89, %p90
    %p92 = scmp.ne.s32.totalorder %s80, %s81
    %p93 = scmp.eq.s32.totalorder %s15, 1
    %p94 = por %p92, %p93
    %p96 = scmp.ne.s32.totalorder %s81, %s95
    %p97 = scmp.eq.s32.totalorder %s15, 0
    %p98 = por %p96, %p97
    %s99 = ssub.s32 %s16, %s28
    %s100 = ssub.s32 %s17, %s24
    %s101 = sor.u32 %s99, %s100
    %p102 = scmp.eq.s32.totalorder %s101, 0
    %s104 = sadd.s32 %s103, 1
    %s105 = scalar_select %p102, %s103, %s104
    %p108 = pneg %p102
    %p109 = scmp.eq.s32.totalorder %s9, 1
    %p110 = por %p108, %p109
    %p111 = scmp.ne.s32.totalorder %s103, %s106
    %p112 = scmp.eq.s32.totalorder %s9, 0
    %p113 = por %p111, %p112
    %p114 = scmp.ne.s32.totalorder %s103, %s106
    %p115 = scmp.eq.s32.totalorder %s14, 1
    %p116 = por %p114, %p115
    %p117 = scmp.ne.s32.totalorder %s106, %s107
    %p118 = scmp.eq.s32.totalorder %s14, 0
    %p119 = por %p117, %p118
    %p120 = scmp.ne.s32.totalorder %s106, %s107
    %p121 = scmp.eq.s32.totalorder %s15, 1
    %p122 = por %p120, %p121
    %p124 = scmp.ne.s32.totalorder %s107, %s123
    %p125 = scmp.eq.s32.totalorder %s15, 0
    %p126 = por %p124, %p125
    %p127 = scmp.le.s32.totalorder 1, %s9
    %p128 = scmp.lt.s32.totalorder %s9, 3
    %p129 = pnand %p127, %p128
    %p130 = pneg %p129
    // Predicated region
    $region9: #{drp2_forward.25} parent=5 // pred_check
      _
    $region10: #{drp2_forward.25} parent=5 // pred_check_branch
      %132 = sbr.rel (%p129) target = $region12
    $region11: #{drp2_forward.25} parent=5 // pred_region
      %s133 = ssub.s32 %s9, 1
      // Predicated region
      $region13: #{drp2_forward.25} parent=11 // pred_check
        %p134 = pneg %p70
      $region14: #{drp2_forward.25} parent=11 // pred_check_branch
        %136 = sbr.rel (%p134) target = $region16
      $region15: #{drp2_forward.25} parent=11 // pred_region
        _
      $region16: #{drp2_forward.25} parent=11 // pred_fallthru
        _
      // Predicated region
      $region17: #{drp2_forward.25} parent=11 // pred_check
        %p137 = pneg %p91
      $region18: #{drp2_forward.25} parent=11 // pred_check_branch
        %139 = sbr.rel (%p137) target = $region20
      $region19: #{drp2_forward.25} parent=11 // pred_region
        _
      $region20: #{drp2_forward.25} parent=11 // pred_fallthru
        _
    $region12: #{drp2_forward.25} parent=5 // pred_fallthru
      _
    %p140 = scmp.lt.s32.totalorder %s9, 2
    // Predicated region
    $region21: #{drp2_forward.25} parent=5 // pred_check
      %p141 = pneg %p140
    $region22: #{drp2_forward.25} parent=5 // pred_check_branch
      %143 = sbr.rel (%p141) target = $region24
    $region23: #{drp2_forward.25} parent=5 // pred_region
      // Predicated region
      $region25: #{drp2_forward.25} parent=23 // pred_check
        %p144 = pneg %p43
      $region26: #{drp2_forward.25} parent=23 // pred_check_branch
        %146 = sbr.rel (%p144) target = $region28
      $region27: #{drp2_forward.25} parent=23 // pred_region
        %s147 = smul.u32 2, %s17
        %p148 = scmp.lt.s32.totalorder %s16, 1
        %s149 = scalar_select %p148, %s16, 1
        %p150 = scmp.lt.s32.totalorder %s147, 1
        %s151 = scalar_select %p150, %s147, 1
        %s152 = smul.addr %s149, 144
        %s153 = sadd.s32 %s151, %s152
        %s154 = smul.addr %s153, 8
        %s155 = scalar_lea.vmem %s0, %s154
        %s156 = smul.u32 2, %s17
      $region28: #{drp2_forward.25} parent=23 // pred_fallthru
        _
    $region24: #{drp2_forward.25} parent=5 // pred_fallthru
      _
    %p157 = scmp.le.s32.totalorder 1, %s9
    %p158 = scmp.lt.s32.totalorder %s9, 3
    %p159 = pnand %p157, %p158
    %p160 = pneg %p159
    // Predicated region
    $region29: #{drp2_forward.25} parent=5 // pred_check
      _
    $region30: #{drp2_forward.25} parent=5 // pred_check_branch
      %162 = sbr.rel (%p159) target = $region32
    $region31: #{drp2_forward.25} parent=5 // pred_region
      %s163 = ssub.s32 %s9, 1
      %s164 = smul.u32 2, %s19
      %p165 = scmp.lt.s32.totalorder %s18, 1
      %s166 = scalar_select %p165, %s18, 1
      %p167 = scmp.lt.s32.totalorder %s164, 1
      %s168 = scalar_select %p167, %s164, 1
      %s169 = smul.addr %s166, 144
      %s170 = sadd.s32 %s168, %s169
      %s171 = smul.addr %s170, 8
      %s172 = scalar_lea.vmem %s0, %s171
      %p173 = pneg %p49
      %p174 = pneg %p46
      %p175 = pneg %p70
      %p176 = pneg %p67
      %p177 = pneg %p91
      %p178 = pneg %p88
      %p179 = pneg %p119
      %p180 = pneg %p116
      %s181 = smul.u32 2, %s19
      %p182 = scmp.lt.s32.totalorder %s18, 1
      %s183 = scalar_select %p182, %s18, 1
      %p184 = scmp.lt.s32.totalorder %s181, 1
      %s185 = scalar_select %p184, %s181, 1
      %s186 = smul.addr %s183, 4
      %s187 = sadd.s32 %s185, %s186
      %s188 = smul.addr %s187, 8
      %s189 = scalar_lea.vmem %s3, %s188
      %s190 = smul.u32 2, %s19
      %p191 = scmp.lt.s32.totalorder %s18, 1
      %s192 = scalar_select %p191, %s18, 1
      %p193 = scmp.lt.s32.totalorder %s190, 1
      %s194 = scalar_select %p193, %s190, 1
      %s195 = smul.addr %s192, 144
      %s196 = sadd.s32 %s194, %s195
      %s197 = smul.addr %s196, 8
      %s198 = scalar_lea.vmem %s0, %s197
      %s199 = smul.u32 2, %s19
      %s200 = smul.u32 2, %s19
      %p201 = scmp.lt.s32.totalorder %s18, 1
      %s202 = scalar_select %p201, %s18, 1
      %p203 = scmp.lt.s32.totalorder %s200, 1
      %s204 = scalar_select %p203, %s200, 1
      %s205 = smul.addr %s202, 4
      %s206 = sadd.s32 %s204, %s205
      %s207 = smul.addr %s206, 8
      %s208 = scalar_lea.vmem %s3, %s207
      %s209 = smul.u32 2, %s19
      %v210 = vld [vmem:[%s198] sm:$0xff]
      %v211 = vld [vmem:[%s198 + $0x8] sm:$0xff]
      %v212 = vld [vmem:[%s198 + $0x10] sm:$0xff]
      %v213 = vld [vmem:[%s198 + $0x18] sm:$0xff]
      %v214 = vld [vmem:[%s198 + $0x20] sm:$0xff]
      %v215 = vld [vmem:[%s198 + $0x28] sm:$0xff]
      %v216 = vld [vmem:[%s198 + $0x30] sm:$0xff]
      %v217 = vld [vmem:[%s198 + $0x38] sm:$0xff]
      %v218 = vld [vmem:[%s198 + $0x40] sm:$0xff]
      %v219 = vld [vmem:[%s198 + $0x48] sm:$0xff]
      %v220 = vld [vmem:[%s198 + $0x50] sm:$0xff]
      %v221 = vld [vmem:[%s198 + $0x58] sm:$0xff]
      %v222 = vld [vmem:[%s198 + $0x60] sm:$0xff]
      %v223 = vld [vmem:[%s198 + $0x68] sm:$0xff]
      %v224 = vld [vmem:[%s198 + $0x70] sm:$0xff]
      %v225 = vld [vmem:[%s198 + $0x78] sm:$0xff]
      %v226 = vld [vmem:[%s198 + $0x80] sm:$0xff]
      %v227 = vld [vmem:[%s198 + $0x88] sm:$0xff]
      %v228 = vld [vmem:[%s198 + $0x90] sm:$0xff]
      %v229 = vld [vmem:[%s198 + $0x98] sm:$0xff]
      %v230 = vld [vmem:[%s198 + $0xa0] sm:$0xff]
      %v231 = vld [vmem:[%s198 + $0xa8] sm:$0xff]
      %v232 = vld [vmem:[%s198 + $0xb0] sm:$0xff]
      %v233 = vld [vmem:[%s198 + $0xb8] sm:$0xff]
      %v234 = vld [vmem:[%s198 + $0xc0] sm:$0xff]
      %v235 = vld [vmem:[%s198 + $0xc8] sm:$0xff]
      %v236 = vld [vmem:[%s198 + $0xd0] sm:$0xff]
      %v237 = vld [vmem:[%s198 + $0xd8] sm:$0xff]
      %v238 = vld [vmem:[%s198 + $0xe0] sm:$0xff]
      %v239 = vld [vmem:[%s198 + $0xe8] sm:$0xff]
      %v240 = vld [vmem:[%s198 + $0xf0] sm:$0xff]
      %v241 = vld [vmem:[%s198 + $0xf8] sm:$0xff]
      %v242 = vld [vmem:[%s198 + $0x100] sm:$0xff]
      %v243 = vld [vmem:[%s198 + $0x108] sm:$0xff]
      %v244 = vld [vmem:[%s198 + $0x110] sm:$0xff]
      %v245 = vld [vmem:[%s198 + $0x118] sm:$0xff]
      %v246 = vld [vmem:[%s198 + $0x120] sm:$0xff]
      %v247 = vld [vmem:[%s198 + $0x128] sm:$0xff]
      %v248 = vld [vmem:[%s198 + $0x130] sm:$0xff]
      %v249 = vld [vmem:[%s198 + $0x138] sm:$0xff]
      %v250 = vld [vmem:[%s198 + $0x140] sm:$0xff]
      %v251 = vld [vmem:[%s198 + $0x148] sm:$0xff]
      %v252 = vld [vmem:[%s198 + $0x150] sm:$0xff]
      %v253 = vld [vmem:[%s198 + $0x158] sm:$0xff]
      %v254 = vld [vmem:[%s198 + $0x160] sm:$0xff]
      %v255 = vld [vmem:[%s198 + $0x168] sm:$0xff]
      %v256 = vld [vmem:[%s198 + $0x170] sm:$0xff]
      %v257 = vld [vmem:[%s198 + $0x178] sm:$0xff]
      %v258 = vld [vmem:[%s198 + $0x180] sm:$0xff]
      %v259 = vld [vmem:[%s198 + $0x188] sm:$0xff]
      %v260 = vld [vmem:[%s198 + $0x190] sm:$0xff]
      %v261 = vld [vmem:[%s198 + $0x198] sm:$0xff]
      %v262 = vld [vmem:[%s198 + $0x1a0] sm:$0xff]
      %v263 = vld [vmem:[%s198 + $0x1a8] sm:$0xff]
      %v264 = vld [vmem:[%s198 + $0x1b0] sm:$0xff]
      %v265 = vld [vmem:[%s198 + $0x1b8] sm:$0xff]
      %v266 = vld [vmem:[%s198 + $0x1c0] sm:$0xff]
      %v267 = vld [vmem:[%s198 + $0x1c8] sm:$0xff]
      %v268 = vld [vmem:[%s198 + $0x1d0] sm:$0xff]
      %v269 = vld [vmem:[%s198 + $0x1d8] sm:$0xff]
      %v270 = vld [vmem:[%s198 + $0x1e0] sm:$0xff]
      %v271 = vld [vmem:[%s198 + $0x1e8] sm:$0xff]
      %v272 = vld [vmem:[%s198 + $0x1f0] sm:$0xff]
      %v273 = vld [vmem:[%s198 + $0x1f8] sm:$0xff]
      %v274 = vld [vmem:[%s198 + $0x200] sm:$0xff]
      %v275 = vld [vmem:[%s198 + $0x208] sm:$0xff]
      %v276 = vld [vmem:[%s198 + $0x210] sm:$0xff]
      %v277 = vld [vmem:[%s198 + $0x218] sm:$0xff]
      %v278 = vld [vmem:[%s198 + $0x220] sm:$0xff]
      %v279 = vld [vmem:[%s198 + $0x228] sm:$0xff]
      %v280 = vld [vmem:[%s198 + $0x230] sm:$0xff]
      %v281 = vld [vmem:[%s198 + $0x238] sm:$0xff]
      %v282 = vld [vmem:[%s198 + $0x240] sm:$0xff]
      %v283 = vld [vmem:[%s198 + $0x248] sm:$0xff]
      %v284 = vld [vmem:[%s198 + $0x250] sm:$0xff]
      %v285 = vld [vmem:[%s198 + $0x258] sm:$0xff]
      %v286 = vld [vmem:[%s198 + $0x260] sm:$0xff]
      %v287 = vld [vmem:[%s198 + $0x268] sm:$0xff]
      %v288 = vld [vmem:[%s198 + $0x270] sm:$0xff]
      %v289 = vld [vmem:[%s198 + $0x278] sm:$0xff]
      %v290 = vld [vmem:[%s198 + $0x280] sm:$0xff]
      %v291 = vld [vmem:[%s198 + $0x288] sm:$0xff]
      %v292 = vld [vmem:[%s198 + $0x290] sm:$0xff]
      %v293 = vld [vmem:[%s198 + $0x298] sm:$0xff]
      %v294 = vld [vmem:[%s198 + $0x2a0] sm:$0xff]
      %v295 = vld [vmem:[%s198 + $0x2a8] sm:$0xff]
      %v296 = vld [vmem:[%s198 + $0x2b0] sm:$0xff]
      %v297 = vld [vmem:[%s198 + $0x2b8] sm:$0xff]
      %v298 = vld [vmem:[%s198 + $0x2c0] sm:$0xff]
      %v299 = vld [vmem:[%s198 + $0x2c8] sm:$0xff]
      %v300 = vld [vmem:[%s198 + $0x2d0] sm:$0xff]
      %v301 = vld [vmem:[%s198 + $0x2d8] sm:$0xff]
      %v302 = vld [vmem:[%s198 + $0x2e0] sm:$0xff]
      %v303 = vld [vmem:[%s198 + $0x2e8] sm:$0xff]
      %v304 = vld [vmem:[%s198 + $0x2f0] sm:$0xff]
      %v305 = vld [vmem:[%s198 + $0x2f8] sm:$0xff]
      %v306 = vld [vmem:[%s198 + $0x300] sm:$0xff]
      %v307 = vld [vmem:[%s198 + $0x308] sm:$0xff]
      %v308 = vld [vmem:[%s198 + $0x310] sm:$0xff]
      %v309 = vld [vmem:[%s198 + $0x318] sm:$0xff]
      %v310 = vld [vmem:[%s198 + $0x320] sm:$0xff]
      %v311 = vld [vmem:[%s198 + $0x328] sm:$0xff]
      %v312 = vld [vmem:[%s198 + $0x330] sm:$0xff]
      %v313 = vld [vmem:[%s198 + $0x338] sm:$0xff]
      %v314 = vld [vmem:[%s198 + $0x340] sm:$0xff]
      %v315 = vld [vmem:[%s198 + $0x348] sm:$0xff]
      %v316 = vld [vmem:[%s198 + $0x350] sm:$0xff]
      %v317 = vld [vmem:[%s198 + $0x358] sm:$0xff]
      %v318 = vld [vmem:[%s198 + $0x360] sm:$0xff]
      %v319 = vld [vmem:[%s198 + $0x368] sm:$0xff]
      %v320 = vld [vmem:[%s198 + $0x370] sm:$0xff]
      %v321 = vld [vmem:[%s198 + $0x378] sm:$0xff]
      %v322 = vld [vmem:[%s198 + $0x380] sm:$0xff]
      %v323 = vld [vmem:[%s198 + $0x388] sm:$0xff]
      %v324 = vld [vmem:[%s198 + $0x390] sm:$0xff]
      %v325 = vld [vmem:[%s198 + $0x398] sm:$0xff]
      %v326 = vld [vmem:[%s198 + $0x3a0] sm:$0xff]
      %v327 = vld [vmem:[%s198 + $0x3a8] sm:$0xff]
      %v328 = vld [vmem:[%s198 + $0x3b0] sm:$0xff]
      %v329 = vld [vmem:[%s198 + $0x3b8] sm:$0xff]
      %v330 = vld [vmem:[%s198 + $0x3c0] sm:$0xff]
      %v331 = vld [vmem:[%s198 + $0x3c8] sm:$0xff]
      %v332 = vld [vmem:[%s198 + $0x3d0] sm:$0xff]
      %v333 = vld [vmem:[%s198 + $0x3d8] sm:$0xff]
      %v334 = vld [vmem:[%s198 + $0x3e0] sm:$0xff]
      %v335 = vld [vmem:[%s198 + $0x3e8] sm:$0xff]
      %v336 = vld [vmem:[%s198 + $0x3f0] sm:$0xff]
      %v337 = vld [vmem:[%s198 + $0x3f8] sm:$0xff]
      %v338 = vld [vmem:[%s198 + $0x400] sm:$0xff]
      %v339 = vld [vmem:[%s198 + $0x408] sm:$0xff]
      %v340 = vld [vmem:[%s198 + $0x410] sm:$0xff]
      %v341 = vld [vmem:[%s198 + $0x418] sm:$0xff]
      %v342 = vld [vmem:[%s198 + $0x420] sm:$0xff]
      %v343 = vld [vmem:[%s198 + $0x428] sm:$0xff]
      %v344 = vld [vmem:[%s198 + $0x430] sm:$0xff]
      %v345 = vld [vmem:[%s198 + $0x438] sm:$0xff]
      %v346 = vld [vmem:[%s198 + $0x440] sm:$0xff]
      %v347 = vld [vmem:[%s198 + $0x448] sm:$0xff]
      %v348 = vld [vmem:[%s198 + $0x450] sm:$0xff]
      %v349 = vld [vmem:[%s198 + $0x458] sm:$0xff]
      %v350 = vld [vmem:[%s198 + $0x460] sm:$0xff]
      %v351 = vld [vmem:[%s198 + $0x468] sm:$0xff]
      %v352 = vld [vmem:[%s198 + $0x470] sm:$0xff]
      %v353 = vld [vmem:[%s198 + $0x478] sm:$0xff]
      %v354 = vld [vmem:[%s1] sm:$0xff]
      %v355 = vld [vmem:[%s1 + $0x8] sm:$0xff]
      %v356 = vld [vmem:[%s1 + $0x10] sm:$0xff]
      %v357 = vld [vmem:[%s1 + $0x18] sm:$0xff]
      %v358 = vld [vmem:[%s1 + $0x20] sm:$0xff]
      %v359 = vld [vmem:[%s1 + $0x28] sm:$0xff]
      %v360 = vld [vmem:[%s1 + $0x30] sm:$0xff]
      %v361 = vld [vmem:[%s1 + $0x38] sm:$0xff]
      %v362 = vld [vmem:[%s1 + $0x40] sm:$0xff]
      %v363 = vld [vmem:[%s1 + $0x48] sm:$0xff]
      %v364 = vld [vmem:[%s2] sm:$0xff]
      %v365 = vld [vmem:[%s2 + $0x8] sm:$0xff]
      %367 = vset.pattern.permute.xlu0 0
      %368 = vperm.xlu0 %367, %v364
      %v369 = vpop.permute.xlu0 %368
      %372 = vset.pattern.permute.xlu0 0
      %373 = vperm.xlu0 %372, %v365
      %v374 = vpop.permute.xlu0 %373
      %vm376 = vcmask 523264
      %v378 = vsel %vm376, %v358, 0
      %v381 = vsel %vm376, %v363, 0
      %383 = vmatprep.subr.mxu0 %v211
      %384 = vmatpush1.msra.mxu0 %v210
      %385 = vmatprep.subr.mxu0 %v213
      %386 = vmatpush1.msra.mxu0 %v212
      %387 = vmatprep.subr.mxu0 %v215
      %388 = vmatpush1.msra.mxu0 %v214
      %389 = vmatprep.subr.mxu0 %v217
      %390 = vmatpush1.msra.mxu0 %v216
      %391 = vmatprep.subr.mxu0 %v219
      %392 = vmatpush1.msra.mxu0 %v218
      %393 = vmatprep.subr.mxu0 %v221
      %394 = vmatpush1.msra.mxu0 %v220
      %395 = vmatprep.subr.mxu0 %v223
      %396 = vmatpush1.msra.mxu0 %v222
      %397 = vmatprep.subr.mxu0 %v225
      %398 = vmatpush1.msra.mxu0 %v224
      %399 = vmatprep.subr.mxu0 %v227
      %400 = vmatpush1.msra.mxu0 %v226
      %401 = vmatprep.subr.mxu0 %v229
      %402 = vmatpush1.msra.mxu0 %v228
      %403 = vmatprep.subr.mxu0 %v231
      %404 = vmatpush1.msra.mxu0 %v230
      %405 = vmatprep.subr.mxu0 %v233
      %406 = vmatpush1.msra.mxu0 %v232
      %407 = vmatprep.subr.mxu0 %v235
      %408 = vmatpush1.msra.mxu0 %v234
      %409 = vmatprep.subr.mxu0 %v237
      %410 = vmatpush1.msra.mxu0 %v236
      %411 = vmatprep.subr.mxu0 %v239
      %412 = vmatpush1.msra.mxu0 %v238
      %413 = vmatprep.subr.mxu0 %v241
      %414 = vmatpush1.msra.mxu0 %v240
      %415 = vmatprep.subr.mxu0 %v243
      %416 = vmatpush1.msra.mxu0 %v242
      %417 = vmatprep.subr.mxu0 %v245
      %418 = vmatpush1.msra.mxu0 %v244
      %419 = vmatprep.subr.mxu0 %v247
      %420 = vmatpush1.msra.mxu0 %v246
      %421 = vmatprep.subr.mxu0 %v249
      %422 = vmatpush1.msra.mxu0 %v248
      %423 = vmatprep.subr.mxu0 %v251
      %424 = vmatpush1.msra.mxu0 %v250
      %425 = vmatprep.subr.mxu0 %v253
      %426 = vmatpush1.msra.mxu0 %v252
      %427 = vmatprep.subr.mxu0 %v255
      %428 = vmatpush1.msra.mxu0 %v254
      %429 = vmatprep.subr.mxu0 %v257
      %430 = vmatpush1.msra.mxu0 %v256
      %431 = vmatprep.subr.mxu0 %v259
      %432 = vmatpush1.msra.mxu0 %v258
      %433 = vmatprep.subr.mxu0 %v261
      %434 = vmatpush1.msra.mxu0 %v260
      %435 = vmatprep.subr.mxu0 %v263
      %436 = vmatpush1.msra.mxu0 %v262
      %437 = vmatprep.subr.mxu0 %v265
      %438 = vmatpush1.msra.mxu0 %v264
      %439 = vmatprep.subr.mxu0 %v267
      %440 = vmatpush1.msra.mxu0 %v266
      %441 = vmatprep.subr.mxu0 %v269
      %442 = vmatpush1.msra.mxu0 %v268
      %443 = vmatprep.subr.mxu0 %v271
      %444 = vmatpush1.msra.mxu0 %v270
      %445 = vmatprep.subr.mxu0 %v273
      %446 = vmatpush1.msra.mxu0 %v272
      %447 = vmatprep.mubr.f32.mxu0 %v355
      %448 = vmatmul.mubr.f32.gmra.mrb[0].mxu0 %v354
      %v449 = vpop.f32.mrb[0].mxu0
      %v450 = vadd.f32 %v369, %v449
      %v451 = vpop.f32.mrb[0].mxu0
      %v452 = vadd.f32 %v369, %v451
      %453 = vmatprep.mubr.f32.mxu0 %v360
      %454 = vmatmul.mubr.f32.gmra.mrb[0].mxu0 %v359
      %v455 = vpop.f32.mrb[0].mxu0
      %v456 = vadd.f32 %v374, %v455
      %v457 = vpop.f32.mrb[0].mxu0
      %v458 = vadd.f32 %v374, %v457
      %459 = vdwg.mxu0
      %460 = vmatprep.subr.mxu0 %v275
      %461 = vmatpush1.msra.mxu0 %v274
      %462 = vmatprep.subr.mxu0 %v277
      %463 = vmatpush1.msra.mxu0 %v276
      %464 = vmatprep.subr.mxu0 %v279
      %465 = vmatpush1.msra.mxu0 %v278
      %466 = vmatprep.subr.mxu0 %v281
      %467 = vmatpush1.msra.mxu0 %v280
      %468 = vmatprep.subr.mxu0 %v283
      %469 = vmatpush1.msra.mxu0 %v282
      %470 = vmatprep.subr.mxu0 %v285
      %471 = vmatpush1.msra.mxu0 %v284
      %472 = vmatprep.subr.mxu0 %v287
      %473 = vmatpush1.msra.mxu0 %v286
      %474 = vmatprep.subr.mxu0 %v289
      %475 = vmatpush1.msra.mxu0 %v288
      %476 = vmatprep.subr.mxu0 %v291
      %477 = vmatpush1.msra.mxu0 %v290
      %478 = vmatprep.subr.mxu0 %v293
      %479 = vmatpush1.msra.mxu0 %v292
      %480 = vmatprep.subr.mxu0 %v295
      %481 = vmatpush1.msra.mxu0 %v294
      %482 = vmatprep.subr.mxu0 %v297
      %483 = vmatpush1.msra.mxu0 %v296
      %484 = vmatprep.subr.mxu0 %v299
      %485 = vmatpush1.msra.mxu0 %v298
      %486 = vmatprep.subr.mxu0 %v301
      %487 = vmatpush1.msra.mxu0 %v300
      %488 = vmatprep.subr.mxu0 %v303
      %489 = vmatpush1.msra.mxu0 %v302
      %490 = vmatprep.subr.mxu0 %v305
      %491 = vmatpush1.msra.mxu0 %v304
      %492 = vmatprep.subr.mxu0 %v307
      %493 = vmatpush1.msra.mxu0 %v306
      %494 = vmatprep.subr.mxu0 %v309
      %495 = vmatpush1.msra.mxu0 %v308
      %496 = vmatprep.subr.mxu0 %v311
      %497 = vmatpush1.msra.mxu0 %v310
      %498 = vmatprep.subr.mxu0 %v313
      %499 = vmatpush1.msra.mxu0 %v312
      %500 = vmatprep.subr.mxu0 %v315
      %501 = vmatpush1.msra.mxu0 %v314
      %502 = vmatprep.subr.mxu0 %v317
      %503 = vmatpush1.msra.mxu0 %v316
      %504 = vmatprep.subr.mxu0 %v319
      %505 = vmatpush1.msra.mxu0 %v318
      %506 = vmatprep.subr.mxu0 %v321
      %507 = vmatpush1.msra.mxu0 %v320
      %508 = vmatprep.subr.mxu0 %v323
      %509 = vmatpush1.msra.mxu0 %v322
      %510 = vmatprep.subr.mxu0 %v325
      %511 = vmatpush1.msra.mxu0 %v324
      %512 = vmatprep.subr.mxu0 %v327
      %513 = vmatpush1.msra.mxu0 %v326
      %514 = vmatprep.subr.mxu0 %v329
      %515 = vmatpush1.msra.mxu0 %v328
      %516 = vmatprep.subr.mxu0 %v331
      %517 = vmatpush1.msra.mxu0 %v330
      %518 = vmatprep.subr.mxu0 %v333
      %519 = vmatpush1.msra.mxu0 %v332
      %520 = vmatprep.subr.mxu0 %v335
      %521 = vmatpush1.msra.mxu0 %v334
      %522 = vmatprep.subr.mxu0 %v337
      %523 = vmatpush1.msra.mxu0 %v336
      %524 = vmatprep.mubr.f32.mxu0 %v357
      %525 = vmatmul.mubr.f32.gmra.mrb[0].mxu0 %v356
      %v526 = vpop.f32.mrb[0].mxu0
      %v527 = vadd.f32 %v450, %v526
      %v528 = vpop.f32.mrb[0].mxu0
      %v529 = vadd.f32 %v452, %v528
      %530 = vmatprep.mubr.f32.mxu0 %v362
      %531 = vmatmul.mubr.f32.gmra.mrb[0].mxu0 %v361
      %v532 = vpop.f32.mrb[0].mxu0
      %v533 = vadd.f32 %v456, %v532
      %v534 = vpop.f32.mrb[0].mxu0
      %v535 = vadd.f32 %v458, %v534
      %536 = vdwg.mxu0
      %537 = vmatprep.subr.mxu0 %v339
      %538 = vmatpush1.msra.mxu0 %v338
      %539 = vmatprep.subr.mxu0 %v341
      %540 = vmatpush1.msra.mxu0 %v340
      %541 = vmatprep.subr.mxu0 %v343
      %542 = vmatpush1.msra.mxu0 %v342
      %543 = vmatprep.subr.mxu0 %v345
      %544 = vmatpush1.msra.mxu0 %v344
      %545 = vmatprep.subr.mxu0 %v347
      %546 = vmatpush1.msra.mxu0 %v346
      %547 = vmatprep.subr.mxu0 %v349
      %548 = vmatpush1.msra.mxu0 %v348
      %549 = vmatprep.subr.mxu0 %v351
      %550 = vmatpush1.msra.mxu0 %v350
      %551 = vmatprep.subr.mxu0 %v353
      %552 = vmatpush1.msra.mxu0 %v352
      %553 = vmatprep.subr.mxu0 0.0
      %554 = vmatpush1.msra.mxu0 0.0
      %555 = vmatprep.subr.mxu0 0.0
      %556 = vmatpush1.msra.mxu0 0.0
      %557 = vmatprep.subr.mxu0 0.0
      %558 = vmatpush1.msra.mxu0 0.0
      %559 = vmatprep.subr.mxu0 0.0
      %560 = vmatpush1.msra.mxu0 0.0
      %561 = vmatprep.subr.mxu0 0.0
      %562 = vmatpush1.msra.mxu0 0.0
      %563 = vmatprep.subr.mxu0 0.0
      %564 = vmatpush1.msra.mxu0 0.0
      %565 = vmatprep.subr.mxu0 0.0
      %566 = vmatpush1.msra.mxu0 0.0
      %567 = vmatprep.subr.mxu0 0.0
      %568 = vmatpush1.msra.mxu0 0.0
      %569 = vmatprep.subr.mxu0 0.0
      %570 = vmatpush1.msra.mxu0 0.0
      %571 = vmatprep.subr.mxu0 0.0
      %572 = vmatpush1.msra.mxu0 0.0
      %573 = vmatprep.subr.mxu0 0.0
      %574 = vmatpush1.msra.mxu0 0.0
      %575 = vmatprep.subr.mxu0 0.0
      %576 = vmatpush1.msra.mxu0 0.0
      %577 = vmatprep.subr.mxu0 0.0
      %578 = vmatpush1.msra.mxu0 0.0
      %579 = vmatprep.subr.mxu0 0.0
      %580 = vmatpush1.msra.mxu0 0.0
      %581 = vmatprep.subr.mxu0 0.0
      %582 = vmatpush1.msra.mxu0 0.0
      %583 = vmatprep.subr.mxu0 0.0
      %584 = vmatpush1.msra.mxu0 0.0
      %585 = vmatprep.subr.mxu0 0.0
      %586 = vmatpush1.msra.mxu0 0.0
      %587 = vmatprep.subr.mxu0 0.0
      %588 = vmatpush1.msra.mxu0 0.0
      %589 = vmatprep.subr.mxu0 0.0
      %590 = vmatpush1.msra.mxu0 0.0
      %591 = vmatprep.subr.mxu0 0.0
      %592 = vmatpush1.msra.mxu0 0.0
      %593 = vmatprep.subr.mxu0 0.0
      %594 = vmatpush1.msra.mxu0 0.0
      %595 = vmatprep.subr.mxu0 0.0
      %596 = vmatpush1.msra.mxu0 0.0
      %597 = vmatprep.subr.mxu0 0.0
      %598 = vmatpush1.msra.mxu0 0.0
      %599 = vmatprep.subr.mxu0 0.0
      %600 = vmatpush1.msra.mxu0 0.0
      %601 = vmatprep.mubr.f32.mxu0 0.0
      %602 = vmatmul.mubr.f32.gmra.mrb[0].mxu0 %v378
      %v603 = vpop.f32.mrb[0].mxu0
      %v604 = vadd.f32 %v527, %v603
      %v605 = vpop.f32.mrb[0].mxu0
      %v606 = vadd.f32 %v529, %v605
      %607 = vmatprep.mubr.f32.mxu0 0.0
      %608 = vmatmul.mubr.f32.gmra.mrb[0].mxu0 %v381
      %v609 = vpop.f32.mrb[0].mxu0
      %v610 = vadd.f32 %v533, %v609
      %v611 = vpop.f32.mrb[0].mxu0
      %v612 = vadd.f32 %v535, %v611
      %613 = vdwg.mxu0
      %v614 = vmax.f32 %v604, 0.0
      %v615 = vmax.f32 %v606, 0.0
      %v616 = vmax.f32 %v610, 0.0
      %v617 = vmax.f32 %v612, 0.0
      %618 = vst [vmem:[%s208] sm:$0xff] %v614
      %619 = vst [vmem:[%s208 + $0x8] sm:$0xff] %v615
      %620 = vst [vmem:[%s208 + $0x10] sm:$0xff] %v616
      %621 = vst [vmem:[%s208 + $0x18] sm:$0xff] %v617
      %s622 = smul.u32 2, %s19
      %p623 = scmp.lt.s32.totalorder %s18, 1
      %s624 = scalar_select %p623, %s18, 1
      %p625 = scmp.lt.s32.totalorder %s622, 1
      %s626 = scalar_select %p625, %s622, 1
      %s627 = smul.addr %s624, 4
      %s628 = sadd.s32 %s626, %s627
      %s629 = smul.addr %s628, 8
      %s630 = scalar_lea.vmem %s3, %s629
      // Predicated region
      $region33: #{drp2_forward.25} parent=31 // pred_check
        %p631 = pneg %p116
      $region34: #{drp2_forward.25} parent=31 // pred_check_branch
        %633 = sbr.rel (%p631) target = $region36
      $region35: #{drp2_forward.25} parent=31 // pred_region
        %s634 = smul.u32 2, %s19
      $region36: #{drp2_forward.25} parent=31 // pred_fallthru
        _
    $region32: #{drp2_forward.25} parent=5 // pred_fallthru
      _
    %p635 = scmp.le.s32.totalorder 2, %s9
    // Predicated region
    $region37: #{drp2_forward.25} parent=5 // pred_check
      %p636 = pneg %p635
    $region38: #{drp2_forward.25} parent=5 // pred_check_branch
      %638 = sbr.rel (%p636) target = $region40
    $region39: #{drp2_forward.25} parent=5 // pred_region
      %s639 = ssub.s32 %s9, 2
      // Predicated region
      $region41: #{drp2_forward.25} parent=39 // pred_check
        %p640 = pneg %p122
      $region42: #{drp2_forward.25} parent=39 // pred_check_branch
        %642 = sbr.rel (%p640) target = $region44
      $region43: #{drp2_forward.25} parent=39 // pred_region
        %s643 = smul.u32 2, %s21
        %p644 = scmp.lt.s32.totalorder %s20, 1
        %s645 = scalar_select %p644, %s20, 1
        %p646 = scmp.lt.s32.totalorder %s643, 1
        %s647 = scalar_select %p646, %s643, 1
        %s648 = smul.addr %s645, 4
        %s649 = sadd.s32 %s647, %s648
        %s650 = smul.addr %s649, 8
        %s651 = scalar_lea.vmem %s3, %s650
      $region44: #{drp2_forward.25} parent=39 // pred_fallthru
        _
    $region40: #{drp2_forward.25} parent=5 // pred_fallthru
      _
  $region6: #{drp2_forward.25} parent=0 // loop_footer
    %s13 = sadd.s32 1, %s9
  $region7: #{drp2_forward.25} parent=0 // loop_footer_branch
    %8 = sbr.rel target = $region3
  $region8: #{drp2_forward.25} parent=0 // loop_exit
    _

// kernel: drp2_forward.27
$region0: #{drp2_forward.27}
  #allocation0 [shape = 'u32[]', space=smem, size = 0x4, offset = 0x4, fixed_abs, tag = 'smem constant byte address 0x4 - core index']
  #allocation1 [shape = 'u32[144,128]{1,0:T(1,128)}', space=vmem, size = 0x12000, scoped, tag = 'internal scratch']
  %s0 = inlined_call_operand.vmem [shape: f32[2,1,256], index: 0, kind: input, shape index: {}]
  %s1 = inlined_call_operand.vmem [shape: f32[2,1,256], index: 1, kind: input, shape index: {}]
  %s2 = inlined_call_operand.vmem [shape: f32[2,1,256], index: 2, kind: input, shape index: {}]
  %s3 = inlined_call_operand.vmem [shape: f32[2,1,256], index: 3, kind: output, shape index: {}]
  %s4 = sld [smem:[#allocation0]]
  $region45: #{drp2_forward.27} parent=0
    _
  %s6 = ssub.s32 1, %s4
  %s7 = scalar_select 0, %s6, %s4
  loop: start=0, step=1, limit=4
  $region2: #{drp2_forward.27} parent=0 // loop_pre_header
    _
  $region3: #{drp2_forward.27} parent=0 // loop_header
    %s9 = sphi 0, %s13
    %p10 = scmp.ge.s32.totalorder %s9, 4
    %s16 = sphi 0, %s28
    %s17 = sphi 0, %s24
    %s18 = sphi 0, %s16
    %s19 = sphi 0, %s17
    %s20 = sphi 0, %s18
    %s21 = sphi 0, %s19
    %s33 = sphi 0, %s35
    %s36 = sphi 0, %s33
    %s37 = sphi 0, %s36
    %s53 = sphi 0, %s37
    %s61 = sphi 0, %s63
    %s64 = sphi 0, %s61
    %s65 = sphi 0, %s64
    %s81 = sphi 0, %s65
    %s89 = sphi 0, %s91
    %s92 = sphi 0, %s89
    %s93 = sphi 0, %s92
    %s109 = sphi 0, %s93
    %s117 = sphi 0, %s119
    %s120 = sphi 0, %s117
    %s121 = sphi 0, %s120
    %s137 = sphi 0, %s121
  $region4: #{drp2_forward.27} parent=0 // loop_header_branch
    %12 = sbr.rel (%p10) target = $region8
  $region5: #{drp2_forward.27} parent=0 // loop_body
    %s14 = ssub.s32 %s9, 1
    %s15 = ssub.s32 %s9, 2
    %s22 = sadd.s32 1, %s17
    %p23 = scmp.ge.s32.totalorder %s22, 1
    %s24 = scalar_select %p23, 0, %s22
    %s25 = sadd.s32 1, %s16
    %s26 = scalar_select %p23, %s25, %s16
    %p27 = scmp.ge.s32.totalorder %s26, 2
    %s28 = scalar_select %p27, 0, %s26
    %s29 = ssub.s32 %s16, %s28
    %s30 = ssub.s32 %s17, %s24
    %s31 = sor.u32 %s29, %s30
    %p32 = scmp.eq.s32.totalorder %s31, 0
    %s34 = sadd.s32 %s33, 1
    %s35 = scalar_select %p32, %s33, %s34
    %p38 = pneg %p32
    %p39 = scmp.eq.s32.totalorder %s9, 1
    %p40 = por %p38, %p39
    %p41 = scmp.ne.s32.totalorder %s33, %s36
    %p42 = scmp.eq.s32.totalorder %s9, 0
    %p43 = por %p41, %p42
    %p44 = scmp.ne.s32.totalorder %s33, %s36
    %p45 = scmp.eq.s32.totalorder %s14, 1
    %p46 = por %p44, %p45
    %p47 = scmp.ne.s32.totalorder %s36, %s37
    %p48 = scmp.eq.s32.totalorder %s14, 0
    %p49 = por %p47, %p48
    %p50 = scmp.ne.s32.totalorder %s36, %s37
    %p51 = scmp.eq.s32.totalorder %s15, 1
    %p52 = por %p50, %p51
    %p54 = scmp.ne.s32.totalorder %s37, %s53
    %p55 = scmp.eq.s32.totalorder %s15, 0
    %p56 = por %p54, %p55
    %s57 = ssub.s32 %s16, %s28
    %s58 = ssub.s32 %s17, %s24
    %s59 = sor.u32 %s57, %s58
    %p60 = scmp.eq.s32.totalorder %s59, 0
    %s62 = sadd.s32 %s61, 1
    %s63 = scalar_select %p60, %s61, %s62
    %p66 = pneg %p60
    %p67 = scmp.eq.s32.totalorder %s9, 1
    %p68 = por %p66, %p67
    %p69 = scmp.ne.s32.totalorder %s61, %s64
    %p70 = scmp.eq.s32.totalorder %s9, 0
    %p71 = por %p69, %p70
    %p72 = scmp.ne.s32.totalorder %s61, %s64
    %p73 = scmp.eq.s32.totalorder %s14, 1
    %p74 = por %p72, %p73
    %p75 = scmp.ne.s32.totalorder %s64, %s65
    %p76 = scmp.eq.s32.totalorder %s14, 0
    %p77 = por %p75, %p76
    %p78 = scmp.ne.s32.totalorder %s64, %s65
    %p79 = scmp.eq.s32.totalorder %s15, 1
    %p80 = por %p78, %p79
    %p82 = scmp.ne.s32.totalorder %s65, %s81
    %p83 = scmp.eq.s32.totalorder %s15, 0
    %p84 = por %p82, %p83
    %s85 = ssub.s32 %s16, %s28
    %s86 = ssub.s32 %s17, %s24
    %s87 = sor.u32 %s85, %s86
    %p88 = scmp.eq.s32.totalorder %s87, 0
    %s90 = sadd.s32 %s89, 1
    %s91 = scalar_select %p88, %s89, %s90
    %p94 = pneg %p88
    %p95 = scmp.eq.s32.totalorder %s9, 1
    %p96 = por %p94, %p95
    %p97 = scmp.ne.s32.totalorder %s89, %s92
    %p98 = scmp.eq.s32.totalorder %s9, 0
    %p99 = por %p97, %p98
    %p100 = scmp.ne.s32.totalorder %s89, %s92
    %p101 = scmp.eq.s32.totalorder %s14, 1
    %p102 = por %p100, %p101
    %p103 = scmp.ne.s32.totalorder %s92, %s93
    %p104 = scmp.eq.s32.totalorder %s14, 0
    %p105 = por %p103, %p104
    %p106 = scmp.ne.s32.totalorder %s92, %s93
    %p107 = scmp.eq.s32.totalorder %s15, 1
    %p108 = por %p106, %p107
    %p110 = scmp.ne.s32.totalorder %s93, %s109
    %p111 = scmp.eq.s32.totalorder %s15, 0
    %p112 = por %p110, %p111
    %s113 = ssub.s32 %s16, %s28
    %s114 = ssub.s32 %s17, %s24
    %s115 = sor.u32 %s113, %s114
    %p116 = scmp.eq.s32.totalorder %s115, 0
    %s118 = sadd.s32 %s117, 1
    %s119 = scalar_select %p116, %s117, %s118
    %p122 = pneg %p116
    %p123 = scmp.eq.s32.totalorder %s9, 1
    %p124 = por %p122, %p123
    %p125 = scmp.ne.s32.totalorder %s117, %s120
    %p126 = scmp.eq.s32.totalorder %s9, 0
    %p127 = por %p125, %p126
    %p128 = scmp.ne.s32.totalorder %s117, %s120
    %p129 = scmp.eq.s32.totalorder %s14, 1
    %p130 = por %p128, %p129
    %p131 = scmp.ne.s32.totalorder %s120, %s121
    %p132 = scmp.eq.s32.totalorder %s14, 0
    %p133 = por %p131, %p132
    %p134 = scmp.ne.s32.totalorder %s120, %s121
    %p135 = scmp.eq.s32.totalorder %s15, 1
    %p136 = por %p134, %p135
    %p138 = scmp.ne.s32.totalorder %s121, %s137
    %p139 = scmp.eq.s32.totalorder %s15, 0
    %p140 = por %p138, %p139
    %p141 = scmp.le.s32.totalorder 1, %s9
    %p142 = scmp.lt.s32.totalorder %s9, 3
    %p143 = pnand %p141, %p142
    %p144 = pneg %p143
    // Predicated region
    $region9: #{drp2_forward.27} parent=5 // pred_check
      _
    $region10: #{drp2_forward.27} parent=5 // pred_check_branch
      %146 = sbr.rel (%p143) target = $region12
    $region11: #{drp2_forward.27} parent=5 // pred_region
      %s147 = ssub.s32 %s9, 1
    $region12: #{drp2_forward.27} parent=5 // pred_fallthru
      _
    %p148 = scmp.lt.s32.totalorder %s9, 2
    // Predicated region
    $region13: #{drp2_forward.27} parent=5 // pred_check
      %p149 = pneg %p148
    $region14: #{drp2_forward.27} parent=5 // pred_check_branch
      %151 = sbr.rel (%p149) target = $region16
    $region15: #{drp2_forward.27} parent=5 // pred_region
      // Predicated region
      $region17: #{drp2_forward.27} parent=15 // pred_check
        %p152 = pneg %p43
      $region18: #{drp2_forward.27} parent=15 // pred_check_branch
        %154 = sbr.rel (%p152) target = $region20
      $region19: #{drp2_forward.27} parent=15 // pred_region
        %s155 = smul.u32 2, %s17
        %p156 = scmp.lt.s32.totalorder %s16, 1
        %s157 = scalar_select %p156, %s16, 1
        %p158 = scmp.lt.s32.totalorder %s155, 1
        %s159 = scalar_select %p158, %s155, 1
        %s160 = smul.addr %s157, 2
        %s161 = sadd.s32 %s159, %s160
        %s162 = scalar_lea.vmem %s0, %s161
        %s163 = smul.u32 2, %s17
      $region20: #{drp2_forward.27} parent=15 // pred_fallthru
        _
      // Predicated region
      $region21: #{drp2_forward.27} parent=15 // pred_check
        %p164 = pneg %p71
      $region22: #{drp2_forward.27} parent=15 // pred_check_branch
        %166 = sbr.rel (%p164) target = $region24
      $region23: #{drp2_forward.27} parent=15 // pred_region
        %s167 = smul.u32 2, %s17
        %p168 = scmp.lt.s32.totalorder %s16, 1
        %s169 = scalar_select %p168, %s16, 1
        %p170 = scmp.lt.s32.totalorder %s167, 1
        %s171 = scalar_select %p170, %s167, 1
        %s172 = smul.addr %s169, 2
        %s173 = sadd.s32 %s171, %s172
        %s174 = scalar_lea.vmem %s1, %s173
        %s175 = smul.u32 2, %s17
      $region24: #{drp2_forward.27} parent=15 // pred_fallthru
        _
      // Predicated region
      $region25: #{drp2_forward.27} parent=15 // pred_check
        %p176 = pneg %p99
      $region26: #{drp2_forward.27} parent=15 // pred_check_branch
        %178 = sbr.rel (%p176) target = $region28
      $region27: #{drp2_forward.27} parent=15 // pred_region
        %s179 = smul.u32 2, %s17
        %p180 = scmp.lt.s32.totalorder %s16, 1
        %s181 = scalar_select %p180, %s16, 1
        %p182 = scmp.lt.s32.totalorder %s179, 1
        %s183 = scalar_select %p182, %s179, 1
        %s184 = smul.addr %s181, 2
        %s185 = sadd.s32 %s183, %s184
        %s186 = scalar_lea.vmem %s2, %s185
        %s187 = smul.u32 2, %s17
      $region28: #{drp2_forward.27} parent=15 // pred_fallthru
        _
    $region16: #{drp2_forward.27} parent=5 // pred_fallthru
      _
    %p188 = scmp.le.s32.totalorder 1, %s9
    %p189 = scmp.lt.s32.totalorder %s9, 3
    %p190 = pnand %p188, %p189
    %p191 = pneg %p190
    // Predicated region
    $region29: #{drp2_forward.27} parent=5 // pred_check
      _
    $region30: #{drp2_forward.27} parent=5 // pred_check_branch
      %193 = sbr.rel (%p190) target = $region32
    $region31: #{drp2_forward.27} parent=5 // pred_region
      %s194 = ssub.s32 %s9, 1
      %s195 = smul.u32 2, %s19
      %p196 = scmp.lt.s32.totalorder %s18, 1
      %s197 = scalar_select %p196, %s18, 1
      %p198 = scmp.lt.s32.totalorder %s195, 1
      %s199 = scalar_select %p198, %s195, 1
      %s200 = smul.addr %s197, 2
      %s201 = sadd.s32 %s199, %s200
      %s202 = scalar_lea.vmem %s0, %s201
      %p203 = pneg %p49
      %p204 = pneg %p46
      %s205 = smul.u32 2, %s19
      %p206 = scmp.lt.s32.totalorder %s18, 1
      %s207 = scalar_select %p206, %s18, 1
      %p208 = scmp.lt.s32.totalorder %s205, 1
      %s209 = scalar_select %p208, %s205, 1
      %s210 = smul.addr %s207, 2
      %s211 = sadd.s32 %s209, %s210
      %s212 = scalar_lea.vmem %s1, %s211
      %p213 = pneg %p77
      %p214 = pneg %p74
      %s215 = smul.u32 2, %s19
      %p216 = scmp.lt.s32.totalorder %s18, 1
      %s217 = scalar_select %p216, %s18, 1
      %p218 = scmp.lt.s32.totalorder %s215, 1
      %s219 = scalar_select %p218, %s215, 1
      %s220 = smul.addr %s217, 2
      %s221 = sadd.s32 %s219, %s220
      %s222 = scalar_lea.vmem %s2, %s221
      %p223 = pneg %p105
      %p224 = pneg %p102
      %p225 = pneg %p133
      %p226 = pneg %p130
      %s227 = smul.u32 2, %s19
      %p228 = scmp.lt.s32.totalorder %s18, 1
      %s229 = scalar_select %p228, %s18, 1
      %p230 = scmp.lt.s32.totalorder %s227, 1
      %s231 = scalar_select %p230, %s227, 1
      %s232 = smul.addr %s229, 2
      %s233 = sadd.s32 %s231, %s232
      %s234 = scalar_lea.vmem %s3, %s233
      %s235 = smul.u32 2, %s19
      %p236 = scmp.lt.s32.totalorder %s18, 1
      %s237 = scalar_select %p236, %s18, 1
      %p238 = scmp.lt.s32.totalorder %s235, 1
      %s239 = scalar_select %p238, %s235, 1
      %s240 = smul.addr %s237, 2
      %s241 = sadd.s32 %s239, %s240
      %s242 = scalar_lea.vmem %s0, %s241
      %s243 = smul.u32 2, %s19
      %s244 = smul.u32 2, %s19
      %p245 = scmp.lt.s32.totalorder %s18, 1
      %s246 = scalar_select %p245, %s18, 1
      %p247 = scmp.lt.s32.totalorder %s244, 1
      %s248 = scalar_select %p247, %s244, 1
      %s249 = smul.addr %s246, 2
      %s250 = sadd.s32 %s248, %s249
      %s251 = scalar_lea.vmem %s1, %s250
      %s252 = smul.u32 2, %s19
      %s253 = smul.u32 2, %s19
      %p254 = scmp.lt.s32.totalorder %s18, 1
      %s255 = scalar_select %p254, %s18, 1
      %p256 = scmp.lt.s32.totalorder %s253, 1
      %s257 = scalar_select %p256, %s253, 1
      %s258 = smul.addr %s255, 2
      %s259 = sadd.s32 %s257, %s258
      %s260 = scalar_lea.vmem %s2, %s259
      %s261 = smul.u32 2, %s19
      %s262 = smul.u32 2, %s19
      %p263 = scmp.lt.s32.totalorder %s18, 1
      %s264 = scalar_select %p263, %s18, 1
      %p265 = scmp.lt.s32.totalorder %s262, 1
      %s266 = scalar_select %p265, %s262, 1
      %s267 = smul.addr %s264, 2
      %s268 = sadd.s32 %s266, %s267
      %s269 = scalar_lea.vmem %s3, %s268
      %s270 = smul.u32 2, %s19
      %v271 = vld [vmem:[%s242] sm:$0x3]
      %v272 = vld [vmem:[%s251] sm:$0x3]
      %v273 = vadd.f32 %v271, %v272
      %v274 = vld [vmem:[%s260] sm:$0x3]
      %v275 = vadd.f32 %v273, %v274
      %v276 = vlaneseq
      %vm277 = vcmp.ge.s32.totalorder %v276, 0
      %vm278 = vcmp.lt.s32.totalorder %v276, 256
      %vm279 = vmand %vm277, %vm278
      %280 = vst.msk [vmem:[%s269] sm:$0x3] %vm279, %v275
      %s281 = smul.u32 2, %s19
      %p282 = scmp.lt.s32.totalorder %s18, 1
      %s283 = scalar_select %p282, %s18, 1
      %p284 = scmp.lt.s32.totalorder %s281, 1
      %s285 = scalar_select %p284, %s281, 1
      %s286 = smul.addr %s283, 2
      %s287 = sadd.s32 %s285, %s286
      %s288 = scalar_lea.vmem %s3, %s287
      // Predicated region
      $region33: #{drp2_forward.27} parent=31 // pred_check
        %p289 = pneg %p130
      $region34: #{drp2_forward.27} parent=31 // pred_check_branch
        %291 = sbr.rel (%p289) target = $region36
      $region35: #{drp2_forward.27} parent=31 // pred_region
        %s292 = smul.u32 2, %s19
      $region36: #{drp2_forward.27} parent=31 // pred_fallthru
        _
    $region32: #{drp2_forward.27} parent=5 // pred_fallthru
      _
    %p293 = scmp.le.s32.totalorder 2, %s9
    // Predicated region
    $region37: #{drp2_forward.27} parent=5 // pred_check
      %p294 = pneg %p293
    $region38: #{drp2_forward.27} parent=5 // pred_check_branch
      %296 = sbr.rel (%p294) target = $region40
    $region39: #{drp2_forward.27} parent=5 // pred_region
      %s297 = ssub.s32 %s9, 2
      // Predicated region
      $region41: #{drp2_forward.27} parent=39 // pred_check
        %p298 = pneg %p136
      $region42: #{drp2_forward.27} parent=39 // pred_check_branch
        %300 = sbr.rel (%p298) target = $region44
      $region43: #{drp2_forward.27} parent=39 // pred_region
        %s301 = smul.u32 2, %s21
        %p302 = scmp.lt.s32.totalorder %s20, 1
        %s303 = scalar_select %p302, %s20, 1
        %p304 = scmp.lt.s32.totalorder %s301, 1
        %s305 = scalar_select %p304, %s301, 1
        %s306 = smul.addr %s303, 2
        %s307 = sadd.s32 %s305, %s306
        %s308 = scalar_lea.vmem %s3, %s307
      $region44: #{drp2_forward.27} parent=39 // pred_fallthru
        _
    $region40: #{drp2_forward.27} parent=5 // pred_fallthru
      _
  $region6: #{drp2_forward.27} parent=0 // loop_footer
    %s13 = sadd.s32 1, %s9
  $region7: #{drp2_forward.27} parent=0 // loop_footer_branch
    %8 = sbr.rel target = $region3
  $region8: #{drp2_forward.27} parent=0 // loop_exit
    _

</llo_original>
